<compile_context>
chip_gen: v5e
topology: v5e:2x2
jax: 0.10.0
libtpu: 0.0.40
codegen_flags: <defaults>
</compile_context>

<pallas_src>
import functools

import jax
import jax.numpy as jnp
from jax.experimental import pallas as pl
from jax.experimental.pallas import tpu as pltpu

COND_DIM = 32     # cond_dimension
IN_CH = 4
OUT_CH = 4


# ----------------------------------------------------------------------------
# Fused Pallas kernel (one batch element per grid step)
# ----------------------------------------------------------------------------
def _fused_unet_kernel(
    targs_ref, x_ref,
    w1a_ref, w1b_ref, b1_ref, w2_ref, b2_ref, filmw_ref, filmb_ref,
    m16_ref, p8_ref, sdown_ref, sup_ref,
    inw_ref, inb_ref,
    dresw_ref, dresb_ref,
    downw_ref, downb_ref,
    mresw_ref, mresb_ref,
    upw_ref, upb_ref,
    ureswa_ref, ureswb_ref, uresb_ref,
    outw_ref, outb_ref,
    o_ref,
    *, cond_dim, h, w,
):
    f32, bf16 = jnp.float32, jnp.bfloat16
    C = cond_dim
    hw = h * w

    def dot(a, b):
        return jnp.dot(a, b, preferred_element_type=f32)

    # boundary masks loaded once per grid step (reused by 5 conv tap builds)
    masks = [m16_ref[k] for k in range(9)]                       # each [1, hw] f32

    def taps_full(x):
        """3x3 'same' taps at full resolution: XLU lane rolls + VPU boundary masks.

        x: [Cin, hw] f32  ->  [9*Cin, hw] bf16 K-stack for one fused MXU matmul.
        """
        parts = []
        for k in range(9):
            dh, dw = k // 3, k % 3
            off = (dh - 1) * w + (dw - 1)
            if off == 0:
                parts.append(x)                                  # centre tap
            else:
                parts.append(pltpu.roll(x, (-off) % hw, 1) * masks[k])
        return jnp.concatenate(parts, axis=0).astype(bf16)

    def taps_half(x):
        """Same K-stack at the downsampled resolution via tiny 0/1 selector matmuls
        (the 8x8 plane is narrower than one vreg of lanes)."""
        xb = x.astype(bf16)
        parts = [dot(xb, p8_ref[k]) for k in range(9)]
        return jnp.concatenate(parts, axis=0).astype(bf16)

    # --- conditioning path: sinusoidal posenc -> 2-layer MLP -> FiLM projections ---
    a = targs_ref[0]                                             # [1, C] = t * freqs
    s, c = jnp.sin(a), jnp.cos(a)
    hvec = jnp.maximum(
        jnp.sum(w1a_ref[...] * s, axis=1, keepdims=True)
        + jnp.sum(w1b_ref[...] * c, axis=1, keepdims=True)
        + b1_ref[...], 0.0)                                      # [2C, 1]
    cond = jnp.maximum(
        jnp.sum(w2_ref[...] * hvec, axis=0, keepdims=True) + b2_ref[...], 0.0)   # [1, C]
    films = jnp.sum(filmw_ref[...] * cond, axis=1, keepdims=True) + filmb_ref[...]  # [8C,1]
    sc_d, sh_d = films[0:C], films[C:2 * C]
    sc_m, sh_m = films[2 * C:4 * C], films[4 * C:6 * C]
    sc_u, sh_u = films[6 * C:7 * C], films[7 * C:8 * C]

    # --- UNet: every activation stays in VMEM, layout [channels, H*W] ---
    x = x_ref[0]                                                 # [Cin_pad, hw]
    h0 = jnp.maximum(dot(inw_ref[...], taps_full(x)) + inb_ref[...], 0.0)
    t = dot(dresw_ref[...], taps_full(h0)) + dresb_ref[...]
    h1 = jnp.maximum(t * (1.0 + sc_d) + sh_d, 0.0) + h0          # FiLM + ReLU + residual
    taps_h1 = taps_full(h1)                                      # shared by 2 convs
    d_full = dot(downw_ref[...], taps_h1)                        # stride-1 conv ...
    d1 = jnp.maximum(                                            # ... then stride-2 pick
        dot(d_full.astype(bf16), sdown_ref[...]) + downb_ref[...], 0.0)
    t = dot(mresw_ref[...], taps_half(d1)) + mresb_ref[...]
    m = jnp.maximum(t * (1.0 + sc_m) + sh_m, 0.0) + d1
    u0 = dot(m.astype(bf16), sup_ref[...])                       # nearest-neighbour 2x up
    u1 = jnp.maximum(dot(upw_ref[...], taps_full(u0)) + upb_ref[...], 0.0)
    t = (dot(ureswa_ref[...], taps_full(u1))                     # skip concat expressed as
         + dot(ureswb_ref[...], taps_h1)                         # two split-weight convs
         + uresb_ref[...])
    u2 = jnp.maximum(t * (1.0 + sc_u) + sh_u, 0.0)
    o_ref[0] = dot(outw_ref[...], taps_full(u2)) + outb_ref[...]  # [OUT_CH, hw]


# ----------------------------------------------------------------------------
# Constant operators / masks built once in the wrapper (pure XLA, folded by jit)
# ----------------------------------------------------------------------------
def _tap_masks(h, w):
    """[9, 1, h*w] f32 validity masks for the 3x3 'same' taps (zero padding)."""
    hw = h * w
    p = jnp.arange(hw)
    r, c = p // w, p % w
    ms = []
    for dh in range(3):
        for dw in range(3):
            dr, dc = dh - 1, dw - 1
            ms.append((r + dr >= 0) & (r + dr < h) & (c + dc >= 0) & (c + dc < w))
    return jnp.stack(ms).astype(jnp.float32)[:, None, :]


def _shift_operators(h, w):
    """[9, h*w, h*w] bf16 0/1 operators: (x @ P[k])[:, p] = x[:, p + off_k] for the
    3x3 'same' tap k = dh*3+dw, with zero padding realised as zero columns.
    Only used at the small downsampled resolution (8x8)."""
    hw = h * w
    p = jnp.arange(hw)
    col = p % w
    rows = jnp.arange(hw)[:, None]
    mats = []
    for dh in range(3):
        for dw in range(3):
            off = (dh - 1) * w + (dw - 1)
            src = p + off
            valid = ((col + (dw - 1) >= 0) & (col + (dw - 1) < w)
                     & (src >= 0) & (src < hw))
            mats.append((rows == src[None, :]) & valid[None, :])
    return jnp.stack(mats).astype(jnp.bfloat16)


def _downsample_operator(h, w):
    """[h*w, (h//2)*(w//2)] bf16: select the stride-2 conv output positions."""
    ho, wo = h // 2, w // 2
    q = jnp.arange(ho * wo)
    src = 2 * (q // wo) * w + 2 * (q % wo)
    return (jnp.arange(h * w)[:, None] == src[None, :]).astype(jnp.bfloat16)


def _upsample_operator(h, w):
    """[(h//2)*(w//2), h*w] bf16: nearest-neighbour 2x upsample as a matmul."""
    ho, wo = h // 2, w // 2
    p = jnp.arange(h * w)
    src = (p // (2 * w)) * wo + (p % w) // 2
    return (jnp.arange(ho * wo)[:, None] == src[None, :]).astype(jnp.bfloat16)


# ----------------------------------------------------------------------------
# Parameters (deterministic synthetic init)
# ----------------------------------------------------------------------------
def init_params(key):
    ks = iter(jax.random.split(key, 16))

    def conv_w(shape):  # (kh, kw, cin, cout), He init
        fan_in = shape[0] * shape[1] * shape[2]
        return jax.random.normal(next(ks), shape, jnp.float32) * (2.0 / fan_in) ** 0.5

    def lin_w(shape):   # (in, out)
        return jax.random.normal(next(ks), shape, jnp.float32) * (2.0 / shape[0]) ** 0.5

    z = lambda n: jnp.zeros((n,), jnp.float32)
    C = COND_DIM
    return dict(
        # GenericFCBlock: Linear(2C->2C) + ReLU, Linear(2C->C)
        mlp_w1=lin_w((2 * C, 2 * C)), mlp_b1=z(2 * C),
        mlp_w2=lin_w((2 * C, C)), mlp_b2=z(C),
        # UNet (representative FiLM-conditioned structure)
        in_w=conv_w((3, 3, IN_CH, C)), in_b=z(C),
        d_res_w=conv_w((3, 3, C, C)), d_res_b=z(C),
        d_film_w=lin_w((C, 2 * C)), d_film_b=z(2 * C),
        down_w=conv_w((3, 3, C, 2 * C)), down_b=z(2 * C),
        m_res_w=conv_w((3, 3, 2 * C, 2 * C)), m_res_b=z(2 * C),
        m_film_w=lin_w((C, 4 * C)), m_film_b=z(4 * C),
        up_w=conv_w((3, 3, 2 * C, C)), up_b=z(C),
        u_res_w=conv_w((3, 3, 2 * C, C)), u_res_b=z(C),
        u_film_w=lin_w((C, 2 * C)), u_film_b=z(2 * C),
        out_w=conv_w((3, 3, C, OUT_CH)), out_b=z(OUT_CH),
    )


# ----------------------------------------------------------------------------
# Forward: conditions_processor(time_step) -> unet(x, cond), single pallas_call
# ----------------------------------------------------------------------------
def diffusion_unet_forward(params, x_nchw, time_step):
    C = COND_DIM
    B, Cin, H, W = x_nchw.shape
    HW = H * W
    Ho, Wo = H // 2, W // 2

    # timestep embedding arguments (sin/cos applied inside the kernel)
    freqs = jnp.exp(-jnp.log(10000.0) * jnp.arange(C, dtype=jnp.float32) / C)
    targs = (time_step.astype(jnp.float32)[:, None] * freqs[None, :])[:, None, :]  # [B,1,C]

    # feature maps in [channels, H*W] layout == flattened NCHW; pad Cin up to 8 sublanes
    x_flat = x_nchw.astype(jnp.float32).reshape(B, Cin, HW)
    cin_pad = max(8, Cin)
    in_w = params["in_w"]
    if Cin < cin_pad:
        x_flat = jnp.concatenate(
            [x_flat, jnp.zeros((B, cin_pad - Cin, HW), jnp.float32)], axis=1)
        in_w = jnp.concatenate(
            [in_w, jnp.zeros((3, 3, cin_pad - Cin, in_w.shape[3]), in_w.dtype)], axis=2)

    def fuse_w(wt):                      # (3,3,ci,co) -> [co, 9*ci] bf16 fused taps
        co = wt.shape[3]
        return jnp.transpose(wt, (3, 0, 1, 2)).reshape(co, -1).astype(jnp.bfloat16)

    def colv(v):                         # bias -> column vector [n, 1] f32
        return v.astype(jnp.float32)[:, None]

    w1 = params["mlp_w1"]
    u_res = params["u_res_w"]
    filmw = jnp.concatenate(
        [params["d_film_w"], params["m_film_w"], params["u_film_w"]], axis=1).T   # [8C, C]
    filmb = colv(jnp.concatenate(
        [params["d_film_b"], params["m_film_b"], params["u_film_b"]]))            # [8C, 1]

    inputs = [
        targs,                                                   # per-batch
        x_flat,                                                  # per-batch
        w1[:C, :].T, w1[C:, :].T, colv(params["mlp_b1"]),        # cond MLP layer 1
        params["mlp_w2"], params["mlp_b2"][None, :].astype(jnp.float32),   # layer 2
        filmw, filmb,                                            # all FiLM projections
        _tap_masks(H, W),                                        # roll boundary masks
        _shift_operators(Ho, Wo),                                # 8x8-level selectors
        _downsample_operator(H, W), _upsample_operator(H, W),    # resampling selectors
        fuse_w(in_w), colv(params["in_b"]),
        fuse_w(params["d_res_w"]), colv(params["d_res_b"]),
        fuse_w(params["down_w"]), colv(params["down_b"]),
        fuse_w(params["m_res_w"]), colv(params["m_res_b"]),
        fuse_w(params["up_w"]), colv(params["up_b"]),
        fuse_w(u_res[:, :, :C, :]),                              # skip conv: u half
        fuse_w(u_res[:, :, C:, :]),                              # skip conv: h1 half
        colv(params["u_res_b"]),
        fuse_w(params["out_w"]), colv(params["out_b"]),
    ]

    def rep(a):      # grid-invariant (weights / operators / masks)
        n = a.ndim
        return pl.BlockSpec(a.shape, lambda b, n=n: (0,) * n)

    def per_batch(a):
        return pl.BlockSpec((1,) + a.shape[1:], lambda b: (b, 0, 0))

    in_specs = [per_batch(inputs[0]), per_batch(inputs[1])] + [rep(a) for a in inputs[2:]]

    out = pl.pallas_call(
        functools.partial(_fused_unet_kernel, cond_dim=C, h=H, w=W),
        out_shape=jax.ShapeDtypeStruct((B, OUT_CH, HW), jnp.float32),
        grid=(B,),
        in_specs=in_specs,
        out_specs=pl.BlockSpec((1, OUT_CH, HW), lambda b: (b, 0, 0)),
        compiler_params=pltpu.CompilerParams(
            dimension_semantics=("parallel",),       # batch elements -> both v7x TCs
        ),
    )(*inputs)
    return out.reshape(B, OUT_CH, H, W)              # already NCHW


# ----------------------------------------------------------------------------
# Pure-JAX/XLA reference of the same forward pass (for a numerical sanity check)
# ----------------------------------------------------------------------------
def _reference_forward(params, x_nchw, time_step):
    C = COND_DIM
    x = x_nchw.astype(jnp.float32)
    freqs = jnp.exp(-jnp.log(10000.0) * jnp.arange(C, dtype=jnp.float32) / C)
    a = time_step.astype(jnp.float32)[:, None] * freqs[None, :]
    enc = jnp.concatenate([jnp.sin(a), jnp.cos(a)], axis=-1)
    h = jax.nn.relu(enc @ params["mlp_w1"] + params["mlp_b1"])
    cond = jax.nn.relu(h @ params["mlp_w2"] + params["mlp_b2"])

    def conv(v, w, b, stride=1):
        out = jax.lax.conv_general_dilated(
            v, w, window_strides=(stride, stride), padding=((1, 1), (1, 1)),
            dimension_numbers=("NCHW", "HWIO", "NCHW"))
        return out + b[None, :, None, None]

    def film(v, fw, fb):
        ss = cond @ fw + fb
        co = v.shape[1]
        return v * (1.0 + ss[:, :co][:, :, None, None]) + ss[:, co:][:, :, None, None]

    h0 = jax.nn.relu(conv(x, params["in_w"], params["in_b"]))
    h1 = jax.nn.relu(film(conv(h0, params["d_res_w"], params["d_res_b"]),
                          params["d_film_w"], params["d_film_b"])) + h0
    d1 = jax.nn.relu(conv(h1, params["down_w"], params["down_b"], stride=2))
    m = jax.nn.relu(film(conv(d1, params["m_res_w"], params["m_res_b"]),
                         params["m_film_w"], params["m_film_b"])) + d1
    u = jnp.repeat(jnp.repeat(m, 2, axis=2), 2, axis=3)
    u = jax.nn.relu(conv(u, params["up_w"], params["up_b"]))
    u = jnp.concatenate([u, h1], axis=1)
    u = jax.nn.relu(film(conv(u, params["u_res_w"], params["u_res_b"]),
                         params["u_film_w"], params["u_film_b"]))
    return conv(u, params["out_w"], params["out_b"])


if __name__ == "__main__":
    key = jax.random.PRNGKey(0)
    kx, kt, kp = jax.random.split(key, 3)

    B, H, W = 2, 16, 16
    x = jax.random.normal(kx, (B, IN_CH, H, W), jnp.float32)      # NCHW like PyTorch
    time_step = jax.random.randint(kt, (B,), 0, 1000)
    params = init_params(kp)

    fwd = jax.jit(diffusion_unet_forward)
    out = fwd(params, x, time_step)
    jax.block_until_ready(out)

    assert out.shape == (B, OUT_CH, H, W), out.shape
    assert out.dtype == jnp.float32
    assert bool(jnp.all(jnp.isfinite(out)))

    # sanity check against the pure-JAX reference (loose tolerance: conv matmuls in bf16)
    ref = jax.jit(_reference_forward)(params, x, time_step)
    err = float(jnp.max(jnp.abs(out - ref)))
    scale = float(jnp.max(jnp.abs(ref))) + 1.0
    assert err <= 5e-2 * scale, f"kernel/reference mismatch: max_abs_err={err}, scale={scale}"

    print("KERNEL_OK")
</pallas_src>

<mosaic_0001>
module attributes {stable_mosaic.version = 11 : i64} {
  func.func @_fused_unet_kernel(%arg0: i32, %arg1: memref<1x1x32xf32, #tpu.memory_space<vmem>>, %arg2: memref<1x8x256xf32, #tpu.memory_space<vmem>>, %arg3: memref<64x32xf32, #tpu.memory_space<vmem>>, %arg4: memref<64x32xf32, #tpu.memory_space<vmem>>, %arg5: memref<64x1xf32, #tpu.memory_space<vmem>>, %arg6: memref<64x32xf32, #tpu.memory_space<vmem>>, %arg7: memref<1x32xf32, #tpu.memory_space<vmem>>, %arg8: memref<256x32xf32, #tpu.memory_space<vmem>>, %arg9: memref<256x1xf32, #tpu.memory_space<vmem>>, %arg10: memref<9x1x256xf32, #tpu.memory_space<vmem>>, %arg11: memref<9x64x64xbf16, #tpu.memory_space<vmem>>, %arg12: memref<256x64xbf16, #tpu.memory_space<vmem>>, %arg13: memref<64x256xbf16, #tpu.memory_space<vmem>>, %arg14: memref<32x72xbf16, #tpu.memory_space<vmem>>, %arg15: memref<32x1xf32, #tpu.memory_space<vmem>>, %arg16: memref<32x288xbf16, #tpu.memory_space<vmem>>, %arg17: memref<32x1xf32, #tpu.memory_space<vmem>>, %arg18: memref<64x288xbf16, #tpu.memory_space<vmem>>, %arg19: memref<64x1xf32, #tpu.memory_space<vmem>>, %arg20: memref<64x576xbf16, #tpu.memory_space<vmem>>, %arg21: memref<64x1xf32, #tpu.memory_space<vmem>>, %arg22: memref<32x576xbf16, #tpu.memory_space<vmem>>, %arg23: memref<32x1xf32, #tpu.memory_space<vmem>>, %arg24: memref<32x288xbf16, #tpu.memory_space<vmem>>, %arg25: memref<32x288xbf16, #tpu.memory_space<vmem>>, %arg26: memref<32x1xf32, #tpu.memory_space<vmem>>, %arg27: memref<4x288xbf16, #tpu.memory_space<vmem>>, %arg28: memref<4x1xf32, #tpu.memory_space<vmem>>, %arg29: memref<1x4x256xf32, #tpu.memory_space<vmem>>) attributes {dimension_semantics = [#tpu.dimension_semantics<parallel>], iteration_bounds = array<i64: 2>, scalar_prefetch = 0 : i64, scratch_operands = 0 : i64, tpu.core_type = #tpu.core_type<tc>, window_params = [{transform_indices = @transform_0, window_bounds = array<i64: 1, 1, 32>}, {transform_indices = @transform_1, window_bounds = array<i64: 1, 8, 256>}, {pipeline_mode = #tpu.pipeline_mode<synchronous>, transform_indices = @transform_2, window_bounds = array<i64: 64, 32>}, {pipeline_mode = #tpu.pipeline_mode<synchronous>, transform_indices = @transform_3, window_bounds = array<i64: 64, 32>}, {pipeline_mode = #tpu.pipeline_mode<synchronous>, transform_indices = @transform_4, window_bounds = array<i64: 64, 1>}, {pipeline_mode = #tpu.pipeline_mode<synchronous>, transform_indices = @transform_5, window_bounds = array<i64: 64, 32>}, {pipeline_mode = #tpu.pipeline_mode<synchronous>, transform_indices = @transform_6, window_bounds = array<i64: 1, 32>}, {pipeline_mode = #tpu.pipeline_mode<synchronous>, transform_indices = @transform_7, window_bounds = array<i64: 256, 32>}, {pipeline_mode = #tpu.pipeline_mode<synchronous>, transform_indices = @transform_8, window_bounds = array<i64: 256, 1>}, {pipeline_mode = #tpu.pipeline_mode<synchronous>, transform_indices = @transform_9, window_bounds = array<i64: 9, 1, 256>}, {pipeline_mode = #tpu.pipeline_mode<synchronous>, transform_indices = @transform_10, window_bounds = array<i64: 9, 64, 64>}, {pipeline_mode = #tpu.pipeline_mode<synchronous>, transform_indices = @transform_11, window_bounds = array<i64: 256, 64>}, {pipeline_mode = #tpu.pipeline_mode<synchronous>, transform_indices = @transform_12, window_bounds = array<i64: 64, 256>}, {pipeline_mode = #tpu.pipeline_mode<synchronous>, transform_indices = @transform_13, window_bounds = array<i64: 32, 72>}, {pipeline_mode = #tpu.pipeline_mode<synchronous>, transform_indices = @transform_14, window_bounds = array<i64: 32, 1>}, {pipeline_mode = #tpu.pipeline_mode<synchronous>, transform_indices = @transform_15, window_bounds = array<i64: 32, 288>}, {pipeline_mode = #tpu.pipeline_mode<synchronous>, transform_indices = @transform_16, window_bounds = array<i64: 32, 1>}, {pipeline_mode = #tpu.pipeline_mode<synchronous>, transform_indices = @transform_17, window_bounds = array<i64: 64, 288>}, {pipeline_mode = #tpu.pipeline_mode<synchronous>, transform_indices = @transform_18, window_bounds = array<i64: 64, 1>}, {pipeline_mode = #tpu.pipeline_mode<synchronous>, transform_indices = @transform_19, window_bounds = array<i64: 64, 576>}, {pipeline_mode = #tpu.pipeline_mode<synchronous>, transform_indices = @transform_20, window_bounds = array<i64: 64, 1>}, {pipeline_mode = #tpu.pipeline_mode<synchronous>, transform_indices = @transform_21, window_bounds = array<i64: 32, 576>}, {pipeline_mode = #tpu.pipeline_mode<synchronous>, transform_indices = @transform_22, window_bounds = array<i64: 32, 1>}, {pipeline_mode = #tpu.pipeline_mode<synchronous>, transform_indices = @transform_23, window_bounds = array<i64: 32, 288>}, {pipeline_mode = #tpu.pipeline_mode<synchronous>, transform_indices = @transform_24, window_bounds = array<i64: 32, 288>}, {pipeline_mode = #tpu.pipeline_mode<synchronous>, transform_indices = @transform_25, window_bounds = array<i64: 32, 1>}, {pipeline_mode = #tpu.pipeline_mode<synchronous>, transform_indices = @transform_26, window_bounds = array<i64: 4, 288>}, {pipeline_mode = #tpu.pipeline_mode<synchronous>, transform_indices = @transform_27, window_bounds = array<i64: 4, 1>}, {transform_indices = @transform_28, window_bounds = array<i64: 1, 4, 256>}]} {
    %c0 = arith.constant 0 : index
    %c0_0 = arith.constant 0 : index
    %c0_1 = arith.constant 0 : index
    %0 = vector.load %arg10[%c0, %c0_0, %c0_1] : memref<9x1x256xf32, #tpu.memory_space<vmem>>, vector<1x1x256xf32>
    %1 = vector.shape_cast %0 : vector<1x1x256xf32> to vector<1x256xf32>
    %c1 = arith.constant 1 : index
    %c0_2 = arith.constant 0 : index
    %c0_3 = arith.constant 0 : index
    %2 = vector.load %arg10[%c1, %c0_2, %c0_3] : memref<9x1x256xf32, #tpu.memory_space<vmem>>, vector<1x1x256xf32>
    %3 = vector.shape_cast %2 : vector<1x1x256xf32> to vector<1x256xf32>
    %c2 = arith.constant 2 : index
    %c0_4 = arith.constant 0 : index
    %c0_5 = arith.constant 0 : index
    %4 = vector.load %arg10[%c2, %c0_4, %c0_5] : memref<9x1x256xf32, #tpu.memory_space<vmem>>, vector<1x1x256xf32>
    %5 = vector.shape_cast %4 : vector<1x1x256xf32> to vector<1x256xf32>
    %c3 = arith.constant 3 : index
    %c0_6 = arith.constant 0 : index
    %c0_7 = arith.constant 0 : index
    %6 = vector.load %arg10[%c3, %c0_6, %c0_7] : memref<9x1x256xf32, #tpu.memory_space<vmem>>, vector<1x1x256xf32>
    %7 = vector.shape_cast %6 : vector<1x1x256xf32> to vector<1x256xf32>
    %c5 = arith.constant 5 : index
    %c0_8 = arith.constant 0 : index
    %c0_9 = arith.constant 0 : index
    %8 = vector.load %arg10[%c5, %c0_8, %c0_9] : memref<9x1x256xf32, #tpu.memory_space<vmem>>, vector<1x1x256xf32>
    %9 = vector.shape_cast %8 : vector<1x1x256xf32> to vector<1x256xf32>
    %c6 = arith.constant 6 : index
    %c0_10 = arith.constant 0 : index
    %c0_11 = arith.constant 0 : index
    %10 = vector.load %arg10[%c6, %c0_10, %c0_11] : memref<9x1x256xf32, #tpu.memory_space<vmem>>, vector<1x1x256xf32>
    %11 = vector.shape_cast %10 : vector<1x1x256xf32> to vector<1x256xf32>
    %c7 = arith.constant 7 : index
    %c0_12 = arith.constant 0 : index
    %c0_13 = arith.constant 0 : index
    %12 = vector.load %arg10[%c7, %c0_12, %c0_13] : memref<9x1x256xf32, #tpu.memory_space<vmem>>, vector<1x1x256xf32>
    %13 = vector.shape_cast %12 : vector<1x1x256xf32> to vector<1x256xf32>
    %c8 = arith.constant 8 : index
    %c0_14 = arith.constant 0 : index
    %c0_15 = arith.constant 0 : index
    %14 = vector.load %arg10[%c8, %c0_14, %c0_15] : memref<9x1x256xf32, #tpu.memory_space<vmem>>, vector<1x1x256xf32>
    %15 = vector.shape_cast %14 : vector<1x1x256xf32> to vector<1x256xf32>
    %c0_16 = arith.constant 0 : index
    %c0_17 = arith.constant 0 : index
    %c0_18 = arith.constant 0 : index
    %16 = vector.load %arg1[%c0_16, %c0_17, %c0_18] : memref<1x1x32xf32, #tpu.memory_space<vmem>>, vector<1x1x32xf32>
    %17 = vector.shape_cast %16 : vector<1x1x32xf32> to vector<1x32xf32>
    %18 = math.sin %17 : vector<1x32xf32>
    %19 = math.cos %17 : vector<1x32xf32>
    %c0_19 = arith.constant 0 : index
    %c0_20 = arith.constant 0 : index
    %20 = vector.load %arg3[%c0_19, %c0_20] : memref<64x32xf32, #tpu.memory_space<vmem>>, vector<64x32xf32>
    %21 = vector.broadcast %18 : vector<1x32xf32> to vector<64x32xf32>
    %22 = arith.mulf %20, %21 : vector<64x32xf32>
    %cst = arith.constant dense<0.000000e+00> : vector<64xf32>
    %23 = vector.multi_reduction <add>, %22, %cst [1] : vector<64x32xf32> to vector<64xf32>
    %24 = vector.shape_cast %23 : vector<64xf32> to vector<64x1xf32>
    %c0_21 = arith.constant 0 : index
    %c0_22 = arith.constant 0 : index
    %25 = vector.load %arg4[%c0_21, %c0_22] : memref<64x32xf32, #tpu.memory_space<vmem>>, vector<64x32xf32>
    %26 = vector.broadcast %19 : vector<1x32xf32> to vector<64x32xf32>
    %27 = arith.mulf %25, %26 : vector<64x32xf32>
    %cst_23 = arith.constant dense<0.000000e+00> : vector<64xf32>
    %28 = vector.multi_reduction <add>, %27, %cst_23 [1] : vector<64x32xf32> to vector<64xf32>
    %29 = vector.shape_cast %28 : vector<64xf32> to vector<64x1xf32>
    %30 = arith.addf %24, %29 : vector<64x1xf32>
    %c0_24 = arith.constant 0 : index
    %c0_25 = arith.constant 0 : index
    %31 = vector.load %arg5[%c0_24, %c0_25] : memref<64x1xf32, #tpu.memory_space<vmem>>, vector<64x1xf32>
    %32 = arith.addf %30, %31 : vector<64x1xf32>
    %cst_26 = arith.constant 0.000000e+00 : f32
    %33 = vector.broadcast %cst_26 : f32 to vector<64x1xf32>
    %34 = arith.maximumf %32, %33 : vector<64x1xf32>
    %c0_27 = arith.constant 0 : index
    %c0_28 = arith.constant 0 : index
    %35 = vector.load %arg6[%c0_27, %c0_28] : memref<64x32xf32, #tpu.memory_space<vmem>>, vector<64x32xf32>
    %36 = vector.broadcast %34 : vector<64x1xf32> to vector<64x32xf32>
    %37 = arith.mulf %35, %36 : vector<64x32xf32>
    %cst_29 = arith.constant dense<0.000000e+00> : vector<32xf32>
    %38 = vector.multi_reduction <add>, %37, %cst_29 [0] : vector<64x32xf32> to vector<32xf32>
    %39 = vector.shape_cast %38 : vector<32xf32> to vector<1x32xf32>
    %c0_30 = arith.constant 0 : index
    %c0_31 = arith.constant 0 : index
    %40 = vector.load %arg7[%c0_30, %c0_31] : memref<1x32xf32, #tpu.memory_space<vmem>>, vector<1x32xf32>
    %41 = arith.addf %39, %40 : vector<1x32xf32>
    %cst_32 = arith.constant 0.000000e+00 : f32
    %42 = vector.broadcast %cst_32 : f32 to vector<1x32xf32>
    %43 = arith.maximumf %41, %42 : vector<1x32xf32>
    %c0_33 = arith.constant 0 : index
    %c0_34 = arith.constant 0 : index
    %44 = vector.load %arg8[%c0_33, %c0_34] : memref<256x32xf32, #tpu.memory_space<vmem>>, vector<256x32xf32>
    %45 = vector.broadcast %43 : vector<1x32xf32> to vector<256x32xf32>
    %46 = arith.mulf %44, %45 : vector<256x32xf32>
    %cst_35 = arith.constant dense<0.000000e+00> : vector<256xf32>
    %47 = vector.multi_reduction <add>, %46, %cst_35 [1] : vector<256x32xf32> to vector<256xf32>
    %48 = vector.shape_cast %47 : vector<256xf32> to vector<256x1xf32>
    %c0_36 = arith.constant 0 : index
    %c0_37 = arith.constant 0 : index
    %49 = vector.load %arg9[%c0_36, %c0_37] : memref<256x1xf32, #tpu.memory_space<vmem>>, vector<256x1xf32>
    %50 = arith.addf %48, %49 : vector<256x1xf32>
    %51 = vector.extract_strided_slice %50 {offsets = [0, 0], sizes = [32, 1], strides = [1, 1]} : vector<256x1xf32> to vector<32x1xf32>
    %52 = vector.extract_strided_slice %50 {offsets = [32, 0], sizes = [32, 1], strides = [1, 1]} : vector<256x1xf32> to vector<32x1xf32>
    %53 = vector.extract_strided_slice %50 {offsets = [64, 0], sizes = [64, 1], strides = [1, 1]} : vector<256x1xf32> to vector<64x1xf32>
    %54 = vector.extract_strided_slice %50 {offsets = [128, 0], sizes = [64, 1], strides = [1, 1]} : vector<256x1xf32> to vector<64x1xf32>
    %55 = vector.extract_strided_slice %50 {offsets = [192, 0], sizes = [32, 1], strides = [1, 1]} : vector<256x1xf32> to vector<32x1xf32>
    %56 = vector.extract_strided_slice %50 {offsets = [224, 0], sizes = [32, 1], strides = [1, 1]} : vector<256x1xf32> to vector<32x1xf32>
    %c0_38 = arith.constant 0 : index
    %c0_39 = arith.constant 0 : index
    %c0_40 = arith.constant 0 : index
    %57 = vector.load %arg2[%c0_38, %c0_39, %c0_40] : memref<1x8x256xf32, #tpu.memory_space<vmem>>, vector<1x8x256xf32>
    %58 = vector.shape_cast %57 : vector<1x8x256xf32> to vector<8x256xf32>
    %c0_41 = arith.constant 0 : index
    %c0_42 = arith.constant 0 : index
    %59 = vector.load %arg14[%c0_41, %c0_42] : memref<32x72xbf16, #tpu.memory_space<vmem>>, vector<32x72xbf16>
    %c17_i32 = arith.constant 17 : i32
    %60 = tpu.dynamic_rotate %58 by %c17_i32 dim 1 : vector<8x256xf32>, i32 -> vector<8x256xf32>
    %61 = vector.broadcast %1 : vector<1x256xf32> to vector<8x256xf32>
    %62 = arith.mulf %60, %61 : vector<8x256xf32>
    %c16_i32 = arith.constant 16 : i32
    %63 = tpu.dynamic_rotate %58 by %c16_i32 dim 1 : vector<8x256xf32>, i32 -> vector<8x256xf32>
    %64 = vector.broadcast %3 : vector<1x256xf32> to vector<8x256xf32>
    %65 = arith.mulf %63, %64 : vector<8x256xf32>
    %c15_i32 = arith.constant 15 : i32
    %66 = tpu.dynamic_rotate %58 by %c15_i32 dim 1 : vector<8x256xf32>, i32 -> vector<8x256xf32>
    %67 = vector.broadcast %5 : vector<1x256xf32> to vector<8x256xf32>
    %68 = arith.mulf %66, %67 : vector<8x256xf32>
    %c1_i32 = arith.constant 1 : i32
    %69 = tpu.dynamic_rotate %58 by %c1_i32 dim 1 : vector<8x256xf32>, i32 -> vector<8x256xf32>
    %70 = vector.broadcast %7 : vector<1x256xf32> to vector<8x256xf32>
    %71 = arith.mulf %69, %70 : vector<8x256xf32>
    %c255_i32 = arith.constant 255 : i32
    %72 = tpu.dynamic_rotate %58 by %c255_i32 dim 1 : vector<8x256xf32>, i32 -> vector<8x256xf32>
    %73 = vector.broadcast %9 : vector<1x256xf32> to vector<8x256xf32>
    %74 = arith.mulf %72, %73 : vector<8x256xf32>
    %c241_i32 = arith.constant 241 : i32
    %75 = tpu.dynamic_rotate %58 by %c241_i32 dim 1 : vector<8x256xf32>, i32 -> vector<8x256xf32>
    %76 = vector.broadcast %11 : vector<1x256xf32> to vector<8x256xf32>
    %77 = arith.mulf %75, %76 : vector<8x256xf32>
    %c240_i32 = arith.constant 240 : i32
    %78 = tpu.dynamic_rotate %58 by %c240_i32 dim 1 : vector<8x256xf32>, i32 -> vector<8x256xf32>
    %79 = vector.broadcast %13 : vector<1x256xf32> to vector<8x256xf32>
    %80 = arith.mulf %78, %79 : vector<8x256xf32>
    %c239_i32 = arith.constant 239 : i32
    %81 = tpu.dynamic_rotate %58 by %c239_i32 dim 1 : vector<8x256xf32>, i32 -> vector<8x256xf32>
    %82 = vector.broadcast %15 : vector<1x256xf32> to vector<8x256xf32>
    %83 = arith.mulf %81, %82 : vector<8x256xf32>
    %84 = tpu.concatenate %62, %65, %68, %71, %58, %74, %77, %80, %83 in 0 : vector<8x256xf32>, vector<8x256xf32>, vector<8x256xf32>, vector<8x256xf32>, vector<8x256xf32>, vector<8x256xf32>, vector<8x256xf32>, vector<8x256xf32>, vector<8x256xf32> -> vector<72x256xf32>
    %85 = arith.truncf %84 : vector<72x256xf32> to vector<72x256xbf16>
    %cst_43 = arith.constant dense<0.000000e+00> : vector<32x256xf32>
    %86 = tpu.matmul %59, %85, %cst_43 {dimension_numbers = #tpu.dot_dimension_numbers<[1], [0], [0], [1], [0, 0, 1, 1], [], []>} : vector<32x72xbf16>, vector<72x256xbf16>, vector<32x256xf32> -> vector<32x256xf32>
    %c0_44 = arith.constant 0 : index
    %c0_45 = arith.constant 0 : index
    %87 = vector.load %arg15[%c0_44, %c0_45] : memref<32x1xf32, #tpu.memory_space<vmem>>, vector<32x1xf32>
    %88 = vector.broadcast %87 : vector<32x1xf32> to vector<32x256xf32>
    %89 = arith.addf %86, %88 : vector<32x256xf32>
    %cst_46 = arith.constant 0.000000e+00 : f32
    %90 = vector.broadcast %cst_46 : f32 to vector<32x256xf32>
    %91 = arith.maximumf %89, %90 : vector<32x256xf32>
    %c0_47 = arith.constant 0 : index
    %c0_48 = arith.constant 0 : index
    %92 = vector.load %arg16[%c0_47, %c0_48] : memref<32x288xbf16, #tpu.memory_space<vmem>>, vector<32x288xbf16>
    %c17_i32_49 = arith.constant 17 : i32
    %93 = tpu.dynamic_rotate %91 by %c17_i32_49 dim 1 : vector<32x256xf32>, i32 -> vector<32x256xf32>
    %94 = vector.broadcast %1 : vector<1x256xf32> to vector<32x256xf32>
    %95 = arith.mulf %93, %94 : vector<32x256xf32>
    %c16_i32_50 = arith.constant 16 : i32
    %96 = tpu.dynamic_rotate %91 by %c16_i32_50 dim 1 : vector<32x256xf32>, i32 -> vector<32x256xf32>
    %97 = vector.broadcast %3 : vector<1x256xf32> to vector<32x256xf32>
    %98 = arith.mulf %96, %97 : vector<32x256xf32>
    %c15_i32_51 = arith.constant 15 : i32
    %99 = tpu.dynamic_rotate %91 by %c15_i32_51 dim 1 : vector<32x256xf32>, i32 -> vector<32x256xf32>
    %100 = vector.broadcast %5 : vector<1x256xf32> to vector<32x256xf32>
    %101 = arith.mulf %99, %100 : vector<32x256xf32>
    %c1_i32_52 = arith.constant 1 : i32
    %102 = tpu.dynamic_rotate %91 by %c1_i32_52 dim 1 : vector<32x256xf32>, i32 -> vector<32x256xf32>
    %103 = vector.broadcast %7 : vector<1x256xf32> to vector<32x256xf32>
    %104 = arith.mulf %102, %103 : vector<32x256xf32>
    %c255_i32_53 = arith.constant 255 : i32
    %105 = tpu.dynamic_rotate %91 by %c255_i32_53 dim 1 : vector<32x256xf32>, i32 -> vector<32x256xf32>
    %106 = vector.broadcast %9 : vector<1x256xf32> to vector<32x256xf32>
    %107 = arith.mulf %105, %106 : vector<32x256xf32>
    %c241_i32_54 = arith.constant 241 : i32
    %108 = tpu.dynamic_rotate %91 by %c241_i32_54 dim 1 : vector<32x256xf32>, i32 -> vector<32x256xf32>
    %109 = vector.broadcast %11 : vector<1x256xf32> to vector<32x256xf32>
    %110 = arith.mulf %108, %109 : vector<32x256xf32>
    %c240_i32_55 = arith.constant 240 : i32
    %111 = tpu.dynamic_rotate %91 by %c240_i32_55 dim 1 : vector<32x256xf32>, i32 -> vector<32x256xf32>
    %112 = vector.broadcast %13 : vector<1x256xf32> to vector<32x256xf32>
    %113 = arith.mulf %111, %112 : vector<32x256xf32>
    %c239_i32_56 = arith.constant 239 : i32
    %114 = tpu.dynamic_rotate %91 by %c239_i32_56 dim 1 : vector<32x256xf32>, i32 -> vector<32x256xf32>
    %115 = vector.broadcast %15 : vector<1x256xf32> to vector<32x256xf32>
    %116 = arith.mulf %114, %115 : vector<32x256xf32>
    %117 = tpu.concatenate %95, %98, %101, %104, %91, %107, %110, %113, %116 in 0 : vector<32x256xf32>, vector<32x256xf32>, vector<32x256xf32>, vector<32x256xf32>, vector<32x256xf32>, vector<32x256xf32>, vector<32x256xf32>, vector<32x256xf32>, vector<32x256xf32> -> vector<288x256xf32>
    %118 = arith.truncf %117 : vector<288x256xf32> to vector<288x256xbf16>
    %cst_57 = arith.constant dense<0.000000e+00> : vector<32x256xf32>
    %119 = tpu.matmul %92, %118, %cst_57 {dimension_numbers = #tpu.dot_dimension_numbers<[1], [0], [0], [1], [0, 0, 1, 1], [], []>} : vector<32x288xbf16>, vector<288x256xbf16>, vector<32x256xf32> -> vector<32x256xf32>
    %c0_58 = arith.constant 0 : index
    %c0_59 = arith.constant 0 : index
    %120 = vector.load %arg17[%c0_58, %c0_59] : memref<32x1xf32, #tpu.memory_space<vmem>>, vector<32x1xf32>
    %121 = vector.broadcast %120 : vector<32x1xf32> to vector<32x256xf32>
    %122 = arith.addf %119, %121 : vector<32x256xf32>
    %cst_60 = arith.constant 1.000000e+00 : f32
    %123 = vector.broadcast %cst_60 : f32 to vector<32x1xf32>
    %124 = arith.addf %123, %51 : vector<32x1xf32>
    %125 = vector.broadcast %124 : vector<32x1xf32> to vector<32x256xf32>
    %126 = arith.mulf %122, %125 : vector<32x256xf32>
    %127 = vector.broadcast %52 : vector<32x1xf32> to vector<32x256xf32>
    %128 = arith.addf %126, %127 : vector<32x256xf32>
    %cst_61 = arith.constant 0.000000e+00 : f32
    %129 = vector.broadcast %cst_61 : f32 to vector<32x256xf32>
    %130 = arith.maximumf %128, %129 : vector<32x256xf32>
    %131 = arith.addf %130, %91 : vector<32x256xf32>
    %c17_i32_62 = arith.constant 17 : i32
    %132 = tpu.dynamic_rotate %131 by %c17_i32_62 dim 1 : vector<32x256xf32>, i32 -> vector<32x256xf32>
    %133 = vector.broadcast %1 : vector<1x256xf32> to vector<32x256xf32>
    %134 = arith.mulf %132, %133 : vector<32x256xf32>
    %c16_i32_63 = arith.constant 16 : i32
    %135 = tpu.dynamic_rotate %131 by %c16_i32_63 dim 1 : vector<32x256xf32>, i32 -> vector<32x256xf32>
    %136 = vector.broadcast %3 : vector<1x256xf32> to vector<32x256xf32>
    %137 = arith.mulf %135, %136 : vector<32x256xf32>
    %c15_i32_64 = arith.constant 15 : i32
    %138 = tpu.dynamic_rotate %131 by %c15_i32_64 dim 1 : vector<32x256xf32>, i32 -> vector<32x256xf32>
    %139 = vector.broadcast %5 : vector<1x256xf32> to vector<32x256xf32>
    %140 = arith.mulf %138, %139 : vector<32x256xf32>
    %c1_i32_65 = arith.constant 1 : i32
    %141 = tpu.dynamic_rotate %131 by %c1_i32_65 dim 1 : vector<32x256xf32>, i32 -> vector<32x256xf32>
    %142 = vector.broadcast %7 : vector<1x256xf32> to vector<32x256xf32>
    %143 = arith.mulf %141, %142 : vector<32x256xf32>
    %c255_i32_66 = arith.constant 255 : i32
    %144 = tpu.dynamic_rotate %131 by %c255_i32_66 dim 1 : vector<32x256xf32>, i32 -> vector<32x256xf32>
    %145 = vector.broadcast %9 : vector<1x256xf32> to vector<32x256xf32>
    %146 = arith.mulf %144, %145 : vector<32x256xf32>
    %c241_i32_67 = arith.constant 241 : i32
    %147 = tpu.dynamic_rotate %131 by %c241_i32_67 dim 1 : vector<32x256xf32>, i32 -> vector<32x256xf32>
    %148 = vector.broadcast %11 : vector<1x256xf32> to vector<32x256xf32>
    %149 = arith.mulf %147, %148 : vector<32x256xf32>
    %c240_i32_68 = arith.constant 240 : i32
    %150 = tpu.dynamic_rotate %131 by %c240_i32_68 dim 1 : vector<32x256xf32>, i32 -> vector<32x256xf32>
    %151 = vector.broadcast %13 : vector<1x256xf32> to vector<32x256xf32>
    %152 = arith.mulf %150, %151 : vector<32x256xf32>
    %c239_i32_69 = arith.constant 239 : i32
    %153 = tpu.dynamic_rotate %131 by %c239_i32_69 dim 1 : vector<32x256xf32>, i32 -> vector<32x256xf32>
    %154 = vector.broadcast %15 : vector<1x256xf32> to vector<32x256xf32>
    %155 = arith.mulf %153, %154 : vector<32x256xf32>
    %156 = tpu.concatenate %134, %137, %140, %143, %131, %146, %149, %152, %155 in 0 : vector<32x256xf32>, vector<32x256xf32>, vector<32x256xf32>, vector<32x256xf32>, vector<32x256xf32>, vector<32x256xf32>, vector<32x256xf32>, vector<32x256xf32>, vector<32x256xf32> -> vector<288x256xf32>
    %157 = arith.truncf %156 : vector<288x256xf32> to vector<288x256xbf16>
    %c0_70 = arith.constant 0 : index
    %c0_71 = arith.constant 0 : index
    %158 = vector.load %arg18[%c0_70, %c0_71] : memref<64x288xbf16, #tpu.memory_space<vmem>>, vector<64x288xbf16>
    %cst_72 = arith.constant dense<0.000000e+00> : vector<64x256xf32>
    %159 = tpu.matmul %158, %157, %cst_72 {dimension_numbers = #tpu.dot_dimension_numbers<[1], [0], [0], [1], [0, 0, 1, 1], [], []>} : vector<64x288xbf16>, vector<288x256xbf16>, vector<64x256xf32> -> vector<64x256xf32>
    %160 = arith.truncf %159 : vector<64x256xf32> to vector<64x256xbf16>
    %c0_73 = arith.constant 0 : index
    %c0_74 = arith.constant 0 : index
    %161 = vector.load %arg12[%c0_73, %c0_74] : memref<256x64xbf16, #tpu.memory_space<vmem>>, vector<256x64xbf16>
    %cst_75 = arith.constant dense<0.000000e+00> : vector<64x64xf32>
    %162 = tpu.matmul %160, %161, %cst_75 {dimension_numbers = #tpu.dot_dimension_numbers<[1], [0], [0], [1], [0, 0, 1, 1], [], []>} : vector<64x256xbf16>, vector<256x64xbf16>, vector<64x64xf32> -> vector<64x64xf32>
    %c0_76 = arith.constant 0 : index
    %c0_77 = arith.constant 0 : index
    %163 = vector.load %arg19[%c0_76, %c0_77] : memref<64x1xf32, #tpu.memory_space<vmem>>, vector<64x1xf32>
    %164 = vector.broadcast %163 : vector<64x1xf32> to vector<64x64xf32>
    %165 = arith.addf %162, %164 : vector<64x64xf32>
    %cst_78 = arith.constant 0.000000e+00 : f32
    %166 = vector.broadcast %cst_78 : f32 to vector<64x64xf32>
    %167 = arith.maximumf %165, %166 : vector<64x64xf32>
    %c0_79 = arith.constant 0 : index
    %c0_80 = arith.constant 0 : index
    %168 = vector.load %arg20[%c0_79, %c0_80] : memref<64x576xbf16, #tpu.memory_space<vmem>>, vector<64x576xbf16>
    %169 = arith.truncf %167 : vector<64x64xf32> to vector<64x64xbf16>
    %c0_81 = arith.constant 0 : index
    %c0_82 = arith.constant 0 : index
    %c0_83 = arith.constant 0 : index
    %170 = vector.load %arg11[%c0_81, %c0_82, %c0_83] : memref<9x64x64xbf16, #tpu.memory_space<vmem>>, vector<1x64x64xbf16>
    %171 = vector.shape_cast %170 : vector<1x64x64xbf16> to vector<64x64xbf16>
    %cst_84 = arith.constant dense<0.000000e+00> : vector<64x64xf32>
    %172 = tpu.matmul %169, %171, %cst_84 {dimension_numbers = #tpu.dot_dimension_numbers<[1], [0], [0], [1], [0, 0, 1, 1], [], []>} : vector<64x64xbf16>, vector<64x64xbf16>, vector<64x64xf32> -> vector<64x64xf32>
    %c1_85 = arith.constant 1 : index
    %c0_86 = arith.constant 0 : index
    %c0_87 = arith.constant 0 : index
    %173 = vector.load %arg11[%c1_85, %c0_86, %c0_87] : memref<9x64x64xbf16, #tpu.memory_space<vmem>>, vector<1x64x64xbf16>
    %174 = vector.shape_cast %173 : vector<1x64x64xbf16> to vector<64x64xbf16>
    %cst_88 = arith.constant dense<0.000000e+00> : vector<64x64xf32>
    %175 = tpu.matmul %169, %174, %cst_88 {dimension_numbers = #tpu.dot_dimension_numbers<[1], [0], [0], [1], [0, 0, 1, 1], [], []>} : vector<64x64xbf16>, vector<64x64xbf16>, vector<64x64xf32> -> vector<64x64xf32>
    %c2_89 = arith.constant 2 : index
    %c0_90 = arith.constant 0 : index
    %c0_91 = arith.constant 0 : index
    %176 = vector.load %arg11[%c2_89, %c0_90, %c0_91] : memref<9x64x64xbf16, #tpu.memory_space<vmem>>, vector<1x64x64xbf16>
    %177 = vector.shape_cast %176 : vector<1x64x64xbf16> to vector<64x64xbf16>
    %cst_92 = arith.constant dense<0.000000e+00> : vector<64x64xf32>
    %178 = tpu.matmul %169, %177, %cst_92 {dimension_numbers = #tpu.dot_dimension_numbers<[1], [0], [0], [1], [0, 0, 1, 1], [], []>} : vector<64x64xbf16>, vector<64x64xbf16>, vector<64x64xf32> -> vector<64x64xf32>
    %c3_93 = arith.constant 3 : index
    %c0_94 = arith.constant 0 : index
    %c0_95 = arith.constant 0 : index
    %179 = vector.load %arg11[%c3_93, %c0_94, %c0_95] : memref<9x64x64xbf16, #tpu.memory_space<vmem>>, vector<1x64x64xbf16>
    %180 = vector.shape_cast %179 : vector<1x64x64xbf16> to vector<64x64xbf16>
    %cst_96 = arith.constant dense<0.000000e+00> : vector<64x64xf32>
    %181 = tpu.matmul %169, %180, %cst_96 {dimension_numbers = #tpu.dot_dimension_numbers<[1], [0], [0], [1], [0, 0, 1, 1], [], []>} : vector<64x64xbf16>, vector<64x64xbf16>, vector<64x64xf32> -> vector<64x64xf32>
    %c4 = arith.constant 4 : index
    %c0_97 = arith.constant 0 : index
    %c0_98 = arith.constant 0 : index
    %182 = vector.load %arg11[%c4, %c0_97, %c0_98] : memref<9x64x64xbf16, #tpu.memory_space<vmem>>, vector<1x64x64xbf16>
    %183 = vector.shape_cast %182 : vector<1x64x64xbf16> to vector<64x64xbf16>
    %cst_99 = arith.constant dense<0.000000e+00> : vector<64x64xf32>
    %184 = tpu.matmul %169, %183, %cst_99 {dimension_numbers = #tpu.dot_dimension_numbers<[1], [0], [0], [1], [0, 0, 1, 1], [], []>} : vector<64x64xbf16>, vector<64x64xbf16>, vector<64x64xf32> -> vector<64x64xf32>
    %c5_100 = arith.constant 5 : index
    %c0_101 = arith.constant 0 : index
    %c0_102 = arith.constant 0 : index
    %185 = vector.load %arg11[%c5_100, %c0_101, %c0_102] : memref<9x64x64xbf16, #tpu.memory_space<vmem>>, vector<1x64x64xbf16>
    %186 = vector.shape_cast %185 : vector<1x64x64xbf16> to vector<64x64xbf16>
    %cst_103 = arith.constant dense<0.000000e+00> : vector<64x64xf32>
    %187 = tpu.matmul %169, %186, %cst_103 {dimension_numbers = #tpu.dot_dimension_numbers<[1], [0], [0], [1], [0, 0, 1, 1], [], []>} : vector<64x64xbf16>, vector<64x64xbf16>, vector<64x64xf32> -> vector<64x64xf32>
    %c6_104 = arith.constant 6 : index
    %c0_105 = arith.constant 0 : index
    %c0_106 = arith.constant 0 : index
    %188 = vector.load %arg11[%c6_104, %c0_105, %c0_106] : memref<9x64x64xbf16, #tpu.memory_space<vmem>>, vector<1x64x64xbf16>
    %189 = vector.shape_cast %188 : vector<1x64x64xbf16> to vector<64x64xbf16>
    %cst_107 = arith.constant dense<0.000000e+00> : vector<64x64xf32>
    %190 = tpu.matmul %169, %189, %cst_107 {dimension_numbers = #tpu.dot_dimension_numbers<[1], [0], [0], [1], [0, 0, 1, 1], [], []>} : vector<64x64xbf16>, vector<64x64xbf16>, vector<64x64xf32> -> vector<64x64xf32>
    %c7_108 = arith.constant 7 : index
    %c0_109 = arith.constant 0 : index
    %c0_110 = arith.constant 0 : index
    %191 = vector.load %arg11[%c7_108, %c0_109, %c0_110] : memref<9x64x64xbf16, #tpu.memory_space<vmem>>, vector<1x64x64xbf16>
    %192 = vector.shape_cast %191 : vector<1x64x64xbf16> to vector<64x64xbf16>
    %cst_111 = arith.constant dense<0.000000e+00> : vector<64x64xf32>
    %193 = tpu.matmul %169, %192, %cst_111 {dimension_numbers = #tpu.dot_dimension_numbers<[1], [0], [0], [1], [0, 0, 1, 1], [], []>} : vector<64x64xbf16>, vector<64x64xbf16>, vector<64x64xf32> -> vector<64x64xf32>
    %c8_112 = arith.constant 8 : index
    %c0_113 = arith.constant 0 : index
    %c0_114 = arith.constant 0 : index
    %194 = vector.load %arg11[%c8_112, %c0_113, %c0_114] : memref<9x64x64xbf16, #tpu.memory_space<vmem>>, vector<1x64x64xbf16>
    %195 = vector.shape_cast %194 : vector<1x64x64xbf16> to vector<64x64xbf16>
    %cst_115 = arith.constant dense<0.000000e+00> : vector<64x64xf32>
    %196 = tpu.matmul %169, %195, %cst_115 {dimension_numbers = #tpu.dot_dimension_numbers<[1], [0], [0], [1], [0, 0, 1, 1], [], []>} : vector<64x64xbf16>, vector<64x64xbf16>, vector<64x64xf32> -> vector<64x64xf32>
    %197 = tpu.concatenate %172, %175, %178, %181, %184, %187, %190, %193, %196 in 0 : vector<64x64xf32>, vector<64x64xf32>, vector<64x64xf32>, vector<64x64xf32>, vector<64x64xf32>, vector<64x64xf32>, vector<64x64xf32>, vector<64x64xf32>, vector<64x64xf32> -> vector<576x64xf32>
    %198 = arith.truncf %197 : vector<576x64xf32> to vector<576x64xbf16>
    %cst_116 = arith.constant dense<0.000000e+00> : vector<64x64xf32>
    %199 = tpu.matmul %168, %198, %cst_116 {dimension_numbers = #tpu.dot_dimension_numbers<[1], [0], [0], [1], [0, 0, 1, 1], [], []>} : vector<64x576xbf16>, vector<576x64xbf16>, vector<64x64xf32> -> vector<64x64xf32>
    %c0_117 = arith.constant 0 : index
    %c0_118 = arith.constant 0 : index
    %200 = vector.load %arg21[%c0_117, %c0_118] : memref<64x1xf32, #tpu.memory_space<vmem>>, vector<64x1xf32>
    %201 = vector.broadcast %200 : vector<64x1xf32> to vector<64x64xf32>
    %202 = arith.addf %199, %201 : vector<64x64xf32>
    %cst_119 = arith.constant 1.000000e+00 : f32
    %203 = vector.broadcast %cst_119 : f32 to vector<64x1xf32>
    %204 = arith.addf %203, %53 : vector<64x1xf32>
    %205 = vector.broadcast %204 : vector<64x1xf32> to vector<64x64xf32>
    %206 = arith.mulf %202, %205 : vector<64x64xf32>
    %207 = vector.broadcast %54 : vector<64x1xf32> to vector<64x64xf32>
    %208 = arith.addf %206, %207 : vector<64x64xf32>
    %cst_120 = arith.constant 0.000000e+00 : f32
    %209 = vector.broadcast %cst_120 : f32 to vector<64x64xf32>
    %210 = arith.maximumf %208, %209 : vector<64x64xf32>
    %211 = arith.addf %210, %167 : vector<64x64xf32>
    %212 = arith.truncf %211 : vector<64x64xf32> to vector<64x64xbf16>
    %c0_121 = arith.constant 0 : index
    %c0_122 = arith.constant 0 : index
    %213 = vector.load %arg13[%c0_121, %c0_122] : memref<64x256xbf16, #tpu.memory_space<vmem>>, vector<64x256xbf16>
    %cst_123 = arith.constant dense<0.000000e+00> : vector<64x256xf32>
    %214 = tpu.matmul %212, %213, %cst_123 {dimension_numbers = #tpu.dot_dimension_numbers<[1], [0], [0], [1], [0, 0, 1, 1], [], []>} : vector<64x64xbf16>, vector<64x256xbf16>, vector<64x256xf32> -> vector<64x256xf32>
    %c0_124 = arith.constant 0 : index
    %c0_125 = arith.constant 0 : index
    %215 = vector.load %arg22[%c0_124, %c0_125] : memref<32x576xbf16, #tpu.memory_space<vmem>>, vector<32x576xbf16>
    %c17_i32_126 = arith.constant 17 : i32
    %216 = tpu.dynamic_rotate %214 by %c17_i32_126 dim 1 : vector<64x256xf32>, i32 -> vector<64x256xf32>
    %217 = vector.broadcast %1 : vector<1x256xf32> to vector<64x256xf32>
    %218 = arith.mulf %216, %217 : vector<64x256xf32>
    %c16_i32_127 = arith.constant 16 : i32
    %219 = tpu.dynamic_rotate %214 by %c16_i32_127 dim 1 : vector<64x256xf32>, i32 -> vector<64x256xf32>
    %220 = vector.broadcast %3 : vector<1x256xf32> to vector<64x256xf32>
    %221 = arith.mulf %219, %220 : vector<64x256xf32>
    %c15_i32_128 = arith.constant 15 : i32
    %222 = tpu.dynamic_rotate %214 by %c15_i32_128 dim 1 : vector<64x256xf32>, i32 -> vector<64x256xf32>
    %223 = vector.broadcast %5 : vector<1x256xf32> to vector<64x256xf32>
    %224 = arith.mulf %222, %223 : vector<64x256xf32>
    %c1_i32_129 = arith.constant 1 : i32
    %225 = tpu.dynamic_rotate %214 by %c1_i32_129 dim 1 : vector<64x256xf32>, i32 -> vector<64x256xf32>
    %226 = vector.broadcast %7 : vector<1x256xf32> to vector<64x256xf32>
    %227 = arith.mulf %225, %226 : vector<64x256xf32>
    %c255_i32_130 = arith.constant 255 : i32
    %228 = tpu.dynamic_rotate %214 by %c255_i32_130 dim 1 : vector<64x256xf32>, i32 -> vector<64x256xf32>
    %229 = vector.broadcast %9 : vector<1x256xf32> to vector<64x256xf32>
    %230 = arith.mulf %228, %229 : vector<64x256xf32>
    %c241_i32_131 = arith.constant 241 : i32
    %231 = tpu.dynamic_rotate %214 by %c241_i32_131 dim 1 : vector<64x256xf32>, i32 -> vector<64x256xf32>
    %232 = vector.broadcast %11 : vector<1x256xf32> to vector<64x256xf32>
    %233 = arith.mulf %231, %232 : vector<64x256xf32>
    %c240_i32_132 = arith.constant 240 : i32
    %234 = tpu.dynamic_rotate %214 by %c240_i32_132 dim 1 : vector<64x256xf32>, i32 -> vector<64x256xf32>
    %235 = vector.broadcast %13 : vector<1x256xf32> to vector<64x256xf32>
    %236 = arith.mulf %234, %235 : vector<64x256xf32>
    %c239_i32_133 = arith.constant 239 : i32
    %237 = tpu.dynamic_rotate %214 by %c239_i32_133 dim 1 : vector<64x256xf32>, i32 -> vector<64x256xf32>
    %238 = vector.broadcast %15 : vector<1x256xf32> to vector<64x256xf32>
    %239 = arith.mulf %237, %238 : vector<64x256xf32>
    %240 = tpu.concatenate %218, %221, %224, %227, %214, %230, %233, %236, %239 in 0 : vector<64x256xf32>, vector<64x256xf32>, vector<64x256xf32>, vector<64x256xf32>, vector<64x256xf32>, vector<64x256xf32>, vector<64x256xf32>, vector<64x256xf32>, vector<64x256xf32> -> vector<576x256xf32>
    %241 = arith.truncf %240 : vector<576x256xf32> to vector<576x256xbf16>
    %cst_134 = arith.constant dense<0.000000e+00> : vector<32x256xf32>
    %242 = tpu.matmul %215, %241, %cst_134 {dimension_numbers = #tpu.dot_dimension_numbers<[1], [0], [0], [1], [0, 0, 1, 1], [], []>} : vector<32x576xbf16>, vector<576x256xbf16>, vector<32x256xf32> -> vector<32x256xf32>
    %c0_135 = arith.constant 0 : index
    %c0_136 = arith.constant 0 : index
    %243 = vector.load %arg23[%c0_135, %c0_136] : memref<32x1xf32, #tpu.memory_space<vmem>>, vector<32x1xf32>
    %244 = vector.broadcast %243 : vector<32x1xf32> to vector<32x256xf32>
    %245 = arith.addf %242, %244 : vector<32x256xf32>
    %cst_137 = arith.constant 0.000000e+00 : f32
    %246 = vector.broadcast %cst_137 : f32 to vector<32x256xf32>
    %247 = arith.maximumf %245, %246 : vector<32x256xf32>
    %c0_138 = arith.constant 0 : index
    %c0_139 = arith.constant 0 : index
    %248 = vector.load %arg24[%c0_138, %c0_139] : memref<32x288xbf16, #tpu.memory_space<vmem>>, vector<32x288xbf16>
    %c17_i32_140 = arith.constant 17 : i32
    %249 = tpu.dynamic_rotate %247 by %c17_i32_140 dim 1 : vector<32x256xf32>, i32 -> vector<32x256xf32>
    %250 = vector.broadcast %1 : vector<1x256xf32> to vector<32x256xf32>
    %251 = arith.mulf %249, %250 : vector<32x256xf32>
    %c16_i32_141 = arith.constant 16 : i32
    %252 = tpu.dynamic_rotate %247 by %c16_i32_141 dim 1 : vector<32x256xf32>, i32 -> vector<32x256xf32>
    %253 = vector.broadcast %3 : vector<1x256xf32> to vector<32x256xf32>
    %254 = arith.mulf %252, %253 : vector<32x256xf32>
    %c15_i32_142 = arith.constant 15 : i32
    %255 = tpu.dynamic_rotate %247 by %c15_i32_142 dim 1 : vector<32x256xf32>, i32 -> vector<32x256xf32>
    %256 = vector.broadcast %5 : vector<1x256xf32> to vector<32x256xf32>
    %257 = arith.mulf %255, %256 : vector<32x256xf32>
    %c1_i32_143 = arith.constant 1 : i32
    %258 = tpu.dynamic_rotate %247 by %c1_i32_143 dim 1 : vector<32x256xf32>, i32 -> vector<32x256xf32>
    %259 = vector.broadcast %7 : vector<1x256xf32> to vector<32x256xf32>
    %260 = arith.mulf %258, %259 : vector<32x256xf32>
    %c255_i32_144 = arith.constant 255 : i32
    %261 = tpu.dynamic_rotate %247 by %c255_i32_144 dim 1 : vector<32x256xf32>, i32 -> vector<32x256xf32>
    %262 = vector.broadcast %9 : vector<1x256xf32> to vector<32x256xf32>
    %263 = arith.mulf %261, %262 : vector<32x256xf32>
    %c241_i32_145 = arith.constant 241 : i32
    %264 = tpu.dynamic_rotate %247 by %c241_i32_145 dim 1 : vector<32x256xf32>, i32 -> vector<32x256xf32>
    %265 = vector.broadcast %11 : vector<1x256xf32> to vector<32x256xf32>
    %266 = arith.mulf %264, %265 : vector<32x256xf32>
    %c240_i32_146 = arith.constant 240 : i32
    %267 = tpu.dynamic_rotate %247 by %c240_i32_146 dim 1 : vector<32x256xf32>, i32 -> vector<32x256xf32>
    %268 = vector.broadcast %13 : vector<1x256xf32> to vector<32x256xf32>
    %269 = arith.mulf %267, %268 : vector<32x256xf32>
    %c239_i32_147 = arith.constant 239 : i32
    %270 = tpu.dynamic_rotate %247 by %c239_i32_147 dim 1 : vector<32x256xf32>, i32 -> vector<32x256xf32>
    %271 = vector.broadcast %15 : vector<1x256xf32> to vector<32x256xf32>
    %272 = arith.mulf %270, %271 : vector<32x256xf32>
    %273 = tpu.concatenate %251, %254, %257, %260, %247, %263, %266, %269, %272 in 0 : vector<32x256xf32>, vector<32x256xf32>, vector<32x256xf32>, vector<32x256xf32>, vector<32x256xf32>, vector<32x256xf32>, vector<32x256xf32>, vector<32x256xf32>, vector<32x256xf32> -> vector<288x256xf32>
    %274 = arith.truncf %273 : vector<288x256xf32> to vector<288x256xbf16>
    %cst_148 = arith.constant dense<0.000000e+00> : vector<32x256xf32>
    %275 = tpu.matmul %248, %274, %cst_148 {dimension_numbers = #tpu.dot_dimension_numbers<[1], [0], [0], [1], [0, 0, 1, 1], [], []>} : vector<32x288xbf16>, vector<288x256xbf16>, vector<32x256xf32> -> vector<32x256xf32>
    %c0_149 = arith.constant 0 : index
    %c0_150 = arith.constant 0 : index
    %276 = vector.load %arg25[%c0_149, %c0_150] : memref<32x288xbf16, #tpu.memory_space<vmem>>, vector<32x288xbf16>
    %cst_151 = arith.constant dense<0.000000e+00> : vector<32x256xf32>
    %277 = tpu.matmul %276, %157, %cst_151 {dimension_numbers = #tpu.dot_dimension_numbers<[1], [0], [0], [1], [0, 0, 1, 1], [], []>} : vector<32x288xbf16>, vector<288x256xbf16>, vector<32x256xf32> -> vector<32x256xf32>
    %278 = arith.addf %275, %277 : vector<32x256xf32>
    %c0_152 = arith.constant 0 : index
    %c0_153 = arith.constant 0 : index
    %279 = vector.load %arg26[%c0_152, %c0_153] : memref<32x1xf32, #tpu.memory_space<vmem>>, vector<32x1xf32>
    %280 = vector.broadcast %279 : vector<32x1xf32> to vector<32x256xf32>
    %281 = arith.addf %278, %280 : vector<32x256xf32>
    %cst_154 = arith.constant 1.000000e+00 : f32
    %282 = vector.broadcast %cst_154 : f32 to vector<32x1xf32>
    %283 = arith.addf %282, %55 : vector<32x1xf32>
    %284 = vector.broadcast %283 : vector<32x1xf32> to vector<32x256xf32>
    %285 = arith.mulf %281, %284 : vector<32x256xf32>
    %286 = vector.broadcast %56 : vector<32x1xf32> to vector<32x256xf32>
    %287 = arith.addf %285, %286 : vector<32x256xf32>
    %cst_155 = arith.constant 0.000000e+00 : f32
    %288 = vector.broadcast %cst_155 : f32 to vector<32x256xf32>
    %289 = arith.maximumf %287, %288 : vector<32x256xf32>
    %c0_156 = arith.constant 0 : index
    %c0_157 = arith.constant 0 : index
    %290 = vector.load %arg27[%c0_156, %c0_157] : memref<4x288xbf16, #tpu.memory_space<vmem>>, vector<4x288xbf16>
    %c17_i32_158 = arith.constant 17 : i32
    %291 = tpu.dynamic_rotate %289 by %c17_i32_158 dim 1 : vector<32x256xf32>, i32 -> vector<32x256xf32>
    %292 = vector.broadcast %1 : vector<1x256xf32> to vector<32x256xf32>
    %293 = arith.mulf %291, %292 : vector<32x256xf32>
    %c16_i32_159 = arith.constant 16 : i32
    %294 = tpu.dynamic_rotate %289 by %c16_i32_159 dim 1 : vector<32x256xf32>, i32 -> vector<32x256xf32>
    %295 = vector.broadcast %3 : vector<1x256xf32> to vector<32x256xf32>
    %296 = arith.mulf %294, %295 : vector<32x256xf32>
    %c15_i32_160 = arith.constant 15 : i32
    %297 = tpu.dynamic_rotate %289 by %c15_i32_160 dim 1 : vector<32x256xf32>, i32 -> vector<32x256xf32>
    %298 = vector.broadcast %5 : vector<1x256xf32> to vector<32x256xf32>
    %299 = arith.mulf %297, %298 : vector<32x256xf32>
    %c1_i32_161 = arith.constant 1 : i32
    %300 = tpu.dynamic_rotate %289 by %c1_i32_161 dim 1 : vector<32x256xf32>, i32 -> vector<32x256xf32>
    %301 = vector.broadcast %7 : vector<1x256xf32> to vector<32x256xf32>
    %302 = arith.mulf %300, %301 : vector<32x256xf32>
    %c255_i32_162 = arith.constant 255 : i32
    %303 = tpu.dynamic_rotate %289 by %c255_i32_162 dim 1 : vector<32x256xf32>, i32 -> vector<32x256xf32>
    %304 = vector.broadcast %9 : vector<1x256xf32> to vector<32x256xf32>
    %305 = arith.mulf %303, %304 : vector<32x256xf32>
    %c241_i32_163 = arith.constant 241 : i32
    %306 = tpu.dynamic_rotate %289 by %c241_i32_163 dim 1 : vector<32x256xf32>, i32 -> vector<32x256xf32>
    %307 = vector.broadcast %11 : vector<1x256xf32> to vector<32x256xf32>
    %308 = arith.mulf %306, %307 : vector<32x256xf32>
    %c240_i32_164 = arith.constant 240 : i32
    %309 = tpu.dynamic_rotate %289 by %c240_i32_164 dim 1 : vector<32x256xf32>, i32 -> vector<32x256xf32>
    %310 = vector.broadcast %13 : vector<1x256xf32> to vector<32x256xf32>
    %311 = arith.mulf %309, %310 : vector<32x256xf32>
    %c239_i32_165 = arith.constant 239 : i32
    %312 = tpu.dynamic_rotate %289 by %c239_i32_165 dim 1 : vector<32x256xf32>, i32 -> vector<32x256xf32>
    %313 = vector.broadcast %15 : vector<1x256xf32> to vector<32x256xf32>
    %314 = arith.mulf %312, %313 : vector<32x256xf32>
    %315 = tpu.concatenate %293, %296, %299, %302, %289, %305, %308, %311, %314 in 0 : vector<32x256xf32>, vector<32x256xf32>, vector<32x256xf32>, vector<32x256xf32>, vector<32x256xf32>, vector<32x256xf32>, vector<32x256xf32>, vector<32x256xf32>, vector<32x256xf32> -> vector<288x256xf32>
    %316 = arith.truncf %315 : vector<288x256xf32> to vector<288x256xbf16>
    %cst_166 = arith.constant dense<0.000000e+00> : vector<4x256xf32>
    %317 = tpu.matmul %290, %316, %cst_166 {dimension_numbers = #tpu.dot_dimension_numbers<[1], [0], [0], [1], [0, 0, 1, 1], [], []>} : vector<4x288xbf16>, vector<288x256xbf16>, vector<4x256xf32> -> vector<4x256xf32>
    %c0_167 = arith.constant 0 : index
    %c0_168 = arith.constant 0 : index
    %318 = vector.load %arg28[%c0_167, %c0_168] : memref<4x1xf32, #tpu.memory_space<vmem>>, vector<4x1xf32>
    %319 = vector.broadcast %318 : vector<4x1xf32> to vector<4x256xf32>
    %320 = arith.addf %317, %319 : vector<4x256xf32>
    %c0_169 = arith.constant 0 : index
    %c0_170 = arith.constant 0 : index
    %c0_171 = arith.constant 0 : index
    %321 = vector.load %arg29[%c0_169, %c0_170, %c0_171] : memref<1x4x256xf32, #tpu.memory_space<vmem>>, vector<1x4x256xf32>
    %322 = vector.shape_cast %321 : vector<1x4x256xf32> to vector<4x256xf32>
    %323 = vector.shape_cast %320 : vector<4x256xf32> to vector<1x4x256xf32>
    tpu.vector_store %arg29[%c0_169, %c0_170, %c0_171], %323 {strides = array<i32>} : memref<1x4x256xf32, #tpu.memory_space<vmem>>, vector<1x4x256xf32>,
    return
  }
  func.func @transform_0(%arg0: i32) -> (i32, i32, i32) {
    %c0_i32 = arith.constant 0 : i32
    %c0_i32_0 = arith.constant 0 : i32
    %c0_i32_1 = arith.constant 0 : i32
    return %arg0, %c0_i32, %c0_i32_0 : i32, i32, i32
  }
  func.func @transform_1(%arg0: i32) -> (i32, i32, i32) {
    %c0_i32 = arith.constant 0 : i32
    %c0_i32_0 = arith.constant 0 : i32
    %c0_i32_1 = arith.constant 0 : i32
    return %arg0, %c0_i32, %c0_i32_0 : i32, i32, i32
  }
  func.func @transform_2(%arg0: i32) -> (i32, i32) {
    %c0_i32 = arith.constant 0 : i32
    %c0_i32_0 = arith.constant 0 : i32
    %c0_i32_1 = arith.constant 0 : i32
    return %c0_i32, %c0_i32_0 : i32, i32
  }
  func.func @transform_3(%arg0: i32) -> (i32, i32) {
    %c0_i32 = arith.constant 0 : i32
    %c0_i32_0 = arith.constant 0 : i32
    %c0_i32_1 = arith.constant 0 : i32
    return %c0_i32, %c0_i32_0 : i32, i32
  }
  func.func @transform_4(%arg0: i32) -> (i32, i32) {
    %c0_i32 = arith.constant 0 : i32
    %c0_i32_0 = arith.constant 0 : i32
    %c0_i32_1 = arith.constant 0 : i32
    return %c0_i32, %c0_i32_0 : i32, i32
  }
  func.func @transform_5(%arg0: i32) -> (i32, i32) {
    %c0_i32 = arith.constant 0 : i32
    %c0_i32_0 = arith.constant 0 : i32
    %c0_i32_1 = arith.constant 0 : i32
    return %c0_i32, %c0_i32_0 : i32, i32
  }
  func.func @transform_6(%arg0: i32) -> (i32, i32) {
    %c0_i32 = arith.constant 0 : i32
    %c0_i32_0 = arith.constant 0 : i32
    %c0_i32_1 = arith.constant 0 : i32
    return %c0_i32, %c0_i32_0 : i32, i32
  }
  func.func @transform_7(%arg0: i32) -> (i32, i32) {
    %c0_i32 = arith.constant 0 : i32
    %c0_i32_0 = arith.constant 0 : i32
    %c0_i32_1 = arith.constant 0 : i32
    return %c0_i32, %c0_i32_0 : i32, i32
  }
  func.func @transform_8(%arg0: i32) -> (i32, i32) {
    %c0_i32 = arith.constant 0 : i32
    %c0_i32_0 = arith.constant 0 : i32
    %c0_i32_1 = arith.constant 0 : i32
    return %c0_i32, %c0_i32_0 : i32, i32
  }
  func.func @transform_9(%arg0: i32) -> (i32, i32, i32) {
    %c0_i32 = arith.constant 0 : i32
    %c0_i32_0 = arith.constant 0 : i32
    %c0_i32_1 = arith.constant 0 : i32
    %c0_i32_2 = arith.constant 0 : i32
    return %c0_i32, %c0_i32_0, %c0_i32_1 : i32, i32, i32
  }
  func.func @transform_10(%arg0: i32) -> (i32, i32, i32) {
    %c0_i32 = arith.constant 0 : i32
    %c0_i32_0 = arith.constant 0 : i32
    %c0_i32_1 = arith.constant 0 : i32
    %c0_i32_2 = arith.constant 0 : i32
    return %c0_i32, %c0_i32_0, %c0_i32_1 : i32, i32, i32
  }
  func.func @transform_11(%arg0: i32) -> (i32, i32) {
    %c0_i32 = arith.constant 0 : i32
    %c0_i32_0 = arith.constant 0 : i32
    %c0_i32_1 = arith.constant 0 : i32
    return %c0_i32, %c0_i32_0 : i32, i32
  }
  func.func @transform_12(%arg0: i32) -> (i32, i32) {
    %c0_i32 = arith.constant 0 : i32
    %c0_i32_0 = arith.constant 0 : i32
    %c0_i32_1 = arith.constant 0 : i32
    return %c0_i32, %c0_i32_0 : i32, i32
  }
  func.func @transform_13(%arg0: i32) -> (i32, i32) {
    %c0_i32 = arith.constant 0 : i32
    %c0_i32_0 = arith.constant 0 : i32
    %c0_i32_1 = arith.constant 0 : i32
    return %c0_i32, %c0_i32_0 : i32, i32
  }
  func.func @transform_14(%arg0: i32) -> (i32, i32) {
    %c0_i32 = arith.constant 0 : i32
    %c0_i32_0 = arith.constant 0 : i32
    %c0_i32_1 = arith.constant 0 : i32
    return %c0_i32, %c0_i32_0 : i32, i32
  }
  func.func @transform_15(%arg0: i32) -> (i32, i32) {
    %c0_i32 = arith.constant 0 : i32
    %c0_i32_0 = arith.constant 0 : i32
    %c0_i32_1 = arith.constant 0 : i32
    return %c0_i32, %c0_i32_0 : i32, i32
  }
  func.func @transform_16(%arg0: i32) -> (i32, i32) {
    %c0_i32 = arith.constant 0 : i32
    %c0_i32_0 = arith.constant 0 : i32
    %c0_i32_1 = arith.constant 0 : i32
    return %c0_i32, %c0_i32_0 : i32, i32
  }
  func.func @transform_17(%arg0: i32) -> (i32, i32) {
    %c0_i32 = arith.constant 0 : i32
    %c0_i32_0 = arith.constant 0 : i32
    %c0_i32_1 = arith.constant 0 : i32
    return %c0_i32, %c0_i32_0 : i32, i32
  }
  func.func @transform_18(%arg0: i32) -> (i32, i32) {
    %c0_i32 = arith.constant 0 : i32
    %c0_i32_0 = arith.constant 0 : i32
    %c0_i32_1 = arith.constant 0 : i32
    return %c0_i32, %c0_i32_0 : i32, i32
  }
  func.func @transform_19(%arg0: i32) -> (i32, i32) {
    %c0_i32 = arith.constant 0 : i32
    %c0_i32_0 = arith.constant 0 : i32
    %c0_i32_1 = arith.constant 0 : i32
    return %c0_i32, %c0_i32_0 : i32, i32
  }
  func.func @transform_20(%arg0: i32) -> (i32, i32) {
    %c0_i32 = arith.constant 0 : i32
    %c0_i32_0 = arith.constant 0 : i32
    %c0_i32_1 = arith.constant 0 : i32
    return %c0_i32, %c0_i32_0 : i32, i32
  }
  func.func @transform_21(%arg0: i32) -> (i32, i32) {
    %c0_i32 = arith.constant 0 : i32
    %c0_i32_0 = arith.constant 0 : i32
    %c0_i32_1 = arith.constant 0 : i32
    return %c0_i32, %c0_i32_0 : i32, i32
  }
  func.func @transform_22(%arg0: i32) -> (i32, i32) {
    %c0_i32 = arith.constant 0 : i32
    %c0_i32_0 = arith.constant 0 : i32
    %c0_i32_1 = arith.constant 0 : i32
    return %c0_i32, %c0_i32_0 : i32, i32
  }
  func.func @transform_23(%arg0: i32) -> (i32, i32) {
    %c0_i32 = arith.constant 0 : i32
    %c0_i32_0 = arith.constant 0 : i32
    %c0_i32_1 = arith.constant 0 : i32
    return %c0_i32, %c0_i32_0 : i32, i32
  }
  func.func @transform_24(%arg0: i32) -> (i32, i32) {
    %c0_i32 = arith.constant 0 : i32
    %c0_i32_0 = arith.constant 0 : i32
    %c0_i32_1 = arith.constant 0 : i32
    return %c0_i32, %c0_i32_0 : i32, i32
  }
  func.func @transform_25(%arg0: i32) -> (i32, i32) {
    %c0_i32 = arith.constant 0 : i32
    %c0_i32_0 = arith.constant 0 : i32
    %c0_i32_1 = arith.constant 0 : i32
    return %c0_i32, %c0_i32_0 : i32, i32
  }
  func.func @transform_26(%arg0: i32) -> (i32, i32) {
    %c0_i32 = arith.constant 0 : i32
    %c0_i32_0 = arith.constant 0 : i32
    %c0_i32_1 = arith.constant 0 : i32
    return %c0_i32, %c0_i32_0 : i32, i32
  }
  func.func @transform_27(%arg0: i32) -> (i32, i32) {
    %c0_i32 = arith.constant 0 : i32
    %c0_i32_0 = arith.constant 0 : i32
    %c0_i32_1 = arith.constant 0 : i32
    return %c0_i32, %c0_i32_0 : i32, i32
  }
  func.func @transform_28(%arg0: i32) -> (i32, i32, i32) {
    %c0_i32 = arith.constant 0 : i32
    %c0_i32_0 = arith.constant 0 : i32
    %c0_i32_1 = arith.constant 0 : i32
    return %arg0, %c0_i32, %c0_i32_0 : i32, i32, i32
  }
}

</mosaic_0001>

<llo_original>
// kernel: diffusion_unet_forward.1
$region0: #{diffusion_unet_forward.1}
  #allocation0 [shape = 'u32[]', space=smem, size = 0x4, offset = 0x4, fixed_abs, tag = 'smem constant byte address 0x4 - core index']
  #allocation1 [shape = 'u32[72,128]{1,0:T(1,128)}', space=vmem, size = 0x9000, scoped, tag = 'internal scratch']
  %s0 = inlined_call_operand.vmem [shape: f32[2,1,32], index: 0, kind: input, shape index: {}]
  %s1 = inlined_call_operand.vmem [shape: f32[2,8,256], index: 1, kind: input, shape index: {}]
  %s2 = inlined_call_operand.vmem [shape: f32[64,32], index: 2, kind: input, shape index: {}]
  %s3 = inlined_call_operand.vmem [shape: f32[64,32], index: 3, kind: input, shape index: {}]
  %s4 = inlined_call_operand.vmem [shape: f32[64,1], index: 4, kind: input, shape index: {}]
  %s5 = inlined_call_operand.vmem [shape: f32[64,32], index: 5, kind: input, shape index: {}]
  %s6 = inlined_call_operand.vmem [shape: f32[1,32], index: 6, kind: input, shape index: {}]
  %s7 = inlined_call_operand.vmem [shape: f32[256,32], index: 7, kind: input, shape index: {}]
  %s8 = inlined_call_operand.vmem [shape: f32[256,1], index: 8, kind: input, shape index: {}]
  %s9 = inlined_call_operand.vmem [shape: f32[9,1,256], index: 9, kind: input, shape index: {}]
  %s10 = inlined_call_operand.vmem [shape: bf16[9,64,64], index: 10, kind: input, shape index: {}]
  %s11 = inlined_call_operand.vmem [shape: bf16[256,64], index: 11, kind: input, shape index: {}]
  %s12 = inlined_call_operand.vmem [shape: bf16[64,256], index: 12, kind: input, shape index: {}]
  %s13 = inlined_call_operand.vmem [shape: bf16[32,72], index: 13, kind: input, shape index: {}]
  %s14 = inlined_call_operand.vmem [shape: f32[32,1], index: 14, kind: input, shape index: {}]
  %s15 = inlined_call_operand.vmem [shape: bf16[32,288], index: 15, kind: input, shape index: {}]
  %s16 = inlined_call_operand.vmem [shape: f32[32,1], index: 16, kind: input, shape index: {}]
  %s17 = inlined_call_operand.vmem [shape: bf16[64,288], index: 17, kind: input, shape index: {}]
  %s18 = inlined_call_operand.vmem [shape: f32[64,1], index: 18, kind: input, shape index: {}]
  %s19 = inlined_call_operand.vmem [shape: bf16[64,576], index: 19, kind: input, shape index: {}]
  %s20 = inlined_call_operand.vmem [shape: f32[64,1], index: 20, kind: input, shape index: {}]
  %s21 = inlined_call_operand.vmem [shape: bf16[32,576], index: 21, kind: input, shape index: {}]
  %s22 = inlined_call_operand.vmem [shape: f32[32,1], index: 22, kind: input, shape index: {}]
  %s23 = inlined_call_operand.vmem [shape: bf16[32,288], index: 23, kind: input, shape index: {}]
  %s24 = inlined_call_operand.vmem [shape: bf16[32,288], index: 24, kind: input, shape index: {}]
  %s25 = inlined_call_operand.vmem [shape: f32[32,1], index: 25, kind: input, shape index: {}]
  %s26 = inlined_call_operand.vmem [shape: bf16[4,288], index: 26, kind: input, shape index: {}]
  %s27 = inlined_call_operand.vmem [shape: f32[4,1], index: 27, kind: input, shape index: {}]
  %s28 = inlined_call_operand.vmem [shape: f32[2,4,256], index: 28, kind: output, shape index: {}]
  %s29 = sld [smem:[#allocation0]]
  $region145: #{diffusion_unet_forward.1} parent=0
    _
  %s31 = ssub.s32 1, %s29
  %s32 = scalar_select 0, %s31, %s29
  loop: start=0, step=1, limit=4
  $region2: #{diffusion_unet_forward.1} parent=0 // loop_pre_header
    _
  $region3: #{diffusion_unet_forward.1} parent=0 // loop_header
    %s34 = sphi 0, %s38
    %p35 = scmp.ge.s32.totalorder %s34, 4
    %s44 = sphi 0, %s46
    %s47 = sphi 0, %s44
    %s48 = sphi 0, %s47
    %s64 = sphi 0, %s48
    %s70 = sphi 0, %s72
    %s73 = sphi 0, %s70
    %s74 = sphi 0, %s73
    %s90 = sphi 0, %s74
    %s94 = sphi 0, %s94
    %s96 = sphi 0, %s94
    %s97 = sphi 0, %s96
    %s111 = sphi 0, %s97
    %s115 = sphi 0, %s115
    %s117 = sphi 0, %s115
    %s118 = sphi 0, %s117
    %s132 = sphi 0, %s118
    %s136 = sphi 0, %s136
    %s138 = sphi 0, %s136
    %s139 = sphi 0, %s138
    %s153 = sphi 0, %s139
    %s157 = sphi 0, %s157
    %s159 = sphi 0, %s157
    %s160 = sphi 0, %s159
    %s174 = sphi 0, %s160
    %s178 = sphi 0, %s178
    %s180 = sphi 0, %s178
    %s181 = sphi 0, %s180
    %s195 = sphi 0, %s181
    %s199 = sphi 0, %s199
    %s201 = sphi 0, %s199
    %s202 = sphi 0, %s201
    %s216 = sphi 0, %s202
    %s220 = sphi 0, %s220
    %s222 = sphi 0, %s220
    %s223 = sphi 0, %s222
    %s237 = sphi 0, %s223
    %s241 = sphi 0, %s241
    %s243 = sphi 0, %s241
    %s244 = sphi 0, %s243
    %s258 = sphi 0, %s244
    %s262 = sphi 0, %s262
    %s264 = sphi 0, %s262
    %s265 = sphi 0, %s264
    %s279 = sphi 0, %s265
    %s283 = sphi 0, %s283
    %s285 = sphi 0, %s283
    %s286 = sphi 0, %s285
    %s300 = sphi 0, %s286
    %s304 = sphi 0, %s304
    %s306 = sphi 0, %s304
    %s307 = sphi 0, %s306
    %s321 = sphi 0, %s307
    %s325 = sphi 0, %s325
    %s327 = sphi 0, %s325
    %s328 = sphi 0, %s327
    %s342 = sphi 0, %s328
    %s346 = sphi 0, %s346
    %s348 = sphi 0, %s346
    %s349 = sphi 0, %s348
    %s363 = sphi 0, %s349
    %s367 = sphi 0, %s367
    %s369 = sphi 0, %s367
    %s370 = sphi 0, %s369
    %s384 = sphi 0, %s370
    %s388 = sphi 0, %s388
    %s390 = sphi 0, %s388
    %s391 = sphi 0, %s390
    %s405 = sphi 0, %s391
    %s409 = sphi 0, %s409
    %s411 = sphi 0, %s409
    %s412 = sphi 0, %s411
    %s426 = sphi 0, %s412
    %s430 = sphi 0, %s430
    %s432 = sphi 0, %s430
    %s433 = sphi 0, %s432
    %s447 = sphi 0, %s433
    %s451 = sphi 0, %s451
    %s453 = sphi 0, %s451
    %s454 = sphi 0, %s453
    %s468 = sphi 0, %s454
    %s472 = sphi 0, %s472
    %s474 = sphi 0, %s472
    %s475 = sphi 0, %s474
    %s489 = sphi 0, %s475
    %s493 = sphi 0, %s493
    %s495 = sphi 0, %s493
    %s496 = sphi 0, %s495
    %s510 = sphi 0, %s496
    %s514 = sphi 0, %s514
    %s516 = sphi 0, %s514
    %s517 = sphi 0, %s516
    %s531 = sphi 0, %s517
    %s535 = sphi 0, %s535
    %s537 = sphi 0, %s535
    %s538 = sphi 0, %s537
    %s552 = sphi 0, %s538
    %s556 = sphi 0, %s556
    %s558 = sphi 0, %s556
    %s559 = sphi 0, %s558
    %s573 = sphi 0, %s559
    %s577 = sphi 0, %s577
    %s579 = sphi 0, %s577
    %s580 = sphi 0, %s579
    %s594 = sphi 0, %s580
    %s598 = sphi 0, %s598
    %s600 = sphi 0, %s598
    %s601 = sphi 0, %s600
    %s615 = sphi 0, %s601
    %s619 = sphi 0, %s619
    %s621 = sphi 0, %s619
    %s622 = sphi 0, %s621
    %s636 = sphi 0, %s622
    %s642 = sphi 0, %s644
    %s645 = sphi 0, %s642
    %s646 = sphi 0, %s645
    %s662 = sphi 0, %s646
  $region4: #{diffusion_unet_forward.1} parent=0 // loop_header_branch
    %37 = sbr.rel (%p35) target = $region8
  $region5: #{diffusion_unet_forward.1} parent=0 // loop_body
    %s39 = ssub.s32 %s34, 1
    %s40 = ssub.s32 %s34, 2
    %s41 = sadd.s32 %s34, 1
    %s42 = ssub.s32 %s34, %s41
    %p43 = scmp.eq.s32.totalorder %s42, 0
    %s45 = sadd.s32 %s44, 1
    %s46 = scalar_select %p43, %s44, %s45
    %p49 = pneg %p43
    %p50 = scmp.eq.s32.totalorder %s34, 1
    %p51 = por %p49, %p50
    %p52 = scmp.ne.s32.totalorder %s44, %s47
    %p53 = scmp.eq.s32.totalorder %s34, 0
    %p54 = por %p52, %p53
    %p55 = scmp.ne.s32.totalorder %s44, %s47
    %p56 = scmp.eq.s32.totalorder %s39, 1
    %p57 = por %p55, %p56
    %p58 = scmp.ne.s32.totalorder %s47, %s48
    %p59 = scmp.eq.s32.totalorder %s39, 0
    %p60 = por %p58, %p59
    %p61 = scmp.ne.s32.totalorder %s47, %s48
    %p62 = scmp.eq.s32.totalorder %s40, 1
    %p63 = por %p61, %p62
    %p65 = scmp.ne.s32.totalorder %s48, %s64
    %p66 = scmp.eq.s32.totalorder %s40, 0
    %p67 = por %p65, %p66
    %s68 = ssub.s32 %s34, %s41
    %p69 = scmp.eq.s32.totalorder %s68, 0
    %s71 = sadd.s32 %s70, 1
    %s72 = scalar_select %p69, %s70, %s71
    %p75 = pneg %p69
    %p76 = scmp.eq.s32.totalorder %s34, 1
    %p77 = por %p75, %p76
    %p78 = scmp.ne.s32.totalorder %s70, %s73
    %p79 = scmp.eq.s32.totalorder %s34, 0
    %p80 = por %p78, %p79
    %p81 = scmp.ne.s32.totalorder %s70, %s73
    %p82 = scmp.eq.s32.totalorder %s39, 1
    %p83 = por %p81, %p82
    %p84 = scmp.ne.s32.totalorder %s73, %s74
    %p85 = scmp.eq.s32.totalorder %s39, 0
    %p86 = por %p84, %p85
    %p87 = scmp.ne.s32.totalorder %s73, %s74
    %p88 = scmp.eq.s32.totalorder %s40, 1
    %p89 = por %p87, %p88
    %p91 = scmp.ne.s32.totalorder %s74, %s90
    %p92 = scmp.eq.s32.totalorder %s40, 0
    %p93 = por %p91, %p92
    %s95 = sadd.s32 %s94, 1
    %p98 = scmp.eq.s32.totalorder %s34, 1
    %p99 = scmp.ne.s32.totalorder %s94, %s96
    %p100 = scmp.eq.s32.totalorder %s34, 0
    %p101 = por %p99, %p100
    %p102 = scmp.ne.s32.totalorder %s94, %s96
    %p103 = scmp.eq.s32.totalorder %s39, 1
    %p104 = por %p102, %p103
    %p105 = scmp.ne.s32.totalorder %s96, %s97
    %p106 = scmp.eq.s32.totalorder %s39, 0
    %p107 = por %p105, %p106
    %p108 = scmp.ne.s32.totalorder %s96, %s97
    %p109 = scmp.eq.s32.totalorder %s40, 1
    %p110 = por %p108, %p109
    %p112 = scmp.ne.s32.totalorder %s97, %s111
    %p113 = scmp.eq.s32.totalorder %s40, 0
    %p114 = por %p112, %p113
    %s116 = sadd.s32 %s115, 1
    %p119 = scmp.eq.s32.totalorder %s34, 1
    %p120 = scmp.ne.s32.totalorder %s115, %s117
    %p121 = scmp.eq.s32.totalorder %s34, 0
    %p122 = por %p120, %p121
    %p123 = scmp.ne.s32.totalorder %s115, %s117
    %p124 = scmp.eq.s32.totalorder %s39, 1
    %p125 = por %p123, %p124
    %p126 = scmp.ne.s32.totalorder %s117, %s118
    %p127 = scmp.eq.s32.totalorder %s39, 0
    %p128 = por %p126, %p127
    %p129 = scmp.ne.s32.totalorder %s117, %s118
    %p130 = scmp.eq.s32.totalorder %s40, 1
    %p131 = por %p129, %p130
    %p133 = scmp.ne.s32.totalorder %s118, %s132
    %p134 = scmp.eq.s32.totalorder %s40, 0
    %p135 = por %p133, %p134
    %s137 = sadd.s32 %s136, 1
    %p140 = scmp.eq.s32.totalorder %s34, 1
    %p141 = scmp.ne.s32.totalorder %s136, %s138
    %p142 = scmp.eq.s32.totalorder %s34, 0
    %p143 = por %p141, %p142
    %p144 = scmp.ne.s32.totalorder %s136, %s138
    %p145 = scmp.eq.s32.totalorder %s39, 1
    %p146 = por %p144, %p145
    %p147 = scmp.ne.s32.totalorder %s138, %s139
    %p148 = scmp.eq.s32.totalorder %s39, 0
    %p149 = por %p147, %p148
    %p150 = scmp.ne.s32.totalorder %s138, %s139
    %p151 = scmp.eq.s32.totalorder %s40, 1
    %p152 = por %p150, %p151
    %p154 = scmp.ne.s32.totalorder %s139, %s153
    %p155 = scmp.eq.s32.totalorder %s40, 0
    %p156 = por %p154, %p155
    %s158 = sadd.s32 %s157, 1
    %p161 = scmp.eq.s32.totalorder %s34, 1
    %p162 = scmp.ne.s32.totalorder %s157, %s159
    %p163 = scmp.eq.s32.totalorder %s34, 0
    %p164 = por %p162, %p163
    %p165 = scmp.ne.s32.totalorder %s157, %s159
    %p166 = scmp.eq.s32.totalorder %s39, 1
    %p167 = por %p165, %p166
    %p168 = scmp.ne.s32.totalorder %s159, %s160
    %p169 = scmp.eq.s32.totalorder %s39, 0
    %p170 = por %p168, %p169
    %p171 = scmp.ne.s32.totalorder %s159, %s160
    %p172 = scmp.eq.s32.totalorder %s40, 1
    %p173 = por %p171, %p172
    %p175 = scmp.ne.s32.totalorder %s160, %s174
    %p176 = scmp.eq.s32.totalorder %s40, 0
    %p177 = por %p175, %p176
    %s179 = sadd.s32 %s178, 1
    %p182 = scmp.eq.s32.totalorder %s34, 1
    %p183 = scmp.ne.s32.totalorder %s178, %s180
    %p184 = scmp.eq.s32.totalorder %s34, 0
    %p185 = por %p183, %p184
    %p186 = scmp.ne.s32.totalorder %s178, %s180
    %p187 = scmp.eq.s32.totalorder %s39, 1
    %p188 = por %p186, %p187
    %p189 = scmp.ne.s32.totalorder %s180, %s181
    %p190 = scmp.eq.s32.totalorder %s39, 0
    %p191 = por %p189, %p190
    %p192 = scmp.ne.s32.totalorder %s180, %s181
    %p193 = scmp.eq.s32.totalorder %s40, 1
    %p194 = por %p192, %p193
    %p196 = scmp.ne.s32.totalorder %s181, %s195
    %p197 = scmp.eq.s32.totalorder %s40, 0
    %p198 = por %p196, %p197
    %s200 = sadd.s32 %s199, 1
    %p203 = scmp.eq.s32.totalorder %s34, 1
    %p204 = scmp.ne.s32.totalorder %s199, %s201
    %p205 = scmp.eq.s32.totalorder %s34, 0
    %p206 = por %p204, %p205
    %p207 = scmp.ne.s32.totalorder %s199, %s201
    %p208 = scmp.eq.s32.totalorder %s39, 1
    %p209 = por %p207, %p208
    %p210 = scmp.ne.s32.totalorder %s201, %s202
    %p211 = scmp.eq.s32.totalorder %s39, 0
    %p212 = por %p210, %p211
    %p213 = scmp.ne.s32.totalorder %s201, %s202
    %p214 = scmp.eq.s32.totalorder %s40, 1
    %p215 = por %p213, %p214
    %p217 = scmp.ne.s32.totalorder %s202, %s216
    %p218 = scmp.eq.s32.totalorder %s40, 0
    %p219 = por %p217, %p218
    %s221 = sadd.s32 %s220, 1
    %p224 = scmp.eq.s32.totalorder %s34, 1
    %p225 = scmp.ne.s32.totalorder %s220, %s222
    %p226 = scmp.eq.s32.totalorder %s34, 0
    %p227 = por %p225, %p226
    %p228 = scmp.ne.s32.totalorder %s220, %s222
    %p229 = scmp.eq.s32.totalorder %s39, 1
    %p230 = por %p228, %p229
    %p231 = scmp.ne.s32.totalorder %s222, %s223
    %p232 = scmp.eq.s32.totalorder %s39, 0
    %p233 = por %p231, %p232
    %p234 = scmp.ne.s32.totalorder %s222, %s223
    %p235 = scmp.eq.s32.totalorder %s40, 1
    %p236 = por %p234, %p235
    %p238 = scmp.ne.s32.totalorder %s223, %s237
    %p239 = scmp.eq.s32.totalorder %s40, 0
    %p240 = por %p238, %p239
    %s242 = sadd.s32 %s241, 1
    %p245 = scmp.eq.s32.totalorder %s34, 1
    %p246 = scmp.ne.s32.totalorder %s241, %s243
    %p247 = scmp.eq.s32.totalorder %s34, 0
    %p248 = por %p246, %p247
    %p249 = scmp.ne.s32.totalorder %s241, %s243
    %p250 = scmp.eq.s32.totalorder %s39, 1
    %p251 = por %p249, %p250
    %p252 = scmp.ne.s32.totalorder %s243, %s244
    %p253 = scmp.eq.s32.totalorder %s39, 0
    %p254 = por %p252, %p253
    %p255 = scmp.ne.s32.totalorder %s243, %s244
    %p256 = scmp.eq.s32.totalorder %s40, 1
    %p257 = por %p255, %p256
    %p259 = scmp.ne.s32.totalorder %s244, %s258
    %p260 = scmp.eq.s32.totalorder %s40, 0
    %p261 = por %p259, %p260
    %s263 = sadd.s32 %s262, 1
    %p266 = scmp.eq.s32.totalorder %s34, 1
    %p267 = scmp.ne.s32.totalorder %s262, %s264
    %p268 = scmp.eq.s32.totalorder %s34, 0
    %p269 = por %p267, %p268
    %p270 = scmp.ne.s32.totalorder %s262, %s264
    %p271 = scmp.eq.s32.totalorder %s39, 1
    %p272 = por %p270, %p271
    %p273 = scmp.ne.s32.totalorder %s264, %s265
    %p274 = scmp.eq.s32.totalorder %s39, 0
    %p275 = por %p273, %p274
    %p276 = scmp.ne.s32.totalorder %s264, %s265
    %p277 = scmp.eq.s32.totalorder %s40, 1
    %p278 = por %p276, %p277
    %p280 = scmp.ne.s32.totalorder %s265, %s279
    %p281 = scmp.eq.s32.totalorder %s40, 0
    %p282 = por %p280, %p281
    %s284 = sadd.s32 %s283, 1
    %p287 = scmp.eq.s32.totalorder %s34, 1
    %p288 = scmp.ne.s32.totalorder %s283, %s285
    %p289 = scmp.eq.s32.totalorder %s34, 0
    %p290 = por %p288, %p289
    %p291 = scmp.ne.s32.totalorder %s283, %s285
    %p292 = scmp.eq.s32.totalorder %s39, 1
    %p293 = por %p291, %p292
    %p294 = scmp.ne.s32.totalorder %s285, %s286
    %p295 = scmp.eq.s32.totalorder %s39, 0
    %p296 = por %p294, %p295
    %p297 = scmp.ne.s32.totalorder %s285, %s286
    %p298 = scmp.eq.s32.totalorder %s40, 1
    %p299 = por %p297, %p298
    %p301 = scmp.ne.s32.totalorder %s286, %s300
    %p302 = scmp.eq.s32.totalorder %s40, 0
    %p303 = por %p301, %p302
    %s305 = sadd.s32 %s304, 1
    %p308 = scmp.eq.s32.totalorder %s34, 1
    %p309 = scmp.ne.s32.totalorder %s304, %s306
    %p310 = scmp.eq.s32.totalorder %s34, 0
    %p311 = por %p309, %p310
    %p312 = scmp.ne.s32.totalorder %s304, %s306
    %p313 = scmp.eq.s32.totalorder %s39, 1
    %p314 = por %p312, %p313
    %p315 = scmp.ne.s32.totalorder %s306, %s307
    %p316 = scmp.eq.s32.totalorder %s39, 0
    %p317 = por %p315, %p316
    %p318 = scmp.ne.s32.totalorder %s306, %s307
    %p319 = scmp.eq.s32.totalorder %s40, 1
    %p320 = por %p318, %p319
    %p322 = scmp.ne.s32.totalorder %s307, %s321
    %p323 = scmp.eq.s32.totalorder %s40, 0
    %p324 = por %p322, %p323
    %s326 = sadd.s32 %s325, 1
    %p329 = scmp.eq.s32.totalorder %s34, 1
    %p330 = scmp.ne.s32.totalorder %s325, %s327
    %p331 = scmp.eq.s32.totalorder %s34, 0
    %p332 = por %p330, %p331
    %p333 = scmp.ne.s32.totalorder %s325, %s327
    %p334 = scmp.eq.s32.totalorder %s39, 1
    %p335 = por %p333, %p334
    %p336 = scmp.ne.s32.totalorder %s327, %s328
    %p337 = scmp.eq.s32.totalorder %s39, 0
    %p338 = por %p336, %p337
    %p339 = scmp.ne.s32.totalorder %s327, %s328
    %p340 = scmp.eq.s32.totalorder %s40, 1
    %p341 = por %p339, %p340
    %p343 = scmp.ne.s32.totalorder %s328, %s342
    %p344 = scmp.eq.s32.totalorder %s40, 0
    %p345 = por %p343, %p344
    %s347 = sadd.s32 %s346, 1
    %p350 = scmp.eq.s32.totalorder %s34, 1
    %p351 = scmp.ne.s32.totalorder %s346, %s348
    %p352 = scmp.eq.s32.totalorder %s34, 0
    %p353 = por %p351, %p352
    %p354 = scmp.ne.s32.totalorder %s346, %s348
    %p355 = scmp.eq.s32.totalorder %s39, 1
    %p356 = por %p354, %p355
    %p357 = scmp.ne.s32.totalorder %s348, %s349
    %p358 = scmp.eq.s32.totalorder %s39, 0
    %p359 = por %p357, %p358
    %p360 = scmp.ne.s32.totalorder %s348, %s349
    %p361 = scmp.eq.s32.totalorder %s40, 1
    %p362 = por %p360, %p361
    %p364 = scmp.ne.s32.totalorder %s349, %s363
    %p365 = scmp.eq.s32.totalorder %s40, 0
    %p366 = por %p364, %p365
    %s368 = sadd.s32 %s367, 1
    %p371 = scmp.eq.s32.totalorder %s34, 1
    %p372 = scmp.ne.s32.totalorder %s367, %s369
    %p373 = scmp.eq.s32.totalorder %s34, 0
    %p374 = por %p372, %p373
    %p375 = scmp.ne.s32.totalorder %s367, %s369
    %p376 = scmp.eq.s32.totalorder %s39, 1
    %p377 = por %p375, %p376
    %p378 = scmp.ne.s32.totalorder %s369, %s370
    %p379 = scmp.eq.s32.totalorder %s39, 0
    %p380 = por %p378, %p379
    %p381 = scmp.ne.s32.totalorder %s369, %s370
    %p382 = scmp.eq.s32.totalorder %s40, 1
    %p383 = por %p381, %p382
    %p385 = scmp.ne.s32.totalorder %s370, %s384
    %p386 = scmp.eq.s32.totalorder %s40, 0
    %p387 = por %p385, %p386
    %s389 = sadd.s32 %s388, 1
    %p392 = scmp.eq.s32.totalorder %s34, 1
    %p393 = scmp.ne.s32.totalorder %s388, %s390
    %p394 = scmp.eq.s32.totalorder %s34, 0
    %p395 = por %p393, %p394
    %p396 = scmp.ne.s32.totalorder %s388, %s390
    %p397 = scmp.eq.s32.totalorder %s39, 1
    %p398 = por %p396, %p397
    %p399 = scmp.ne.s32.totalorder %s390, %s391
    %p400 = scmp.eq.s32.totalorder %s39, 0
    %p401 = por %p399, %p400
    %p402 = scmp.ne.s32.totalorder %s390, %s391
    %p403 = scmp.eq.s32.totalorder %s40, 1
    %p404 = por %p402, %p403
    %p406 = scmp.ne.s32.totalorder %s391, %s405
    %p407 = scmp.eq.s32.totalorder %s40, 0
    %p408 = por %p406, %p407
    %s410 = sadd.s32 %s409, 1
    %p413 = scmp.eq.s32.totalorder %s34, 1
    %p414 = scmp.ne.s32.totalorder %s409, %s411
    %p415 = scmp.eq.s32.totalorder %s34, 0
    %p416 = por %p414, %p415
    %p417 = scmp.ne.s32.totalorder %s409, %s411
    %p418 = scmp.eq.s32.totalorder %s39, 1
    %p419 = por %p417, %p418
    %p420 = scmp.ne.s32.totalorder %s411, %s412
    %p421 = scmp.eq.s32.totalorder %s39, 0
    %p422 = por %p420, %p421
    %p423 = scmp.ne.s32.totalorder %s411, %s412
    %p424 = scmp.eq.s32.totalorder %s40, 1
    %p425 = por %p423, %p424
    %p427 = scmp.ne.s32.totalorder %s412, %s426
    %p428 = scmp.eq.s32.totalorder %s40, 0
    %p429 = por %p427, %p428
    %s431 = sadd.s32 %s430, 1
    %p434 = scmp.eq.s32.totalorder %s34, 1
    %p435 = scmp.ne.s32.totalorder %s430, %s432
    %p436 = scmp.eq.s32.totalorder %s34, 0
    %p437 = por %p435, %p436
    %p438 = scmp.ne.s32.totalorder %s430, %s432
    %p439 = scmp.eq.s32.totalorder %s39, 1
    %p440 = por %p438, %p439
    %p441 = scmp.ne.s32.totalorder %s432, %s433
    %p442 = scmp.eq.s32.totalorder %s39, 0
    %p443 = por %p441, %p442
    %p444 = scmp.ne.s32.totalorder %s432, %s433
    %p445 = scmp.eq.s32.totalorder %s40, 1
    %p446 = por %p444, %p445
    %p448 = scmp.ne.s32.totalorder %s433, %s447
    %p449 = scmp.eq.s32.totalorder %s40, 0
    %p450 = por %p448, %p449
    %s452 = sadd.s32 %s451, 1
    %p455 = scmp.eq.s32.totalorder %s34, 1
    %p456 = scmp.ne.s32.totalorder %s451, %s453
    %p457 = scmp.eq.s32.totalorder %s34, 0
    %p458 = por %p456, %p457
    %p459 = scmp.ne.s32.totalorder %s451, %s453
    %p460 = scmp.eq.s32.totalorder %s39, 1
    %p461 = por %p459, %p460
    %p462 = scmp.ne.s32.totalorder %s453, %s454
    %p463 = scmp.eq.s32.totalorder %s39, 0
    %p464 = por %p462, %p463
    %p465 = scmp.ne.s32.totalorder %s453, %s454
    %p466 = scmp.eq.s32.totalorder %s40, 1
    %p467 = por %p465, %p466
    %p469 = scmp.ne.s32.totalorder %s454, %s468
    %p470 = scmp.eq.s32.totalorder %s40, 0
    %p471 = por %p469, %p470
    %s473 = sadd.s32 %s472, 1
    %p476 = scmp.eq.s32.totalorder %s34, 1
    %p477 = scmp.ne.s32.totalorder %s472, %s474
    %p478 = scmp.eq.s32.totalorder %s34, 0
    %p479 = por %p477, %p478
    %p480 = scmp.ne.s32.totalorder %s472, %s474
    %p481 = scmp.eq.s32.totalorder %s39, 1
    %p482 = por %p480, %p481
    %p483 = scmp.ne.s32.totalorder %s474, %s475
    %p484 = scmp.eq.s32.totalorder %s39, 0
    %p485 = por %p483, %p484
    %p486 = scmp.ne.s32.totalorder %s474, %s475
    %p487 = scmp.eq.s32.totalorder %s40, 1
    %p488 = por %p486, %p487
    %p490 = scmp.ne.s32.totalorder %s475, %s489
    %p491 = scmp.eq.s32.totalorder %s40, 0
    %p492 = por %p490, %p491
    %s494 = sadd.s32 %s493, 1
    %p497 = scmp.eq.s32.totalorder %s34, 1
    %p498 = scmp.ne.s32.totalorder %s493, %s495
    %p499 = scmp.eq.s32.totalorder %s34, 0
    %p500 = por %p498, %p499
    %p501 = scmp.ne.s32.totalorder %s493, %s495
    %p502 = scmp.eq.s32.totalorder %s39, 1
    %p503 = por %p501, %p502
    %p504 = scmp.ne.s32.totalorder %s495, %s496
    %p505 = scmp.eq.s32.totalorder %s39, 0
    %p506 = por %p504, %p505
    %p507 = scmp.ne.s32.totalorder %s495, %s496
    %p508 = scmp.eq.s32.totalorder %s40, 1
    %p509 = por %p507, %p508
    %p511 = scmp.ne.s32.totalorder %s496, %s510
    %p512 = scmp.eq.s32.totalorder %s40, 0
    %p513 = por %p511, %p512
    %s515 = sadd.s32 %s514, 1
    %p518 = scmp.eq.s32.totalorder %s34, 1
    %p519 = scmp.ne.s32.totalorder %s514, %s516
    %p520 = scmp.eq.s32.totalorder %s34, 0
    %p521 = por %p519, %p520
    %p522 = scmp.ne.s32.totalorder %s514, %s516
    %p523 = scmp.eq.s32.totalorder %s39, 1
    %p524 = por %p522, %p523
    %p525 = scmp.ne.s32.totalorder %s516, %s517
    %p526 = scmp.eq.s32.totalorder %s39, 0
    %p527 = por %p525, %p526
    %p528 = scmp.ne.s32.totalorder %s516, %s517
    %p529 = scmp.eq.s32.totalorder %s40, 1
    %p530 = por %p528, %p529
    %p532 = scmp.ne.s32.totalorder %s517, %s531
    %p533 = scmp.eq.s32.totalorder %s40, 0
    %p534 = por %p532, %p533
    %s536 = sadd.s32 %s535, 1
    %p539 = scmp.eq.s32.totalorder %s34, 1
    %p540 = scmp.ne.s32.totalorder %s535, %s537
    %p541 = scmp.eq.s32.totalorder %s34, 0
    %p542 = por %p540, %p541
    %p543 = scmp.ne.s32.totalorder %s535, %s537
    %p544 = scmp.eq.s32.totalorder %s39, 1
    %p545 = por %p543, %p544
    %p546 = scmp.ne.s32.totalorder %s537, %s538
    %p547 = scmp.eq.s32.totalorder %s39, 0
    %p548 = por %p546, %p547
    %p549 = scmp.ne.s32.totalorder %s537, %s538
    %p550 = scmp.eq.s32.totalorder %s40, 1
    %p551 = por %p549, %p550
    %p553 = scmp.ne.s32.totalorder %s538, %s552
    %p554 = scmp.eq.s32.totalorder %s40, 0
    %p555 = por %p553, %p554
    %s557 = sadd.s32 %s556, 1
    %p560 = scmp.eq.s32.totalorder %s34, 1
    %p561 = scmp.ne.s32.totalorder %s556, %s558
    %p562 = scmp.eq.s32.totalorder %s34, 0
    %p563 = por %p561, %p562
    %p564 = scmp.ne.s32.totalorder %s556, %s558
    %p565 = scmp.eq.s32.totalorder %s39, 1
    %p566 = por %p564, %p565
    %p567 = scmp.ne.s32.totalorder %s558, %s559
    %p568 = scmp.eq.s32.totalorder %s39, 0
    %p569 = por %p567, %p568
    %p570 = scmp.ne.s32.totalorder %s558, %s559
    %p571 = scmp.eq.s32.totalorder %s40, 1
    %p572 = por %p570, %p571
    %p574 = scmp.ne.s32.totalorder %s559, %s573
    %p575 = scmp.eq.s32.totalorder %s40, 0
    %p576 = por %p574, %p575
    %s578 = sadd.s32 %s577, 1
    %p581 = scmp.eq.s32.totalorder %s34, 1
    %p582 = scmp.ne.s32.totalorder %s577, %s579
    %p583 = scmp.eq.s32.totalorder %s34, 0
    %p584 = por %p582, %p583
    %p585 = scmp.ne.s32.totalorder %s577, %s579
    %p586 = scmp.eq.s32.totalorder %s39, 1
    %p587 = por %p585, %p586
    %p588 = scmp.ne.s32.totalorder %s579, %s580
    %p589 = scmp.eq.s32.totalorder %s39, 0
    %p590 = por %p588, %p589
    %p591 = scmp.ne.s32.totalorder %s579, %s580
    %p592 = scmp.eq.s32.totalorder %s40, 1
    %p593 = por %p591, %p592
    %p595 = scmp.ne.s32.totalorder %s580, %s594
    %p596 = scmp.eq.s32.totalorder %s40, 0
    %p597 = por %p595, %p596
    %s599 = sadd.s32 %s598, 1
    %p602 = scmp.eq.s32.totalorder %s34, 1
    %p603 = scmp.ne.s32.totalorder %s598, %s600
    %p604 = scmp.eq.s32.totalorder %s34, 0
    %p605 = por %p603, %p604
    %p606 = scmp.ne.s32.totalorder %s598, %s600
    %p607 = scmp.eq.s32.totalorder %s39, 1
    %p608 = por %p606, %p607
    %p609 = scmp.ne.s32.totalorder %s600, %s601
    %p610 = scmp.eq.s32.totalorder %s39, 0
    %p611 = por %p609, %p610
    %p612 = scmp.ne.s32.totalorder %s600, %s601
    %p613 = scmp.eq.s32.totalorder %s40, 1
    %p614 = por %p612, %p613
    %p616 = scmp.ne.s32.totalorder %s601, %s615
    %p617 = scmp.eq.s32.totalorder %s40, 0
    %p618 = por %p616, %p617
    %s620 = sadd.s32 %s619, 1
    %p623 = scmp.eq.s32.totalorder %s34, 1
    %p624 = scmp.ne.s32.totalorder %s619, %s621
    %p625 = scmp.eq.s32.totalorder %s34, 0
    %p626 = por %p624, %p625
    %p627 = scmp.ne.s32.totalorder %s619, %s621
    %p628 = scmp.eq.s32.totalorder %s39, 1
    %p629 = por %p627, %p628
    %p630 = scmp.ne.s32.totalorder %s621, %s622
    %p631 = scmp.eq.s32.totalorder %s39, 0
    %p632 = por %p630, %p631
    %p633 = scmp.ne.s32.totalorder %s621, %s622
    %p634 = scmp.eq.s32.totalorder %s40, 1
    %p635 = por %p633, %p634
    %p637 = scmp.ne.s32.totalorder %s622, %s636
    %p638 = scmp.eq.s32.totalorder %s40, 0
    %p639 = por %p637, %p638
    %s640 = ssub.s32 %s34, %s41
    %p641 = scmp.eq.s32.totalorder %s640, 0
    %s643 = sadd.s32 %s642, 1
    %s644 = scalar_select %p641, %s642, %s643
    %p647 = pneg %p641
    %p648 = scmp.eq.s32.totalorder %s34, 1
    %p649 = por %p647, %p648
    %p650 = scmp.ne.s32.totalorder %s642, %s645
    %p651 = scmp.eq.s32.totalorder %s34, 0
    %p652 = por %p650, %p651
    %p653 = scmp.ne.s32.totalorder %s642, %s645
    %p654 = scmp.eq.s32.totalorder %s39, 1
    %p655 = por %p653, %p654
    %p656 = scmp.ne.s32.totalorder %s645, %s646
    %p657 = scmp.eq.s32.totalorder %s39, 0
    %p658 = por %p656, %p657
    %p659 = scmp.ne.s32.totalorder %s645, %s646
    %p660 = scmp.eq.s32.totalorder %s40, 1
    %p661 = por %p659, %p660
    %p663 = scmp.ne.s32.totalorder %s646, %s662
    %p664 = scmp.eq.s32.totalorder %s40, 0
    %p665 = por %p663, %p664
    %p666 = scmp.le.s32.totalorder 1, %s34
    %p667 = scmp.lt.s32.totalorder %s34, 3
    %p668 = pnand %p666, %p667
    %p669 = pneg %p668
    // Predicated region
    $region9: #{diffusion_unet_forward.1} parent=5 // pred_check
      _
    $region10: #{diffusion_unet_forward.1} parent=5 // pred_check_branch
      %671 = sbr.rel (%p668) target = $region12
    $region11: #{diffusion_unet_forward.1} parent=5 // pred_region
      %s672 = ssub.s32 %s34, 1
      // Predicated region
      $region13: #{diffusion_unet_forward.1} parent=11 // pred_check
        %p673 = pneg %p107
      $region14: #{diffusion_unet_forward.1} parent=11 // pred_check_branch
        %675 = sbr.rel (%p673) target = $region16
      $region15: #{diffusion_unet_forward.1} parent=11 // pred_region
        _
      $region16: #{diffusion_unet_forward.1} parent=11 // pred_fallthru
        _
      // Predicated region
      $region17: #{diffusion_unet_forward.1} parent=11 // pred_check
        %p676 = pneg %p128
      $region18: #{diffusion_unet_forward.1} parent=11 // pred_check_branch
        %678 = sbr.rel (%p676) target = $region20
      $region19: #{diffusion_unet_forward.1} parent=11 // pred_region
        _
      $region20: #{diffusion_unet_forward.1} parent=11 // pred_fallthru
        _
      // Predicated region
      $region21: #{diffusion_unet_forward.1} parent=11 // pred_check
        %p679 = pneg %p149
      $region22: #{diffusion_unet_forward.1} parent=11 // pred_check_branch
        %681 = sbr.rel (%p679) target = $region24
      $region23: #{diffusion_unet_forward.1} parent=11 // pred_region
        _
      $region24: #{diffusion_unet_forward.1} parent=11 // pred_fallthru
        _
      // Predicated region
      $region25: #{diffusion_unet_forward.1} parent=11 // pred_check
        %p682 = pneg %p170
      $region26: #{diffusion_unet_forward.1} parent=11 // pred_check_branch
        %684 = sbr.rel (%p682) target = $region28
      $region27: #{diffusion_unet_forward.1} parent=11 // pred_region
        _
      $region28: #{diffusion_unet_forward.1} parent=11 // pred_fallthru
        _
      // Predicated region
      $region29: #{diffusion_unet_forward.1} parent=11 // pred_check
        %p685 = pneg %p191
      $region30: #{diffusion_unet_forward.1} parent=11 // pred_check_branch
        %687 = sbr.rel (%p685) target = $region32
      $region31: #{diffusion_unet_forward.1} parent=11 // pred_region
        _
      $region32: #{diffusion_unet_forward.1} parent=11 // pred_fallthru
        _
      // Predicated region
      $region33: #{diffusion_unet_forward.1} parent=11 // pred_check
        %p688 = pneg %p212
      $region34: #{diffusion_unet_forward.1} parent=11 // pred_check_branch
        %690 = sbr.rel (%p688) target = $region36
      $region35: #{diffusion_unet_forward.1} parent=11 // pred_region
        _
      $region36: #{diffusion_unet_forward.1} parent=11 // pred_fallthru
        _
      // Predicated region
      $region37: #{diffusion_unet_forward.1} parent=11 // pred_check
        %p691 = pneg %p233
      $region38: #{diffusion_unet_forward.1} parent=11 // pred_check_branch
        %693 = sbr.rel (%p691) target = $region40
      $region39: #{diffusion_unet_forward.1} parent=11 // pred_region
        _
      $region40: #{diffusion_unet_forward.1} parent=11 // pred_fallthru
        _
      // Predicated region
      $region41: #{diffusion_unet_forward.1} parent=11 // pred_check
        %p694 = pneg %p254
      $region42: #{diffusion_unet_forward.1} parent=11 // pred_check_branch
        %696 = sbr.rel (%p694) target = $region44
      $region43: #{diffusion_unet_forward.1} parent=11 // pred_region
        _
      $region44: #{diffusion_unet_forward.1} parent=11 // pred_fallthru
        _
      // Predicated region
      $region45: #{diffusion_unet_forward.1} parent=11 // pred_check
        %p697 = pneg %p275
      $region46: #{diffusion_unet_forward.1} parent=11 // pred_check_branch
        %699 = sbr.rel (%p697) target = $region48
      $region47: #{diffusion_unet_forward.1} parent=11 // pred_region
        _
      $region48: #{diffusion_unet_forward.1} parent=11 // pred_fallthru
        _
      // Predicated region
      $region49: #{diffusion_unet_forward.1} parent=11 // pred_check
        %p700 = pneg %p296
      $region50: #{diffusion_unet_forward.1} parent=11 // pred_check_branch
        %702 = sbr.rel (%p700) target = $region52
      $region51: #{diffusion_unet_forward.1} parent=11 // pred_region
        _
      $region52: #{diffusion_unet_forward.1} parent=11 // pred_fallthru
        _
      // Predicated region
      $region53: #{diffusion_unet_forward.1} parent=11 // pred_check
        %p703 = pneg %p317
      $region54: #{diffusion_unet_forward.1} parent=11 // pred_check_branch
        %705 = sbr.rel (%p703) target = $region56
      $region55: #{diffusion_unet_forward.1} parent=11 // pred_region
        _
      $region56: #{diffusion_unet_forward.1} parent=11 // pred_fallthru
        _
      // Predicated region
      $region57: #{diffusion_unet_forward.1} parent=11 // pred_check
        %p706 = pneg %p338
      $region58: #{diffusion_unet_forward.1} parent=11 // pred_check_branch
        %708 = sbr.rel (%p706) target = $region60
      $region59: #{diffusion_unet_forward.1} parent=11 // pred_region
        _
      $region60: #{diffusion_unet_forward.1} parent=11 // pred_fallthru
        _
      // Predicated region
      $region61: #{diffusion_unet_forward.1} parent=11 // pred_check
        %p709 = pneg %p359
      $region62: #{diffusion_unet_forward.1} parent=11 // pred_check_branch
        %711 = sbr.rel (%p709) target = $region64
      $region63: #{diffusion_unet_forward.1} parent=11 // pred_region
        _
      $region64: #{diffusion_unet_forward.1} parent=11 // pred_fallthru
        _
      // Predicated region
      $region65: #{diffusion_unet_forward.1} parent=11 // pred_check
        %p712 = pneg %p380
      $region66: #{diffusion_unet_forward.1} parent=11 // pred_check_branch
        %714 = sbr.rel (%p712) target = $region68
      $region67: #{diffusion_unet_forward.1} parent=11 // pred_region
        _
      $region68: #{diffusion_unet_forward.1} parent=11 // pred_fallthru
        _
      // Predicated region
      $region69: #{diffusion_unet_forward.1} parent=11 // pred_check
        %p715 = pneg %p401
      $region70: #{diffusion_unet_forward.1} parent=11 // pred_check_branch
        %717 = sbr.rel (%p715) target = $region72
      $region71: #{diffusion_unet_forward.1} parent=11 // pred_region
        _
      $region72: #{diffusion_unet_forward.1} parent=11 // pred_fallthru
        _
      // Predicated region
      $region73: #{diffusion_unet_forward.1} parent=11 // pred_check
        %p718 = pneg %p422
      $region74: #{diffusion_unet_forward.1} parent=11 // pred_check_branch
        %720 = sbr.rel (%p718) target = $region76
      $region75: #{diffusion_unet_forward.1} parent=11 // pred_region
        _
      $region76: #{diffusion_unet_forward.1} parent=11 // pred_fallthru
        _
      // Predicated region
      $region77: #{diffusion_unet_forward.1} parent=11 // pred_check
        %p721 = pneg %p443
      $region78: #{diffusion_unet_forward.1} parent=11 // pred_check_branch
        %723 = sbr.rel (%p721) target = $region80
      $region79: #{diffusion_unet_forward.1} parent=11 // pred_region
        _
      $region80: #{diffusion_unet_forward.1} parent=11 // pred_fallthru
        _
      // Predicated region
      $region81: #{diffusion_unet_forward.1} parent=11 // pred_check
        %p724 = pneg %p464
      $region82: #{diffusion_unet_forward.1} parent=11 // pred_check_branch
        %726 = sbr.rel (%p724) target = $region84
      $region83: #{diffusion_unet_forward.1} parent=11 // pred_region
        _
      $region84: #{diffusion_unet_forward.1} parent=11 // pred_fallthru
        _
      // Predicated region
      $region85: #{diffusion_unet_forward.1} parent=11 // pred_check
        %p727 = pneg %p485
      $region86: #{diffusion_unet_forward.1} parent=11 // pred_check_branch
        %729 = sbr.rel (%p727) target = $region88
      $region87: #{diffusion_unet_forward.1} parent=11 // pred_region
        _
      $region88: #{diffusion_unet_forward.1} parent=11 // pred_fallthru
        _
      // Predicated region
      $region89: #{diffusion_unet_forward.1} parent=11 // pred_check
        %p730 = pneg %p506
      $region90: #{diffusion_unet_forward.1} parent=11 // pred_check_branch
        %732 = sbr.rel (%p730) target = $region92
      $region91: #{diffusion_unet_forward.1} parent=11 // pred_region
        _
      $region92: #{diffusion_unet_forward.1} parent=11 // pred_fallthru
        _
      // Predicated region
      $region93: #{diffusion_unet_forward.1} parent=11 // pred_check
        %p733 = pneg %p527
      $region94: #{diffusion_unet_forward.1} parent=11 // pred_check_branch
        %735 = sbr.rel (%p733) target = $region96
      $region95: #{diffusion_unet_forward.1} parent=11 // pred_region
        _
      $region96: #{diffusion_unet_forward.1} parent=11 // pred_fallthru
        _
      // Predicated region
      $region97: #{diffusion_unet_forward.1} parent=11 // pred_check
        %p736 = pneg %p548
      $region98: #{diffusion_unet_forward.1} parent=11 // pred_check_branch
        %738 = sbr.rel (%p736) target = $region100
      $region99: #{diffusion_unet_forward.1} parent=11 // pred_region
        _
      $region100: #{diffusion_unet_forward.1} parent=11 // pred_fallthru
        _
      // Predicated region
      $region101: #{diffusion_unet_forward.1} parent=11 // pred_check
        %p739 = pneg %p569
      $region102: #{diffusion_unet_forward.1} parent=11 // pred_check_branch
        %741 = sbr.rel (%p739) target = $region104
      $region103: #{diffusion_unet_forward.1} parent=11 // pred_region
        _
      $region104: #{diffusion_unet_forward.1} parent=11 // pred_fallthru
        _
      // Predicated region
      $region105: #{diffusion_unet_forward.1} parent=11 // pred_check
        %p742 = pneg %p590
      $region106: #{diffusion_unet_forward.1} parent=11 // pred_check_branch
        %744 = sbr.rel (%p742) target = $region108
      $region107: #{diffusion_unet_forward.1} parent=11 // pred_region
        _
      $region108: #{diffusion_unet_forward.1} parent=11 // pred_fallthru
        _
      // Predicated region
      $region109: #{diffusion_unet_forward.1} parent=11 // pred_check
        %p745 = pneg %p611
      $region110: #{diffusion_unet_forward.1} parent=11 // pred_check_branch
        %747 = sbr.rel (%p745) target = $region112
      $region111: #{diffusion_unet_forward.1} parent=11 // pred_region
        _
      $region112: #{diffusion_unet_forward.1} parent=11 // pred_fallthru
        _
      // Predicated region
      $region113: #{diffusion_unet_forward.1} parent=11 // pred_check
        %p748 = pneg %p632
      $region114: #{diffusion_unet_forward.1} parent=11 // pred_check_branch
        %750 = sbr.rel (%p748) target = $region116
      $region115: #{diffusion_unet_forward.1} parent=11 // pred_region
        _
      $region116: #{diffusion_unet_forward.1} parent=11 // pred_fallthru
        _
    $region12: #{diffusion_unet_forward.1} parent=5 // pred_fallthru
      _
    %p751 = scmp.lt.s32.totalorder %s34, 2
    // Predicated region
    $region117: #{diffusion_unet_forward.1} parent=5 // pred_check
      %p752 = pneg %p751
    $region118: #{diffusion_unet_forward.1} parent=5 // pred_check_branch
      %754 = sbr.rel (%p752) target = $region120
    $region119: #{diffusion_unet_forward.1} parent=5 // pred_region
      // Predicated region
      $region121: #{diffusion_unet_forward.1} parent=119 // pred_check
        %p755 = pneg %p54
      $region122: #{diffusion_unet_forward.1} parent=119 // pred_check_branch
        %757 = sbr.rel (%p755) target = $region124
      $region123: #{diffusion_unet_forward.1} parent=119 // pred_region
        %p758 = scmp.lt.s32.totalorder %s34, 1
        %s759 = scalar_select %p758, %s34, 1
        %s760 = scalar_lea.vmem %s0, %s759
      $region124: #{diffusion_unet_forward.1} parent=119 // pred_fallthru
        _
      // Predicated region
      $region125: #{diffusion_unet_forward.1} parent=119 // pred_check
        %p761 = pneg %p80
      $region126: #{diffusion_unet_forward.1} parent=119 // pred_check_branch
        %763 = sbr.rel (%p761) target = $region128
      $region127: #{diffusion_unet_forward.1} parent=119 // pred_region
        %p764 = scmp.lt.s32.totalorder %s34, 1
        %s765 = scalar_select %p764, %s34, 1
        %s766 = smul.addr %s765, 2
        %s767 = smul.addr %s766, 8
        %s768 = scalar_lea.vmem %s1, %s767
      $region128: #{diffusion_unet_forward.1} parent=119 // pred_fallthru
        _
    $region120: #{diffusion_unet_forward.1} parent=5 // pred_fallthru
      _
    %p769 = scmp.le.s32.totalorder 1, %s34
    %p770 = scmp.lt.s32.totalorder %s34, 3
    %p771 = pnand %p769, %p770
    %p772 = pneg %p771
    // Predicated region
    $region129: #{diffusion_unet_forward.1} parent=5 // pred_check
      _
    $region130: #{diffusion_unet_forward.1} parent=5 // pred_check_branch
      %774 = sbr.rel (%p771) target = $region132
    $region131: #{diffusion_unet_forward.1} parent=5 // pred_region
      %s775 = ssub.s32 %s34, 1
      %p776 = scmp.lt.s32.totalorder %s39, 1
      %s777 = scalar_select %p776, %s39, 1
      %s778 = scalar_lea.vmem %s0, %s777
      %p779 = pneg %p60
      %p780 = pneg %p57
      %p781 = scmp.lt.s32.totalorder %s39, 1
      %s782 = scalar_select %p781, %s39, 1
      %s783 = smul.addr %s782, 2
      %s784 = smul.addr %s783, 8
      %s785 = scalar_lea.vmem %s1, %s784
      %p786 = pneg %p86
      %p787 = pneg %p83
      %p788 = pneg %p107
      %p789 = pneg %p104
      %p790 = pneg %p128
      %p791 = pneg %p125
      %p792 = pneg %p149
      %p793 = pneg %p146
      %p794 = pneg %p170
      %p795 = pneg %p167
      %p796 = pneg %p191
      %p797 = pneg %p188
      %p798 = pneg %p212
      %p799 = pneg %p209
      %p800 = pneg %p233
      %p801 = pneg %p230
      %p802 = pneg %p254
      %p803 = pneg %p251
      %p804 = pneg %p275
      %p805 = pneg %p272
      %p806 = pneg %p296
      %p807 = pneg %p293
      %p808 = pneg %p317
      %p809 = pneg %p314
      %p810 = pneg %p338
      %p811 = pneg %p335
      %p812 = pneg %p359
      %p813 = pneg %p356
      %p814 = pneg %p380
      %p815 = pneg %p377
      %p816 = pneg %p401
      %p817 = pneg %p398
      %p818 = pneg %p422
      %p819 = pneg %p419
      %p820 = pneg %p443
      %p821 = pneg %p440
      %p822 = pneg %p464
      %p823 = pneg %p461
      %p824 = pneg %p485
      %p825 = pneg %p482
      %p826 = pneg %p506
      %p827 = pneg %p503
      %p828 = pneg %p527
      %p829 = pneg %p524
      %p830 = pneg %p548
      %p831 = pneg %p545
      %p832 = pneg %p569
      %p833 = pneg %p566
      %p834 = pneg %p590
      %p835 = pneg %p587
      %p836 = pneg %p611
      %p837 = pneg %p608
      %p838 = pneg %p632
      %p839 = pneg %p629
      %p840 = pneg %p658
      %p841 = pneg %p655
      %p842 = scmp.lt.s32.totalorder %s39, 1
      %s843 = scalar_select %p842, %s39, 1
      %s844 = smul.addr %s843, 2
      %s845 = smul.addr %s844, 4
      %s846 = scalar_lea.vmem %s28, %s845
      %p847 = scmp.lt.s32.totalorder %s39, 1
      %s848 = scalar_select %p847, %s39, 1
      %s849 = scalar_lea.vmem %s0, %s848
      %p850 = scmp.lt.s32.totalorder %s39, 1
      %s851 = scalar_select %p850, %s39, 1
      %s852 = smul.addr %s851, 2
      %s853 = smul.addr %s852, 8
      %s854 = scalar_lea.vmem %s1, %s853
      %p855 = scmp.lt.s32.totalorder %s39, 1
      %s856 = scalar_select %p855, %s39, 1
      %s857 = smul.addr %s856, 2
      %s858 = smul.addr %s857, 4
      %s859 = scalar_lea.vmem %s28, %s858
      %v861 = vld [vmem:[%s9] sm:$0x3]
      %s862 = scalar_lea.vmem %s9, 2
      %v863 = vld [vmem:[%s862] sm:$0x3]
      %s864 = scalar_lea.vmem %s9, 4
      %v865 = vld [vmem:[%s864] sm:$0x3]
      %s866 = scalar_lea.vmem %s9, 6
      %v867 = vld [vmem:[%s866] sm:$0x3]
      %s868 = scalar_lea.vmem %s9, 10
      %v869 = vld [vmem:[%s868] sm:$0x3]
      %s870 = scalar_lea.vmem %s9, 12
      %v871 = vld [vmem:[%s870] sm:$0x3]
      %s872 = scalar_lea.vmem %s9, 14
      %v873 = vld [vmem:[%s872] sm:$0x3]
      %s874 = scalar_lea.vmem %s9, 16
      %v875 = vld [vmem:[%s874] sm:$0x3]
      %v876 = vld [vmem:[%s849] sm:$0x1]
      %v877 = vand.u32 2147483647, %v876
      %vm878 = vcmp.le.f32.partialorder %v877, 0.7853982
      %vm879 = vcmp.lt.s32.totalorder %v876, 0
      %v880 = vand.u32 %v876, 2139095040
      %v881 = vshrl.u32 %v880, 23
      %v882 = vsub.s32 %v881, 127
      %v883 = vand.u32 2147483647, %v876
      %v884 = vand.u32 %v883, 8388607
      %v885 = vor.u32 %v884, 8388608
      %v886 = vsub.s32 0, %v885
      %v887 = vadd.s32 %v882, 1
      %vm888 = vcmp.gt.s32.totalorder %v887, 0
      %v889 = vsel %vm888, %v887, 0
      %v890 = vshrl.u32 %v889, 5
      %v891 = vand.u32 %v889, 31
      %v892 = vsub.s32 32, %v891
      %v893 = vshrl.u32 683565275, %v892
      %v894 = vshll.u32 683565275, %v891
      %v895 = vshrl.u32 2475754826, %v892
      %v896 = vor.u32 %v894, %v895
      %v897 = vshll.u32 2475754826, %v891
      %v898 = vshrl.u32 2131351028, %v892
      %v899 = vor.u32 %v897, %v898
      %v900 = vshll.u32 2131351028, %v891
      %v901 = vshrl.u32 2102212464, %v892
      %v902 = vor.u32 %v900, %v901
      %v903 = vshll.u32 2102212464, %v891
      %v904 = vshrl.u32 920167782, %v892
      %v905 = vor.u32 %v903, %v904
      %v906 = vshll.u32 920167782, %v891
      %v907 = vshrl.u32 1326507024, %v892
      %v908 = vor.u32 %v906, %v907
      %vm909 = vcmp.lt.s32.totalorder %v890, 1
      %vm910 = vcmp.lt.s32.totalorder %v890, 2
      %vm911 = vcmp.lt.s32.totalorder %v890, 3
      %vm912 = vcmp.lt.s32.totalorder %v890, 4
      %v913 = vsel %vm909, %v893, %v896
      %v914 = vsel %vm912, %v902, 2102212464
      %v915 = vsel %vm911, %v899, %v914
      %v916 = vsel %vm910, %v913, %v915
      %v917 = vsel %vm909, %v896, %v899
      %v918 = vsel %vm912, %v905, 920167782
      %v919 = vsel %vm911, %v902, %v918
      %v920 = vsel %vm910, %v917, %v919
      %v921 = vsel %vm909, %v899, %v902
      %v922 = vsel %vm912, %v908, 1326507024
      %v923 = vsel %vm911, %v905, %v922
      %v924 = vsel %vm910, %v921, %v923
      %v925 = vshll.u32 %v885, 8
      %v926 = vand.u32 %v925, 65535
      %v927 = vshrl.u32 %v925, 16
      %v928 = vand.u32 %v924, 65535
      %v929 = vshrl.u32 %v924, 16
      %v930 = vmul.u32 %v926, %v928
      %v931 = vmul.u32 %v926, %v929
      %v932 = vmul.u32 %v927, %v928
      %v933 = vmul.u32 %v927, %v929
      %v934 = vshll.u32 %v931, 16
      %v935 = vshrl.u32 %v931, 16
      %v936 = vshll.u32 %v932, 16
      %v937 = vshrl.u32 %v932, 16
      %vm938 = vc.u32 %v930, %v934
      %v939 = vsel %vm938, 1, 0
      %v940 = vadd.s32 %v930, %v934
      %v941 = vadd.s32 %v933, %v939
      %vm942 = vc.u32 %v940, %v936
      %v943 = vsel %vm942, 1, 0
      %v944 = vadd.s32 %v940, %v936
      %v945 = vadd.s32 %v941, %v943
      %v946 = vadd.s32 %v945, %v935
      %v947 = vadd.s32 %v946, %v937
      %v948 = vand.u32 %v925, 65535
      %v949 = vshrl.u32 %v925, 16
      %v950 = vand.u32 %v920, 65535
      %v951 = vshrl.u32 %v920, 16
      %v952 = vmul.u32 %v948, %v950
      %v953 = vmul.u32 %v948, %v951
      %v954 = vmul.u32 %v949, %v950
      %v955 = vmul.u32 %v949, %v951
      %v956 = vshll.u32 %v953, 16
      %v957 = vshrl.u32 %v953, 16
      %v958 = vshll.u32 %v954, 16
      %v959 = vshrl.u32 %v954, 16
      %vm960 = vc.u32 %v952, %v956
      %v961 = vsel %vm960, 1, 0
      %v962 = vadd.s32 %v952, %v956
      %v963 = vadd.s32 %v955, %v961
      %vm964 = vc.u32 %v962, %v958
      %v965 = vsel %vm964, 1, 0
      %v966 = vadd.s32 %v962, %v958
      %v967 = vadd.s32 %v963, %v965
      %v968 = vadd.s32 %v967, %v957
      %v969 = vadd.s32 %v968, %v959
      %v970 = vmul.u32 %v925, %v916
      %v971 = vadd.s32 %v947, %v966
      %vm972 = vc.u32 %v947, %v966
      %v973 = vadd.s32 %v969, 1
      %v974 = vsel %vm972, %v973, %v969
      %v975 = vadd.s32 %v970, %v974
      %v976 = vadd.s32 %v975, 536870912
      %v977 = vshrl.u32 %v976, 30
      %v978 = vshll.u32 %v977, 30
      %v979 = vsub.s32 %v975, %v978
      %vm980 = vcmp.lt.s32.totalorder %v979, 0
      %v981 = vsub.s32 0, %v979
      %v982 = vsel %vm980, %v981, %v979
      %v983 = vclz %v982
      %v984 = vsub.s32 %v983, 2
      %vm985 = vcmp.gt.s32.totalorder 0, %v984
      %v986 = vsel %vm985, 0, %v984
      %v987 = vsub.s32 32, %v986
      %v988 = vshll.u32 %v979, %v986
      %v989 = vshrl.u32 %v971, %v987
      %v990 = vor.u32 %v988, %v989
      %v991 = vsub.s32 4294967266, %v986
      %v992 = vadd.s32 %v991, 127
      %v993 = vshll.u32 %v992, 23
      %v994 = vor.u32 4788187, %v993
      %v995 = vand.u32 2147483647, %v994
      %v997 = vcvt.s32.f32 %v990
      %v998 = vmul.f32 %v997, %v995
      %v999 = vxor.u32 %v998, 2147483648
      %v1000 = vsel %vm879, %v999, %v998
      %v1001 = vsub.s32 4, %v977
      %v1002 = vsel %vm879, %v1001, %v977
      %v1003 = vsel %vm878, %v876, %v1000
      %v1004 = vsel %vm878, 0, %v1002
      %v1005 = vmul.f32 %v1003, %v1003
      %v1006 = vmul.f32 %v1005, -0.001358992
      %v1007 = vadd.f32 %v1006, 0.041655596
      %v1008 = vmul.f32 %v1005, %v1007
      %v1009 = vadd.f32 %v1008, -0.4999988
      %v1010 = vmul.f32 %v1005, %v1009
      %v1011 = vadd.f32 1.0, %v1010
      %v1012 = vmul.f32 %v1003, %v1003
      %v1013 = vmul.f32 %v1012, -0.00019511016
      %v1014 = vadd.f32 %v1013, 0.008332121
      %v1015 = vmul.f32 %v1012, %v1014
      %v1016 = vadd.f32 %v1015, -0.16666654
      %v1017 = vmul.f32 %v1012, %v1016
      %v1018 = vadd.f32 %v1017, 1.0
      %v1019 = vmul.f32 %v1018, %v1003
      %vm1020 = vweird.f32 %v876
      %v1021 = vadd.s32 %v1004, 3
      %v1022 = vand.u32 %v1021, 3
      %vm1023 = vcmp.lt.s32.totalorder %v1022, 2
      %vm1024 = vcmp.eq.s32.totalorder %v1022, 0
      %v1025 = vxor.u32 %v1019, 2147483648
      %v1026 = vsel %vm1024, %v1011, %v1025
      %vm1027 = vcmp.eq.s32.totalorder %v1022, 2
      %v1028 = vxor.u32 %v1011, 2147483648
      %v1029 = vsel %vm1027, %v1028, %v1019
      %v1030 = vsel %vm1023, %v1026, %v1029
      %v1031 = vsel %vm1020, nan, %v1030
      %v1032 = vand.u32 2147483647, %v876
      %vm1033 = vcmp.le.f32.partialorder %v1032, 0.7853982
      %vm1034 = vcmp.lt.s32.totalorder %v876, 0
      %v1035 = vand.u32 %v876, 2139095040
      %v1036 = vshrl.u32 %v1035, 23
      %v1037 = vsub.s32 %v1036, 127
      %v1038 = vand.u32 2147483647, %v876
      %v1039 = vand.u32 %v1038, 8388607
      %v1040 = vor.u32 %v1039, 8388608
      %v1041 = vsub.s32 0, %v1040
      %v1042 = vadd.s32 %v1037, 1
      %vm1043 = vcmp.gt.s32.totalorder %v1042, 0
      %v1044 = vsel %vm1043, %v1042, 0
      %v1045 = vshrl.u32 %v1044, 5
      %v1046 = vand.u32 %v1044, 31
      %v1047 = vsub.s32 32, %v1046
      %v1048 = vshrl.u32 683565275, %v1047
      %v1049 = vshll.u32 683565275, %v1046
      %v1050 = vshrl.u32 2475754826, %v1047
      %v1051 = vor.u32 %v1049, %v1050
      %v1052 = vshll.u32 2475754826, %v1046
      %v1053 = vshrl.u32 2131351028, %v1047
      %v1054 = vor.u32 %v1052, %v1053
      %v1055 = vshll.u32 2131351028, %v1046
      %v1056 = vshrl.u32 2102212464, %v1047
      %v1057 = vor.u32 %v1055, %v1056
      %v1058 = vshll.u32 2102212464, %v1046
      %v1059 = vshrl.u32 920167782, %v1047
      %v1060 = vor.u32 %v1058, %v1059
      %v1061 = vshll.u32 920167782, %v1046
      %v1062 = vshrl.u32 1326507024, %v1047
      %v1063 = vor.u32 %v1061, %v1062
      %vm1064 = vcmp.lt.s32.totalorder %v1045, 1
      %vm1065 = vcmp.lt.s32.totalorder %v1045, 2
      %vm1066 = vcmp.lt.s32.totalorder %v1045, 3
      %vm1067 = vcmp.lt.s32.totalorder %v1045, 4
      %v1068 = vsel %vm1064, %v1048, %v1051
      %v1069 = vsel %vm1067, %v1057, 2102212464
      %v1070 = vsel %vm1066, %v1054, %v1069
      %v1071 = vsel %vm1065, %v1068, %v1070
      %v1072 = vsel %vm1064, %v1051, %v1054
      %v1073 = vsel %vm1067, %v1060, 920167782
      %v1074 = vsel %vm1066, %v1057, %v1073
      %v1075 = vsel %vm1065, %v1072, %v1074
      %v1076 = vsel %vm1064, %v1054, %v1057
      %v1077 = vsel %vm1067, %v1063, 1326507024
      %v1078 = vsel %vm1066, %v1060, %v1077
      %v1079 = vsel %vm1065, %v1076, %v1078
      %v1080 = vshll.u32 %v1040, 8
      %v1081 = vand.u32 %v1080, 65535
      %v1082 = vshrl.u32 %v1080, 16
      %v1083 = vand.u32 %v1079, 65535
      %v1084 = vshrl.u32 %v1079, 16
      %v1085 = vmul.u32 %v1081, %v1083
      %v1086 = vmul.u32 %v1081, %v1084
      %v1087 = vmul.u32 %v1082, %v1083
      %v1088 = vmul.u32 %v1082, %v1084
      %v1089 = vshll.u32 %v1086, 16
      %v1090 = vshrl.u32 %v1086, 16
      %v1091 = vshll.u32 %v1087, 16
      %v1092 = vshrl.u32 %v1087, 16
      %vm1093 = vc.u32 %v1085, %v1089
      %v1094 = vsel %vm1093, 1, 0
      %v1095 = vadd.s32 %v1085, %v1089
      %v1096 = vadd.s32 %v1088, %v1094
      %vm1097 = vc.u32 %v1095, %v1091
      %v1098 = vsel %vm1097, 1, 0
      %v1099 = vadd.s32 %v1095, %v1091
      %v1100 = vadd.s32 %v1096, %v1098
      %v1101 = vadd.s32 %v1100, %v1090
      %v1102 = vadd.s32 %v1101, %v1092
      %v1103 = vand.u32 %v1080, 65535
      %v1104 = vshrl.u32 %v1080, 16
      %v1105 = vand.u32 %v1075, 65535
      %v1106 = vshrl.u32 %v1075, 16
      %v1107 = vmul.u32 %v1103, %v1105
      %v1108 = vmul.u32 %v1103, %v1106
      %v1109 = vmul.u32 %v1104, %v1105
      %v1110 = vmul.u32 %v1104, %v1106
      %v1111 = vshll.u32 %v1108, 16
      %v1112 = vshrl.u32 %v1108, 16
      %v1113 = vshll.u32 %v1109, 16
      %v1114 = vshrl.u32 %v1109, 16
      %vm1115 = vc.u32 %v1107, %v1111
      %v1116 = vsel %vm1115, 1, 0
      %v1117 = vadd.s32 %v1107, %v1111
      %v1118 = vadd.s32 %v1110, %v1116
      %vm1119 = vc.u32 %v1117, %v1113
      %v1120 = vsel %vm1119, 1, 0
      %v1121 = vadd.s32 %v1117, %v1113
      %v1122 = vadd.s32 %v1118, %v1120
      %v1123 = vadd.s32 %v1122, %v1112
      %v1124 = vadd.s32 %v1123, %v1114
      %v1125 = vmul.u32 %v1080, %v1071
      %v1126 = vadd.s32 %v1102, %v1121
      %vm1127 = vc.u32 %v1102, %v1121
      %v1128 = vadd.s32 %v1124, 1
      %v1129 = vsel %vm1127, %v1128, %v1124
      %v1130 = vadd.s32 %v1125, %v1129
      %v1131 = vadd.s32 %v1130, 536870912
      %v1132 = vshrl.u32 %v1131, 30
      %v1133 = vshll.u32 %v1132, 30
      %v1134 = vsub.s32 %v1130, %v1133
      %vm1135 = vcmp.lt.s32.totalorder %v1134, 0
      %v1136 = vsub.s32 0, %v1134
      %v1137 = vsel %vm1135, %v1136, %v1134
      %v1138 = vclz %v1137
      %v1139 = vsub.s32 %v1138, 2
      %vm1140 = vcmp.gt.s32.totalorder 0, %v1139
      %v1141 = vsel %vm1140, 0, %v1139
      %v1142 = vsub.s32 32, %v1141
      %v1143 = vshll.u32 %v1134, %v1141
      %v1144 = vshrl.u32 %v1126, %v1142
      %v1145 = vor.u32 %v1143, %v1144
      %v1146 = vsub.s32 4294967266, %v1141
      %v1147 = vadd.s32 %v1146, 127
      %v1148 = vshll.u32 %v1147, 23
      %v1149 = vor.u32 4788187, %v1148
      %v1150 = vand.u32 2147483647, %v1149
      %v1152 = vcvt.s32.f32 %v1145
      %v1153 = vmul.f32 %v1152, %v1150
      %v1154 = vxor.u32 %v1153, 2147483648
      %v1155 = vsel %vm1034, %v1154, %v1153
      %v1156 = vsub.s32 4, %v1132
      %v1157 = vsel %vm1034, %v1156, %v1132
      %v1158 = vsel %vm1033, %v876, %v1155
      %v1159 = vsel %vm1033, 0, %v1157
      %v1160 = vmul.f32 %v1158, %v1158
      %v1161 = vmul.f32 %v1160, -0.001358992
      %v1162 = vadd.f32 %v1161, 0.041655596
      %v1163 = vmul.f32 %v1160, %v1162
      %v1164 = vadd.f32 %v1163, -0.4999988
      %v1165 = vmul.f32 %v1160, %v1164
      %v1166 = vadd.f32 1.0, %v1165
      %v1167 = vmul.f32 %v1158, %v1158
      %v1168 = vmul.f32 %v1167, -0.00019511016
      %v1169 = vadd.f32 %v1168, 0.008332121
      %v1170 = vmul.f32 %v1167, %v1169
      %v1171 = vadd.f32 %v1170, -0.16666654
      %v1172 = vmul.f32 %v1167, %v1171
      %v1173 = vadd.f32 %v1172, 1.0
      %v1174 = vmul.f32 %v1173, %v1158
      %vm1175 = vweird.f32 %v876
      %v1176 = vand.u32 %v1159, 3
      %vm1177 = vcmp.lt.s32.totalorder %v1176, 2
      %vm1178 = vcmp.eq.s32.totalorder %v1176, 0
      %v1179 = vxor.u32 %v1174, 2147483648
      %v1180 = vsel %vm1178, %v1166, %v1179
      %vm1181 = vcmp.eq.s32.totalorder %v1176, 2
      %v1182 = vxor.u32 %v1166, 2147483648
      %v1183 = vsel %vm1181, %v1182, %v1174
      %v1184 = vsel %vm1177, %v1180, %v1183
      %v1185 = vsel %vm1175, nan, %v1184
      %v1186 = vld [vmem:[%s2] sm:$0xff]
      %v1187 = vld [vmem:[%s2 + $0x8] sm:$0xff]
      %v1188 = vld [vmem:[%s2 + $0x10] sm:$0xff]
      %v1189 = vld [vmem:[%s2 + $0x18] sm:$0xff]
      %v1190 = vld [vmem:[%s2 + $0x20] sm:$0xff]
      %v1191 = vld [vmem:[%s2 + $0x28] sm:$0xff]
      %v1192 = vld [vmem:[%s2 + $0x30] sm:$0xff]
      %v1193 = vld [vmem:[%s2 + $0x38] sm:$0xff]
      %v1195 = vperm.slane %v1031, 0
      %v1197 = vmul.f32 %v1186, %v1195
      %v1198 = vmul.f32 %v1187, %v1195
      %v1199 = vmul.f32 %v1188, %v1195
      %v1200 = vmul.f32 %v1189, %v1195
      %v1201 = vmul.f32 %v1190, %v1195
      %v1202 = vmul.f32 %v1191, %v1195
      %v1203 = vmul.f32 %v1192, %v1195
      %v1204 = vmul.f32 %v1193, %v1195
      %vm1205 = vcmask 261120
      %v1206 = vsel %vm1205, %v1197, 0.0
      %1207 = vadd.xlane.f32.xlu0 %v1206
      %v1208 = vpop.xlane.xlu0 %1207
      %v1209 = vsel %vm1205, %v1198, 0.0
      %1210 = vadd.xlane.f32.xlu0 %v1209
      %v1211 = vpop.xlane.xlu0 %1210
      %v1212 = vsel %vm1205, %v1199, 0.0
      %1213 = vadd.xlane.f32.xlu0 %v1212
      %v1214 = vpop.xlane.xlu0 %1213
      %v1215 = vsel %vm1205, %v1200, 0.0
      %1216 = vadd.xlane.f32.xlu0 %v1215
      %v1217 = vpop.xlane.xlu0 %1216
      %v1218 = vsel %vm1205, %v1201, 0.0
      %1219 = vadd.xlane.f32.xlu0 %v1218
      %v1220 = vpop.xlane.xlu0 %1219
      %v1221 = vsel %vm1205, %v1202, 0.0
      %1222 = vadd.xlane.f32.xlu0 %v1221
      %v1223 = vpop.xlane.xlu0 %1222
      %v1224 = vsel %vm1205, %v1203, 0.0
      %1225 = vadd.xlane.f32.xlu0 %v1224
      %v1226 = vpop.xlane.xlu0 %1225
      %v1227 = vsel %vm1205, %v1204, 0.0
      %1228 = vadd.xlane.f32.xlu0 %v1227
      %v1229 = vpop.xlane.xlu0 %1228
      %v1230 = vld [vmem:[%s3] sm:$0xff]
      %v1231 = vld [vmem:[%s3 + $0x8] sm:$0xff]
      %v1232 = vld [vmem:[%s3 + $0x10] sm:$0xff]
      %v1233 = vld [vmem:[%s3 + $0x18] sm:$0xff]
      %v1234 = vld [vmem:[%s3 + $0x20] sm:$0xff]
      %v1235 = vld [vmem:[%s3 + $0x28] sm:$0xff]
      %v1236 = vld [vmem:[%s3 + $0x30] sm:$0xff]
      %v1237 = vld [vmem:[%s3 + $0x38] sm:$0xff]
      %v1239 = vperm.slane %v1185, 0
      %v1241 = vmul.f32 %v1230, %v1239
      %v1242 = vmul.f32 %v1231, %v1239
      %v1243 = vmul.f32 %v1232, %v1239
      %v1244 = vmul.f32 %v1233, %v1239
      %v1245 = vmul.f32 %v1234, %v1239
      %v1246 = vmul.f32 %v1235, %v1239
      %v1247 = vmul.f32 %v1236, %v1239
      %v1248 = vmul.f32 %v1237, %v1239
      %v1249 = vsel %vm1205, %v1241, 0.0
      %1250 = vadd.xlane.f32.xlu0 %v1249
      %v1251 = vpop.xlane.xlu0 %1250
      %v1252 = vsel %vm1205, %v1242, 0.0
      %1253 = vadd.xlane.f32.xlu0 %v1252
      %v1254 = vpop.xlane.xlu0 %1253
      %v1255 = vsel %vm1205, %v1243, 0.0
      %1256 = vadd.xlane.f32.xlu0 %v1255
      %v1257 = vpop.xlane.xlu0 %1256
      %v1258 = vsel %vm1205, %v1244, 0.0
      %1259 = vadd.xlane.f32.xlu0 %v1258
      %v1260 = vpop.xlane.xlu0 %1259
      %v1261 = vsel %vm1205, %v1245, 0.0
      %1262 = vadd.xlane.f32.xlu0 %v1261
      %v1263 = vpop.xlane.xlu0 %1262
      %v1264 = vsel %vm1205, %v1246, 0.0
      %1265 = vadd.xlane.f32.xlu0 %v1264
      %v1266 = vpop.xlane.xlu0 %1265
      %v1267 = vsel %vm1205, %v1247, 0.0
      %1268 = vadd.xlane.f32.xlu0 %v1267
      %v1269 = vpop.xlane.xlu0 %1268
      %v1270 = vsel %vm1205, %v1248, 0.0
      %1271 = vadd.xlane.f32.xlu0 %v1270
      %v1272 = vpop.xlane.xlu0 %1271
      %v1273 = vadd.f32 %v1208, %v1251
      %v1274 = vadd.f32 %v1211, %v1254
      %v1275 = vadd.f32 %v1214, %v1257
      %v1276 = vadd.f32 %v1217, %v1260
      %v1277 = vadd.f32 %v1220, %v1263
      %v1278 = vadd.f32 %v1223, %v1266
      %v1279 = vadd.f32 %v1226, %v1269
      %v1280 = vadd.f32 %v1229, %v1272
      %v1281 = vld [vmem:[%s4] sm:$0xff]
      %v1282 = vld [vmem:[%s4 + $0x8] sm:$0xff]
      %v1283 = vld [vmem:[%s4 + $0x10] sm:$0xff]
      %v1284 = vld [vmem:[%s4 + $0x18] sm:$0xff]
      %v1285 = vld [vmem:[%s4 + $0x20] sm:$0xff]
      %v1286 = vld [vmem:[%s4 + $0x28] sm:$0xff]
      %v1287 = vld [vmem:[%s4 + $0x30] sm:$0xff]
      %v1288 = vld [vmem:[%s4 + $0x38] sm:$0xff]
      %v1289 = vadd.f32 %v1273, %v1281
      %v1290 = vadd.f32 %v1274, %v1282
      %v1291 = vadd.f32 %v1275, %v1283
      %v1292 = vadd.f32 %v1276, %v1284
      %v1293 = vadd.f32 %v1277, %v1285
      %v1294 = vadd.f32 %v1278, %v1286
      %v1295 = vadd.f32 %v1279, %v1287
      %v1296 = vadd.f32 %v1280, %v1288
      %v1297 = vmax.f32 %v1289, 0.0
      %v1298 = vmax.f32 %v1290, 0.0
      %v1299 = vmax.f32 %v1291, 0.0
      %v1300 = vmax.f32 %v1292, 0.0
      %v1301 = vmax.f32 %v1293, 0.0
      %v1302 = vmax.f32 %v1294, 0.0
      %v1303 = vmax.f32 %v1295, 0.0
      %v1304 = vmax.f32 %v1296, 0.0
      %v1305 = vld [vmem:[%s5] sm:$0xff]
      %v1306 = vld [vmem:[%s5 + $0x8] sm:$0xff]
      %v1307 = vld [vmem:[%s5 + $0x10] sm:$0xff]
      %v1308 = vld [vmem:[%s5 + $0x18] sm:$0xff]
      %v1309 = vld [vmem:[%s5 + $0x20] sm:$0xff]
      %v1310 = vld [vmem:[%s5 + $0x28] sm:$0xff]
      %v1311 = vld [vmem:[%s5 + $0x30] sm:$0xff]
      %v1312 = vld [vmem:[%s5 + $0x38] sm:$0xff]
      %1314 = vset.pattern.permute.xlu0 0
      %1315 = vperm.xlu0 %1314, %v1297
      %v1316 = vpop.permute.xlu0 %1315
      %1319 = vset.pattern.permute.xlu0 0
      %1320 = vperm.xlu0 %1319, %v1298
      %v1321 = vpop.permute.xlu0 %1320
      %1324 = vset.pattern.permute.xlu0 0
      %1325 = vperm.xlu0 %1324, %v1299
      %v1326 = vpop.permute.xlu0 %1325
      %1329 = vset.pattern.permute.xlu0 0
      %1330 = vperm.xlu0 %1329, %v1300
      %v1331 = vpop.permute.xlu0 %1330
      %1334 = vset.pattern.permute.xlu0 0
      %1335 = vperm.xlu0 %1334, %v1301
      %v1336 = vpop.permute.xlu0 %1335
      %1339 = vset.pattern.permute.xlu0 0
      %1340 = vperm.xlu0 %1339, %v1302
      %v1341 = vpop.permute.xlu0 %1340
      %1344 = vset.pattern.permute.xlu0 0
      %1345 = vperm.xlu0 %1344, %v1303
      %v1346 = vpop.permute.xlu0 %1345
      %1349 = vset.pattern.permute.xlu0 0
      %1350 = vperm.xlu0 %1349, %v1304
      %v1351 = vpop.permute.xlu0 %1350
      %v1353 = vmul.f32 %v1305, %v1316
      %v1354 = vmul.f32 %v1306, %v1321
      %v1355 = vmul.f32 %v1307, %v1326
      %v1356 = vmul.f32 %v1308, %v1331
      %v1357 = vmul.f32 %v1309, %v1336
      %v1358 = vmul.f32 %v1310, %v1341
      %v1359 = vmul.f32 %v1311, %v1346
      %v1360 = vmul.f32 %v1312, %v1351
      %v1361 = vsel %vm1205, %v1353, 0.0
      %v1362 = vsel %vm1205, %v1354, 0.0
      %v1363 = vadd.f32 %v1361, %v1362
      %v1364 = vsel %vm1205, %v1355, 0.0
      %v1365 = vadd.f32 %v1363, %v1364
      %v1366 = vsel %vm1205, %v1356, 0.0
      %v1367 = vadd.f32 %v1365, %v1366
      %v1368 = vsel %vm1205, %v1357, 0.0
      %v1369 = vadd.f32 %v1367, %v1368
      %v1370 = vsel %vm1205, %v1358, 0.0
      %v1371 = vadd.f32 %v1369, %v1370
      %v1372 = vsel %vm1205, %v1359, 0.0
      %v1373 = vadd.f32 %v1371, %v1372
      %v1374 = vsel %vm1205, %v1360, 0.0
      %v1375 = vadd.f32 %v1373, %v1374
      %v1376 = vrot.slane %v1375, 4
      %v1377 = vadd.f32 %v1375, %v1376
      %v1378 = vrot.slane %v1377, 2
      %v1379 = vadd.f32 %v1377, %v1378
      %v1380 = vrot.slane %v1379, 1
      %v1381 = vadd.f32 %v1379, %v1380
      %v1382 = vld [vmem:[%s6] sm:$0x1]
      %v1383 = vadd.f32 %v1381, %v1382
      %v1384 = vmax.f32 %v1383, 0.0
      %v1385 = vld [vmem:[%s7] sm:$0xff]
      %v1386 = vld [vmem:[%s7 + $0x8] sm:$0xff]
      %v1387 = vld [vmem:[%s7 + $0x10] sm:$0xff]
      %v1388 = vld [vmem:[%s7 + $0x18] sm:$0xff]
      %v1389 = vld [vmem:[%s7 + $0x20] sm:$0xff]
      %v1390 = vld [vmem:[%s7 + $0x28] sm:$0xff]
      %v1391 = vld [vmem:[%s7 + $0x30] sm:$0xff]
      %v1392 = vld [vmem:[%s7 + $0x38] sm:$0xff]
      %v1393 = vld [vmem:[%s7 + $0x40] sm:$0xff]
      %v1394 = vld [vmem:[%s7 + $0x48] sm:$0xff]
      %v1395 = vld [vmem:[%s7 + $0x50] sm:$0xff]
      %v1396 = vld [vmem:[%s7 + $0x58] sm:$0xff]
      %v1397 = vld [vmem:[%s7 + $0x60] sm:$0xff]
      %v1398 = vld [vmem:[%s7 + $0x68] sm:$0xff]
      %v1399 = vld [vmem:[%s7 + $0x70] sm:$0xff]
      %v1400 = vld [vmem:[%s7 + $0x78] sm:$0xff]
      %v1401 = vld [vmem:[%s7 + $0x80] sm:$0xff]
      %v1402 = vld [vmem:[%s7 + $0x88] sm:$0xff]
      %v1403 = vld [vmem:[%s7 + $0x90] sm:$0xff]
      %v1404 = vld [vmem:[%s7 + $0x98] sm:$0xff]
      %v1405 = vld [vmem:[%s7 + $0xa0] sm:$0xff]
      %v1406 = vld [vmem:[%s7 + $0xa8] sm:$0xff]
      %v1407 = vld [vmem:[%s7 + $0xb0] sm:$0xff]
      %v1408 = vld [vmem:[%s7 + $0xb8] sm:$0xff]
      %v1409 = vld [vmem:[%s7 + $0xc0] sm:$0xff]
      %v1410 = vld [vmem:[%s7 + $0xc8] sm:$0xff]
      %v1411 = vld [vmem:[%s7 + $0xd0] sm:$0xff]
      %v1412 = vld [vmem:[%s7 + $0xd8] sm:$0xff]
      %v1413 = vld [vmem:[%s7 + $0xe0] sm:$0xff]
      %v1414 = vld [vmem:[%s7 + $0xe8] sm:$0xff]
      %v1415 = vld [vmem:[%s7 + $0xf0] sm:$0xff]
      %v1416 = vld [vmem:[%s7 + $0xf8] sm:$0xff]
      %v1417 = vperm.slane %v1384, 0
      %v1418 = vmul.f32 %v1385, %v1417
      %v1419 = vmul.f32 %v1386, %v1417
      %v1420 = vmul.f32 %v1387, %v1417
      %v1421 = vmul.f32 %v1388, %v1417
      %v1422 = vmul.f32 %v1389, %v1417
      %v1423 = vmul.f32 %v1390, %v1417
      %v1424 = vmul.f32 %v1391, %v1417
      %v1425 = vmul.f32 %v1392, %v1417
      %v1426 = vmul.f32 %v1393, %v1417
      %v1427 = vmul.f32 %v1394, %v1417
      %v1428 = vmul.f32 %v1395, %v1417
      %v1429 = vmul.f32 %v1396, %v1417
      %v1430 = vmul.f32 %v1397, %v1417
      %v1431 = vmul.f32 %v1398, %v1417
      %v1432 = vmul.f32 %v1399, %v1417
      %v1433 = vmul.f32 %v1400, %v1417
      %v1434 = vmul.f32 %v1401, %v1417
      %v1435 = vmul.f32 %v1402, %v1417
      %v1436 = vmul.f32 %v1403, %v1417
      %v1437 = vmul.f32 %v1404, %v1417
      %v1438 = vmul.f32 %v1405, %v1417
      %v1439 = vmul.f32 %v1406, %v1417
      %v1440 = vmul.f32 %v1407, %v1417
      %v1441 = vmul.f32 %v1408, %v1417
      %v1442 = vmul.f32 %v1409, %v1417
      %v1443 = vmul.f32 %v1410, %v1417
      %v1444 = vmul.f32 %v1411, %v1417
      %v1445 = vmul.f32 %v1412, %v1417
      %v1446 = vmul.f32 %v1413, %v1417
      %v1447 = vmul.f32 %v1414, %v1417
      %v1448 = vmul.f32 %v1415, %v1417
      %v1449 = vmul.f32 %v1416, %v1417
      %v1450 = vsel %vm1205, %v1418, 0.0
      %1451 = vadd.xlane.f32.xlu0 %v1450
      %v1452 = vpop.xlane.xlu0 %1451
      %v1453 = vsel %vm1205, %v1419, 0.0
      %1454 = vadd.xlane.f32.xlu0 %v1453
      %v1455 = vpop.xlane.xlu0 %1454
      %v1456 = vsel %vm1205, %v1420, 0.0
      %1457 = vadd.xlane.f32.xlu0 %v1456
      %v1458 = vpop.xlane.xlu0 %1457
      %v1459 = vsel %vm1205, %v1421, 0.0
      %1460 = vadd.xlane.f32.xlu0 %v1459
      %v1461 = vpop.xlane.xlu0 %1460
      %v1462 = vsel %vm1205, %v1422, 0.0
      %1463 = vadd.xlane.f32.xlu0 %v1462
      %v1464 = vpop.xlane.xlu0 %1463
      %v1465 = vsel %vm1205, %v1423, 0.0
      %1466 = vadd.xlane.f32.xlu0 %v1465
      %v1467 = vpop.xlane.xlu0 %1466
      %v1468 = vsel %vm1205, %v1424, 0.0
      %1469 = vadd.xlane.f32.xlu0 %v1468
      %v1470 = vpop.xlane.xlu0 %1469
      %v1471 = vsel %vm1205, %v1425, 0.0
      %1472 = vadd.xlane.f32.xlu0 %v1471
      %v1473 = vpop.xlane.xlu0 %1472
      %v1474 = vsel %vm1205, %v1426, 0.0
      %1475 = vadd.xlane.f32.xlu0 %v1474
      %v1476 = vpop.xlane.xlu0 %1475
      %v1477 = vsel %vm1205, %v1427, 0.0
      %1478 = vadd.xlane.f32.xlu0 %v1477
      %v1479 = vpop.xlane.xlu0 %1478
      %v1480 = vsel %vm1205, %v1428, 0.0
      %1481 = vadd.xlane.f32.xlu0 %v1480
      %v1482 = vpop.xlane.xlu0 %1481
      %v1483 = vsel %vm1205, %v1429, 0.0
      %1484 = vadd.xlane.f32.xlu0 %v1483
      %v1485 = vpop.xlane.xlu0 %1484
      %v1486 = vsel %vm1205, %v1430, 0.0
      %1487 = vadd.xlane.f32.xlu0 %v1486
      %v1488 = vpop.xlane.xlu0 %1487
      %v1489 = vsel %vm1205, %v1431, 0.0
      %1490 = vadd.xlane.f32.xlu0 %v1489
      %v1491 = vpop.xlane.xlu0 %1490
      %v1492 = vsel %vm1205, %v1432, 0.0
      %1493 = vadd.xlane.f32.xlu0 %v1492
      %v1494 = vpop.xlane.xlu0 %1493
      %v1495 = vsel %vm1205, %v1433, 0.0
      %1496 = vadd.xlane.f32.xlu0 %v1495
      %v1497 = vpop.xlane.xlu0 %1496
      %v1498 = vsel %vm1205, %v1434, 0.0
      %1499 = vadd.xlane.f32.xlu0 %v1498
      %v1500 = vpop.xlane.xlu0 %1499
      %v1501 = vsel %vm1205, %v1435, 0.0
      %1502 = vadd.xlane.f32.xlu0 %v1501
      %v1503 = vpop.xlane.xlu0 %1502
      %v1504 = vsel %vm1205, %v1436, 0.0
      %1505 = vadd.xlane.f32.xlu0 %v1504
      %v1506 = vpop.xlane.xlu0 %1505
      %v1507 = vsel %vm1205, %v1437, 0.0
      %1508 = vadd.xlane.f32.xlu0 %v1507
      %v1509 = vpop.xlane.xlu0 %1508
      %v1510 = vsel %vm1205, %v1438, 0.0
      %1511 = vadd.xlane.f32.xlu0 %v1510
      %v1512 = vpop.xlane.xlu0 %1511
      %v1513 = vsel %vm1205, %v1439, 0.0
      %1514 = vadd.xlane.f32.xlu0 %v1513
      %v1515 = vpop.xlane.xlu0 %1514
      %v1516 = vsel %vm1205, %v1440, 0.0
      %1517 = vadd.xlane.f32.xlu0 %v1516
      %v1518 = vpop.xlane.xlu0 %1517
      %v1519 = vsel %vm1205, %v1441, 0.0
      %1520 = vadd.xlane.f32.xlu0 %v1519
      %v1521 = vpop.xlane.xlu0 %1520
      %v1522 = vsel %vm1205, %v1442, 0.0
      %1523 = vadd.xlane.f32.xlu0 %v1522
      %v1524 = vpop.xlane.xlu0 %1523
      %v1525 = vsel %vm1205, %v1443, 0.0
      %1526 = vadd.xlane.f32.xlu0 %v1525
      %v1527 = vpop.xlane.xlu0 %1526
      %v1528 = vsel %vm1205, %v1444, 0.0
      %1529 = vadd.xlane.f32.xlu0 %v1528
      %v1530 = vpop.xlane.xlu0 %1529
      %v1531 = vsel %vm1205, %v1445, 0.0
      %1532 = vadd.xlane.f32.xlu0 %v1531
      %v1533 = vpop.xlane.xlu0 %1532
      %v1534 = vsel %vm1205, %v1446, 0.0
      %1535 = vadd.xlane.f32.xlu0 %v1534
      %v1536 = vpop.xlane.xlu0 %1535
      %v1537 = vsel %vm1205, %v1447, 0.0
      %1538 = vadd.xlane.f32.xlu0 %v1537
      %v1539 = vpop.xlane.xlu0 %1538
      %v1540 = vsel %vm1205, %v1448, 0.0
      %1541 = vadd.xlane.f32.xlu0 %v1540
      %v1542 = vpop.xlane.xlu0 %1541
      %v1543 = vsel %vm1205, %v1449, 0.0
      %1544 = vadd.xlane.f32.xlu0 %v1543
      %v1545 = vpop.xlane.xlu0 %1544
      %v1546 = vld [vmem:[%s8] sm:$0xff]
      %v1547 = vld [vmem:[%s8 + $0x8] sm:$0xff]
      %v1548 = vld [vmem:[%s8 + $0x10] sm:$0xff]
      %v1549 = vld [vmem:[%s8 + $0x18] sm:$0xff]
      %v1550 = vld [vmem:[%s8 + $0x20] sm:$0xff]
      %v1551 = vld [vmem:[%s8 + $0x28] sm:$0xff]
      %v1552 = vld [vmem:[%s8 + $0x30] sm:$0xff]
      %v1553 = vld [vmem:[%s8 + $0x38] sm:$0xff]
      %v1554 = vld [vmem:[%s8 + $0x40] sm:$0xff]
      %v1555 = vld [vmem:[%s8 + $0x48] sm:$0xff]
      %v1556 = vld [vmem:[%s8 + $0x50] sm:$0xff]
      %v1557 = vld [vmem:[%s8 + $0x58] sm:$0xff]
      %v1558 = vld [vmem:[%s8 + $0x60] sm:$0xff]
      %v1559 = vld [vmem:[%s8 + $0x68] sm:$0xff]
      %v1560 = vld [vmem:[%s8 + $0x70] sm:$0xff]
      %v1561 = vld [vmem:[%s8 + $0x78] sm:$0xff]
      %v1562 = vld [vmem:[%s8 + $0x80] sm:$0xff]
      %v1563 = vld [vmem:[%s8 + $0x88] sm:$0xff]
      %v1564 = vld [vmem:[%s8 + $0x90] sm:$0xff]
      %v1565 = vld [vmem:[%s8 + $0x98] sm:$0xff]
      %v1566 = vld [vmem:[%s8 + $0xa0] sm:$0xff]
      %v1567 = vld [vmem:[%s8 + $0xa8] sm:$0xff]
      %v1568 = vld [vmem:[%s8 + $0xb0] sm:$0xff]
      %v1569 = vld [vmem:[%s8 + $0xb8] sm:$0xff]
      %v1570 = vld [vmem:[%s8 + $0xc0] sm:$0xff]
      %v1571 = vld [vmem:[%s8 + $0xc8] sm:$0xff]
      %v1572 = vld [vmem:[%s8 + $0xd0] sm:$0xff]
      %v1573 = vld [vmem:[%s8 + $0xd8] sm:$0xff]
      %v1574 = vld [vmem:[%s8 + $0xe0] sm:$0xff]
      %v1575 = vld [vmem:[%s8 + $0xe8] sm:$0xff]
      %v1576 = vld [vmem:[%s8 + $0xf0] sm:$0xff]
      %v1577 = vld [vmem:[%s8 + $0xf8] sm:$0xff]
      %v1578 = vadd.f32 %v1452, %v1546
      %v1579 = vadd.f32 %v1455, %v1547
      %v1580 = vadd.f32 %v1458, %v1548
      %v1581 = vadd.f32 %v1461, %v1549
      %v1582 = vadd.f32 %v1464, %v1550
      %v1583 = vadd.f32 %v1467, %v1551
      %v1584 = vadd.f32 %v1470, %v1552
      %v1585 = vadd.f32 %v1473, %v1553
      %v1586 = vadd.f32 %v1476, %v1554
      %v1587 = vadd.f32 %v1479, %v1555
      %v1588 = vadd.f32 %v1482, %v1556
      %v1589 = vadd.f32 %v1485, %v1557
      %v1590 = vadd.f32 %v1488, %v1558
      %v1591 = vadd.f32 %v1491, %v1559
      %v1592 = vadd.f32 %v1494, %v1560
      %v1593 = vadd.f32 %v1497, %v1561
      %v1594 = vadd.f32 %v1500, %v1562
      %v1595 = vadd.f32 %v1503, %v1563
      %v1596 = vadd.f32 %v1506, %v1564
      %v1597 = vadd.f32 %v1509, %v1565
      %v1598 = vadd.f32 %v1512, %v1566
      %v1599 = vadd.f32 %v1515, %v1567
      %v1600 = vadd.f32 %v1518, %v1568
      %v1601 = vadd.f32 %v1521, %v1569
      %v1602 = vadd.f32 %v1524, %v1570
      %v1603 = vadd.f32 %v1527, %v1571
      %v1604 = vadd.f32 %v1530, %v1572
      %v1605 = vadd.f32 %v1533, %v1573
      %v1606 = vadd.f32 %v1536, %v1574
      %v1607 = vadd.f32 %v1539, %v1575
      %v1608 = vadd.f32 %v1542, %v1576
      %v1609 = vadd.f32 %v1545, %v1577
      %v1610 = vld [vmem:[%s854] sm:$0xff]
      %v1611 = vld [vmem:[%s854 + $0x8] sm:$0xff]
      %v1612 = vld [vmem:[%s13] sm:$0xf]
      %v1613 = vld [vmem:[%s13 + $0x4] sm:$0xf]
      %v1614 = vld [vmem:[%s13 + $0x8] sm:$0xf]
      %v1615 = vld [vmem:[%s13 + $0xc] sm:$0xf]
      %1616 = vrot.lane.b32.xlu0 %v1610, 17
      %v1617 = vpop.permute.xlu0 %1616
      %1618 = vrot.lane.b32.xlu0 %v1611, 17
      %v1619 = vpop.permute.xlu0 %1618
      %v1620 = vlaneseq
      %v1621 = vand.u32 %v1620, 127
      %vm1622 = vcmp.lt.s32.totalorder %v1621, 17
      %v1623 = vsel %vm1622, %v1617, %v1619
      %v1624 = vsel %vm1622, %v1619, %v1617
      %v1626 = vperm.slane %v861, 0
      %v1627 = vperm.slane %v861, 1
      %v1630 = vmul.f32 %v1624, %v1626
      %v1631 = vmul.f32 %v1623, %v1627
      %1632 = vrot.lane.b32.xlu0 %v1610, 16
      %v1633 = vpop.permute.xlu0 %1632
      %1634 = vrot.lane.b32.xlu0 %v1611, 16
      %v1635 = vpop.permute.xlu0 %1634
      %vm1636 = vcmp.lt.s32.totalorder %v1621, 16
      %v1637 = vsel %vm1636, %v1633, %v1635
      %v1638 = vsel %vm1636, %v1635, %v1633
      %v1640 = vperm.slane %v863, 0
      %v1641 = vperm.slane %v863, 1
      %v1644 = vmul.f32 %v1638, %v1640
      %v1645 = vmul.f32 %v1637, %v1641
      %1646 = vrot.lane.b32.xlu0 %v1610, 15
      %v1647 = vpop.permute.xlu0 %1646
      %1648 = vrot.lane.b32.xlu0 %v1611, 15
      %v1649 = vpop.permute.xlu0 %1648
      %vm1650 = vcmp.lt.s32.totalorder %v1621, 15
      %v1651 = vsel %vm1650, %v1647, %v1649
      %v1652 = vsel %vm1650, %v1649, %v1647
      %v1654 = vperm.slane %v865, 0
      %v1655 = vperm.slane %v865, 1
      %v1658 = vmul.f32 %v1652, %v1654
      %v1659 = vmul.f32 %v1651, %v1655
      %1660 = vrot.lane.b32.xlu0 %v1610, 1
      %v1661 = vpop.permute.xlu0 %1660
      %1662 = vrot.lane.b32.xlu0 %v1611, 1
      %v1663 = vpop.permute.xlu0 %1662
      %vm1664 = vcmp.lt.s32.totalorder %v1621, 1
      %v1665 = vsel %vm1664, %v1661, %v1663
      %v1666 = vsel %vm1664, %v1663, %v1661
      %v1668 = vperm.slane %v867, 0
      %v1669 = vperm.slane %v867, 1
      %v1672 = vmul.f32 %v1666, %v1668
      %v1673 = vmul.f32 %v1665, %v1669
      %1674 = vrot.lane.b32.xlu0 %v1610, 127
      %v1675 = vpop.permute.xlu0 %1674
      %1676 = vrot.lane.b32.xlu0 %v1611, 127
      %v1677 = vpop.permute.xlu0 %1676
      %vm1678 = vcmp.lt.s32.totalorder %v1621, 127
      %v1679 = vsel %vm1678, %v1675, %v1677
      %v1680 = vsel %vm1678, %v1677, %v1675
      %v1682 = vperm.slane %v869, 0
      %v1683 = vperm.slane %v869, 1
      %v1686 = vmul.f32 %v1679, %v1682
      %v1687 = vmul.f32 %v1680, %v1683
      %1688 = vrot.lane.b32.xlu0 %v1610, 113
      %v1689 = vpop.permute.xlu0 %1688
      %1690 = vrot.lane.b32.xlu0 %v1611, 113
      %v1691 = vpop.permute.xlu0 %1690
      %vm1692 = vcmp.lt.s32.totalorder %v1621, 113
      %v1693 = vsel %vm1692, %v1689, %v1691
      %v1694 = vsel %vm1692, %v1691, %v1689
      %v1696 = vperm.slane %v871, 0
      %v1697 = vperm.slane %v871, 1
      %v1700 = vmul.f32 %v1693, %v1696
      %v1701 = vmul.f32 %v1694, %v1697
      %1702 = vrot.lane.b32.xlu0 %v1610, 112
      %v1703 = vpop.permute.xlu0 %1702
      %1704 = vrot.lane.b32.xlu0 %v1611, 112
      %v1705 = vpop.permute.xlu0 %1704
      %vm1706 = vcmp.lt.s32.totalorder %v1621, 112
      %v1707 = vsel %vm1706, %v1703, %v1705
      %v1708 = vsel %vm1706, %v1705, %v1703
      %v1710 = vperm.slane %v873, 0
      %v1711 = vperm.slane %v873, 1
      %v1714 = vmul.f32 %v1707, %v1710
      %v1715 = vmul.f32 %v1708, %v1711
      %1716 = vrot.lane.b32.xlu0 %v1610, 111
      %v1717 = vpop.permute.xlu0 %1716
      %1718 = vrot.lane.b32.xlu0 %v1611, 111
      %v1719 = vpop.permute.xlu0 %1718
      %vm1720 = vcmp.lt.s32.totalorder %v1621, 111
      %v1721 = vsel %vm1720, %v1717, %v1719
      %v1722 = vsel %vm1720, %v1719, %v1717
      %v1724 = vperm.slane %v875, 0
      %v1725 = vperm.slane %v875, 1
      %v1728 = vmul.f32 %v1721, %v1724
      %v1729 = vmul.f32 %v1722, %v1725
      %v1730 = vpack.c.bf16 %v1644, %v1630
      %v1731 = vpack.c.bf16 %v1645, %v1631
      %v1732 = vpack.c.bf16 %v1672, %v1658
      %v1733 = vpack.c.bf16 %v1673, %v1659
      %v1734 = vpack.c.bf16 %v1686, %v1610
      %v1735 = vpack.c.bf16 %v1687, %v1611
      %v1736 = vpack.c.bf16 %v1714, %v1700
      %v1737 = vpack.c.bf16 %v1715, %v1701
      %v1738 = vpack.c.bf16 %v1728, %v1728
      %v1739 = vpack.c.bf16 %v1729, %v1729
      %v1740 = vld [vmem:[%s14] sm:$0xff]
      %v1741 = vld [vmem:[%s14 + $0x8] sm:$0xff]
      %v1742 = vld [vmem:[%s14 + $0x10] sm:$0xff]
      %v1743 = vld [vmem:[%s14 + $0x18] sm:$0xff]
      %1745 = vset.pattern.permute.xlu0 0
      %1746 = vperm.xlu0 %1745, %v1740
      %v1747 = vpop.permute.xlu0 %1746
      %1750 = vset.pattern.permute.xlu0 0
      %1751 = vperm.xlu0 %1750, %v1741
      %v1752 = vpop.permute.xlu0 %1751
      %1755 = vset.pattern.permute.xlu0 0
      %1756 = vperm.xlu0 %1755, %v1742
      %v1757 = vpop.permute.xlu0 %1756
      %1760 = vset.pattern.permute.xlu0 0
      %1761 = vperm.xlu0 %1760, %v1743
      %v1762 = vpop.permute.xlu0 %1761
      %v1768 = vunpack.c.l.b16 %v1612
      %v1769 = vunpack.c.l.b16 %v1613
      %v1770 = vunpack.c.l.b16 %v1614
      %v1771 = vunpack.c.l.b16 %v1615
      %v1772 = vpack.c.b16 %v1769, %v1768
      %v1773 = vpack.c.b16 %v1771, %v1770
      %vm1774 = vcmask 588800
      %v1776 = vsel %vm1774, %v1772, 0
      %v1779 = vsel %vm1774, %v1773, 0
      %vm1781 = vcmask 1043456
      %v1783 = vsel %vm1781, %v1738, 0
      %v1786 = vsel %vm1781, %v1739, 0
      %1788 = vmatpush.bf16.msra.mxu0 0
      %1789 = vmatpush.bf16.msra.mxu0 0
      %1790 = vmatpush.bf16.msra.mxu0 0
      %1791 = vmatpush.bf16.msra.mxu0 %v1783
      %1792 = vmatpush.bf16.msra.mxu0 %v1736
      %1793 = vmatpush.bf16.msra.mxu0 %v1734
      %1794 = vmatpush.bf16.msra.mxu0 %v1732
      %1795 = vmatpush.bf16.msra.mxu0 %v1730
      %1796 = vmatmul.bf16.gmra.mxu0 %v1776
      %v1797 = vpop.f32.mrf.mxu0
      %v1798 = vadd.f32 %v1747, %v1797
      %v1799 = vpop.f32.mrf.mxu0
      %v1800 = vadd.f32 %v1752, %v1799
      %1801 = vmatmul.bf16.gmra.mxu0 %v1779
      %v1802 = vpop.f32.mrf.mxu0
      %v1803 = vadd.f32 %v1757, %v1802
      %v1804 = vpop.f32.mrf.mxu0
      %v1805 = vadd.f32 %v1762, %v1804
      %1806 = vdwg.mxu0
      %1807 = vmatpush.bf16.msra.mxu0 0
      %1808 = vmatpush.bf16.msra.mxu0 0
      %1809 = vmatpush.bf16.msra.mxu0 0
      %1810 = vmatpush.bf16.msra.mxu0 %v1786
      %1811 = vmatpush.bf16.msra.mxu0 %v1737
      %1812 = vmatpush.bf16.msra.mxu0 %v1735
      %1813 = vmatpush.bf16.msra.mxu0 %v1733
      %1814 = vmatpush.bf16.msra.mxu0 %v1731
      %1815 = vmatmul.bf16.gmra.mxu0 %v1776
      %v1816 = vpop.f32.mrf.mxu0
      %v1817 = vadd.f32 %v1747, %v1816
      %v1818 = vpop.f32.mrf.mxu0
      %v1819 = vadd.f32 %v1752, %v1818
      %1820 = vmatmul.bf16.gmra.mxu0 %v1779
      %v1821 = vpop.f32.mrf.mxu0
      %v1822 = vadd.f32 %v1757, %v1821
      %v1823 = vpop.f32.mrf.mxu0
      %v1824 = vadd.f32 %v1762, %v1823
      %1825 = vdwg.mxu0
      %v1826 = vmax.f32 %v1798, 0.0
      %v1827 = vmax.f32 %v1817, 0.0
      %v1828 = vmax.f32 %v1800, 0.0
      %v1829 = vmax.f32 %v1819, 0.0
      %v1830 = vmax.f32 %v1803, 0.0
      %v1831 = vmax.f32 %v1822, 0.0
      %v1832 = vmax.f32 %v1805, 0.0
      %v1833 = vmax.f32 %v1824, 0.0
      %v1834 = vld [vmem:[%s15] sm:$0xff]
      %v1835 = vld [vmem:[%s15 + $0x8] sm:$0xf]
      %v1836 = vld [vmem:[%s15 + $0xc] sm:$0xff]
      %v1837 = vld [vmem:[%s15 + $0x14] sm:$0xf]
      %v1838 = vld [vmem:[%s15 + $0x18] sm:$0xff]
      %v1839 = vld [vmem:[%s15 + $0x20] sm:$0xf]
      %v1840 = vld [vmem:[%s15 + $0x24] sm:$0xff]
      %v1841 = vld [vmem:[%s15 + $0x2c] sm:$0xf]
      %1842 = vrot.lane.b32.xlu0 %v1826, 17
      %v1843 = vpop.permute.xlu0 %1842
      %1844 = vrot.lane.b32.xlu0 %v1828, 17
      %v1845 = vpop.permute.xlu0 %1844
      %1846 = vrot.lane.b32.xlu0 %v1830, 17
      %v1847 = vpop.permute.xlu0 %1846
      %1848 = vrot.lane.b32.xlu0 %v1832, 17
      %v1849 = vpop.permute.xlu0 %1848
      %1850 = vrot.lane.b32.xlu0 %v1827, 17
      %v1851 = vpop.permute.xlu0 %1850
      %1852 = vrot.lane.b32.xlu0 %v1829, 17
      %v1853 = vpop.permute.xlu0 %1852
      %1854 = vrot.lane.b32.xlu0 %v1831, 17
      %v1855 = vpop.permute.xlu0 %1854
      %1856 = vrot.lane.b32.xlu0 %v1833, 17
      %v1857 = vpop.permute.xlu0 %1856
      %v1858 = vsel %vm1622, %v1843, %v1851
      %v1859 = vsel %vm1622, %v1845, %v1853
      %v1860 = vsel %vm1622, %v1847, %v1855
      %v1861 = vsel %vm1622, %v1849, %v1857
      %v1862 = vsel %vm1622, %v1851, %v1843
      %v1863 = vsel %vm1622, %v1853, %v1845
      %v1864 = vsel %vm1622, %v1855, %v1847
      %v1865 = vsel %vm1622, %v1857, %v1849
      %v1866 = vmul.f32 %v1862, %v1626
      %v1867 = vmul.f32 %v1858, %v1627
      %v1868 = vmul.f32 %v1863, %v1626
      %v1869 = vmul.f32 %v1859, %v1627
      %v1870 = vmul.f32 %v1864, %v1626
      %v1871 = vmul.f32 %v1860, %v1627
      %v1872 = vmul.f32 %v1865, %v1626
      %v1873 = vmul.f32 %v1861, %v1627
      %1874 = vrot.lane.b32.xlu0 %v1826, 16
      %v1875 = vpop.permute.xlu0 %1874
      %1876 = vrot.lane.b32.xlu0 %v1828, 16
      %v1877 = vpop.permute.xlu0 %1876
      %1878 = vrot.lane.b32.xlu0 %v1830, 16
      %v1879 = vpop.permute.xlu0 %1878
      %1880 = vrot.lane.b32.xlu0 %v1832, 16
      %v1881 = vpop.permute.xlu0 %1880
      %1882 = vrot.lane.b32.xlu0 %v1827, 16
      %v1883 = vpop.permute.xlu0 %1882
      %1884 = vrot.lane.b32.xlu0 %v1829, 16
      %v1885 = vpop.permute.xlu0 %1884
      %1886 = vrot.lane.b32.xlu0 %v1831, 16
      %v1887 = vpop.permute.xlu0 %1886
      %1888 = vrot.lane.b32.xlu0 %v1833, 16
      %v1889 = vpop.permute.xlu0 %1888
      %v1890 = vsel %vm1636, %v1875, %v1883
      %v1891 = vsel %vm1636, %v1877, %v1885
      %v1892 = vsel %vm1636, %v1879, %v1887
      %v1893 = vsel %vm1636, %v1881, %v1889
      %v1894 = vsel %vm1636, %v1883, %v1875
      %v1895 = vsel %vm1636, %v1885, %v1877
      %v1896 = vsel %vm1636, %v1887, %v1879
      %v1897 = vsel %vm1636, %v1889, %v1881
      %v1898 = vmul.f32 %v1894, %v1640
      %v1899 = vmul.f32 %v1890, %v1641
      %v1900 = vmul.f32 %v1895, %v1640
      %v1901 = vmul.f32 %v1891, %v1641
      %v1902 = vmul.f32 %v1896, %v1640
      %v1903 = vmul.f32 %v1892, %v1641
      %v1904 = vmul.f32 %v1897, %v1640
      %v1905 = vmul.f32 %v1893, %v1641
      %1906 = vrot.lane.b32.xlu0 %v1826, 15
      %v1907 = vpop.permute.xlu0 %1906
      %1908 = vrot.lane.b32.xlu0 %v1828, 15
      %v1909 = vpop.permute.xlu0 %1908
      %1910 = vrot.lane.b32.xlu0 %v1830, 15
      %v1911 = vpop.permute.xlu0 %1910
      %1912 = vrot.lane.b32.xlu0 %v1832, 15
      %v1913 = vpop.permute.xlu0 %1912
      %1914 = vrot.lane.b32.xlu0 %v1827, 15
      %v1915 = vpop.permute.xlu0 %1914
      %1916 = vrot.lane.b32.xlu0 %v1829, 15
      %v1917 = vpop.permute.xlu0 %1916
      %1918 = vrot.lane.b32.xlu0 %v1831, 15
      %v1919 = vpop.permute.xlu0 %1918
      %1920 = vrot.lane.b32.xlu0 %v1833, 15
      %v1921 = vpop.permute.xlu0 %1920
      %v1922 = vsel %vm1650, %v1907, %v1915
      %v1923 = vsel %vm1650, %v1909, %v1917
      %v1924 = vsel %vm1650, %v1911, %v1919
      %v1925 = vsel %vm1650, %v1913, %v1921
      %v1926 = vsel %vm1650, %v1915, %v1907
      %v1927 = vsel %vm1650, %v1917, %v1909
      %v1928 = vsel %vm1650, %v1919, %v1911
      %v1929 = vsel %vm1650, %v1921, %v1913
      %v1930 = vmul.f32 %v1926, %v1654
      %v1931 = vmul.f32 %v1922, %v1655
      %v1932 = vmul.f32 %v1927, %v1654
      %v1933 = vmul.f32 %v1923, %v1655
      %v1934 = vmul.f32 %v1928, %v1654
      %v1935 = vmul.f32 %v1924, %v1655
      %v1936 = vmul.f32 %v1929, %v1654
      %v1937 = vmul.f32 %v1925, %v1655
      %1938 = vrot.lane.b32.xlu0 %v1826, 1
      %v1939 = vpop.permute.xlu0 %1938
      %1940 = vrot.lane.b32.xlu0 %v1828, 1
      %v1941 = vpop.permute.xlu0 %1940
      %1942 = vrot.lane.b32.xlu0 %v1830, 1
      %v1943 = vpop.permute.xlu0 %1942
      %1944 = vrot.lane.b32.xlu0 %v1832, 1
      %v1945 = vpop.permute.xlu0 %1944
      %1946 = vrot.lane.b32.xlu0 %v1827, 1
      %v1947 = vpop.permute.xlu0 %1946
      %1948 = vrot.lane.b32.xlu0 %v1829, 1
      %v1949 = vpop.permute.xlu0 %1948
      %1950 = vrot.lane.b32.xlu0 %v1831, 1
      %v1951 = vpop.permute.xlu0 %1950
      %1952 = vrot.lane.b32.xlu0 %v1833, 1
      %v1953 = vpop.permute.xlu0 %1952
      %v1954 = vsel %vm1664, %v1939, %v1947
      %v1955 = vsel %vm1664, %v1941, %v1949
      %v1956 = vsel %vm1664, %v1943, %v1951
      %v1957 = vsel %vm1664, %v1945, %v1953
      %v1958 = vsel %vm1664, %v1947, %v1939
      %v1959 = vsel %vm1664, %v1949, %v1941
      %v1960 = vsel %vm1664, %v1951, %v1943
      %v1961 = vsel %vm1664, %v1953, %v1945
      %v1962 = vmul.f32 %v1958, %v1668
      %v1963 = vmul.f32 %v1954, %v1669
      %v1964 = vmul.f32 %v1959, %v1668
      %v1965 = vmul.f32 %v1955, %v1669
      %v1966 = vmul.f32 %v1960, %v1668
      %v1967 = vmul.f32 %v1956, %v1669
      %v1968 = vmul.f32 %v1961, %v1668
      %v1969 = vmul.f32 %v1957, %v1669
      %1970 = vrot.lane.b32.xlu0 %v1826, 127
      %v1971 = vpop.permute.xlu0 %1970
      %1972 = vrot.lane.b32.xlu0 %v1828, 127
      %v1973 = vpop.permute.xlu0 %1972
      %1974 = vrot.lane.b32.xlu0 %v1830, 127
      %v1975 = vpop.permute.xlu0 %1974
      %1976 = vrot.lane.b32.xlu0 %v1832, 127
      %v1977 = vpop.permute.xlu0 %1976
      %1978 = vrot.lane.b32.xlu0 %v1827, 127
      %v1979 = vpop.permute.xlu0 %1978
      %1980 = vrot.lane.b32.xlu0 %v1829, 127
      %v1981 = vpop.permute.xlu0 %1980
      %1982 = vrot.lane.b32.xlu0 %v1831, 127
      %v1983 = vpop.permute.xlu0 %1982
      %1984 = vrot.lane.b32.xlu0 %v1833, 127
      %v1985 = vpop.permute.xlu0 %1984
      %v1986 = vsel %vm1678, %v1971, %v1979
      %v1987 = vsel %vm1678, %v1973, %v1981
      %v1988 = vsel %vm1678, %v1975, %v1983
      %v1989 = vsel %vm1678, %v1977, %v1985
      %v1990 = vsel %vm1678, %v1979, %v1971
      %v1991 = vsel %vm1678, %v1981, %v1973
      %v1992 = vsel %vm1678, %v1983, %v1975
      %v1993 = vsel %vm1678, %v1985, %v1977
      %v1994 = vmul.f32 %v1986, %v1682
      %v1995 = vmul.f32 %v1990, %v1683
      %v1996 = vmul.f32 %v1987, %v1682
      %v1997 = vmul.f32 %v1991, %v1683
      %v1998 = vmul.f32 %v1988, %v1682
      %v1999 = vmul.f32 %v1992, %v1683
      %v2000 = vmul.f32 %v1989, %v1682
      %v2001 = vmul.f32 %v1993, %v1683
      %2002 = vrot.lane.b32.xlu0 %v1826, 113
      %v2003 = vpop.permute.xlu0 %2002
      %2004 = vrot.lane.b32.xlu0 %v1828, 113
      %v2005 = vpop.permute.xlu0 %2004
      %2006 = vrot.lane.b32.xlu0 %v1830, 113
      %v2007 = vpop.permute.xlu0 %2006
      %2008 = vrot.lane.b32.xlu0 %v1832, 113
      %v2009 = vpop.permute.xlu0 %2008
      %2010 = vrot.lane.b32.xlu0 %v1827, 113
      %v2011 = vpop.permute.xlu0 %2010
      %2012 = vrot.lane.b32.xlu0 %v1829, 113
      %v2013 = vpop.permute.xlu0 %2012
      %2014 = vrot.lane.b32.xlu0 %v1831, 113
      %v2015 = vpop.permute.xlu0 %2014
      %2016 = vrot.lane.b32.xlu0 %v1833, 113
      %v2017 = vpop.permute.xlu0 %2016
      %v2018 = vsel %vm1692, %v2003, %v2011
      %v2019 = vsel %vm1692, %v2005, %v2013
      %v2020 = vsel %vm1692, %v2007, %v2015
      %v2021 = vsel %vm1692, %v2009, %v2017
      %v2022 = vsel %vm1692, %v2011, %v2003
      %v2023 = vsel %vm1692, %v2013, %v2005
      %v2024 = vsel %vm1692, %v2015, %v2007
      %v2025 = vsel %vm1692, %v2017, %v2009
      %v2026 = vmul.f32 %v2018, %v1696
      %v2027 = vmul.f32 %v2022, %v1697
      %v2028 = vmul.f32 %v2019, %v1696
      %v2029 = vmul.f32 %v2023, %v1697
      %v2030 = vmul.f32 %v2020, %v1696
      %v2031 = vmul.f32 %v2024, %v1697
      %v2032 = vmul.f32 %v2021, %v1696
      %v2033 = vmul.f32 %v2025, %v1697
      %2034 = vrot.lane.b32.xlu0 %v1826, 112
      %v2035 = vpop.permute.xlu0 %2034
      %2036 = vrot.lane.b32.xlu0 %v1828, 112
      %v2037 = vpop.permute.xlu0 %2036
      %2038 = vrot.lane.b32.xlu0 %v1830, 112
      %v2039 = vpop.permute.xlu0 %2038
      %2040 = vrot.lane.b32.xlu0 %v1832, 112
      %v2041 = vpop.permute.xlu0 %2040
      %2042 = vrot.lane.b32.xlu0 %v1827, 112
      %v2043 = vpop.permute.xlu0 %2042
      %2044 = vrot.lane.b32.xlu0 %v1829, 112
      %v2045 = vpop.permute.xlu0 %2044
      %2046 = vrot.lane.b32.xlu0 %v1831, 112
      %v2047 = vpop.permute.xlu0 %2046
      %2048 = vrot.lane.b32.xlu0 %v1833, 112
      %v2049 = vpop.permute.xlu0 %2048
      %v2050 = vsel %vm1706, %v2035, %v2043
      %v2051 = vsel %vm1706, %v2037, %v2045
      %v2052 = vsel %vm1706, %v2039, %v2047
      %v2053 = vsel %vm1706, %v2041, %v2049
      %v2054 = vsel %vm1706, %v2043, %v2035
      %v2055 = vsel %vm1706, %v2045, %v2037
      %v2056 = vsel %vm1706, %v2047, %v2039
      %v2057 = vsel %vm1706, %v2049, %v2041
      %v2058 = vmul.f32 %v2050, %v1710
      %v2059 = vmul.f32 %v2054, %v1711
      %v2060 = vmul.f32 %v2051, %v1710
      %v2061 = vmul.f32 %v2055, %v1711
      %v2062 = vmul.f32 %v2052, %v1710
      %v2063 = vmul.f32 %v2056, %v1711
      %v2064 = vmul.f32 %v2053, %v1710
      %v2065 = vmul.f32 %v2057, %v1711
      %2066 = vrot.lane.b32.xlu0 %v1826, 111
      %v2067 = vpop.permute.xlu0 %2066
      %2068 = vrot.lane.b32.xlu0 %v1828, 111
      %v2069 = vpop.permute.xlu0 %2068
      %2070 = vrot.lane.b32.xlu0 %v1830, 111
      %v2071 = vpop.permute.xlu0 %2070
      %2072 = vrot.lane.b32.xlu0 %v1832, 111
      %v2073 = vpop.permute.xlu0 %2072
      %2074 = vrot.lane.b32.xlu0 %v1827, 111
      %v2075 = vpop.permute.xlu0 %2074
      %2076 = vrot.lane.b32.xlu0 %v1829, 111
      %v2077 = vpop.permute.xlu0 %2076
      %2078 = vrot.lane.b32.xlu0 %v1831, 111
      %v2079 = vpop.permute.xlu0 %2078
      %2080 = vrot.lane.b32.xlu0 %v1833, 111
      %v2081 = vpop.permute.xlu0 %2080
      %v2082 = vsel %vm1720, %v2067, %v2075
      %v2083 = vsel %vm1720, %v2069, %v2077
      %v2084 = vsel %vm1720, %v2071, %v2079
      %v2085 = vsel %vm1720, %v2073, %v2081
      %v2086 = vsel %vm1720, %v2075, %v2067
      %v2087 = vsel %vm1720, %v2077, %v2069
      %v2088 = vsel %vm1720, %v2079, %v2071
      %v2089 = vsel %vm1720, %v2081, %v2073
      %v2090 = vmul.f32 %v2082, %v1724
      %v2091 = vmul.f32 %v2086, %v1725
      %v2092 = vmul.f32 %v2083, %v1724
      %v2093 = vmul.f32 %v2087, %v1725
      %v2094 = vmul.f32 %v2084, %v1724
      %v2095 = vmul.f32 %v2088, %v1725
      %v2096 = vmul.f32 %v2085, %v1724
      %v2097 = vmul.f32 %v2089, %v1725
      %v2098 = vpack.c.bf16 %v1868, %v1866
      %v2099 = vpack.c.bf16 %v1869, %v1867
      %v2100 = vpack.c.bf16 %v1872, %v1870
      %v2101 = vpack.c.bf16 %v1873, %v1871
      %v2102 = vpack.c.bf16 %v1900, %v1898
      %v2103 = vpack.c.bf16 %v1901, %v1899
      %v2104 = vpack.c.bf16 %v1904, %v1902
      %v2105 = vpack.c.bf16 %v1905, %v1903
      %v2106 = vpack.c.bf16 %v1932, %v1930
      %v2107 = vpack.c.bf16 %v1933, %v1931
      %v2108 = vpack.c.bf16 %v1936, %v1934
      %v2109 = vpack.c.bf16 %v1937, %v1935
      %v2110 = vpack.c.bf16 %v1964, %v1962
      %v2111 = vpack.c.bf16 %v1965, %v1963
      %v2112 = vpack.c.bf16 %v1968, %v1966
      %v2113 = vpack.c.bf16 %v1969, %v1967
      %v2114 = vpack.c.bf16 %v1828, %v1826
      %v2115 = vpack.c.bf16 %v1829, %v1827
      %v2116 = vpack.c.bf16 %v1832, %v1830
      %v2117 = vpack.c.bf16 %v1833, %v1831
      %v2118 = vpack.c.bf16 %v1996, %v1994
      %v2119 = vpack.c.bf16 %v1997, %v1995
      %v2120 = vpack.c.bf16 %v2000, %v1998
      %v2121 = vpack.c.bf16 %v2001, %v1999
      %v2122 = vpack.c.bf16 %v2028, %v2026
      %v2123 = vpack.c.bf16 %v2029, %v2027
      %v2124 = vpack.c.bf16 %v2032, %v2030
      %v2125 = vpack.c.bf16 %v2033, %v2031
      %v2126 = vpack.c.bf16 %v2060, %v2058
      %v2127 = vpack.c.bf16 %v2061, %v2059
      %v2128 = vpack.c.bf16 %v2064, %v2062
      %v2129 = vpack.c.bf16 %v2065, %v2063
      %v2130 = vpack.c.bf16 %v2092, %v2090
      %v2131 = vpack.c.bf16 %v2093, %v2091
      %v2132 = vpack.c.bf16 %v2096, %v2094
      %v2133 = vpack.c.bf16 %v2097, %v2095
      %v2134 = vld [vmem:[%s16] sm:$0xff]
      %v2135 = vld [vmem:[%s16 + $0x8] sm:$0xff]
      %v2136 = vld [vmem:[%s16 + $0x10] sm:$0xff]
      %v2137 = vld [vmem:[%s16 + $0x18] sm:$0xff]
      %2139 = vset.pattern.permute.xlu0 0
      %2140 = vperm.xlu0 %2139, %v2134
      %v2141 = vpop.permute.xlu0 %2140
      %2144 = vset.pattern.permute.xlu0 0
      %2145 = vperm.xlu0 %2144, %v2135
      %v2146 = vpop.permute.xlu0 %2145
      %2149 = vset.pattern.permute.xlu0 0
      %2150 = vperm.xlu0 %2149, %v2136
      %v2151 = vpop.permute.xlu0 %2150
      %2154 = vset.pattern.permute.xlu0 0
      %2155 = vperm.xlu0 %2154, %v2137
      %v2156 = vpop.permute.xlu0 %2155
      %v2166 = vunpack.c.l.b16 %v1834
      %v2167 = vunpack.c.h.b16 %v1834
      %v2168 = vunpack.c.l.b16 %v1835
      %v2169 = vunpack.c.l.b16 %v1836
      %v2170 = vunpack.c.h.b16 %v1836
      %v2171 = vunpack.c.l.b16 %v1837
      %v2172 = vunpack.c.l.b16 %v1838
      %v2173 = vunpack.c.h.b16 %v1838
      %v2174 = vunpack.c.l.b16 %v1839
      %v2175 = vunpack.c.l.b16 %v1840
      %v2176 = vunpack.c.h.b16 %v1840
      %v2177 = vunpack.c.l.b16 %v1841
      %v2178 = vpack.c.b16 %v2169, %v2166
      %v2179 = vpack.c.b16 %v2170, %v2167
      %v2180 = vpack.c.b16 %v2171, %v2168
      %v2181 = vpack.c.b16 %v2175, %v2172
      %v2182 = vpack.c.b16 %v2176, %v2173
      %v2183 = vpack.c.b16 %v2177, %v2174
      %v2189 = vsel %vm1205, %v2180, 0
      %v2192 = vsel %vm1205, %v2183, 0
      %2194 = vmatpush.bf16.msra.mxu0 %v2112
      %2195 = vmatpush.bf16.msra.mxu0 %v2110
      %2196 = vmatpush.bf16.msra.mxu0 %v2108
      %2197 = vmatpush.bf16.msra.mxu0 %v2106
      %2198 = vmatpush.bf16.msra.mxu0 %v2104
      %2199 = vmatpush.bf16.msra.mxu0 %v2102
      %2200 = vmatpush.bf16.msra.mxu0 %v2100
      %2201 = vmatpush.bf16.msra.mxu0 %v2098
      %2202 = vmatmul.bf16.gmra.mxu0 %v2178
      %v2203 = vpop.f32.mrf.mxu0
      %v2204 = vadd.f32 %v2141, %v2203
      %v2205 = vpop.f32.mrf.mxu0
      %v2206 = vadd.f32 %v2146, %v2205
      %2207 = vmatmul.bf16.gmra.mxu0 %v2181
      %v2208 = vpop.f32.mrf.mxu0
      %v2209 = vadd.f32 %v2151, %v2208
      %v2210 = vpop.f32.mrf.mxu0
      %v2211 = vadd.f32 %v2156, %v2210
      %2212 = vdwg.mxu0
      %2213 = vmatpush.bf16.msra.mxu0 %v2128
      %2214 = vmatpush.bf16.msra.mxu0 %v2126
      %2215 = vmatpush.bf16.msra.mxu0 %v2124
      %2216 = vmatpush.bf16.msra.mxu0 %v2122
      %2217 = vmatpush.bf16.msra.mxu0 %v2120
      %2218 = vmatpush.bf16.msra.mxu0 %v2118
      %2219 = vmatpush.bf16.msra.mxu0 %v2116
      %2220 = vmatpush.bf16.msra.mxu0 %v2114
      %2221 = vmatmul.bf16.gmra.mxu0 %v2179
      %v2222 = vpop.f32.mrf.mxu0
      %v2223 = vadd.f32 %v2204, %v2222
      %v2224 = vpop.f32.mrf.mxu0
      %v2225 = vadd.f32 %v2206, %v2224
      %2226 = vmatmul.bf16.gmra.mxu0 %v2182
      %v2227 = vpop.f32.mrf.mxu0
      %v2228 = vadd.f32 %v2209, %v2227
      %v2229 = vpop.f32.mrf.mxu0
      %v2230 = vadd.f32 %v2211, %v2229
      %2231 = vdwg.mxu0
      %2232 = vmatpush.bf16.msra.mxu0 0
      %2233 = vmatpush.bf16.msra.mxu0 0
      %2234 = vmatpush.bf16.msra.mxu0 0
      %2235 = vmatpush.bf16.msra.mxu0 0
      %2236 = vmatpush.bf16.msra.mxu0 0
      %2237 = vmatpush.bf16.msra.mxu0 0
      %2238 = vmatpush.bf16.msra.mxu0 %v2132
      %2239 = vmatpush.bf16.msra.mxu0 %v2130
      %2240 = vmatmul.bf16.gmra.mxu0 %v2189
      %v2241 = vpop.f32.mrf.mxu0
      %v2242 = vadd.f32 %v2223, %v2241
      %v2243 = vpop.f32.mrf.mxu0
      %v2244 = vadd.f32 %v2225, %v2243
      %2245 = vmatmul.bf16.gmra.mxu0 %v2192
      %v2246 = vpop.f32.mrf.mxu0
      %v2247 = vadd.f32 %v2228, %v2246
      %v2248 = vpop.f32.mrf.mxu0
      %v2249 = vadd.f32 %v2230, %v2248
      %2250 = vdwg.mxu0
      %2251 = vmatpush.bf16.msra.mxu0 %v2113
      %2252 = vmatpush.bf16.msra.mxu0 %v2111
      %2253 = vmatpush.bf16.msra.mxu0 %v2109
      %2254 = vmatpush.bf16.msra.mxu0 %v2107
      %2255 = vmatpush.bf16.msra.mxu0 %v2105
      %2256 = vmatpush.bf16.msra.mxu0 %v2103
      %2257 = vmatpush.bf16.msra.mxu0 %v2101
      %2258 = vmatpush.bf16.msra.mxu0 %v2099
      %2259 = vmatmul.bf16.gmra.mxu0 %v2178
      %v2260 = vpop.f32.mrf.mxu0
      %v2261 = vadd.f32 %v2141, %v2260
      %v2262 = vpop.f32.mrf.mxu0
      %v2263 = vadd.f32 %v2146, %v2262
      %2264 = vmatmul.bf16.gmra.mxu0 %v2181
      %v2265 = vpop.f32.mrf.mxu0
      %v2266 = vadd.f32 %v2151, %v2265
      %v2267 = vpop.f32.mrf.mxu0
      %v2268 = vadd.f32 %v2156, %v2267
      %2269 = vdwg.mxu0
      %2270 = vmatpush.bf16.msra.mxu0 %v2129
      %2271 = vmatpush.bf16.msra.mxu0 %v2127
      %2272 = vmatpush.bf16.msra.mxu0 %v2125
      %2273 = vmatpush.bf16.msra.mxu0 %v2123
      %2274 = vmatpush.bf16.msra.mxu0 %v2121
      %2275 = vmatpush.bf16.msra.mxu0 %v2119
      %2276 = vmatpush.bf16.msra.mxu0 %v2117
      %2277 = vmatpush.bf16.msra.mxu0 %v2115
      %2278 = vmatmul.bf16.gmra.mxu0 %v2179
      %v2279 = vpop.f32.mrf.mxu0
      %v2280 = vadd.f32 %v2261, %v2279
      %v2281 = vpop.f32.mrf.mxu0
      %v2282 = vadd.f32 %v2263, %v2281
      %2283 = vmatmul.bf16.gmra.mxu0 %v2182
      %v2284 = vpop.f32.mrf.mxu0
      %v2285 = vadd.f32 %v2266, %v2284
      %v2286 = vpop.f32.mrf.mxu0
      %v2287 = vadd.f32 %v2268, %v2286
      %2288 = vdwg.mxu0
      %2289 = vmatpush.bf16.msra.mxu0 0
      %2290 = vmatpush.bf16.msra.mxu0 0
      %2291 = vmatpush.bf16.msra.mxu0 0
      %2292 = vmatpush.bf16.msra.mxu0 0
      %2293 = vmatpush.bf16.msra.mxu0 0
      %2294 = vmatpush.bf16.msra.mxu0 0
      %2295 = vmatpush.bf16.msra.mxu0 %v2133
      %2296 = vmatpush.bf16.msra.mxu0 %v2131
      %2297 = vmatmul.bf16.gmra.mxu0 %v2189
      %v2298 = vpop.f32.mrf.mxu0
      %v2299 = vadd.f32 %v2280, %v2298
      %v2300 = vpop.f32.mrf.mxu0
      %v2301 = vadd.f32 %v2282, %v2300
      %2302 = vmatmul.bf16.gmra.mxu0 %v2192
      %v2303 = vpop.f32.mrf.mxu0
      %v2304 = vadd.f32 %v2285, %v2303
      %v2305 = vpop.f32.mrf.mxu0
      %v2306 = vadd.f32 %v2287, %v2305
      %2307 = vdwg.mxu0
      %v2308 = vadd.f32 %v1578, 1.0
      %v2309 = vadd.f32 %v1579, 1.0
      %v2310 = vadd.f32 %v1580, 1.0
      %v2311 = vadd.f32 %v1581, 1.0
      %2313 = vset.pattern.permute.xlu0 0
      %2314 = vperm.xlu0 %2313, %v2308
      %v2315 = vpop.permute.xlu0 %2314
      %2318 = vset.pattern.permute.xlu0 0
      %2319 = vperm.xlu0 %2318, %v2309
      %v2320 = vpop.permute.xlu0 %2319
      %2323 = vset.pattern.permute.xlu0 0
      %2324 = vperm.xlu0 %2323, %v2310
      %v2325 = vpop.permute.xlu0 %2324
      %2328 = vset.pattern.permute.xlu0 0
      %2329 = vperm.xlu0 %2328, %v2311
      %v2330 = vpop.permute.xlu0 %2329
      %v2332 = vmul.f32 %v2242, %v2315
      %v2333 = vmul.f32 %v2299, %v2315
      %v2334 = vmul.f32 %v2244, %v2320
      %v2335 = vmul.f32 %v2301, %v2320
      %v2336 = vmul.f32 %v2247, %v2325
      %v2337 = vmul.f32 %v2304, %v2325
      %v2338 = vmul.f32 %v2249, %v2330
      %v2339 = vmul.f32 %v2306, %v2330
      %2341 = vset.pattern.permute.xlu0 0
      %2342 = vperm.xlu0 %2341, %v1582
      %v2343 = vpop.permute.xlu0 %2342
      %2346 = vset.pattern.permute.xlu0 0
      %2347 = vperm.xlu0 %2346, %v1583
      %v2348 = vpop.permute.xlu0 %2347
      %2351 = vset.pattern.permute.xlu0 0
      %2352 = vperm.xlu0 %2351, %v1584
      %v2353 = vpop.permute.xlu0 %2352
      %2356 = vset.pattern.permute.xlu0 0
      %2357 = vperm.xlu0 %2356, %v1585
      %v2358 = vpop.permute.xlu0 %2357
      %v2360 = vadd.f32 %v2332, %v2343
      %v2361 = vadd.f32 %v2333, %v2343
      %v2362 = vadd.f32 %v2334, %v2348
      %v2363 = vadd.f32 %v2335, %v2348
      %v2364 = vadd.f32 %v2336, %v2353
      %v2365 = vadd.f32 %v2337, %v2353
      %v2366 = vadd.f32 %v2338, %v2358
      %v2367 = vadd.f32 %v2339, %v2358
      %v2368 = vmax.f32 %v2360, 0.0
      %v2369 = vmax.f32 %v2361, 0.0
      %v2370 = vmax.f32 %v2362, 0.0
      %v2371 = vmax.f32 %v2363, 0.0
      %v2372 = vmax.f32 %v2364, 0.0
      %v2373 = vmax.f32 %v2365, 0.0
      %v2374 = vmax.f32 %v2366, 0.0
      %v2375 = vmax.f32 %v2367, 0.0
      %v2376 = vadd.f32 %v2368, %v1826
      %v2377 = vadd.f32 %v2369, %v1827
      %v2378 = vadd.f32 %v2370, %v1828
      %v2379 = vadd.f32 %v2371, %v1829
      %v2380 = vadd.f32 %v2372, %v1830
      %v2381 = vadd.f32 %v2373, %v1831
      %v2382 = vadd.f32 %v2374, %v1832
      %v2383 = vadd.f32 %v2375, %v1833
      %2384 = vrot.lane.b32.xlu0 %v2376, 17
      %v2385 = vpop.permute.xlu0 %2384
      %2386 = vrot.lane.b32.xlu0 %v2378, 17
      %v2387 = vpop.permute.xlu0 %2386
      %2388 = vrot.lane.b32.xlu0 %v2380, 17
      %v2389 = vpop.permute.xlu0 %2388
      %2390 = vrot.lane.b32.xlu0 %v2382, 17
      %v2391 = vpop.permute.xlu0 %2390
      %2392 = vrot.lane.b32.xlu0 %v2377, 17
      %v2393 = vpop.permute.xlu0 %2392
      %2394 = vrot.lane.b32.xlu0 %v2379, 17
      %v2395 = vpop.permute.xlu0 %2394
      %2396 = vrot.lane.b32.xlu0 %v2381, 17
      %v2397 = vpop.permute.xlu0 %2396
      %2398 = vrot.lane.b32.xlu0 %v2383, 17
      %v2399 = vpop.permute.xlu0 %2398
      %v2400 = vsel %vm1622, %v2385, %v2393
      %v2401 = vsel %vm1622, %v2387, %v2395
      %v2402 = vsel %vm1622, %v2389, %v2397
      %v2403 = vsel %vm1622, %v2391, %v2399
      %v2404 = vsel %vm1622, %v2393, %v2385
      %v2405 = vsel %vm1622, %v2395, %v2387
      %v2406 = vsel %vm1622, %v2397, %v2389
      %v2407 = vsel %vm1622, %v2399, %v2391
      %v2408 = vmul.f32 %v2404, %v1626
      %v2409 = vmul.f32 %v2400, %v1627
      %v2410 = vmul.f32 %v2405, %v1626
      %v2411 = vmul.f32 %v2401, %v1627
      %v2412 = vmul.f32 %v2406, %v1626
      %v2413 = vmul.f32 %v2402, %v1627
      %v2414 = vmul.f32 %v2407, %v1626
      %v2415 = vmul.f32 %v2403, %v1627
      %2416 = vrot.lane.b32.xlu0 %v2376, 16
      %v2417 = vpop.permute.xlu0 %2416
      %2418 = vrot.lane.b32.xlu0 %v2378, 16
      %v2419 = vpop.permute.xlu0 %2418
      %2420 = vrot.lane.b32.xlu0 %v2380, 16
      %v2421 = vpop.permute.xlu0 %2420
      %2422 = vrot.lane.b32.xlu0 %v2382, 16
      %v2423 = vpop.permute.xlu0 %2422
      %2424 = vrot.lane.b32.xlu0 %v2377, 16
      %v2425 = vpop.permute.xlu0 %2424
      %2426 = vrot.lane.b32.xlu0 %v2379, 16
      %v2427 = vpop.permute.xlu0 %2426
      %2428 = vrot.lane.b32.xlu0 %v2381, 16
      %v2429 = vpop.permute.xlu0 %2428
      %2430 = vrot.lane.b32.xlu0 %v2383, 16
      %v2431 = vpop.permute.xlu0 %2430
      %v2432 = vsel %vm1636, %v2417, %v2425
      %v2433 = vsel %vm1636, %v2419, %v2427
      %v2434 = vsel %vm1636, %v2421, %v2429
      %v2435 = vsel %vm1636, %v2423, %v2431
      %v2436 = vsel %vm1636, %v2425, %v2417
      %v2437 = vsel %vm1636, %v2427, %v2419
      %v2438 = vsel %vm1636, %v2429, %v2421
      %v2439 = vsel %vm1636, %v2431, %v2423
      %v2440 = vmul.f32 %v2436, %v1640
      %v2441 = vmul.f32 %v2432, %v1641
      %v2442 = vmul.f32 %v2437, %v1640
      %v2443 = vmul.f32 %v2433, %v1641
      %v2444 = vmul.f32 %v2438, %v1640
      %v2445 = vmul.f32 %v2434, %v1641
      %v2446 = vmul.f32 %v2439, %v1640
      %v2447 = vmul.f32 %v2435, %v1641
      %2448 = vrot.lane.b32.xlu0 %v2376, 15
      %v2449 = vpop.permute.xlu0 %2448
      %2450 = vrot.lane.b32.xlu0 %v2378, 15
      %v2451 = vpop.permute.xlu0 %2450
      %2452 = vrot.lane.b32.xlu0 %v2380, 15
      %v2453 = vpop.permute.xlu0 %2452
      %2454 = vrot.lane.b32.xlu0 %v2382, 15
      %v2455 = vpop.permute.xlu0 %2454
      %2456 = vrot.lane.b32.xlu0 %v2377, 15
      %v2457 = vpop.permute.xlu0 %2456
      %2458 = vrot.lane.b32.xlu0 %v2379, 15
      %v2459 = vpop.permute.xlu0 %2458
      %2460 = vrot.lane.b32.xlu0 %v2381, 15
      %v2461 = vpop.permute.xlu0 %2460
      %2462 = vrot.lane.b32.xlu0 %v2383, 15
      %v2463 = vpop.permute.xlu0 %2462
      %v2464 = vsel %vm1650, %v2449, %v2457
      %v2465 = vsel %vm1650, %v2451, %v2459
      %v2466 = vsel %vm1650, %v2453, %v2461
      %v2467 = vsel %vm1650, %v2455, %v2463
      %v2468 = vsel %vm1650, %v2457, %v2449
      %v2469 = vsel %vm1650, %v2459, %v2451
      %v2470 = vsel %vm1650, %v2461, %v2453
      %v2471 = vsel %vm1650, %v2463, %v2455
      %v2472 = vmul.f32 %v2468, %v1654
      %v2473 = vmul.f32 %v2464, %v1655
      %v2474 = vmul.f32 %v2469, %v1654
      %v2475 = vmul.f32 %v2465, %v1655
      %v2476 = vmul.f32 %v2470, %v1654
      %v2477 = vmul.f32 %v2466, %v1655
      %v2478 = vmul.f32 %v2471, %v1654
      %v2479 = vmul.f32 %v2467, %v1655
      %2480 = vrot.lane.b32.xlu0 %v2376, 1
      %v2481 = vpop.permute.xlu0 %2480
      %2482 = vrot.lane.b32.xlu0 %v2378, 1
      %v2483 = vpop.permute.xlu0 %2482
      %2484 = vrot.lane.b32.xlu0 %v2380, 1
      %v2485 = vpop.permute.xlu0 %2484
      %2486 = vrot.lane.b32.xlu0 %v2382, 1
      %v2487 = vpop.permute.xlu0 %2486
      %2488 = vrot.lane.b32.xlu0 %v2377, 1
      %v2489 = vpop.permute.xlu0 %2488
      %2490 = vrot.lane.b32.xlu0 %v2379, 1
      %v2491 = vpop.permute.xlu0 %2490
      %2492 = vrot.lane.b32.xlu0 %v2381, 1
      %v2493 = vpop.permute.xlu0 %2492
      %2494 = vrot.lane.b32.xlu0 %v2383, 1
      %v2495 = vpop.permute.xlu0 %2494
      %v2496 = vsel %vm1664, %v2481, %v2489
      %v2497 = vsel %vm1664, %v2483, %v2491
      %v2498 = vsel %vm1664, %v2485, %v2493
      %v2499 = vsel %vm1664, %v2487, %v2495
      %v2500 = vsel %vm1664, %v2489, %v2481
      %v2501 = vsel %vm1664, %v2491, %v2483
      %v2502 = vsel %vm1664, %v2493, %v2485
      %v2503 = vsel %vm1664, %v2495, %v2487
      %v2504 = vmul.f32 %v2500, %v1668
      %v2505 = vmul.f32 %v2496, %v1669
      %v2506 = vmul.f32 %v2501, %v1668
      %v2507 = vmul.f32 %v2497, %v1669
      %v2508 = vmul.f32 %v2502, %v1668
      %v2509 = vmul.f32 %v2498, %v1669
      %v2510 = vmul.f32 %v2503, %v1668
      %v2511 = vmul.f32 %v2499, %v1669
      %2512 = vrot.lane.b32.xlu0 %v2376, 127
      %v2513 = vpop.permute.xlu0 %2512
      %2514 = vrot.lane.b32.xlu0 %v2378, 127
      %v2515 = vpop.permute.xlu0 %2514
      %2516 = vrot.lane.b32.xlu0 %v2380, 127
      %v2517 = vpop.permute.xlu0 %2516
      %2518 = vrot.lane.b32.xlu0 %v2382, 127
      %v2519 = vpop.permute.xlu0 %2518
      %2520 = vrot.lane.b32.xlu0 %v2377, 127
      %v2521 = vpop.permute.xlu0 %2520
      %2522 = vrot.lane.b32.xlu0 %v2379, 127
      %v2523 = vpop.permute.xlu0 %2522
      %2524 = vrot.lane.b32.xlu0 %v2381, 127
      %v2525 = vpop.permute.xlu0 %2524
      %2526 = vrot.lane.b32.xlu0 %v2383, 127
      %v2527 = vpop.permute.xlu0 %2526
      %v2528 = vsel %vm1678, %v2513, %v2521
      %v2529 = vsel %vm1678, %v2515, %v2523
      %v2530 = vsel %vm1678, %v2517, %v2525
      %v2531 = vsel %vm1678, %v2519, %v2527
      %v2532 = vsel %vm1678, %v2521, %v2513
      %v2533 = vsel %vm1678, %v2523, %v2515
      %v2534 = vsel %vm1678, %v2525, %v2517
      %v2535 = vsel %vm1678, %v2527, %v2519
      %v2536 = vmul.f32 %v2528, %v1682
      %v2537 = vmul.f32 %v2532, %v1683
      %v2538 = vmul.f32 %v2529, %v1682
      %v2539 = vmul.f32 %v2533, %v1683
      %v2540 = vmul.f32 %v2530, %v1682
      %v2541 = vmul.f32 %v2534, %v1683
      %v2542 = vmul.f32 %v2531, %v1682
      %v2543 = vmul.f32 %v2535, %v1683
      %2544 = vrot.lane.b32.xlu0 %v2376, 113
      %v2545 = vpop.permute.xlu0 %2544
      %2546 = vrot.lane.b32.xlu0 %v2378, 113
      %v2547 = vpop.permute.xlu0 %2546
      %2548 = vrot.lane.b32.xlu0 %v2380, 113
      %v2549 = vpop.permute.xlu0 %2548
      %2550 = vrot.lane.b32.xlu0 %v2382, 113
      %v2551 = vpop.permute.xlu0 %2550
      %2552 = vrot.lane.b32.xlu0 %v2377, 113
      %v2553 = vpop.permute.xlu0 %2552
      %2554 = vrot.lane.b32.xlu0 %v2379, 113
      %v2555 = vpop.permute.xlu0 %2554
      %2556 = vrot.lane.b32.xlu0 %v2381, 113
      %v2557 = vpop.permute.xlu0 %2556
      %2558 = vrot.lane.b32.xlu0 %v2383, 113
      %v2559 = vpop.permute.xlu0 %2558
      %v2560 = vsel %vm1692, %v2545, %v2553
      %v2561 = vsel %vm1692, %v2547, %v2555
      %v2562 = vsel %vm1692, %v2549, %v2557
      %v2563 = vsel %vm1692, %v2551, %v2559
      %v2564 = vsel %vm1692, %v2553, %v2545
      %v2565 = vsel %vm1692, %v2555, %v2547
      %v2566 = vsel %vm1692, %v2557, %v2549
      %v2567 = vsel %vm1692, %v2559, %v2551
      %v2568 = vmul.f32 %v2560, %v1696
      %v2569 = vmul.f32 %v2564, %v1697
      %v2570 = vmul.f32 %v2561, %v1696
      %v2571 = vmul.f32 %v2565, %v1697
      %v2572 = vmul.f32 %v2562, %v1696
      %v2573 = vmul.f32 %v2566, %v1697
      %v2574 = vmul.f32 %v2563, %v1696
      %v2575 = vmul.f32 %v2567, %v1697
      %2576 = vrot.lane.b32.xlu0 %v2376, 112
      %v2577 = vpop.permute.xlu0 %2576
      %2578 = vrot.lane.b32.xlu0 %v2378, 112
      %v2579 = vpop.permute.xlu0 %2578
      %2580 = vrot.lane.b32.xlu0 %v2380, 112
      %v2581 = vpop.permute.xlu0 %2580
      %2582 = vrot.lane.b32.xlu0 %v2382, 112
      %v2583 = vpop.permute.xlu0 %2582
      %2584 = vrot.lane.b32.xlu0 %v2377, 112
      %v2585 = vpop.permute.xlu0 %2584
      %2586 = vrot.lane.b32.xlu0 %v2379, 112
      %v2587 = vpop.permute.xlu0 %2586
      %2588 = vrot.lane.b32.xlu0 %v2381, 112
      %v2589 = vpop.permute.xlu0 %2588
      %2590 = vrot.lane.b32.xlu0 %v2383, 112
      %v2591 = vpop.permute.xlu0 %2590
      %v2592 = vsel %vm1706, %v2577, %v2585
      %v2593 = vsel %vm1706, %v2579, %v2587
      %v2594 = vsel %vm1706, %v2581, %v2589
      %v2595 = vsel %vm1706, %v2583, %v2591
      %v2596 = vsel %vm1706, %v2585, %v2577
      %v2597 = vsel %vm1706, %v2587, %v2579
      %v2598 = vsel %vm1706, %v2589, %v2581
      %v2599 = vsel %vm1706, %v2591, %v2583
      %v2600 = vmul.f32 %v2592, %v1710
      %v2601 = vmul.f32 %v2596, %v1711
      %v2602 = vmul.f32 %v2593, %v1710
      %v2603 = vmul.f32 %v2597, %v1711
      %v2604 = vmul.f32 %v2594, %v1710
      %v2605 = vmul.f32 %v2598, %v1711
      %v2606 = vmul.f32 %v2595, %v1710
      %v2607 = vmul.f32 %v2599, %v1711
      %2608 = vrot.lane.b32.xlu0 %v2376, 111
      %v2609 = vpop.permute.xlu0 %2608
      %2610 = vrot.lane.b32.xlu0 %v2378, 111
      %v2611 = vpop.permute.xlu0 %2610
      %2612 = vrot.lane.b32.xlu0 %v2380, 111
      %v2613 = vpop.permute.xlu0 %2612
      %2614 = vrot.lane.b32.xlu0 %v2382, 111
      %v2615 = vpop.permute.xlu0 %2614
      %2616 = vrot.lane.b32.xlu0 %v2377, 111
      %v2617 = vpop.permute.xlu0 %2616
      %2618 = vrot.lane.b32.xlu0 %v2379, 111
      %v2619 = vpop.permute.xlu0 %2618
      %2620 = vrot.lane.b32.xlu0 %v2381, 111
      %v2621 = vpop.permute.xlu0 %2620
      %2622 = vrot.lane.b32.xlu0 %v2383, 111
      %v2623 = vpop.permute.xlu0 %2622
      %v2624 = vsel %vm1720, %v2609, %v2617
      %v2625 = vsel %vm1720, %v2611, %v2619
      %v2626 = vsel %vm1720, %v2613, %v2621
      %v2627 = vsel %vm1720, %v2615, %v2623
      %v2628 = vsel %vm1720, %v2617, %v2609
      %v2629 = vsel %vm1720, %v2619, %v2611
      %v2630 = vsel %vm1720, %v2621, %v2613
      %v2631 = vsel %vm1720, %v2623, %v2615
      %v2632 = vmul.f32 %v2624, %v1724
      %v2633 = vmul.f32 %v2628, %v1725
      %v2634 = vmul.f32 %v2625, %v1724
      %v2635 = vmul.f32 %v2629, %v1725
      %v2636 = vmul.f32 %v2626, %v1724
      %v2637 = vmul.f32 %v2630, %v1725
      %v2638 = vmul.f32 %v2627, %v1724
      %v2639 = vmul.f32 %v2631, %v1725
      %v2640 = vpack.c.bf16 %v2410, %v2408
      %v2641 = vpack.c.bf16 %v2411, %v2409
      %v2642 = vpack.c.bf16 %v2414, %v2412
      %v2643 = vpack.c.bf16 %v2415, %v2413
      %v2644 = vpack.c.bf16 %v2442, %v2440
      %v2645 = vpack.c.bf16 %v2443, %v2441
      %v2646 = vpack.c.bf16 %v2446, %v2444
      %v2647 = vpack.c.bf16 %v2447, %v2445
      %v2648 = vpack.c.bf16 %v2474, %v2472
      %v2649 = vpack.c.bf16 %v2475, %v2473
      %v2650 = vpack.c.bf16 %v2478, %v2476
      %v2651 = vpack.c.bf16 %v2479, %v2477
      %v2652 = vpack.c.bf16 %v2506, %v2504
      %v2653 = vpack.c.bf16 %v2507, %v2505
      %v2654 = vpack.c.bf16 %v2510, %v2508
      %v2655 = vpack.c.bf16 %v2511, %v2509
      %v2656 = vpack.c.bf16 %v2378, %v2376
      %v2657 = vpack.c.bf16 %v2379, %v2377
      %v2658 = vpack.c.bf16 %v2382, %v2380
      %v2659 = vpack.c.bf16 %v2383, %v2381
      %v2660 = vpack.c.bf16 %v2538, %v2536
      %v2661 = vpack.c.bf16 %v2539, %v2537
      %v2662 = vpack.c.bf16 %v2542, %v2540
      %v2663 = vpack.c.bf16 %v2543, %v2541
      %v2664 = vpack.c.bf16 %v2570, %v2568
      %v2665 = vpack.c.bf16 %v2571, %v2569
      %v2666 = vpack.c.bf16 %v2574, %v2572
      %v2667 = vpack.c.bf16 %v2575, %v2573
      %v2668 = vpack.c.bf16 %v2602, %v2600
      %v2669 = vpack.c.bf16 %v2603, %v2601
      %v2670 = vpack.c.bf16 %v2606, %v2604
      %v2671 = vpack.c.bf16 %v2607, %v2605
      %v2672 = vpack.c.bf16 %v2634, %v2632
      %v2673 = vpack.c.bf16 %v2635, %v2633
      %v2674 = vpack.c.bf16 %v2638, %v2636
      %v2675 = vpack.c.bf16 %v2639, %v2637
      %v2676 = vld [vmem:[%s17] sm:$0xff]
      %v2677 = vld [vmem:[%s17 + $0x8] sm:$0xf]
      %v2678 = vld [vmem:[%s17 + $0xc] sm:$0xff]
      %v2679 = vld [vmem:[%s17 + $0x14] sm:$0xf]
      %v2680 = vld [vmem:[%s17 + $0x18] sm:$0xff]
      %v2681 = vld [vmem:[%s17 + $0x20] sm:$0xf]
      %v2682 = vld [vmem:[%s17 + $0x24] sm:$0xff]
      %v2683 = vld [vmem:[%s17 + $0x2c] sm:$0xf]
      %v2684 = vld [vmem:[%s17 + $0x30] sm:$0xff]
      %v2685 = vld [vmem:[%s17 + $0x38] sm:$0xf]
      %v2686 = vld [vmem:[%s17 + $0x3c] sm:$0xff]
      %v2687 = vld [vmem:[%s17 + $0x44] sm:$0xf]
      %v2688 = vld [vmem:[%s17 + $0x48] sm:$0xff]
      %v2689 = vld [vmem:[%s17 + $0x50] sm:$0xf]
      %v2690 = vld [vmem:[%s17 + $0x54] sm:$0xff]
      %v2691 = vld [vmem:[%s17 + $0x5c] sm:$0xf]
      %v2708 = vunpack.c.l.b16 %v2676
      %v2709 = vunpack.c.h.b16 %v2676
      %v2710 = vunpack.c.l.b16 %v2677
      %v2711 = vunpack.c.l.b16 %v2678
      %v2712 = vunpack.c.h.b16 %v2678
      %v2713 = vunpack.c.l.b16 %v2679
      %v2714 = vunpack.c.l.b16 %v2680
      %v2715 = vunpack.c.h.b16 %v2680
      %v2716 = vunpack.c.l.b16 %v2681
      %v2717 = vunpack.c.l.b16 %v2682
      %v2718 = vunpack.c.h.b16 %v2682
      %v2719 = vunpack.c.l.b16 %v2683
      %v2720 = vunpack.c.l.b16 %v2684
      %v2721 = vunpack.c.h.b16 %v2684
      %v2722 = vunpack.c.l.b16 %v2685
      %v2723 = vunpack.c.l.b16 %v2686
      %v2724 = vunpack.c.h.b16 %v2686
      %v2725 = vunpack.c.l.b16 %v2687
      %v2726 = vunpack.c.l.b16 %v2688
      %v2727 = vunpack.c.h.b16 %v2688
      %v2728 = vunpack.c.l.b16 %v2689
      %v2729 = vunpack.c.l.b16 %v2690
      %v2730 = vunpack.c.h.b16 %v2690
      %v2731 = vunpack.c.l.b16 %v2691
      %v2732 = vpack.c.b16 %v2711, %v2708
      %v2733 = vpack.c.b16 %v2712, %v2709
      %v2734 = vpack.c.b16 %v2713, %v2710
      %v2735 = vpack.c.b16 %v2717, %v2714
      %v2736 = vpack.c.b16 %v2718, %v2715
      %v2737 = vpack.c.b16 %v2719, %v2716
      %v2738 = vpack.c.b16 %v2723, %v2720
      %v2739 = vpack.c.b16 %v2724, %v2721
      %v2740 = vpack.c.b16 %v2725, %v2722
      %v2741 = vpack.c.b16 %v2729, %v2726
      %v2742 = vpack.c.b16 %v2730, %v2727
      %v2743 = vpack.c.b16 %v2731, %v2728
      %v2753 = vsel %vm1205, %v2734, 0
      %v2756 = vsel %vm1205, %v2737, 0
      %v2759 = vsel %vm1205, %v2740, 0
      %v2762 = vsel %vm1205, %v2743, 0
      %2764 = vmatpush.bf16.msra.mxu0 %v2654
      %2765 = vmatpush.bf16.msra.mxu0 %v2652
      %2766 = vmatpush.bf16.msra.mxu0 %v2650
      %2767 = vmatpush.bf16.msra.mxu0 %v2648
      %2768 = vmatpush.bf16.msra.mxu0 %v2646
      %2769 = vmatpush.bf16.msra.mxu0 %v2644
      %2770 = vmatpush.bf16.msra.mxu0 %v2642
      %2771 = vmatpush.bf16.msra.mxu0 %v2640
      %2772 = vmatmul.bf16.gmra.mxu0 %v2732
      %v2773 = vpop.f32.mrf.mxu0
      %v2774 = vadd.f32 0.0, %v2773
      %v2775 = vpop.f32.mrf.mxu0
      %v2776 = vadd.f32 0.0, %v2775
      %2777 = vmatmul.bf16.gmra.mxu0 %v2735
      %v2778 = vpop.f32.mrf.mxu0
      %v2779 = vadd.f32 0.0, %v2778
      %v2780 = vpop.f32.mrf.mxu0
      %v2781 = vadd.f32 0.0, %v2780
      %2782 = vmatmul.bf16.gmra.mxu0 %v2738
      %v2783 = vpop.f32.mrf.mxu0
      %v2784 = vadd.f32 0.0, %v2783
      %v2785 = vpop.f32.mrf.mxu0
      %v2786 = vadd.f32 0.0, %v2785
      %2787 = vmatmul.bf16.gmra.mxu0 %v2741
      %v2788 = vpop.f32.mrf.mxu0
      %v2789 = vadd.f32 0.0, %v2788
      %v2790 = vpop.f32.mrf.mxu0
      %v2791 = vadd.f32 0.0, %v2790
      %2792 = vdwg.mxu0
      %2793 = vmatpush.bf16.msra.mxu0 %v2670
      %2794 = vmatpush.bf16.msra.mxu0 %v2668
      %2795 = vmatpush.bf16.msra.mxu0 %v2666
      %2796 = vmatpush.bf16.msra.mxu0 %v2664
      %2797 = vmatpush.bf16.msra.mxu0 %v2662
      %2798 = vmatpush.bf16.msra.mxu0 %v2660
      %2799 = vmatpush.bf16.msra.mxu0 %v2658
      %2800 = vmatpush.bf16.msra.mxu0 %v2656
      %2801 = vmatmul.bf16.gmra.mxu0 %v2733
      %v2802 = vpop.f32.mrf.mxu0
      %v2803 = vadd.f32 %v2774, %v2802
      %v2804 = vpop.f32.mrf.mxu0
      %v2805 = vadd.f32 %v2776, %v2804
      %2806 = vmatmul.bf16.gmra.mxu0 %v2736
      %v2807 = vpop.f32.mrf.mxu0
      %v2808 = vadd.f32 %v2779, %v2807
      %v2809 = vpop.f32.mrf.mxu0
      %v2810 = vadd.f32 %v2781, %v2809
      %2811 = vmatmul.bf16.gmra.mxu0 %v2739
      %v2812 = vpop.f32.mrf.mxu0
      %v2813 = vadd.f32 %v2784, %v2812
      %v2814 = vpop.f32.mrf.mxu0
      %v2815 = vadd.f32 %v2786, %v2814
      %2816 = vmatmul.bf16.gmra.mxu0 %v2742
      %v2817 = vpop.f32.mrf.mxu0
      %v2818 = vadd.f32 %v2789, %v2817
      %v2819 = vpop.f32.mrf.mxu0
      %v2820 = vadd.f32 %v2791, %v2819
      %2821 = vdwg.mxu0
      %2822 = vmatpush.bf16.msra.mxu0 0
      %2823 = vmatpush.bf16.msra.mxu0 0
      %2824 = vmatpush.bf16.msra.mxu0 0
      %2825 = vmatpush.bf16.msra.mxu0 0
      %2826 = vmatpush.bf16.msra.mxu0 0
      %2827 = vmatpush.bf16.msra.mxu0 0
      %2828 = vmatpush.bf16.msra.mxu0 %v2674
      %2829 = vmatpush.bf16.msra.mxu0 %v2672
      %2830 = vmatmul.bf16.gmra.mxu0 %v2753
      %v2831 = vpop.f32.mrf.mxu0
      %v2832 = vadd.f32 %v2803, %v2831
      %v2833 = vpop.f32.mrf.mxu0
      %v2834 = vadd.f32 %v2805, %v2833
      %2835 = vmatmul.bf16.gmra.mxu0 %v2756
      %v2836 = vpop.f32.mrf.mxu0
      %v2837 = vadd.f32 %v2808, %v2836
      %v2838 = vpop.f32.mrf.mxu0
      %v2839 = vadd.f32 %v2810, %v2838
      %2840 = vmatmul.bf16.gmra.mxu0 %v2759
      %v2841 = vpop.f32.mrf.mxu0
      %v2842 = vadd.f32 %v2813, %v2841
      %v2843 = vpop.f32.mrf.mxu0
      %v2844 = vadd.f32 %v2815, %v2843
      %2845 = vmatmul.bf16.gmra.mxu0 %v2762
      %v2846 = vpop.f32.mrf.mxu0
      %v2847 = vadd.f32 %v2818, %v2846
      %v2848 = vpop.f32.mrf.mxu0
      %v2849 = vadd.f32 %v2820, %v2848
      %2850 = vdwg.mxu0
      %2851 = vmatpush.bf16.msra.mxu0 %v2655
      %2852 = vmatpush.bf16.msra.mxu0 %v2653
      %2853 = vmatpush.bf16.msra.mxu0 %v2651
      %2854 = vmatpush.bf16.msra.mxu0 %v2649
      %2855 = vmatpush.bf16.msra.mxu0 %v2647
      %2856 = vmatpush.bf16.msra.mxu0 %v2645
      %2857 = vmatpush.bf16.msra.mxu0 %v2643
      %2858 = vmatpush.bf16.msra.mxu0 %v2641
      %2859 = vmatmul.bf16.gmra.mxu0 %v2732
      %v2860 = vpop.f32.mrf.mxu0
      %v2861 = vadd.f32 0.0, %v2860
      %v2862 = vpop.f32.mrf.mxu0
      %v2863 = vadd.f32 0.0, %v2862
      %2864 = vmatmul.bf16.gmra.mxu0 %v2735
      %v2865 = vpop.f32.mrf.mxu0
      %v2866 = vadd.f32 0.0, %v2865
      %v2867 = vpop.f32.mrf.mxu0
      %v2868 = vadd.f32 0.0, %v2867
      %2869 = vmatmul.bf16.gmra.mxu0 %v2738
      %v2870 = vpop.f32.mrf.mxu0
      %v2871 = vadd.f32 0.0, %v2870
      %v2872 = vpop.f32.mrf.mxu0
      %v2873 = vadd.f32 0.0, %v2872
      %2874 = vmatmul.bf16.gmra.mxu0 %v2741
      %v2875 = vpop.f32.mrf.mxu0
      %v2876 = vadd.f32 0.0, %v2875
      %v2877 = vpop.f32.mrf.mxu0
      %v2878 = vadd.f32 0.0, %v2877
      %2879 = vdwg.mxu0
      %2880 = vmatpush.bf16.msra.mxu0 %v2671
      %2881 = vmatpush.bf16.msra.mxu0 %v2669
      %2882 = vmatpush.bf16.msra.mxu0 %v2667
      %2883 = vmatpush.bf16.msra.mxu0 %v2665
      %2884 = vmatpush.bf16.msra.mxu0 %v2663
      %2885 = vmatpush.bf16.msra.mxu0 %v2661
      %2886 = vmatpush.bf16.msra.mxu0 %v2659
      %2887 = vmatpush.bf16.msra.mxu0 %v2657
      %2888 = vmatmul.bf16.gmra.mxu0 %v2733
      %v2889 = vpop.f32.mrf.mxu0
      %v2890 = vadd.f32 %v2861, %v2889
      %v2891 = vpop.f32.mrf.mxu0
      %v2892 = vadd.f32 %v2863, %v2891
      %2893 = vmatmul.bf16.gmra.mxu0 %v2736
      %v2894 = vpop.f32.mrf.mxu0
      %v2895 = vadd.f32 %v2866, %v2894
      %v2896 = vpop.f32.mrf.mxu0
      %v2897 = vadd.f32 %v2868, %v2896
      %2898 = vmatmul.bf16.gmra.mxu0 %v2739
      %v2899 = vpop.f32.mrf.mxu0
      %v2900 = vadd.f32 %v2871, %v2899
      %v2901 = vpop.f32.mrf.mxu0
      %v2902 = vadd.f32 %v2873, %v2901
      %2903 = vmatmul.bf16.gmra.mxu0 %v2742
      %v2904 = vpop.f32.mrf.mxu0
      %v2905 = vadd.f32 %v2876, %v2904
      %v2906 = vpop.f32.mrf.mxu0
      %v2907 = vadd.f32 %v2878, %v2906
      %2908 = vdwg.mxu0
      %2909 = vmatpush.bf16.msra.mxu0 0
      %2910 = vmatpush.bf16.msra.mxu0 0
      %2911 = vmatpush.bf16.msra.mxu0 0
      %2912 = vmatpush.bf16.msra.mxu0 0
      %2913 = vmatpush.bf16.msra.mxu0 0
      %2914 = vmatpush.bf16.msra.mxu0 0
      %2915 = vmatpush.bf16.msra.mxu0 %v2675
      %2916 = vmatpush.bf16.msra.mxu0 %v2673
      %2917 = vmatmul.bf16.gmra.mxu0 %v2753
      %v2918 = vpop.f32.mrf.mxu0
      %v2919 = vadd.f32 %v2890, %v2918
      %v2920 = vpop.f32.mrf.mxu0
      %v2921 = vadd.f32 %v2892, %v2920
      %2922 = vmatmul.bf16.gmra.mxu0 %v2756
      %v2923 = vpop.f32.mrf.mxu0
      %v2924 = vadd.f32 %v2895, %v2923
      %v2925 = vpop.f32.mrf.mxu0
      %v2926 = vadd.f32 %v2897, %v2925
      %2927 = vmatmul.bf16.gmra.mxu0 %v2759
      %v2928 = vpop.f32.mrf.mxu0
      %v2929 = vadd.f32 %v2900, %v2928
      %v2930 = vpop.f32.mrf.mxu0
      %v2931 = vadd.f32 %v2902, %v2930
      %2932 = vmatmul.bf16.gmra.mxu0 %v2762
      %v2933 = vpop.f32.mrf.mxu0
      %v2934 = vadd.f32 %v2905, %v2933
      %v2935 = vpop.f32.mrf.mxu0
      %v2936 = vadd.f32 %v2907, %v2935
      %2937 = vdwg.mxu0
      %v2938 = vpack.c.bf16 %v2834, %v2832
      %v2939 = vpack.c.bf16 %v2921, %v2919
      %v2940 = vpack.c.bf16 %v2839, %v2837
      %v2941 = vpack.c.bf16 %v2926, %v2924
      %v2942 = vpack.c.bf16 %v2844, %v2842
      %v2943 = vpack.c.bf16 %v2931, %v2929
      %v2944 = vpack.c.bf16 %v2849, %v2847
      %v2945 = vpack.c.bf16 %v2936, %v2934
      %v2946 = vld [vmem:[%s11] sm:$0xf]
      %v2947 = vld [vmem:[%s11 + $0x4] sm:$0xf]
      %v2948 = vld [vmem:[%s11 + $0x8] sm:$0xf]
      %v2949 = vld [vmem:[%s11 + $0xc] sm:$0xf]
      %v2950 = vld [vmem:[%s11 + $0x10] sm:$0xf]
      %v2951 = vld [vmem:[%s11 + $0x14] sm:$0xf]
      %v2952 = vld [vmem:[%s11 + $0x18] sm:$0xf]
      %v2953 = vld [vmem:[%s11 + $0x1c] sm:$0xf]
      %v2954 = vld [vmem:[%s11 + $0x20] sm:$0xf]
      %v2955 = vld [vmem:[%s11 + $0x24] sm:$0xf]
      %v2956 = vld [vmem:[%s11 + $0x28] sm:$0xf]
      %v2957 = vld [vmem:[%s11 + $0x2c] sm:$0xf]
      %v2958 = vld [vmem:[%s11 + $0x30] sm:$0xf]
      %v2959 = vld [vmem:[%s11 + $0x34] sm:$0xf]
      %v2960 = vld [vmem:[%s11 + $0x38] sm:$0xf]
      %v2961 = vld [vmem:[%s11 + $0x3c] sm:$0xf]
      %v2962 = vld [vmem:[%s11 + $0x40] sm:$0xf]
      %v2963 = vld [vmem:[%s11 + $0x44] sm:$0xf]
      %v2964 = vld [vmem:[%s11 + $0x48] sm:$0xf]
      %v2965 = vld [vmem:[%s11 + $0x4c] sm:$0xf]
      %v2966 = vld [vmem:[%s11 + $0x50] sm:$0xf]
      %v2967 = vld [vmem:[%s11 + $0x54] sm:$0xf]
      %v2968 = vld [vmem:[%s11 + $0x58] sm:$0xf]
      %v2969 = vld [vmem:[%s11 + $0x5c] sm:$0xf]
      %v2970 = vld [vmem:[%s11 + $0x60] sm:$0xf]
      %v2971 = vld [vmem:[%s11 + $0x64] sm:$0xf]
      %v2972 = vld [vmem:[%s11 + $0x68] sm:$0xf]
      %v2973 = vld [vmem:[%s11 + $0x6c] sm:$0xf]
      %v2974 = vld [vmem:[%s11 + $0x70] sm:$0xf]
      %v2975 = vld [vmem:[%s11 + $0x74] sm:$0xf]
      %v2976 = vld [vmem:[%s11 + $0x78] sm:$0xf]
      %v2977 = vld [vmem:[%s11 + $0x7c] sm:$0xf]
      %v2978 = vld [vmem:[%s18] sm:$0xff]
      %v2979 = vld [vmem:[%s18 + $0x8] sm:$0xff]
      %v2980 = vld [vmem:[%s18 + $0x10] sm:$0xff]
      %v2981 = vld [vmem:[%s18 + $0x18] sm:$0xff]
      %v2982 = vld [vmem:[%s18 + $0x20] sm:$0xff]
      %v2983 = vld [vmem:[%s18 + $0x28] sm:$0xff]
      %v2984 = vld [vmem:[%s18 + $0x30] sm:$0xff]
      %v2985 = vld [vmem:[%s18 + $0x38] sm:$0xff]
      %2987 = vset.pattern.permute.xlu0 0
      %2988 = vperm.xlu0 %2987, %v2978
      %v2989 = vpop.permute.xlu0 %2988
      %2992 = vset.pattern.permute.xlu0 0
      %2993 = vperm.xlu0 %2992, %v2979
      %v2994 = vpop.permute.xlu0 %2993
      %2997 = vset.pattern.permute.xlu0 0
      %2998 = vperm.xlu0 %2997, %v2980
      %v2999 = vpop.permute.xlu0 %2998
      %3002 = vset.pattern.permute.xlu0 0
      %3003 = vperm.xlu0 %3002, %v2981
      %v3004 = vpop.permute.xlu0 %3003
      %3007 = vset.pattern.permute.xlu0 0
      %3008 = vperm.xlu0 %3007, %v2982
      %v3009 = vpop.permute.xlu0 %3008
      %3012 = vset.pattern.permute.xlu0 0
      %3013 = vperm.xlu0 %3012, %v2983
      %v3014 = vpop.permute.xlu0 %3013
      %3017 = vset.pattern.permute.xlu0 0
      %3018 = vperm.xlu0 %3017, %v2984
      %v3019 = vpop.permute.xlu0 %3018
      %3022 = vset.pattern.permute.xlu0 0
      %3023 = vperm.xlu0 %3022, %v2985
      %v3024 = vpop.permute.xlu0 %3023
      %v3058 = vunpack.c.l.b16 %v2946
      %v3059 = vunpack.c.l.b16 %v2947
      %v3060 = vunpack.c.l.b16 %v2948
      %v3061 = vunpack.c.l.b16 %v2949
      %v3062 = vunpack.c.l.b16 %v2950
      %v3063 = vunpack.c.l.b16 %v2951
      %v3064 = vunpack.c.l.b16 %v2952
      %v3065 = vunpack.c.l.b16 %v2953
      %v3066 = vunpack.c.l.b16 %v2954
      %v3067 = vunpack.c.l.b16 %v2955
      %v3068 = vunpack.c.l.b16 %v2956
      %v3069 = vunpack.c.l.b16 %v2957
      %v3070 = vunpack.c.l.b16 %v2958
      %v3071 = vunpack.c.l.b16 %v2959
      %v3072 = vunpack.c.l.b16 %v2960
      %v3073 = vunpack.c.l.b16 %v2961
      %v3074 = vunpack.c.l.b16 %v2962
      %v3075 = vunpack.c.l.b16 %v2963
      %v3076 = vunpack.c.l.b16 %v2964
      %v3077 = vunpack.c.l.b16 %v2965
      %v3078 = vunpack.c.l.b16 %v2966
      %v3079 = vunpack.c.l.b16 %v2967
      %v3080 = vunpack.c.l.b16 %v2968
      %v3081 = vunpack.c.l.b16 %v2969
      %v3082 = vunpack.c.l.b16 %v2970
      %v3083 = vunpack.c.l.b16 %v2971
      %v3084 = vunpack.c.l.b16 %v2972
      %v3085 = vunpack.c.l.b16 %v2973
      %v3086 = vunpack.c.l.b16 %v2974
      %v3087 = vunpack.c.l.b16 %v2975
      %v3088 = vunpack.c.l.b16 %v2976
      %v3089 = vunpack.c.l.b16 %v2977
      %v3090 = vpack.c.b16 %v3059, %v3058
      %v3091 = vpack.c.b16 %v3061, %v3060
      %v3092 = vpack.c.b16 %v3063, %v3062
      %v3093 = vpack.c.b16 %v3065, %v3064
      %v3094 = vpack.c.b16 %v3067, %v3066
      %v3095 = vpack.c.b16 %v3069, %v3068
      %v3096 = vpack.c.b16 %v3071, %v3070
      %v3097 = vpack.c.b16 %v3073, %v3072
      %v3098 = vpack.c.b16 %v3075, %v3074
      %v3099 = vpack.c.b16 %v3077, %v3076
      %v3100 = vpack.c.b16 %v3079, %v3078
      %v3101 = vpack.c.b16 %v3081, %v3080
      %v3102 = vpack.c.b16 %v3083, %v3082
      %v3103 = vpack.c.b16 %v3085, %v3084
      %v3104 = vpack.c.b16 %v3087, %v3086
      %v3105 = vpack.c.b16 %v3089, %v3088
      %3122 = vmatpush.bf16.msra.mxu0 %v3097
      %3123 = vmatpush.bf16.msra.mxu0 %v3096
      %3124 = vmatpush.bf16.msra.mxu0 %v3095
      %3125 = vmatpush.bf16.msra.mxu0 %v3094
      %3126 = vmatpush.bf16.msra.mxu0 %v3093
      %3127 = vmatpush.bf16.msra.mxu0 %v3092
      %3128 = vmatpush.bf16.msra.mxu0 %v3091
      %3129 = vmatpush.bf16.msra.mxu0 %v3090
      %3130 = vmatmul.bf16.gmra.mxu0 %v2938
      %v3131 = vpop.f32.mrf.mxu0
      %v3132 = vadd.f32 %v2989, %v3131
      %v3133 = vpop.f32.mrf.mxu0
      %v3134 = vadd.f32 %v2994, %v3133
      %3135 = vmatmul.bf16.gmra.mxu0 %v2940
      %v3136 = vpop.f32.mrf.mxu0
      %v3137 = vadd.f32 %v2999, %v3136
      %v3138 = vpop.f32.mrf.mxu0
      %v3139 = vadd.f32 %v3004, %v3138
      %3140 = vmatmul.bf16.gmra.mxu0 %v2942
      %v3141 = vpop.f32.mrf.mxu0
      %v3142 = vadd.f32 %v3009, %v3141
      %v3143 = vpop.f32.mrf.mxu0
      %v3144 = vadd.f32 %v3014, %v3143
      %3145 = vmatmul.bf16.gmra.mxu0 %v2944
      %v3146 = vpop.f32.mrf.mxu0
      %v3147 = vadd.f32 %v3019, %v3146
      %v3148 = vpop.f32.mrf.mxu0
      %v3149 = vadd.f32 %v3024, %v3148
      %3150 = vdwg.mxu0
      %3151 = vmatpush.bf16.msra.mxu0 %v3105
      %3152 = vmatpush.bf16.msra.mxu0 %v3104
      %3153 = vmatpush.bf16.msra.mxu0 %v3103
      %3154 = vmatpush.bf16.msra.mxu0 %v3102
      %3155 = vmatpush.bf16.msra.mxu0 %v3101
      %3156 = vmatpush.bf16.msra.mxu0 %v3100
      %3157 = vmatpush.bf16.msra.mxu0 %v3099
      %3158 = vmatpush.bf16.msra.mxu0 %v3098
      %3159 = vmatmul.bf16.gmra.mxu0 %v2939
      %v3160 = vpop.f32.mrf.mxu0
      %v3161 = vadd.f32 %v3132, %v3160
      %v3162 = vpop.f32.mrf.mxu0
      %v3163 = vadd.f32 %v3134, %v3162
      %3164 = vmatmul.bf16.gmra.mxu0 %v2941
      %v3165 = vpop.f32.mrf.mxu0
      %v3166 = vadd.f32 %v3137, %v3165
      %v3167 = vpop.f32.mrf.mxu0
      %v3168 = vadd.f32 %v3139, %v3167
      %3169 = vmatmul.bf16.gmra.mxu0 %v2943
      %v3170 = vpop.f32.mrf.mxu0
      %v3171 = vadd.f32 %v3142, %v3170
      %v3172 = vpop.f32.mrf.mxu0
      %v3173 = vadd.f32 %v3144, %v3172
      %3174 = vmatmul.bf16.gmra.mxu0 %v2945
      %v3175 = vpop.f32.mrf.mxu0
      %v3176 = vadd.f32 %v3147, %v3175
      %v3177 = vpop.f32.mrf.mxu0
      %v3178 = vadd.f32 %v3149, %v3177
      %3179 = vdwg.mxu0
      %v3180 = vmax.f32 %v3161, 0.0
      %v3181 = vmax.f32 %v3163, 0.0
      %v3182 = vmax.f32 %v3166, 0.0
      %v3183 = vmax.f32 %v3168, 0.0
      %v3184 = vmax.f32 %v3171, 0.0
      %v3185 = vmax.f32 %v3173, 0.0
      %v3186 = vmax.f32 %v3176, 0.0
      %v3187 = vmax.f32 %v3178, 0.0
      %v3188 = vld [vmem:[%s19] sm:$0xff]
      %v3189 = vld [vmem:[%s19 + $0x8] sm:$0xff]
      %v3190 = vld [vmem:[%s19 + $0x10] sm:$0xf]
      %v3191 = vld [vmem:[%s19 + $0x14] sm:$0xff]
      %v3192 = vld [vmem:[%s19 + $0x1c] sm:$0xff]
      %v3193 = vld [vmem:[%s19 + $0x24] sm:$0xf]
      %v3194 = vld [vmem:[%s19 + $0x28] sm:$0xff]
      %v3195 = vld [vmem:[%s19 + $0x30] sm:$0xff]
      %v3196 = vld [vmem:[%s19 + $0x38] sm:$0xf]
      %v3197 = vld [vmem:[%s19 + $0x3c] sm:$0xff]
      %v3198 = vld [vmem:[%s19 + $0x44] sm:$0xff]
      %v3199 = vld [vmem:[%s19 + $0x4c] sm:$0xf]
      %v3200 = vld [vmem:[%s19 + $0x50] sm:$0xff]
      %v3201 = vld [vmem:[%s19 + $0x58] sm:$0xff]
      %v3202 = vld [vmem:[%s19 + $0x60] sm:$0xf]
      %v3203 = vld [vmem:[%s19 + $0x64] sm:$0xff]
      %v3204 = vld [vmem:[%s19 + $0x6c] sm:$0xff]
      %v3205 = vld [vmem:[%s19 + $0x74] sm:$0xf]
      %v3206 = vld [vmem:[%s19 + $0x78] sm:$0xff]
      %v3207 = vld [vmem:[%s19 + $0x80] sm:$0xff]
      %v3208 = vld [vmem:[%s19 + $0x88] sm:$0xf]
      %v3209 = vld [vmem:[%s19 + $0x8c] sm:$0xff]
      %v3210 = vld [vmem:[%s19 + $0x94] sm:$0xff]
      %v3211 = vld [vmem:[%s19 + $0x9c] sm:$0xf]
      %v3212 = vpack.c.bf16 %v3181, %v3180
      %v3213 = vpack.c.bf16 %v3183, %v3182
      %v3214 = vpack.c.bf16 %v3185, %v3184
      %v3215 = vpack.c.bf16 %v3187, %v3186
      %v3216 = vld [vmem:[%s10] sm:$0xf]
      %v3217 = vld [vmem:[%s10 + $0x4] sm:$0xf]
      %v3218 = vld [vmem:[%s10 + $0x8] sm:$0xf]
      %v3219 = vld [vmem:[%s10 + $0xc] sm:$0xf]
      %v3220 = vld [vmem:[%s10 + $0x10] sm:$0xf]
      %v3221 = vld [vmem:[%s10 + $0x14] sm:$0xf]
      %v3222 = vld [vmem:[%s10 + $0x18] sm:$0xf]
      %v3223 = vld [vmem:[%s10 + $0x1c] sm:$0xf]
      %v3232 = vunpack.c.l.b16 %v3216
      %v3233 = vunpack.c.l.b16 %v3217
      %v3234 = vunpack.c.l.b16 %v3218
      %v3235 = vunpack.c.l.b16 %v3219
      %v3236 = vunpack.c.l.b16 %v3220
      %v3237 = vunpack.c.l.b16 %v3221
      %v3238 = vunpack.c.l.b16 %v3222
      %v3239 = vunpack.c.l.b16 %v3223
      %v3240 = vpack.c.b16 %v3233, %v3232
      %v3241 = vpack.c.b16 %v3235, %v3234
      %v3242 = vpack.c.b16 %v3237, %v3236
      %v3243 = vpack.c.b16 %v3239, %v3238
      %vm3248 = vcmask 523264
      %v3250 = vsel %vm3248, %v3212, 0
      %v3253 = vsel %vm3248, %v3213, 0
      %v3256 = vsel %vm3248, %v3214, 0
      %v3259 = vsel %vm3248, %v3215, 0
      %3261 = vmatpush.bf16.msra.mxu0 0
      %3262 = vmatpush.bf16.msra.mxu0 0
      %3263 = vmatpush.bf16.msra.mxu0 0
      %3264 = vmatpush.bf16.msra.mxu0 0
      %3265 = vmatpush.bf16.msra.mxu0 %v3243
      %3266 = vmatpush.bf16.msra.mxu0 %v3242
      %3267 = vmatpush.bf16.msra.mxu0 %v3241
      %3268 = vmatpush.bf16.msra.mxu0 %v3240
      %3269 = vmatmul.bf16.gmra.mxu0 %v3250
      %v3270 = vpop.f32.mrf.mxu0
      %v3271 = vadd.f32 0.0, %v3270
      %v3272 = vpop.f32.mrf.mxu0
      %v3273 = vadd.f32 0.0, %v3272
      %3274 = vmatmul.bf16.gmra.mxu0 %v3253
      %v3275 = vpop.f32.mrf.mxu0
      %v3276 = vadd.f32 0.0, %v3275
      %v3277 = vpop.f32.mrf.mxu0
      %v3278 = vadd.f32 0.0, %v3277
      %3279 = vmatmul.bf16.gmra.mxu0 %v3256
      %v3280 = vpop.f32.mrf.mxu0
      %v3281 = vadd.f32 0.0, %v3280
      %v3282 = vpop.f32.mrf.mxu0
      %v3283 = vadd.f32 0.0, %v3282
      %3284 = vmatmul.bf16.gmra.mxu0 %v3259
      %v3285 = vpop.f32.mrf.mxu0
      %v3286 = vadd.f32 0.0, %v3285
      %v3287 = vpop.f32.mrf.mxu0
      %v3288 = vadd.f32 0.0, %v3287
      %3289 = vdwg.mxu0
      %s3290 = scalar_lea.vmem %s10, 32
      %v3291 = vld [vmem:[%s3290] sm:$0xf]
      %v3292 = vld [vmem:[%s3290 + $0x4] sm:$0xf]
      %v3293 = vld [vmem:[%s3290 + $0x8] sm:$0xf]
      %v3294 = vld [vmem:[%s3290 + $0xc] sm:$0xf]
      %v3295 = vld [vmem:[%s3290 + $0x10] sm:$0xf]
      %v3296 = vld [vmem:[%s3290 + $0x14] sm:$0xf]
      %v3297 = vld [vmem:[%s3290 + $0x18] sm:$0xf]
      %v3298 = vld [vmem:[%s3290 + $0x1c] sm:$0xf]
      %v3307 = vunpack.c.l.b16 %v3291
      %v3308 = vunpack.c.l.b16 %v3292
      %v3309 = vunpack.c.l.b16 %v3293
      %v3310 = vunpack.c.l.b16 %v3294
      %v3311 = vunpack.c.l.b16 %v3295
      %v3312 = vunpack.c.l.b16 %v3296
      %v3313 = vunpack.c.l.b16 %v3297
      %v3314 = vunpack.c.l.b16 %v3298
      %v3315 = vpack.c.b16 %v3308, %v3307
      %v3316 = vpack.c.b16 %v3310, %v3309
      %v3317 = vpack.c.b16 %v3312, %v3311
      %v3318 = vpack.c.b16 %v3314, %v3313
      %3323 = vmatpush.bf16.msra.mxu0 0
      %3324 = vmatpush.bf16.msra.mxu0 0
      %3325 = vmatpush.bf16.msra.mxu0 0
      %3326 = vmatpush.bf16.msra.mxu0 0
      %3327 = vmatpush.bf16.msra.mxu0 %v3318
      %3328 = vmatpush.bf16.msra.mxu0 %v3317
      %3329 = vmatpush.bf16.msra.mxu0 %v3316
      %3330 = vmatpush.bf16.msra.mxu0 %v3315
      %3331 = vmatmul.bf16.gmra.mxu0 %v3250
      %v3332 = vpop.f32.mrf.mxu0
      %v3333 = vadd.f32 0.0, %v3332
      %v3334 = vpop.f32.mrf.mxu0
      %v3335 = vadd.f32 0.0, %v3334
      %3336 = vmatmul.bf16.gmra.mxu0 %v3253
      %v3337 = vpop.f32.mrf.mxu0
      %v3338 = vadd.f32 0.0, %v3337
      %v3339 = vpop.f32.mrf.mxu0
      %v3340 = vadd.f32 0.0, %v3339
      %3341 = vmatmul.bf16.gmra.mxu0 %v3256
      %v3342 = vpop.f32.mrf.mxu0
      %v3343 = vadd.f32 0.0, %v3342
      %v3344 = vpop.f32.mrf.mxu0
      %v3345 = vadd.f32 0.0, %v3344
      %3346 = vmatmul.bf16.gmra.mxu0 %v3259
      %v3347 = vpop.f32.mrf.mxu0
      %v3348 = vadd.f32 0.0, %v3347
      %v3349 = vpop.f32.mrf.mxu0
      %v3350 = vadd.f32 0.0, %v3349
      %3351 = vdwg.mxu0
      %s3352 = scalar_lea.vmem %s10, 64
      %v3353 = vld [vmem:[%s3352] sm:$0xf]
      %v3354 = vld [vmem:[%s3352 + $0x4] sm:$0xf]
      %v3355 = vld [vmem:[%s3352 + $0x8] sm:$0xf]
      %v3356 = vld [vmem:[%s3352 + $0xc] sm:$0xf]
      %v3357 = vld [vmem:[%s3352 + $0x10] sm:$0xf]
      %v3358 = vld [vmem:[%s3352 + $0x14] sm:$0xf]
      %v3359 = vld [vmem:[%s3352 + $0x18] sm:$0xf]
      %v3360 = vld [vmem:[%s3352 + $0x1c] sm:$0xf]
      %v3369 = vunpack.c.l.b16 %v3353
      %v3370 = vunpack.c.l.b16 %v3354
      %v3371 = vunpack.c.l.b16 %v3355
      %v3372 = vunpack.c.l.b16 %v3356
      %v3373 = vunpack.c.l.b16 %v3357
      %v3374 = vunpack.c.l.b16 %v3358
      %v3375 = vunpack.c.l.b16 %v3359
      %v3376 = vunpack.c.l.b16 %v3360
      %v3377 = vpack.c.b16 %v3370, %v3369
      %v3378 = vpack.c.b16 %v3372, %v3371
      %v3379 = vpack.c.b16 %v3374, %v3373
      %v3380 = vpack.c.b16 %v3376, %v3375
      %3385 = vmatpush.bf16.msra.mxu0 0
      %3386 = vmatpush.bf16.msra.mxu0 0
      %3387 = vmatpush.bf16.msra.mxu0 0
      %3388 = vmatpush.bf16.msra.mxu0 0
      %3389 = vmatpush.bf16.msra.mxu0 %v3380
      %3390 = vmatpush.bf16.msra.mxu0 %v3379
      %3391 = vmatpush.bf16.msra.mxu0 %v3378
      %3392 = vmatpush.bf16.msra.mxu0 %v3377
      %3393 = vmatmul.bf16.gmra.mxu0 %v3250
      %v3394 = vpop.f32.mrf.mxu0
      %v3395 = vadd.f32 0.0, %v3394
      %v3396 = vpop.f32.mrf.mxu0
      %v3397 = vadd.f32 0.0, %v3396
      %3398 = vmatmul.bf16.gmra.mxu0 %v3253
      %v3399 = vpop.f32.mrf.mxu0
      %v3400 = vadd.f32 0.0, %v3399
      %v3401 = vpop.f32.mrf.mxu0
      %v3402 = vadd.f32 0.0, %v3401
      %3403 = vmatmul.bf16.gmra.mxu0 %v3256
      %v3404 = vpop.f32.mrf.mxu0
      %v3405 = vadd.f32 0.0, %v3404
      %v3406 = vpop.f32.mrf.mxu0
      %v3407 = vadd.f32 0.0, %v3406
      %3408 = vmatmul.bf16.gmra.mxu0 %v3259
      %v3409 = vpop.f32.mrf.mxu0
      %v3410 = vadd.f32 0.0, %v3409
      %v3411 = vpop.f32.mrf.mxu0
      %v3412 = vadd.f32 0.0, %v3411
      %3413 = vdwg.mxu0
      %s3414 = scalar_lea.vmem %s10, 96
      %v3415 = vld [vmem:[%s3414] sm:$0xf]
      %v3416 = vld [vmem:[%s3414 + $0x4] sm:$0xf]
      %v3417 = vld [vmem:[%s3414 + $0x8] sm:$0xf]
      %v3418 = vld [vmem:[%s3414 + $0xc] sm:$0xf]
      %v3419 = vld [vmem:[%s3414 + $0x10] sm:$0xf]
      %v3420 = vld [vmem:[%s3414 + $0x14] sm:$0xf]
      %v3421 = vld [vmem:[%s3414 + $0x18] sm:$0xf]
      %v3422 = vld [vmem:[%s3414 + $0x1c] sm:$0xf]
      %v3431 = vunpack.c.l.b16 %v3415
      %v3432 = vunpack.c.l.b16 %v3416
      %v3433 = vunpack.c.l.b16 %v3417
      %v3434 = vunpack.c.l.b16 %v3418
      %v3435 = vunpack.c.l.b16 %v3419
      %v3436 = vunpack.c.l.b16 %v3420
      %v3437 = vunpack.c.l.b16 %v3421
      %v3438 = vunpack.c.l.b16 %v3422
      %v3439 = vpack.c.b16 %v3432, %v3431
      %v3440 = vpack.c.b16 %v3434, %v3433
      %v3441 = vpack.c.b16 %v3436, %v3435
      %v3442 = vpack.c.b16 %v3438, %v3437
      %3447 = vmatpush.bf16.msra.mxu0 0
      %3448 = vmatpush.bf16.msra.mxu0 0
      %3449 = vmatpush.bf16.msra.mxu0 0
      %3450 = vmatpush.bf16.msra.mxu0 0
      %3451 = vmatpush.bf16.msra.mxu0 %v3442
      %3452 = vmatpush.bf16.msra.mxu0 %v3441
      %3453 = vmatpush.bf16.msra.mxu0 %v3440
      %3454 = vmatpush.bf16.msra.mxu0 %v3439
      %3455 = vmatmul.bf16.gmra.mxu0 %v3250
      %v3456 = vpop.f32.mrf.mxu0
      %v3457 = vadd.f32 0.0, %v3456
      %v3458 = vpop.f32.mrf.mxu0
      %v3459 = vadd.f32 0.0, %v3458
      %3460 = vmatmul.bf16.gmra.mxu0 %v3253
      %v3461 = vpop.f32.mrf.mxu0
      %v3462 = vadd.f32 0.0, %v3461
      %v3463 = vpop.f32.mrf.mxu0
      %v3464 = vadd.f32 0.0, %v3463
      %3465 = vmatmul.bf16.gmra.mxu0 %v3256
      %v3466 = vpop.f32.mrf.mxu0
      %v3467 = vadd.f32 0.0, %v3466
      %v3468 = vpop.f32.mrf.mxu0
      %v3469 = vadd.f32 0.0, %v3468
      %3470 = vmatmul.bf16.gmra.mxu0 %v3259
      %v3471 = vpop.f32.mrf.mxu0
      %v3472 = vadd.f32 0.0, %v3471
      %v3473 = vpop.f32.mrf.mxu0
      %v3474 = vadd.f32 0.0, %v3473
      %3475 = vdwg.mxu0
      %s3476 = scalar_lea.vmem %s10, 128
      %v3477 = vld [vmem:[%s3476] sm:$0xf]
      %v3478 = vld [vmem:[%s3476 + $0x4] sm:$0xf]
      %v3479 = vld [vmem:[%s3476 + $0x8] sm:$0xf]
      %v3480 = vld [vmem:[%s3476 + $0xc] sm:$0xf]
      %v3481 = vld [vmem:[%s3476 + $0x10] sm:$0xf]
      %v3482 = vld [vmem:[%s3476 + $0x14] sm:$0xf]
      %v3483 = vld [vmem:[%s3476 + $0x18] sm:$0xf]
      %v3484 = vld [vmem:[%s3476 + $0x1c] sm:$0xf]
      %v3493 = vunpack.c.l.b16 %v3477
      %v3494 = vunpack.c.l.b16 %v3478
      %v3495 = vunpack.c.l.b16 %v3479
      %v3496 = vunpack.c.l.b16 %v3480
      %v3497 = vunpack.c.l.b16 %v3481
      %v3498 = vunpack.c.l.b16 %v3482
      %v3499 = vunpack.c.l.b16 %v3483
      %v3500 = vunpack.c.l.b16 %v3484
      %v3501 = vpack.c.b16 %v3494, %v3493
      %v3502 = vpack.c.b16 %v3496, %v3495
      %v3503 = vpack.c.b16 %v3498, %v3497
      %v3504 = vpack.c.b16 %v3500, %v3499
      %3509 = vmatpush.bf16.msra.mxu0 0
      %3510 = vmatpush.bf16.msra.mxu0 0
      %3511 = vmatpush.bf16.msra.mxu0 0
      %3512 = vmatpush.bf16.msra.mxu0 0
      %3513 = vmatpush.bf16.msra.mxu0 %v3504
      %3514 = vmatpush.bf16.msra.mxu0 %v3503
      %3515 = vmatpush.bf16.msra.mxu0 %v3502
      %3516 = vmatpush.bf16.msra.mxu0 %v3501
      %3517 = vmatmul.bf16.gmra.mxu0 %v3250
      %v3518 = vpop.f32.mrf.mxu0
      %v3519 = vadd.f32 0.0, %v3518
      %v3520 = vpop.f32.mrf.mxu0
      %v3521 = vadd.f32 0.0, %v3520
      %3522 = vmatmul.bf16.gmra.mxu0 %v3253
      %v3523 = vpop.f32.mrf.mxu0
      %v3524 = vadd.f32 0.0, %v3523
      %v3525 = vpop.f32.mrf.mxu0
      %v3526 = vadd.f32 0.0, %v3525
      %3527 = vmatmul.bf16.gmra.mxu0 %v3256
      %v3528 = vpop.f32.mrf.mxu0
      %v3529 = vadd.f32 0.0, %v3528
      %v3530 = vpop.f32.mrf.mxu0
      %v3531 = vadd.f32 0.0, %v3530
      %3532 = vmatmul.bf16.gmra.mxu0 %v3259
      %v3533 = vpop.f32.mrf.mxu0
      %v3534 = vadd.f32 0.0, %v3533
      %v3535 = vpop.f32.mrf.mxu0
      %v3536 = vadd.f32 0.0, %v3535
      %3537 = vdwg.mxu0
      %s3538 = scalar_lea.vmem %s10, 160
      %v3539 = vld [vmem:[%s3538] sm:$0xf]
      %v3540 = vld [vmem:[%s3538 + $0x4] sm:$0xf]
      %v3541 = vld [vmem:[%s3538 + $0x8] sm:$0xf]
      %v3542 = vld [vmem:[%s3538 + $0xc] sm:$0xf]
      %v3543 = vld [vmem:[%s3538 + $0x10] sm:$0xf]
      %v3544 = vld [vmem:[%s3538 + $0x14] sm:$0xf]
      %v3545 = vld [vmem:[%s3538 + $0x18] sm:$0xf]
      %v3546 = vld [vmem:[%s3538 + $0x1c] sm:$0xf]
      %v3555 = vunpack.c.l.b16 %v3539
      %v3556 = vunpack.c.l.b16 %v3540
      %v3557 = vunpack.c.l.b16 %v3541
      %v3558 = vunpack.c.l.b16 %v3542
      %v3559 = vunpack.c.l.b16 %v3543
      %v3560 = vunpack.c.l.b16 %v3544
      %v3561 = vunpack.c.l.b16 %v3545
      %v3562 = vunpack.c.l.b16 %v3546
      %v3563 = vpack.c.b16 %v3556, %v3555
      %v3564 = vpack.c.b16 %v3558, %v3557
      %v3565 = vpack.c.b16 %v3560, %v3559
      %v3566 = vpack.c.b16 %v3562, %v3561
      %3571 = vmatpush.bf16.msra.mxu0 0
      %3572 = vmatpush.bf16.msra.mxu0 0
      %3573 = vmatpush.bf16.msra.mxu0 0
      %3574 = vmatpush.bf16.msra.mxu0 0
      %3575 = vmatpush.bf16.msra.mxu0 %v3566
      %3576 = vmatpush.bf16.msra.mxu0 %v3565
      %3577 = vmatpush.bf16.msra.mxu0 %v3564
      %3578 = vmatpush.bf16.msra.mxu0 %v3563
      %3579 = vmatmul.bf16.gmra.mxu0 %v3250
      %v3580 = vpop.f32.mrf.mxu0
      %v3581 = vadd.f32 0.0, %v3580
      %v3582 = vpop.f32.mrf.mxu0
      %v3583 = vadd.f32 0.0, %v3582
      %3584 = vmatmul.bf16.gmra.mxu0 %v3253
      %v3585 = vpop.f32.mrf.mxu0
      %v3586 = vadd.f32 0.0, %v3585
      %v3587 = vpop.f32.mrf.mxu0
      %v3588 = vadd.f32 0.0, %v3587
      %3589 = vmatmul.bf16.gmra.mxu0 %v3256
      %v3590 = vpop.f32.mrf.mxu0
      %v3591 = vadd.f32 0.0, %v3590
      %v3592 = vpop.f32.mrf.mxu0
      %v3593 = vadd.f32 0.0, %v3592
      %3594 = vmatmul.bf16.gmra.mxu0 %v3259
      %v3595 = vpop.f32.mrf.mxu0
      %v3596 = vadd.f32 0.0, %v3595
      %v3597 = vpop.f32.mrf.mxu0
      %v3598 = vadd.f32 0.0, %v3597
      %3599 = vdwg.mxu0
      %s3600 = scalar_lea.vmem %s10, 192
      %v3601 = vld [vmem:[%s3600] sm:$0xf]
      %v3602 = vld [vmem:[%s3600 + $0x4] sm:$0xf]
      %v3603 = vld [vmem:[%s3600 + $0x8] sm:$0xf]
      %v3604 = vld [vmem:[%s3600 + $0xc] sm:$0xf]
      %v3605 = vld [vmem:[%s3600 + $0x10] sm:$0xf]
      %v3606 = vld [vmem:[%s3600 + $0x14] sm:$0xf]
      %v3607 = vld [vmem:[%s3600 + $0x18] sm:$0xf]
      %v3608 = vld [vmem:[%s3600 + $0x1c] sm:$0xf]
      %v3617 = vunpack.c.l.b16 %v3601
      %v3618 = vunpack.c.l.b16 %v3602
      %v3619 = vunpack.c.l.b16 %v3603
      %v3620 = vunpack.c.l.b16 %v3604
      %v3621 = vunpack.c.l.b16 %v3605
      %v3622 = vunpack.c.l.b16 %v3606
      %v3623 = vunpack.c.l.b16 %v3607
      %v3624 = vunpack.c.l.b16 %v3608
      %v3625 = vpack.c.b16 %v3618, %v3617
      %v3626 = vpack.c.b16 %v3620, %v3619
      %v3627 = vpack.c.b16 %v3622, %v3621
      %v3628 = vpack.c.b16 %v3624, %v3623
      %3633 = vmatpush.bf16.msra.mxu0 0
      %3634 = vmatpush.bf16.msra.mxu0 0
      %3635 = vmatpush.bf16.msra.mxu0 0
      %3636 = vmatpush.bf16.msra.mxu0 0
      %3637 = vmatpush.bf16.msra.mxu0 %v3628
      %3638 = vmatpush.bf16.msra.mxu0 %v3627
      %3639 = vmatpush.bf16.msra.mxu0 %v3626
      %3640 = vmatpush.bf16.msra.mxu0 %v3625
      %3641 = vmatmul.bf16.gmra.mxu0 %v3250
      %v3642 = vpop.f32.mrf.mxu0
      %v3643 = vadd.f32 0.0, %v3642
      %v3644 = vpop.f32.mrf.mxu0
      %v3645 = vadd.f32 0.0, %v3644
      %3646 = vmatmul.bf16.gmra.mxu0 %v3253
      %v3647 = vpop.f32.mrf.mxu0
      %v3648 = vadd.f32 0.0, %v3647
      %v3649 = vpop.f32.mrf.mxu0
      %v3650 = vadd.f32 0.0, %v3649
      %3651 = vmatmul.bf16.gmra.mxu0 %v3256
      %v3652 = vpop.f32.mrf.mxu0
      %v3653 = vadd.f32 0.0, %v3652
      %v3654 = vpop.f32.mrf.mxu0
      %v3655 = vadd.f32 0.0, %v3654
      %3656 = vmatmul.bf16.gmra.mxu0 %v3259
      %v3657 = vpop.f32.mrf.mxu0
      %v3658 = vadd.f32 0.0, %v3657
      %v3659 = vpop.f32.mrf.mxu0
      %v3660 = vadd.f32 0.0, %v3659
      %3661 = vdwg.mxu0
      %s3662 = scalar_lea.vmem %s10, 224
      %v3663 = vld [vmem:[%s3662] sm:$0xf]
      %v3664 = vld [vmem:[%s3662 + $0x4] sm:$0xf]
      %v3665 = vld [vmem:[%s3662 + $0x8] sm:$0xf]
      %v3666 = vld [vmem:[%s3662 + $0xc] sm:$0xf]
      %v3667 = vld [vmem:[%s3662 + $0x10] sm:$0xf]
      %v3668 = vld [vmem:[%s3662 + $0x14] sm:$0xf]
      %v3669 = vld [vmem:[%s3662 + $0x18] sm:$0xf]
      %v3670 = vld [vmem:[%s3662 + $0x1c] sm:$0xf]
      %v3679 = vunpack.c.l.b16 %v3663
      %v3680 = vunpack.c.l.b16 %v3664
      %v3681 = vunpack.c.l.b16 %v3665
      %v3682 = vunpack.c.l.b16 %v3666
      %v3683 = vunpack.c.l.b16 %v3667
      %v3684 = vunpack.c.l.b16 %v3668
      %v3685 = vunpack.c.l.b16 %v3669
      %v3686 = vunpack.c.l.b16 %v3670
      %v3687 = vpack.c.b16 %v3680, %v3679
      %v3688 = vpack.c.b16 %v3682, %v3681
      %v3689 = vpack.c.b16 %v3684, %v3683
      %v3690 = vpack.c.b16 %v3686, %v3685
      %3695 = vmatpush.bf16.msra.mxu0 0
      %3696 = vmatpush.bf16.msra.mxu0 0
      %3697 = vmatpush.bf16.msra.mxu0 0
      %3698 = vmatpush.bf16.msra.mxu0 0
      %3699 = vmatpush.bf16.msra.mxu0 %v3690
      %3700 = vmatpush.bf16.msra.mxu0 %v3689
      %3701 = vmatpush.bf16.msra.mxu0 %v3688
      %3702 = vmatpush.bf16.msra.mxu0 %v3687
      %3703 = vmatmul.bf16.gmra.mxu0 %v3250
      %v3704 = vpop.f32.mrf.mxu0
      %v3705 = vadd.f32 0.0, %v3704
      %v3706 = vpop.f32.mrf.mxu0
      %v3707 = vadd.f32 0.0, %v3706
      %3708 = vmatmul.bf16.gmra.mxu0 %v3253
      %v3709 = vpop.f32.mrf.mxu0
      %v3710 = vadd.f32 0.0, %v3709
      %v3711 = vpop.f32.mrf.mxu0
      %v3712 = vadd.f32 0.0, %v3711
      %3713 = vmatmul.bf16.gmra.mxu0 %v3256
      %v3714 = vpop.f32.mrf.mxu0
      %v3715 = vadd.f32 0.0, %v3714
      %v3716 = vpop.f32.mrf.mxu0
      %v3717 = vadd.f32 0.0, %v3716
      %3718 = vmatmul.bf16.gmra.mxu0 %v3259
      %v3719 = vpop.f32.mrf.mxu0
      %v3720 = vadd.f32 0.0, %v3719
      %v3721 = vpop.f32.mrf.mxu0
      %v3722 = vadd.f32 0.0, %v3721
      %3723 = vdwg.mxu0
      %s3724 = scalar_lea.vmem %s10, 256
      %v3725 = vld [vmem:[%s3724] sm:$0xf]
      %v3726 = vld [vmem:[%s3724 + $0x4] sm:$0xf]
      %v3727 = vld [vmem:[%s3724 + $0x8] sm:$0xf]
      %v3728 = vld [vmem:[%s3724 + $0xc] sm:$0xf]
      %v3729 = vld [vmem:[%s3724 + $0x10] sm:$0xf]
      %v3730 = vld [vmem:[%s3724 + $0x14] sm:$0xf]
      %v3731 = vld [vmem:[%s3724 + $0x18] sm:$0xf]
      %v3732 = vld [vmem:[%s3724 + $0x1c] sm:$0xf]
      %v3741 = vunpack.c.l.b16 %v3725
      %v3742 = vunpack.c.l.b16 %v3726
      %v3743 = vunpack.c.l.b16 %v3727
      %v3744 = vunpack.c.l.b16 %v3728
      %v3745 = vunpack.c.l.b16 %v3729
      %v3746 = vunpack.c.l.b16 %v3730
      %v3747 = vunpack.c.l.b16 %v3731
      %v3748 = vunpack.c.l.b16 %v3732
      %v3749 = vpack.c.b16 %v3742, %v3741
      %v3750 = vpack.c.b16 %v3744, %v3743
      %v3751 = vpack.c.b16 %v3746, %v3745
      %v3752 = vpack.c.b16 %v3748, %v3747
      %3757 = vmatpush.bf16.msra.mxu0 0
      %3758 = vmatpush.bf16.msra.mxu0 0
      %3759 = vmatpush.bf16.msra.mxu0 0
      %3760 = vmatpush.bf16.msra.mxu0 0
      %3761 = vmatpush.bf16.msra.mxu0 %v3752
      %3762 = vmatpush.bf16.msra.mxu0 %v3751
      %3763 = vmatpush.bf16.msra.mxu0 %v3750
      %3764 = vmatpush.bf16.msra.mxu0 %v3749
      %3765 = vmatmul.bf16.gmra.mxu0 %v3250
      %v3766 = vpop.f32.mrf.mxu0
      %v3767 = vadd.f32 0.0, %v3766
      %v3768 = vpop.f32.mrf.mxu0
      %v3769 = vadd.f32 0.0, %v3768
      %3770 = vmatmul.bf16.gmra.mxu0 %v3253
      %v3771 = vpop.f32.mrf.mxu0
      %v3772 = vadd.f32 0.0, %v3771
      %v3773 = vpop.f32.mrf.mxu0
      %v3774 = vadd.f32 0.0, %v3773
      %3775 = vmatmul.bf16.gmra.mxu0 %v3256
      %v3776 = vpop.f32.mrf.mxu0
      %v3777 = vadd.f32 0.0, %v3776
      %v3778 = vpop.f32.mrf.mxu0
      %v3779 = vadd.f32 0.0, %v3778
      %3780 = vmatmul.bf16.gmra.mxu0 %v3259
      %v3781 = vpop.f32.mrf.mxu0
      %v3782 = vadd.f32 0.0, %v3781
      %v3783 = vpop.f32.mrf.mxu0
      %v3784 = vadd.f32 0.0, %v3783
      %3785 = vdwg.mxu0
      %v3786 = vpack.c.bf16 %v3273, %v3271
      %v3787 = vpack.c.bf16 %v3278, %v3276
      %v3788 = vpack.c.bf16 %v3283, %v3281
      %v3789 = vpack.c.bf16 %v3288, %v3286
      %v3790 = vpack.c.bf16 %v3335, %v3333
      %v3791 = vpack.c.bf16 %v3340, %v3338
      %v3792 = vpack.c.bf16 %v3345, %v3343
      %v3793 = vpack.c.bf16 %v3350, %v3348
      %v3794 = vpack.c.bf16 %v3397, %v3395
      %v3795 = vpack.c.bf16 %v3402, %v3400
      %v3796 = vpack.c.bf16 %v3407, %v3405
      %v3797 = vpack.c.bf16 %v3412, %v3410
      %v3798 = vpack.c.bf16 %v3459, %v3457
      %v3799 = vpack.c.bf16 %v3464, %v3462
      %v3800 = vpack.c.bf16 %v3469, %v3467
      %v3801 = vpack.c.bf16 %v3474, %v3472
      %v3802 = vpack.c.bf16 %v3521, %v3519
      %v3803 = vpack.c.bf16 %v3526, %v3524
      %v3804 = vpack.c.bf16 %v3531, %v3529
      %v3805 = vpack.c.bf16 %v3536, %v3534
      %v3806 = vpack.c.bf16 %v3583, %v3581
      %v3807 = vpack.c.bf16 %v3588, %v3586
      %v3808 = vpack.c.bf16 %v3593, %v3591
      %v3809 = vpack.c.bf16 %v3598, %v3596
      %v3810 = vpack.c.bf16 %v3645, %v3643
      %v3811 = vpack.c.bf16 %v3650, %v3648
      %v3812 = vpack.c.bf16 %v3655, %v3653
      %v3813 = vpack.c.bf16 %v3660, %v3658
      %v3814 = vpack.c.bf16 %v3707, %v3705
      %v3815 = vpack.c.bf16 %v3712, %v3710
      %v3816 = vpack.c.bf16 %v3717, %v3715
      %v3817 = vpack.c.bf16 %v3722, %v3720
      %v3818 = vpack.c.bf16 %v3769, %v3767
      %v3819 = vpack.c.bf16 %v3774, %v3772
      %v3820 = vpack.c.bf16 %v3779, %v3777
      %v3821 = vpack.c.bf16 %v3784, %v3782
      %v3822 = vld [vmem:[%s20] sm:$0xff]
      %v3823 = vld [vmem:[%s20 + $0x8] sm:$0xff]
      %v3824 = vld [vmem:[%s20 + $0x10] sm:$0xff]
      %v3825 = vld [vmem:[%s20 + $0x18] sm:$0xff]
      %v3826 = vld [vmem:[%s20 + $0x20] sm:$0xff]
      %v3827 = vld [vmem:[%s20 + $0x28] sm:$0xff]
      %v3828 = vld [vmem:[%s20 + $0x30] sm:$0xff]
      %v3829 = vld [vmem:[%s20 + $0x38] sm:$0xff]
      %3831 = vset.pattern.permute.xlu0 0
      %3832 = vperm.xlu0 %3831, %v3822
      %v3833 = vpop.permute.xlu0 %3832
      %3836 = vset.pattern.permute.xlu0 0
      %3837 = vperm.xlu0 %3836, %v3823
      %v3838 = vpop.permute.xlu0 %3837
      %3841 = vset.pattern.permute.xlu0 0
      %3842 = vperm.xlu0 %3841, %v3824
      %v3843 = vpop.permute.xlu0 %3842
      %3846 = vset.pattern.permute.xlu0 0
      %3847 = vperm.xlu0 %3846, %v3825
      %v3848 = vpop.permute.xlu0 %3847
      %3851 = vset.pattern.permute.xlu0 0
      %3852 = vperm.xlu0 %3851, %v3826
      %v3853 = vpop.permute.xlu0 %3852
      %3856 = vset.pattern.permute.xlu0 0
      %3857 = vperm.xlu0 %3856, %v3827
      %v3858 = vpop.permute.xlu0 %3857
      %3861 = vset.pattern.permute.xlu0 0
      %3862 = vperm.xlu0 %3861, %v3828
      %v3863 = vpop.permute.xlu0 %3862
      %3866 = vset.pattern.permute.xlu0 0
      %3867 = vperm.xlu0 %3866, %v3829
      %v3868 = vpop.permute.xlu0 %3867
      %v3894 = vunpack.c.l.b16 %v3188
      %v3895 = vunpack.c.h.b16 %v3188
      %v3896 = vunpack.c.l.b16 %v3189
      %v3897 = vunpack.c.h.b16 %v3189
      %v3898 = vunpack.c.l.b16 %v3190
      %v3899 = vunpack.c.l.b16 %v3191
      %v3900 = vunpack.c.h.b16 %v3191
      %v3901 = vunpack.c.l.b16 %v3192
      %v3902 = vunpack.c.h.b16 %v3192
      %v3903 = vunpack.c.l.b16 %v3193
      %v3904 = vunpack.c.l.b16 %v3194
      %v3905 = vunpack.c.h.b16 %v3194
      %v3906 = vunpack.c.l.b16 %v3195
      %v3907 = vunpack.c.h.b16 %v3195
      %v3908 = vunpack.c.l.b16 %v3196
      %v3909 = vunpack.c.l.b16 %v3197
      %v3910 = vunpack.c.h.b16 %v3197
      %v3911 = vunpack.c.l.b16 %v3198
      %v3912 = vunpack.c.h.b16 %v3198
      %v3913 = vunpack.c.l.b16 %v3199
      %v3914 = vunpack.c.l.b16 %v3200
      %v3915 = vunpack.c.h.b16 %v3200
      %v3916 = vunpack.c.l.b16 %v3201
      %v3917 = vunpack.c.h.b16 %v3201
      %v3918 = vunpack.c.l.b16 %v3202
      %v3919 = vunpack.c.l.b16 %v3203
      %v3920 = vunpack.c.h.b16 %v3203
      %v3921 = vunpack.c.l.b16 %v3204
      %v3922 = vunpack.c.h.b16 %v3204
      %v3923 = vunpack.c.l.b16 %v3205
      %v3924 = vunpack.c.l.b16 %v3206
      %v3925 = vunpack.c.h.b16 %v3206
      %v3926 = vunpack.c.l.b16 %v3207
      %v3927 = vunpack.c.h.b16 %v3207
      %v3928 = vunpack.c.l.b16 %v3208
      %v3929 = vunpack.c.l.b16 %v3209
      %v3930 = vunpack.c.h.b16 %v3209
      %v3931 = vunpack.c.l.b16 %v3210
      %v3932 = vunpack.c.h.b16 %v3210
      %v3933 = vunpack.c.l.b16 %v3211
      %v3934 = vpack.c.b16 %v3899, %v3894
      %v3935 = vpack.c.b16 %v3900, %v3895
      %v3936 = vpack.c.b16 %v3901, %v3896
      %v3937 = vpack.c.b16 %v3902, %v3897
      %v3938 = vpack.c.b16 %v3903, %v3898
      %v3939 = vpack.c.b16 %v3909, %v3904
      %v3940 = vpack.c.b16 %v3910, %v3905
      %v3941 = vpack.c.b16 %v3911, %v3906
      %v3942 = vpack.c.b16 %v3912, %v3907
      %v3943 = vpack.c.b16 %v3913, %v3908
      %v3944 = vpack.c.b16 %v3919, %v3914
      %v3945 = vpack.c.b16 %v3920, %v3915
      %v3946 = vpack.c.b16 %v3921, %v3916
      %v3947 = vpack.c.b16 %v3922, %v3917
      %v3948 = vpack.c.b16 %v3923, %v3918
      %v3949 = vpack.c.b16 %v3929, %v3924
      %v3950 = vpack.c.b16 %v3930, %v3925
      %v3951 = vpack.c.b16 %v3931, %v3926
      %v3952 = vpack.c.b16 %v3932, %v3927
      %v3953 = vpack.c.b16 %v3933, %v3928
      %v3971 = vsel %vm3248, %v3938, 0
      %v3974 = vsel %vm3248, %v3943, 0
      %v3977 = vsel %vm3248, %v3948, 0
      %v3980 = vsel %vm3248, %v3953, 0
      %3982 = vmatpush.bf16.msra.mxu0 %v3793
      %3983 = vmatpush.bf16.msra.mxu0 %v3792
      %3984 = vmatpush.bf16.msra.mxu0 %v3791
      %3985 = vmatpush.bf16.msra.mxu0 %v3790
      %3986 = vmatpush.bf16.msra.mxu0 %v3789
      %3987 = vmatpush.bf16.msra.mxu0 %v3788
      %3988 = vmatpush.bf16.msra.mxu0 %v3787
      %3989 = vmatpush.bf16.msra.mxu0 %v3786
      %3990 = vmatmul.bf16.gmra.mxu0 %v3934
      %v3991 = vpop.f32.mrf.mxu0
      %v3992 = vadd.f32 %v3833, %v3991
      %v3993 = vpop.f32.mrf.mxu0
      %v3994 = vadd.f32 %v3838, %v3993
      %3995 = vmatmul.bf16.gmra.mxu0 %v3939
      %v3996 = vpop.f32.mrf.mxu0
      %v3997 = vadd.f32 %v3843, %v3996
      %v3998 = vpop.f32.mrf.mxu0
      %v3999 = vadd.f32 %v3848, %v3998
      %4000 = vmatmul.bf16.gmra.mxu0 %v3944
      %v4001 = vpop.f32.mrf.mxu0
      %v4002 = vadd.f32 %v3853, %v4001
      %v4003 = vpop.f32.mrf.mxu0
      %v4004 = vadd.f32 %v3858, %v4003
      %4005 = vmatmul.bf16.gmra.mxu0 %v3949
      %v4006 = vpop.f32.mrf.mxu0
      %v4007 = vadd.f32 %v3863, %v4006
      %v4008 = vpop.f32.mrf.mxu0
      %v4009 = vadd.f32 %v3868, %v4008
      %4010 = vdwg.mxu0
      %4011 = vmatpush.bf16.msra.mxu0 %v3801
      %4012 = vmatpush.bf16.msra.mxu0 %v3800
      %4013 = vmatpush.bf16.msra.mxu0 %v3799
      %4014 = vmatpush.bf16.msra.mxu0 %v3798
      %4015 = vmatpush.bf16.msra.mxu0 %v3797
      %4016 = vmatpush.bf16.msra.mxu0 %v3796
      %4017 = vmatpush.bf16.msra.mxu0 %v3795
      %4018 = vmatpush.bf16.msra.mxu0 %v3794
      %4019 = vmatmul.bf16.gmra.mxu0 %v3935
      %v4020 = vpop.f32.mrf.mxu0
      %v4021 = vadd.f32 %v3992, %v4020
      %v4022 = vpop.f32.mrf.mxu0
      %v4023 = vadd.f32 %v3994, %v4022
      %4024 = vmatmul.bf16.gmra.mxu0 %v3940
      %v4025 = vpop.f32.mrf.mxu0
      %v4026 = vadd.f32 %v3997, %v4025
      %v4027 = vpop.f32.mrf.mxu0
      %v4028 = vadd.f32 %v3999, %v4027
      %4029 = vmatmul.bf16.gmra.mxu0 %v3945
      %v4030 = vpop.f32.mrf.mxu0
      %v4031 = vadd.f32 %v4002, %v4030
      %v4032 = vpop.f32.mrf.mxu0
      %v4033 = vadd.f32 %v4004, %v4032
      %4034 = vmatmul.bf16.gmra.mxu0 %v3950
      %v4035 = vpop.f32.mrf.mxu0
      %v4036 = vadd.f32 %v4007, %v4035
      %v4037 = vpop.f32.mrf.mxu0
      %v4038 = vadd.f32 %v4009, %v4037
      %4039 = vdwg.mxu0
      %4040 = vmatpush.bf16.msra.mxu0 %v3809
      %4041 = vmatpush.bf16.msra.mxu0 %v3808
      %4042 = vmatpush.bf16.msra.mxu0 %v3807
      %4043 = vmatpush.bf16.msra.mxu0 %v3806
      %4044 = vmatpush.bf16.msra.mxu0 %v3805
      %4045 = vmatpush.bf16.msra.mxu0 %v3804
      %4046 = vmatpush.bf16.msra.mxu0 %v3803
      %4047 = vmatpush.bf16.msra.mxu0 %v3802
      %4048 = vmatmul.bf16.gmra.mxu0 %v3936
      %v4049 = vpop.f32.mrf.mxu0
      %v4050 = vadd.f32 %v4021, %v4049
      %v4051 = vpop.f32.mrf.mxu0
      %v4052 = vadd.f32 %v4023, %v4051
      %4053 = vmatmul.bf16.gmra.mxu0 %v3941
      %v4054 = vpop.f32.mrf.mxu0
      %v4055 = vadd.f32 %v4026, %v4054
      %v4056 = vpop.f32.mrf.mxu0
      %v4057 = vadd.f32 %v4028, %v4056
      %4058 = vmatmul.bf16.gmra.mxu0 %v3946
      %v4059 = vpop.f32.mrf.mxu0
      %v4060 = vadd.f32 %v4031, %v4059
      %v4061 = vpop.f32.mrf.mxu0
      %v4062 = vadd.f32 %v4033, %v4061
      %4063 = vmatmul.bf16.gmra.mxu0 %v3951
      %v4064 = vpop.f32.mrf.mxu0
      %v4065 = vadd.f32 %v4036, %v4064
      %v4066 = vpop.f32.mrf.mxu0
      %v4067 = vadd.f32 %v4038, %v4066
      %4068 = vdwg.mxu0
      %4069 = vmatpush.bf16.msra.mxu0 %v3817
      %4070 = vmatpush.bf16.msra.mxu0 %v3816
      %4071 = vmatpush.bf16.msra.mxu0 %v3815
      %4072 = vmatpush.bf16.msra.mxu0 %v3814
      %4073 = vmatpush.bf16.msra.mxu0 %v3813
      %4074 = vmatpush.bf16.msra.mxu0 %v3812
      %4075 = vmatpush.bf16.msra.mxu0 %v3811
      %4076 = vmatpush.bf16.msra.mxu0 %v3810
      %4077 = vmatmul.bf16.gmra.mxu0 %v3937
      %v4078 = vpop.f32.mrf.mxu0
      %v4079 = vadd.f32 %v4050, %v4078
      %v4080 = vpop.f32.mrf.mxu0
      %v4081 = vadd.f32 %v4052, %v4080
      %4082 = vmatmul.bf16.gmra.mxu0 %v3942
      %v4083 = vpop.f32.mrf.mxu0
      %v4084 = vadd.f32 %v4055, %v4083
      %v4085 = vpop.f32.mrf.mxu0
      %v4086 = vadd.f32 %v4057, %v4085
      %4087 = vmatmul.bf16.gmra.mxu0 %v3947
      %v4088 = vpop.f32.mrf.mxu0
      %v4089 = vadd.f32 %v4060, %v4088
      %v4090 = vpop.f32.mrf.mxu0
      %v4091 = vadd.f32 %v4062, %v4090
      %4092 = vmatmul.bf16.gmra.mxu0 %v3952
      %v4093 = vpop.f32.mrf.mxu0
      %v4094 = vadd.f32 %v4065, %v4093
      %v4095 = vpop.f32.mrf.mxu0
      %v4096 = vadd.f32 %v4067, %v4095
      %4097 = vdwg.mxu0
      %4098 = vmatpush.bf16.msra.mxu0 0
      %4099 = vmatpush.bf16.msra.mxu0 0
      %4100 = vmatpush.bf16.msra.mxu0 0
      %4101 = vmatpush.bf16.msra.mxu0 0
      %4102 = vmatpush.bf16.msra.mxu0 %v3821
      %4103 = vmatpush.bf16.msra.mxu0 %v3820
      %4104 = vmatpush.bf16.msra.mxu0 %v3819
      %4105 = vmatpush.bf16.msra.mxu0 %v3818
      %4106 = vmatmul.bf16.gmra.mxu0 %v3971
      %v4107 = vpop.f32.mrf.mxu0
      %v4108 = vadd.f32 %v4079, %v4107
      %v4109 = vpop.f32.mrf.mxu0
      %v4110 = vadd.f32 %v4081, %v4109
      %4111 = vmatmul.bf16.gmra.mxu0 %v3974
      %v4112 = vpop.f32.mrf.mxu0
      %v4113 = vadd.f32 %v4084, %v4112
      %v4114 = vpop.f32.mrf.mxu0
      %v4115 = vadd.f32 %v4086, %v4114
      %4116 = vmatmul.bf16.gmra.mxu0 %v3977
      %v4117 = vpop.f32.mrf.mxu0
      %v4118 = vadd.f32 %v4089, %v4117
      %v4119 = vpop.f32.mrf.mxu0
      %v4120 = vadd.f32 %v4091, %v4119
      %4121 = vmatmul.bf16.gmra.mxu0 %v3980
      %v4122 = vpop.f32.mrf.mxu0
      %v4123 = vadd.f32 %v4094, %v4122
      %v4124 = vpop.f32.mrf.mxu0
      %v4125 = vadd.f32 %v4096, %v4124
      %4126 = vdwg.mxu0
      %v4127 = vadd.f32 %v1586, 1.0
      %v4128 = vadd.f32 %v1587, 1.0
      %v4129 = vadd.f32 %v1588, 1.0
      %v4130 = vadd.f32 %v1589, 1.0
      %v4131 = vadd.f32 %v1590, 1.0
      %v4132 = vadd.f32 %v1591, 1.0
      %v4133 = vadd.f32 %v1592, 1.0
      %v4134 = vadd.f32 %v1593, 1.0
      %4136 = vset.pattern.permute.xlu0 0
      %4137 = vperm.xlu0 %4136, %v4127
      %v4138 = vpop.permute.xlu0 %4137
      %4141 = vset.pattern.permute.xlu0 0
      %4142 = vperm.xlu0 %4141, %v4128
      %v4143 = vpop.permute.xlu0 %4142
      %4146 = vset.pattern.permute.xlu0 0
      %4147 = vperm.xlu0 %4146, %v4129
      %v4148 = vpop.permute.xlu0 %4147
      %4151 = vset.pattern.permute.xlu0 0
      %4152 = vperm.xlu0 %4151, %v4130
      %v4153 = vpop.permute.xlu0 %4152
      %4156 = vset.pattern.permute.xlu0 0
      %4157 = vperm.xlu0 %4156, %v4131
      %v4158 = vpop.permute.xlu0 %4157
      %4161 = vset.pattern.permute.xlu0 0
      %4162 = vperm.xlu0 %4161, %v4132
      %v4163 = vpop.permute.xlu0 %4162
      %4166 = vset.pattern.permute.xlu0 0
      %4167 = vperm.xlu0 %4166, %v4133
      %v4168 = vpop.permute.xlu0 %4167
      %4171 = vset.pattern.permute.xlu0 0
      %4172 = vperm.xlu0 %4171, %v4134
      %v4173 = vpop.permute.xlu0 %4172
      %v4175 = vmul.f32 %v4108, %v4138
      %v4176 = vmul.f32 %v4110, %v4143
      %v4177 = vmul.f32 %v4113, %v4148
      %v4178 = vmul.f32 %v4115, %v4153
      %v4179 = vmul.f32 %v4118, %v4158
      %v4180 = vmul.f32 %v4120, %v4163
      %v4181 = vmul.f32 %v4123, %v4168
      %v4182 = vmul.f32 %v4125, %v4173
      %4184 = vset.pattern.permute.xlu0 0
      %4185 = vperm.xlu0 %4184, %v1594
      %v4186 = vpop.permute.xlu0 %4185
      %4189 = vset.pattern.permute.xlu0 0
      %4190 = vperm.xlu0 %4189, %v1595
      %v4191 = vpop.permute.xlu0 %4190
      %4194 = vset.pattern.permute.xlu0 0
      %4195 = vperm.xlu0 %4194, %v1596
      %v4196 = vpop.permute.xlu0 %4195
      %4199 = vset.pattern.permute.xlu0 0
      %4200 = vperm.xlu0 %4199, %v1597
      %v4201 = vpop.permute.xlu0 %4200
      %4204 = vset.pattern.permute.xlu0 0
      %4205 = vperm.xlu0 %4204, %v1598
      %v4206 = vpop.permute.xlu0 %4205
      %4209 = vset.pattern.permute.xlu0 0
      %4210 = vperm.xlu0 %4209, %v1599
      %v4211 = vpop.permute.xlu0 %4210
      %4214 = vset.pattern.permute.xlu0 0
      %4215 = vperm.xlu0 %4214, %v1600
      %v4216 = vpop.permute.xlu0 %4215
      %4219 = vset.pattern.permute.xlu0 0
      %4220 = vperm.xlu0 %4219, %v1601
      %v4221 = vpop.permute.xlu0 %4220
      %v4223 = vadd.f32 %v4175, %v4186
      %v4224 = vadd.f32 %v4176, %v4191
      %v4225 = vadd.f32 %v4177, %v4196
      %v4226 = vadd.f32 %v4178, %v4201
      %v4227 = vadd.f32 %v4179, %v4206
      %v4228 = vadd.f32 %v4180, %v4211
      %v4229 = vadd.f32 %v4181, %v4216
      %v4230 = vadd.f32 %v4182, %v4221
      %v4231 = vmax.f32 %v4223, 0.0
      %v4232 = vmax.f32 %v4224, 0.0
      %v4233 = vmax.f32 %v4225, 0.0
      %v4234 = vmax.f32 %v4226, 0.0
      %v4235 = vmax.f32 %v4227, 0.0
      %v4236 = vmax.f32 %v4228, 0.0
      %v4237 = vmax.f32 %v4229, 0.0
      %v4238 = vmax.f32 %v4230, 0.0
      %v4239 = vadd.f32 %v4231, %v3180
      %v4240 = vadd.f32 %v4232, %v3181
      %v4241 = vadd.f32 %v4233, %v3182
      %v4242 = vadd.f32 %v4234, %v3183
      %v4243 = vadd.f32 %v4235, %v3184
      %v4244 = vadd.f32 %v4236, %v3185
      %v4245 = vadd.f32 %v4237, %v3186
      %v4246 = vadd.f32 %v4238, %v3187
      %v4247 = vpack.c.bf16 %v4240, %v4239
      %v4248 = vpack.c.bf16 %v4242, %v4241
      %v4249 = vpack.c.bf16 %v4244, %v4243
      %v4250 = vpack.c.bf16 %v4246, %v4245
      %v4251 = vld [vmem:[%s12] sm:$0xff]
      %v4252 = vld [vmem:[%s12 + $0x8] sm:$0xff]
      %v4253 = vld [vmem:[%s12 + $0x10] sm:$0xff]
      %v4254 = vld [vmem:[%s12 + $0x18] sm:$0xff]
      %v4255 = vld [vmem:[%s12 + $0x20] sm:$0xff]
      %v4256 = vld [vmem:[%s12 + $0x28] sm:$0xff]
      %v4257 = vld [vmem:[%s12 + $0x30] sm:$0xff]
      %v4258 = vld [vmem:[%s12 + $0x38] sm:$0xff]
      %v4267 = vunpack.c.l.b16 %v4251
      %v4268 = vunpack.c.h.b16 %v4251
      %v4269 = vunpack.c.l.b16 %v4252
      %v4270 = vunpack.c.h.b16 %v4252
      %v4271 = vunpack.c.l.b16 %v4253
      %v4272 = vunpack.c.h.b16 %v4253
      %v4273 = vunpack.c.l.b16 %v4254
      %v4274 = vunpack.c.h.b16 %v4254
      %v4275 = vunpack.c.l.b16 %v4255
      %v4276 = vunpack.c.h.b16 %v4255
      %v4277 = vunpack.c.l.b16 %v4256
      %v4278 = vunpack.c.h.b16 %v4256
      %v4279 = vunpack.c.l.b16 %v4257
      %v4280 = vunpack.c.h.b16 %v4257
      %v4281 = vunpack.c.l.b16 %v4258
      %v4282 = vunpack.c.h.b16 %v4258
      %v4283 = vpack.c.b16 %v4269, %v4267
      %v4284 = vpack.c.b16 %v4270, %v4268
      %v4285 = vpack.c.b16 %v4273, %v4271
      %v4286 = vpack.c.b16 %v4274, %v4272
      %v4287 = vpack.c.b16 %v4277, %v4275
      %v4288 = vpack.c.b16 %v4278, %v4276
      %v4289 = vpack.c.b16 %v4281, %v4279
      %v4290 = vpack.c.b16 %v4282, %v4280
      %v4300 = vsel %vm3248, %v4247, 0
      %v4303 = vsel %vm3248, %v4248, 0
      %v4306 = vsel %vm3248, %v4249, 0
      %v4309 = vsel %vm3248, %v4250, 0
      %4311 = vmatpush.bf16.msra.mxu0 0
      %4312 = vmatpush.bf16.msra.mxu0 0
      %4313 = vmatpush.bf16.msra.mxu0 0
      %4314 = vmatpush.bf16.msra.mxu0 0
      %4315 = vmatpush.bf16.msra.mxu0 %v4289
      %4316 = vmatpush.bf16.msra.mxu0 %v4287
      %4317 = vmatpush.bf16.msra.mxu0 %v4285
      %4318 = vmatpush.bf16.msra.mxu0 %v4283
      %4319 = vmatmul.bf16.gmra.mxu0 %v4300
      %v4320 = vpop.f32.mrf.mxu0
      %v4321 = vadd.f32 0.0, %v4320
      %v4322 = vpop.f32.mrf.mxu0
      %v4323 = vadd.f32 0.0, %v4322
      %4324 = vmatmul.bf16.gmra.mxu0 %v4303
      %v4325 = vpop.f32.mrf.mxu0
      %v4326 = vadd.f32 0.0, %v4325
      %v4327 = vpop.f32.mrf.mxu0
      %v4328 = vadd.f32 0.0, %v4327
      %4329 = vmatmul.bf16.gmra.mxu0 %v4306
      %v4330 = vpop.f32.mrf.mxu0
      %v4331 = vadd.f32 0.0, %v4330
      %v4332 = vpop.f32.mrf.mxu0
      %v4333 = vadd.f32 0.0, %v4332
      %4334 = vmatmul.bf16.gmra.mxu0 %v4309
      %v4335 = vpop.f32.mrf.mxu0
      %v4336 = vadd.f32 0.0, %v4335
      %v4337 = vpop.f32.mrf.mxu0
      %v4338 = vadd.f32 0.0, %v4337
      %4339 = vdwg.mxu0
      %4340 = vmatpush.bf16.msra.mxu0 0
      %4341 = vmatpush.bf16.msra.mxu0 0
      %4342 = vmatpush.bf16.msra.mxu0 0
      %4343 = vmatpush.bf16.msra.mxu0 0
      %4344 = vmatpush.bf16.msra.mxu0 %v4290
      %4345 = vmatpush.bf16.msra.mxu0 %v4288
      %4346 = vmatpush.bf16.msra.mxu0 %v4286
      %4347 = vmatpush.bf16.msra.mxu0 %v4284
      %4348 = vmatmul.bf16.gmra.mxu0 %v4300
      %v4349 = vpop.f32.mrf.mxu0
      %v4350 = vadd.f32 0.0, %v4349
      %v4351 = vpop.f32.mrf.mxu0
      %v4352 = vadd.f32 0.0, %v4351
      %4353 = vmatmul.bf16.gmra.mxu0 %v4303
      %v4354 = vpop.f32.mrf.mxu0
      %v4355 = vadd.f32 0.0, %v4354
      %v4356 = vpop.f32.mrf.mxu0
      %v4357 = vadd.f32 0.0, %v4356
      %4358 = vmatmul.bf16.gmra.mxu0 %v4306
      %v4359 = vpop.f32.mrf.mxu0
      %v4360 = vadd.f32 0.0, %v4359
      %v4361 = vpop.f32.mrf.mxu0
      %v4362 = vadd.f32 0.0, %v4361
      %4363 = vmatmul.bf16.gmra.mxu0 %v4309
      %v4364 = vpop.f32.mrf.mxu0
      %v4365 = vadd.f32 0.0, %v4364
      %v4366 = vpop.f32.mrf.mxu0
      %v4367 = vadd.f32 0.0, %v4366
      %4368 = vdwg.mxu0
      %v4369 = vld [vmem:[%s21] sm:$0xff]
      %v4370 = vld [vmem:[%s21 + $0x8] sm:$0xff]
      %v4371 = vld [vmem:[%s21 + $0x10] sm:$0xf]
      %v4372 = vld [vmem:[%s21 + $0x14] sm:$0xff]
      %v4373 = vld [vmem:[%s21 + $0x1c] sm:$0xff]
      %v4374 = vld [vmem:[%s21 + $0x24] sm:$0xf]
      %v4375 = vld [vmem:[%s21 + $0x28] sm:$0xff]
      %v4376 = vld [vmem:[%s21 + $0x30] sm:$0xff]
      %v4377 = vld [vmem:[%s21 + $0x38] sm:$0xf]
      %v4378 = vld [vmem:[%s21 + $0x3c] sm:$0xff]
      %v4379 = vld [vmem:[%s21 + $0x44] sm:$0xff]
      %v4380 = vld [vmem:[%s21 + $0x4c] sm:$0xf]
      %4381 = vrot.lane.b32.xlu0 %v4321, 17
      %v4382 = vpop.permute.xlu0 %4381
      %4383 = vrot.lane.b32.xlu0 %v4323, 17
      %v4384 = vpop.permute.xlu0 %4383
      %4385 = vrot.lane.b32.xlu0 %v4326, 17
      %v4386 = vpop.permute.xlu0 %4385
      %4387 = vrot.lane.b32.xlu0 %v4328, 17
      %v4388 = vpop.permute.xlu0 %4387
      %4389 = vrot.lane.b32.xlu0 %v4331, 17
      %v4390 = vpop.permute.xlu0 %4389
      %4391 = vrot.lane.b32.xlu0 %v4333, 17
      %v4392 = vpop.permute.xlu0 %4391
      %4393 = vrot.lane.b32.xlu0 %v4336, 17
      %v4394 = vpop.permute.xlu0 %4393
      %4395 = vrot.lane.b32.xlu0 %v4338, 17
      %v4396 = vpop.permute.xlu0 %4395
      %4397 = vrot.lane.b32.xlu0 %v4350, 17
      %v4398 = vpop.permute.xlu0 %4397
      %4399 = vrot.lane.b32.xlu0 %v4352, 17
      %v4400 = vpop.permute.xlu0 %4399
      %4401 = vrot.lane.b32.xlu0 %v4355, 17
      %v4402 = vpop.permute.xlu0 %4401
      %4403 = vrot.lane.b32.xlu0 %v4357, 17
      %v4404 = vpop.permute.xlu0 %4403
      %4405 = vrot.lane.b32.xlu0 %v4360, 17
      %v4406 = vpop.permute.xlu0 %4405
      %4407 = vrot.lane.b32.xlu0 %v4362, 17
      %v4408 = vpop.permute.xlu0 %4407
      %4409 = vrot.lane.b32.xlu0 %v4365, 17
      %v4410 = vpop.permute.xlu0 %4409
      %4411 = vrot.lane.b32.xlu0 %v4367, 17
      %v4412 = vpop.permute.xlu0 %4411
      %v4413 = vsel %vm1622, %v4382, %v4398
      %v4414 = vsel %vm1622, %v4384, %v4400
      %v4415 = vsel %vm1622, %v4386, %v4402
      %v4416 = vsel %vm1622, %v4388, %v4404
      %v4417 = vsel %vm1622, %v4390, %v4406
      %v4418 = vsel %vm1622, %v4392, %v4408
      %v4419 = vsel %vm1622, %v4394, %v4410
      %v4420 = vsel %vm1622, %v4396, %v4412
      %v4421 = vsel %vm1622, %v4398, %v4382
      %v4422 = vsel %vm1622, %v4400, %v4384
      %v4423 = vsel %vm1622, %v4402, %v4386
      %v4424 = vsel %vm1622, %v4404, %v4388
      %v4425 = vsel %vm1622, %v4406, %v4390
      %v4426 = vsel %vm1622, %v4408, %v4392
      %v4427 = vsel %vm1622, %v4410, %v4394
      %v4428 = vsel %vm1622, %v4412, %v4396
      %v4429 = vmul.f32 %v4421, %v1626
      %v4430 = vmul.f32 %v4413, %v1627
      %v4431 = vmul.f32 %v4422, %v1626
      %v4432 = vmul.f32 %v4414, %v1627
      %v4433 = vmul.f32 %v4423, %v1626
      %v4434 = vmul.f32 %v4415, %v1627
      %v4435 = vmul.f32 %v4424, %v1626
      %v4436 = vmul.f32 %v4416, %v1627
      %v4437 = vmul.f32 %v4425, %v1626
      %v4438 = vmul.f32 %v4417, %v1627
      %v4439 = vmul.f32 %v4426, %v1626
      %v4440 = vmul.f32 %v4418, %v1627
      %v4441 = vmul.f32 %v4427, %v1626
      %v4442 = vmul.f32 %v4419, %v1627
      %v4443 = vmul.f32 %v4428, %v1626
      %v4444 = vmul.f32 %v4420, %v1627
      %4445 = vrot.lane.b32.xlu0 %v4321, 16
      %v4446 = vpop.permute.xlu0 %4445
      %4447 = vrot.lane.b32.xlu0 %v4323, 16
      %v4448 = vpop.permute.xlu0 %4447
      %4449 = vrot.lane.b32.xlu0 %v4326, 16
      %v4450 = vpop.permute.xlu0 %4449
      %4451 = vrot.lane.b32.xlu0 %v4328, 16
      %v4452 = vpop.permute.xlu0 %4451
      %4453 = vrot.lane.b32.xlu0 %v4331, 16
      %v4454 = vpop.permute.xlu0 %4453
      %4455 = vrot.lane.b32.xlu0 %v4333, 16
      %v4456 = vpop.permute.xlu0 %4455
      %4457 = vrot.lane.b32.xlu0 %v4336, 16
      %v4458 = vpop.permute.xlu0 %4457
      %4459 = vrot.lane.b32.xlu0 %v4338, 16
      %v4460 = vpop.permute.xlu0 %4459
      %4461 = vrot.lane.b32.xlu0 %v4350, 16
      %v4462 = vpop.permute.xlu0 %4461
      %4463 = vrot.lane.b32.xlu0 %v4352, 16
      %v4464 = vpop.permute.xlu0 %4463
      %4465 = vrot.lane.b32.xlu0 %v4355, 16
      %v4466 = vpop.permute.xlu0 %4465
      %4467 = vrot.lane.b32.xlu0 %v4357, 16
      %v4468 = vpop.permute.xlu0 %4467
      %4469 = vrot.lane.b32.xlu0 %v4360, 16
      %v4470 = vpop.permute.xlu0 %4469
      %4471 = vrot.lane.b32.xlu0 %v4362, 16
      %v4472 = vpop.permute.xlu0 %4471
      %4473 = vrot.lane.b32.xlu0 %v4365, 16
      %v4474 = vpop.permute.xlu0 %4473
      %4475 = vrot.lane.b32.xlu0 %v4367, 16
      %v4476 = vpop.permute.xlu0 %4475
      %v4477 = vsel %vm1636, %v4446, %v4462
      %v4478 = vsel %vm1636, %v4448, %v4464
      %v4479 = vsel %vm1636, %v4450, %v4466
      %v4480 = vsel %vm1636, %v4452, %v4468
      %v4481 = vsel %vm1636, %v4454, %v4470
      %v4482 = vsel %vm1636, %v4456, %v4472
      %v4483 = vsel %vm1636, %v4458, %v4474
      %v4484 = vsel %vm1636, %v4460, %v4476
      %v4485 = vsel %vm1636, %v4462, %v4446
      %v4486 = vsel %vm1636, %v4464, %v4448
      %v4487 = vsel %vm1636, %v4466, %v4450
      %v4488 = vsel %vm1636, %v4468, %v4452
      %v4489 = vsel %vm1636, %v4470, %v4454
      %v4490 = vsel %vm1636, %v4472, %v4456
      %v4491 = vsel %vm1636, %v4474, %v4458
      %v4492 = vsel %vm1636, %v4476, %v4460
      %v4493 = vmul.f32 %v4485, %v1640
      %v4494 = vmul.f32 %v4477, %v1641
      %v4495 = vmul.f32 %v4486, %v1640
      %v4496 = vmul.f32 %v4478, %v1641
      %v4497 = vmul.f32 %v4487, %v1640
      %v4498 = vmul.f32 %v4479, %v1641
      %v4499 = vmul.f32 %v4488, %v1640
      %v4500 = vmul.f32 %v4480, %v1641
      %v4501 = vmul.f32 %v4489, %v1640
      %v4502 = vmul.f32 %v4481, %v1641
      %v4503 = vmul.f32 %v4490, %v1640
      %v4504 = vmul.f32 %v4482, %v1641
      %v4505 = vmul.f32 %v4491, %v1640
      %v4506 = vmul.f32 %v4483, %v1641
      %v4507 = vmul.f32 %v4492, %v1640
      %v4508 = vmul.f32 %v4484, %v1641
      %4509 = vrot.lane.b32.xlu0 %v4321, 15
      %v4510 = vpop.permute.xlu0 %4509
      %4511 = vrot.lane.b32.xlu0 %v4323, 15
      %v4512 = vpop.permute.xlu0 %4511
      %4513 = vrot.lane.b32.xlu0 %v4326, 15
      %v4514 = vpop.permute.xlu0 %4513
      %4515 = vrot.lane.b32.xlu0 %v4328, 15
      %v4516 = vpop.permute.xlu0 %4515
      %4517 = vrot.lane.b32.xlu0 %v4331, 15
      %v4518 = vpop.permute.xlu0 %4517
      %4519 = vrot.lane.b32.xlu0 %v4333, 15
      %v4520 = vpop.permute.xlu0 %4519
      %4521 = vrot.lane.b32.xlu0 %v4336, 15
      %v4522 = vpop.permute.xlu0 %4521
      %4523 = vrot.lane.b32.xlu0 %v4338, 15
      %v4524 = vpop.permute.xlu0 %4523
      %4525 = vrot.lane.b32.xlu0 %v4350, 15
      %v4526 = vpop.permute.xlu0 %4525
      %4527 = vrot.lane.b32.xlu0 %v4352, 15
      %v4528 = vpop.permute.xlu0 %4527
      %4529 = vrot.lane.b32.xlu0 %v4355, 15
      %v4530 = vpop.permute.xlu0 %4529
      %4531 = vrot.lane.b32.xlu0 %v4357, 15
      %v4532 = vpop.permute.xlu0 %4531
      %4533 = vrot.lane.b32.xlu0 %v4360, 15
      %v4534 = vpop.permute.xlu0 %4533
      %4535 = vrot.lane.b32.xlu0 %v4362, 15
      %v4536 = vpop.permute.xlu0 %4535
      %4537 = vrot.lane.b32.xlu0 %v4365, 15
      %v4538 = vpop.permute.xlu0 %4537
      %4539 = vrot.lane.b32.xlu0 %v4367, 15
      %v4540 = vpop.permute.xlu0 %4539
      %v4541 = vsel %vm1650, %v4510, %v4526
      %v4542 = vsel %vm1650, %v4512, %v4528
      %v4543 = vsel %vm1650, %v4514, %v4530
      %v4544 = vsel %vm1650, %v4516, %v4532
      %v4545 = vsel %vm1650, %v4518, %v4534
      %v4546 = vsel %vm1650, %v4520, %v4536
      %v4547 = vsel %vm1650, %v4522, %v4538
      %v4548 = vsel %vm1650, %v4524, %v4540
      %v4549 = vsel %vm1650, %v4526, %v4510
      %v4550 = vsel %vm1650, %v4528, %v4512
      %v4551 = vsel %vm1650, %v4530, %v4514
      %v4552 = vsel %vm1650, %v4532, %v4516
      %v4553 = vsel %vm1650, %v4534, %v4518
      %v4554 = vsel %vm1650, %v4536, %v4520
      %v4555 = vsel %vm1650, %v4538, %v4522
      %v4556 = vsel %vm1650, %v4540, %v4524
      %v4557 = vmul.f32 %v4549, %v1654
      %v4558 = vmul.f32 %v4541, %v1655
      %v4559 = vmul.f32 %v4550, %v1654
      %v4560 = vmul.f32 %v4542, %v1655
      %v4561 = vmul.f32 %v4551, %v1654
      %v4562 = vmul.f32 %v4543, %v1655
      %v4563 = vmul.f32 %v4552, %v1654
      %v4564 = vmul.f32 %v4544, %v1655
      %v4565 = vmul.f32 %v4553, %v1654
      %v4566 = vmul.f32 %v4545, %v1655
      %v4567 = vmul.f32 %v4554, %v1654
      %v4568 = vmul.f32 %v4546, %v1655
      %v4569 = vmul.f32 %v4555, %v1654
      %v4570 = vmul.f32 %v4547, %v1655
      %v4571 = vmul.f32 %v4556, %v1654
      %v4572 = vmul.f32 %v4548, %v1655
      %4573 = vrot.lane.b32.xlu0 %v4321, 1
      %v4574 = vpop.permute.xlu0 %4573
      %4575 = vrot.lane.b32.xlu0 %v4323, 1
      %v4576 = vpop.permute.xlu0 %4575
      %4577 = vrot.lane.b32.xlu0 %v4326, 1
      %v4578 = vpop.permute.xlu0 %4577
      %4579 = vrot.lane.b32.xlu0 %v4328, 1
      %v4580 = vpop.permute.xlu0 %4579
      %4581 = vrot.lane.b32.xlu0 %v4331, 1
      %v4582 = vpop.permute.xlu0 %4581
      %4583 = vrot.lane.b32.xlu0 %v4333, 1
      %v4584 = vpop.permute.xlu0 %4583
      %4585 = vrot.lane.b32.xlu0 %v4336, 1
      %v4586 = vpop.permute.xlu0 %4585
      %4587 = vrot.lane.b32.xlu0 %v4338, 1
      %v4588 = vpop.permute.xlu0 %4587
      %4589 = vrot.lane.b32.xlu0 %v4350, 1
      %v4590 = vpop.permute.xlu0 %4589
      %4591 = vrot.lane.b32.xlu0 %v4352, 1
      %v4592 = vpop.permute.xlu0 %4591
      %4593 = vrot.lane.b32.xlu0 %v4355, 1
      %v4594 = vpop.permute.xlu0 %4593
      %4595 = vrot.lane.b32.xlu0 %v4357, 1
      %v4596 = vpop.permute.xlu0 %4595
      %4597 = vrot.lane.b32.xlu0 %v4360, 1
      %v4598 = vpop.permute.xlu0 %4597
      %4599 = vrot.lane.b32.xlu0 %v4362, 1
      %v4600 = vpop.permute.xlu0 %4599
      %4601 = vrot.lane.b32.xlu0 %v4365, 1
      %v4602 = vpop.permute.xlu0 %4601
      %4603 = vrot.lane.b32.xlu0 %v4367, 1
      %v4604 = vpop.permute.xlu0 %4603
      %v4605 = vsel %vm1664, %v4574, %v4590
      %v4606 = vsel %vm1664, %v4576, %v4592
      %v4607 = vsel %vm1664, %v4578, %v4594
      %v4608 = vsel %vm1664, %v4580, %v4596
      %v4609 = vsel %vm1664, %v4582, %v4598
      %v4610 = vsel %vm1664, %v4584, %v4600
      %v4611 = vsel %vm1664, %v4586, %v4602
      %v4612 = vsel %vm1664, %v4588, %v4604
      %v4613 = vsel %vm1664, %v4590, %v4574
      %v4614 = vsel %vm1664, %v4592, %v4576
      %v4615 = vsel %vm1664, %v4594, %v4578
      %v4616 = vsel %vm1664, %v4596, %v4580
      %v4617 = vsel %vm1664, %v4598, %v4582
      %v4618 = vsel %vm1664, %v4600, %v4584
      %v4619 = vsel %vm1664, %v4602, %v4586
      %v4620 = vsel %vm1664, %v4604, %v4588
      %v4621 = vmul.f32 %v4613, %v1668
      %v4622 = vmul.f32 %v4605, %v1669
      %v4623 = vmul.f32 %v4614, %v1668
      %v4624 = vmul.f32 %v4606, %v1669
      %v4625 = vmul.f32 %v4615, %v1668
      %v4626 = vmul.f32 %v4607, %v1669
      %v4627 = vmul.f32 %v4616, %v1668
      %v4628 = vmul.f32 %v4608, %v1669
      %v4629 = vmul.f32 %v4617, %v1668
      %v4630 = vmul.f32 %v4609, %v1669
      %v4631 = vmul.f32 %v4618, %v1668
      %v4632 = vmul.f32 %v4610, %v1669
      %v4633 = vmul.f32 %v4619, %v1668
      %v4634 = vmul.f32 %v4611, %v1669
      %v4635 = vmul.f32 %v4620, %v1668
      %v4636 = vmul.f32 %v4612, %v1669
      %4637 = vrot.lane.b32.xlu0 %v4321, 127
      %v4638 = vpop.permute.xlu0 %4637
      %4639 = vrot.lane.b32.xlu0 %v4323, 127
      %v4640 = vpop.permute.xlu0 %4639
      %4641 = vrot.lane.b32.xlu0 %v4326, 127
      %v4642 = vpop.permute.xlu0 %4641
      %4643 = vrot.lane.b32.xlu0 %v4328, 127
      %v4644 = vpop.permute.xlu0 %4643
      %4645 = vrot.lane.b32.xlu0 %v4331, 127
      %v4646 = vpop.permute.xlu0 %4645
      %4647 = vrot.lane.b32.xlu0 %v4333, 127
      %v4648 = vpop.permute.xlu0 %4647
      %4649 = vrot.lane.b32.xlu0 %v4336, 127
      %v4650 = vpop.permute.xlu0 %4649
      %4651 = vrot.lane.b32.xlu0 %v4338, 127
      %v4652 = vpop.permute.xlu0 %4651
      %4653 = vrot.lane.b32.xlu0 %v4350, 127
      %v4654 = vpop.permute.xlu0 %4653
      %4655 = vrot.lane.b32.xlu0 %v4352, 127
      %v4656 = vpop.permute.xlu0 %4655
      %4657 = vrot.lane.b32.xlu0 %v4355, 127
      %v4658 = vpop.permute.xlu0 %4657
      %4659 = vrot.lane.b32.xlu0 %v4357, 127
      %v4660 = vpop.permute.xlu0 %4659
      %4661 = vrot.lane.b32.xlu0 %v4360, 127
      %v4662 = vpop.permute.xlu0 %4661
      %4663 = vrot.lane.b32.xlu0 %v4362, 127
      %v4664 = vpop.permute.xlu0 %4663
      %4665 = vrot.lane.b32.xlu0 %v4365, 127
      %v4666 = vpop.permute.xlu0 %4665
      %4667 = vrot.lane.b32.xlu0 %v4367, 127
      %v4668 = vpop.permute.xlu0 %4667
      %v4669 = vsel %vm1678, %v4638, %v4654
      %v4670 = vsel %vm1678, %v4640, %v4656
      %v4671 = vsel %vm1678, %v4642, %v4658
      %v4672 = vsel %vm1678, %v4644, %v4660
      %v4673 = vsel %vm1678, %v4646, %v4662
      %v4674 = vsel %vm1678, %v4648, %v4664
      %v4675 = vsel %vm1678, %v4650, %v4666
      %v4676 = vsel %vm1678, %v4652, %v4668
      %v4677 = vsel %vm1678, %v4654, %v4638
      %v4678 = vsel %vm1678, %v4656, %v4640
      %v4679 = vsel %vm1678, %v4658, %v4642
      %v4680 = vsel %vm1678, %v4660, %v4644
      %v4681 = vsel %vm1678, %v4662, %v4646
      %v4682 = vsel %vm1678, %v4664, %v4648
      %v4683 = vsel %vm1678, %v4666, %v4650
      %v4684 = vsel %vm1678, %v4668, %v4652
      %v4685 = vmul.f32 %v4669, %v1682
      %v4686 = vmul.f32 %v4677, %v1683
      %v4687 = vmul.f32 %v4670, %v1682
      %v4688 = vmul.f32 %v4678, %v1683
      %v4689 = vmul.f32 %v4671, %v1682
      %v4690 = vmul.f32 %v4679, %v1683
      %v4691 = vmul.f32 %v4672, %v1682
      %v4692 = vmul.f32 %v4680, %v1683
      %v4693 = vmul.f32 %v4673, %v1682
      %v4694 = vmul.f32 %v4681, %v1683
      %v4695 = vmul.f32 %v4674, %v1682
      %v4696 = vmul.f32 %v4682, %v1683
      %v4697 = vmul.f32 %v4675, %v1682
      %v4698 = vmul.f32 %v4683, %v1683
      %v4699 = vmul.f32 %v4676, %v1682
      %v4700 = vmul.f32 %v4684, %v1683
      %4701 = vrot.lane.b32.xlu0 %v4321, 113
      %v4702 = vpop.permute.xlu0 %4701
      %4703 = vrot.lane.b32.xlu0 %v4323, 113
      %v4704 = vpop.permute.xlu0 %4703
      %4705 = vrot.lane.b32.xlu0 %v4326, 113
      %v4706 = vpop.permute.xlu0 %4705
      %4707 = vrot.lane.b32.xlu0 %v4328, 113
      %v4708 = vpop.permute.xlu0 %4707
      %4709 = vrot.lane.b32.xlu0 %v4331, 113
      %v4710 = vpop.permute.xlu0 %4709
      %4711 = vrot.lane.b32.xlu0 %v4333, 113
      %v4712 = vpop.permute.xlu0 %4711
      %4713 = vrot.lane.b32.xlu0 %v4336, 113
      %v4714 = vpop.permute.xlu0 %4713
      %4715 = vrot.lane.b32.xlu0 %v4338, 113
      %v4716 = vpop.permute.xlu0 %4715
      %4717 = vrot.lane.b32.xlu0 %v4350, 113
      %v4718 = vpop.permute.xlu0 %4717
      %4719 = vrot.lane.b32.xlu0 %v4352, 113
      %v4720 = vpop.permute.xlu0 %4719
      %4721 = vrot.lane.b32.xlu0 %v4355, 113
      %v4722 = vpop.permute.xlu0 %4721
      %4723 = vrot.lane.b32.xlu0 %v4357, 113
      %v4724 = vpop.permute.xlu0 %4723
      %4725 = vrot.lane.b32.xlu0 %v4360, 113
      %v4726 = vpop.permute.xlu0 %4725
      %4727 = vrot.lane.b32.xlu0 %v4362, 113
      %v4728 = vpop.permute.xlu0 %4727
      %4729 = vrot.lane.b32.xlu0 %v4365, 113
      %v4730 = vpop.permute.xlu0 %4729
      %4731 = vrot.lane.b32.xlu0 %v4367, 113
      %v4732 = vpop.permute.xlu0 %4731
      %v4733 = vsel %vm1692, %v4702, %v4718
      %v4734 = vsel %vm1692, %v4704, %v4720
      %v4735 = vsel %vm1692, %v4706, %v4722
      %v4736 = vsel %vm1692, %v4708, %v4724
      %v4737 = vsel %vm1692, %v4710, %v4726
      %v4738 = vsel %vm1692, %v4712, %v4728
      %v4739 = vsel %vm1692, %v4714, %v4730
      %v4740 = vsel %vm1692, %v4716, %v4732
      %v4741 = vsel %vm1692, %v4718, %v4702
      %v4742 = vsel %vm1692, %v4720, %v4704
      %v4743 = vsel %vm1692, %v4722, %v4706
      %v4744 = vsel %vm1692, %v4724, %v4708
      %v4745 = vsel %vm1692, %v4726, %v4710
      %v4746 = vsel %vm1692, %v4728, %v4712
      %v4747 = vsel %vm1692, %v4730, %v4714
      %v4748 = vsel %vm1692, %v4732, %v4716
      %v4749 = vmul.f32 %v4733, %v1696
      %v4750 = vmul.f32 %v4741, %v1697
      %v4751 = vmul.f32 %v4734, %v1696
      %v4752 = vmul.f32 %v4742, %v1697
      %v4753 = vmul.f32 %v4735, %v1696
      %v4754 = vmul.f32 %v4743, %v1697
      %v4755 = vmul.f32 %v4736, %v1696
      %v4756 = vmul.f32 %v4744, %v1697
      %v4757 = vmul.f32 %v4737, %v1696
      %v4758 = vmul.f32 %v4745, %v1697
      %v4759 = vmul.f32 %v4738, %v1696
      %v4760 = vmul.f32 %v4746, %v1697
      %v4761 = vmul.f32 %v4739, %v1696
      %v4762 = vmul.f32 %v4747, %v1697
      %v4763 = vmul.f32 %v4740, %v1696
      %v4764 = vmul.f32 %v4748, %v1697
      %4765 = vrot.lane.b32.xlu0 %v4321, 112
      %v4766 = vpop.permute.xlu0 %4765
      %4767 = vrot.lane.b32.xlu0 %v4323, 112
      %v4768 = vpop.permute.xlu0 %4767
      %4769 = vrot.lane.b32.xlu0 %v4326, 112
      %v4770 = vpop.permute.xlu0 %4769
      %4771 = vrot.lane.b32.xlu0 %v4328, 112
      %v4772 = vpop.permute.xlu0 %4771
      %4773 = vrot.lane.b32.xlu0 %v4331, 112
      %v4774 = vpop.permute.xlu0 %4773
      %4775 = vrot.lane.b32.xlu0 %v4333, 112
      %v4776 = vpop.permute.xlu0 %4775
      %4777 = vrot.lane.b32.xlu0 %v4336, 112
      %v4778 = vpop.permute.xlu0 %4777
      %4779 = vrot.lane.b32.xlu0 %v4338, 112
      %v4780 = vpop.permute.xlu0 %4779
      %4781 = vrot.lane.b32.xlu0 %v4350, 112
      %v4782 = vpop.permute.xlu0 %4781
      %4783 = vrot.lane.b32.xlu0 %v4352, 112
      %v4784 = vpop.permute.xlu0 %4783
      %4785 = vrot.lane.b32.xlu0 %v4355, 112
      %v4786 = vpop.permute.xlu0 %4785
      %4787 = vrot.lane.b32.xlu0 %v4357, 112
      %v4788 = vpop.permute.xlu0 %4787
      %4789 = vrot.lane.b32.xlu0 %v4360, 112
      %v4790 = vpop.permute.xlu0 %4789
      %4791 = vrot.lane.b32.xlu0 %v4362, 112
      %v4792 = vpop.permute.xlu0 %4791
      %4793 = vrot.lane.b32.xlu0 %v4365, 112
      %v4794 = vpop.permute.xlu0 %4793
      %4795 = vrot.lane.b32.xlu0 %v4367, 112
      %v4796 = vpop.permute.xlu0 %4795
      %v4797 = vsel %vm1706, %v4766, %v4782
      %v4798 = vsel %vm1706, %v4768, %v4784
      %v4799 = vsel %vm1706, %v4770, %v4786
      %v4800 = vsel %vm1706, %v4772, %v4788
      %v4801 = vsel %vm1706, %v4774, %v4790
      %v4802 = vsel %vm1706, %v4776, %v4792
      %v4803 = vsel %vm1706, %v4778, %v4794
      %v4804 = vsel %vm1706, %v4780, %v4796
      %v4805 = vsel %vm1706, %v4782, %v4766
      %v4806 = vsel %vm1706, %v4784, %v4768
      %v4807 = vsel %vm1706, %v4786, %v4770
      %v4808 = vsel %vm1706, %v4788, %v4772
      %v4809 = vsel %vm1706, %v4790, %v4774
      %v4810 = vsel %vm1706, %v4792, %v4776
      %v4811 = vsel %vm1706, %v4794, %v4778
      %v4812 = vsel %vm1706, %v4796, %v4780
      %v4813 = vmul.f32 %v4797, %v1710
      %v4814 = vmul.f32 %v4805, %v1711
      %v4815 = vmul.f32 %v4798, %v1710
      %v4816 = vmul.f32 %v4806, %v1711
      %v4817 = vmul.f32 %v4799, %v1710
      %v4818 = vmul.f32 %v4807, %v1711
      %v4819 = vmul.f32 %v4800, %v1710
      %v4820 = vmul.f32 %v4808, %v1711
      %v4821 = vmul.f32 %v4801, %v1710
      %v4822 = vmul.f32 %v4809, %v1711
      %v4823 = vmul.f32 %v4802, %v1710
      %v4824 = vmul.f32 %v4810, %v1711
      %v4825 = vmul.f32 %v4803, %v1710
      %v4826 = vmul.f32 %v4811, %v1711
      %v4827 = vmul.f32 %v4804, %v1710
      %v4828 = vmul.f32 %v4812, %v1711
      %4829 = vrot.lane.b32.xlu0 %v4321, 111
      %v4830 = vpop.permute.xlu0 %4829
      %4831 = vrot.lane.b32.xlu0 %v4323, 111
      %v4832 = vpop.permute.xlu0 %4831
      %4833 = vrot.lane.b32.xlu0 %v4326, 111
      %v4834 = vpop.permute.xlu0 %4833
      %4835 = vrot.lane.b32.xlu0 %v4328, 111
      %v4836 = vpop.permute.xlu0 %4835
      %4837 = vrot.lane.b32.xlu0 %v4331, 111
      %v4838 = vpop.permute.xlu0 %4837
      %4839 = vrot.lane.b32.xlu0 %v4333, 111
      %v4840 = vpop.permute.xlu0 %4839
      %4841 = vrot.lane.b32.xlu0 %v4336, 111
      %v4842 = vpop.permute.xlu0 %4841
      %4843 = vrot.lane.b32.xlu0 %v4338, 111
      %v4844 = vpop.permute.xlu0 %4843
      %4845 = vrot.lane.b32.xlu0 %v4350, 111
      %v4846 = vpop.permute.xlu0 %4845
      %4847 = vrot.lane.b32.xlu0 %v4352, 111
      %v4848 = vpop.permute.xlu0 %4847
      %4849 = vrot.lane.b32.xlu0 %v4355, 111
      %v4850 = vpop.permute.xlu0 %4849
      %4851 = vrot.lane.b32.xlu0 %v4357, 111
      %v4852 = vpop.permute.xlu0 %4851
      %4853 = vrot.lane.b32.xlu0 %v4360, 111
      %v4854 = vpop.permute.xlu0 %4853
      %4855 = vrot.lane.b32.xlu0 %v4362, 111
      %v4856 = vpop.permute.xlu0 %4855
      %4857 = vrot.lane.b32.xlu0 %v4365, 111
      %v4858 = vpop.permute.xlu0 %4857
      %4859 = vrot.lane.b32.xlu0 %v4367, 111
      %v4860 = vpop.permute.xlu0 %4859
      %v4861 = vsel %vm1720, %v4830, %v4846
      %v4862 = vsel %vm1720, %v4832, %v4848
      %v4863 = vsel %vm1720, %v4834, %v4850
      %v4864 = vsel %vm1720, %v4836, %v4852
      %v4865 = vsel %vm1720, %v4838, %v4854
      %v4866 = vsel %vm1720, %v4840, %v4856
      %v4867 = vsel %vm1720, %v4842, %v4858
      %v4868 = vsel %vm1720, %v4844, %v4860
      %v4869 = vsel %vm1720, %v4846, %v4830
      %v4870 = vsel %vm1720, %v4848, %v4832
      %v4871 = vsel %vm1720, %v4850, %v4834
      %v4872 = vsel %vm1720, %v4852, %v4836
      %v4873 = vsel %vm1720, %v4854, %v4838
      %v4874 = vsel %vm1720, %v4856, %v4840
      %v4875 = vsel %vm1720, %v4858, %v4842
      %v4876 = vsel %vm1720, %v4860, %v4844
      %v4877 = vmul.f32 %v4861, %v1724
      %v4878 = vmul.f32 %v4869, %v1725
      %v4879 = vmul.f32 %v4862, %v1724
      %v4880 = vmul.f32 %v4870, %v1725
      %v4881 = vmul.f32 %v4863, %v1724
      %v4882 = vmul.f32 %v4871, %v1725
      %v4883 = vmul.f32 %v4864, %v1724
      %v4884 = vmul.f32 %v4872, %v1725
      %v4885 = vmul.f32 %v4865, %v1724
      %v4886 = vmul.f32 %v4873, %v1725
      %v4887 = vmul.f32 %v4866, %v1724
      %v4888 = vmul.f32 %v4874, %v1725
      %v4889 = vmul.f32 %v4867, %v1724
      %v4890 = vmul.f32 %v4875, %v1725
      %v4891 = vmul.f32 %v4868, %v1724
      %v4892 = vmul.f32 %v4876, %v1725
      %v4893 = vpack.c.bf16 %v4431, %v4429
      %v4894 = vpack.c.bf16 %v4432, %v4430
      %v4895 = vpack.c.bf16 %v4435, %v4433
      %v4896 = vpack.c.bf16 %v4436, %v4434
      %v4897 = vpack.c.bf16 %v4439, %v4437
      %v4898 = vpack.c.bf16 %v4440, %v4438
      %v4899 = vpack.c.bf16 %v4443, %v4441
      %v4900 = vpack.c.bf16 %v4444, %v4442
      %v4901 = vpack.c.bf16 %v4495, %v4493
      %v4902 = vpack.c.bf16 %v4496, %v4494
      %v4903 = vpack.c.bf16 %v4499, %v4497
      %v4904 = vpack.c.bf16 %v4500, %v4498
      %v4905 = vpack.c.bf16 %v4503, %v4501
      %v4906 = vpack.c.bf16 %v4504, %v4502
      %v4907 = vpack.c.bf16 %v4507, %v4505
      %v4908 = vpack.c.bf16 %v4508, %v4506
      %v4909 = vpack.c.bf16 %v4559, %v4557
      %v4910 = vpack.c.bf16 %v4560, %v4558
      %v4911 = vpack.c.bf16 %v4563, %v4561
      %v4912 = vpack.c.bf16 %v4564, %v4562
      %v4913 = vpack.c.bf16 %v4567, %v4565
      %v4914 = vpack.c.bf16 %v4568, %v4566
      %v4915 = vpack.c.bf16 %v4571, %v4569
      %v4916 = vpack.c.bf16 %v4572, %v4570
      %v4917 = vpack.c.bf16 %v4623, %v4621
      %v4918 = vpack.c.bf16 %v4624, %v4622
      %v4919 = vpack.c.bf16 %v4627, %v4625
      %v4920 = vpack.c.bf16 %v4628, %v4626
      %v4921 = vpack.c.bf16 %v4631, %v4629
      %v4922 = vpack.c.bf16 %v4632, %v4630
      %v4923 = vpack.c.bf16 %v4635, %v4633
      %v4924 = vpack.c.bf16 %v4636, %v4634
      %v4925 = vpack.c.bf16 %v4323, %v4321
      %v4926 = vpack.c.bf16 %v4352, %v4350
      %v4927 = vpack.c.bf16 %v4328, %v4326
      %v4928 = vpack.c.bf16 %v4357, %v4355
      %v4929 = vpack.c.bf16 %v4333, %v4331
      %v4930 = vpack.c.bf16 %v4362, %v4360
      %v4931 = vpack.c.bf16 %v4338, %v4336
      %v4932 = vpack.c.bf16 %v4367, %v4365
      %v4933 = vpack.c.bf16 %v4687, %v4685
      %v4934 = vpack.c.bf16 %v4688, %v4686
      %v4935 = vpack.c.bf16 %v4691, %v4689
      %v4936 = vpack.c.bf16 %v4692, %v4690
      %v4937 = vpack.c.bf16 %v4695, %v4693
      %v4938 = vpack.c.bf16 %v4696, %v4694
      %v4939 = vpack.c.bf16 %v4699, %v4697
      %v4940 = vpack.c.bf16 %v4700, %v4698
      %v4941 = vpack.c.bf16 %v4751, %v4749
      %v4942 = vpack.c.bf16 %v4752, %v4750
      %v4943 = vpack.c.bf16 %v4755, %v4753
      %v4944 = vpack.c.bf16 %v4756, %v4754
      %v4945 = vpack.c.bf16 %v4759, %v4757
      %v4946 = vpack.c.bf16 %v4760, %v4758
      %v4947 = vpack.c.bf16 %v4763, %v4761
      %v4948 = vpack.c.bf16 %v4764, %v4762
      %v4949 = vpack.c.bf16 %v4815, %v4813
      %v4950 = vpack.c.bf16 %v4816, %v4814
      %v4951 = vpack.c.bf16 %v4819, %v4817
      %v4952 = vpack.c.bf16 %v4820, %v4818
      %v4953 = vpack.c.bf16 %v4823, %v4821
      %v4954 = vpack.c.bf16 %v4824, %v4822
      %v4955 = vpack.c.bf16 %v4827, %v4825
      %v4956 = vpack.c.bf16 %v4828, %v4826
      %v4957 = vpack.c.bf16 %v4879, %v4877
      %v4958 = vpack.c.bf16 %v4880, %v4878
      %v4959 = vpack.c.bf16 %v4883, %v4881
      %v4960 = vpack.c.bf16 %v4884, %v4882
      %v4961 = vpack.c.bf16 %v4887, %v4885
      %v4962 = vpack.c.bf16 %v4888, %v4886
      %v4963 = vpack.c.bf16 %v4891, %v4889
      %v4964 = vpack.c.bf16 %v4892, %v4890
      %v4965 = vld [vmem:[%s22] sm:$0xff]
      %v4966 = vld [vmem:[%s22 + $0x8] sm:$0xff]
      %v4967 = vld [vmem:[%s22 + $0x10] sm:$0xff]
      %v4968 = vld [vmem:[%s22 + $0x18] sm:$0xff]
      %4970 = vset.pattern.permute.xlu0 0
      %4971 = vperm.xlu0 %4970, %v4965
      %v4972 = vpop.permute.xlu0 %4971
      %4975 = vset.pattern.permute.xlu0 0
      %4976 = vperm.xlu0 %4975, %v4966
      %v4977 = vpop.permute.xlu0 %4976
      %4980 = vset.pattern.permute.xlu0 0
      %4981 = vperm.xlu0 %4980, %v4967
      %v4982 = vpop.permute.xlu0 %4981
      %4985 = vset.pattern.permute.xlu0 0
      %4986 = vperm.xlu0 %4985, %v4968
      %v4987 = vpop.permute.xlu0 %4986
      %v5001 = vunpack.c.l.b16 %v4369
      %v5002 = vunpack.c.h.b16 %v4369
      %v5003 = vunpack.c.l.b16 %v4370
      %v5004 = vunpack.c.h.b16 %v4370
      %v5005 = vunpack.c.l.b16 %v4371
      %v5006 = vunpack.c.l.b16 %v4372
      %v5007 = vunpack.c.h.b16 %v4372
      %v5008 = vunpack.c.l.b16 %v4373
      %v5009 = vunpack.c.h.b16 %v4373
      %v5010 = vunpack.c.l.b16 %v4374
      %v5011 = vunpack.c.l.b16 %v4375
      %v5012 = vunpack.c.h.b16 %v4375
      %v5013 = vunpack.c.l.b16 %v4376
      %v5014 = vunpack.c.h.b16 %v4376
      %v5015 = vunpack.c.l.b16 %v4377
      %v5016 = vunpack.c.l.b16 %v4378
      %v5017 = vunpack.c.h.b16 %v4378
      %v5018 = vunpack.c.l.b16 %v4379
      %v5019 = vunpack.c.h.b16 %v4379
      %v5020 = vunpack.c.l.b16 %v4380
      %v5021 = vpack.c.b16 %v5006, %v5001
      %v5022 = vpack.c.b16 %v5007, %v5002
      %v5023 = vpack.c.b16 %v5008, %v5003
      %v5024 = vpack.c.b16 %v5009, %v5004
      %v5025 = vpack.c.b16 %v5010, %v5005
      %v5026 = vpack.c.b16 %v5016, %v5011
      %v5027 = vpack.c.b16 %v5017, %v5012
      %v5028 = vpack.c.b16 %v5018, %v5013
      %v5029 = vpack.c.b16 %v5019, %v5014
      %v5030 = vpack.c.b16 %v5020, %v5015
      %v5040 = vsel %vm3248, %v5025, 0
      %v5043 = vsel %vm3248, %v5030, 0
      %5045 = vmatpush.bf16.msra.mxu0 %v4907
      %5046 = vmatpush.bf16.msra.mxu0 %v4905
      %5047 = vmatpush.bf16.msra.mxu0 %v4903
      %5048 = vmatpush.bf16.msra.mxu0 %v4901
      %5049 = vmatpush.bf16.msra.mxu0 %v4899
      %5050 = vmatpush.bf16.msra.mxu0 %v4897
      %5051 = vmatpush.bf16.msra.mxu0 %v4895
      %5052 = vmatpush.bf16.msra.mxu0 %v4893
      %5053 = vmatmul.bf16.gmra.mxu0 %v5021
      %v5054 = vpop.f32.mrf.mxu0
      %v5055 = vadd.f32 %v4972, %v5054
      %v5056 = vpop.f32.mrf.mxu0
      %v5057 = vadd.f32 %v4977, %v5056
      %5058 = vmatmul.bf16.gmra.mxu0 %v5026
      %v5059 = vpop.f32.mrf.mxu0
      %v5060 = vadd.f32 %v4982, %v5059
      %v5061 = vpop.f32.mrf.mxu0
      %v5062 = vadd.f32 %v4987, %v5061
      %5063 = vdwg.mxu0
      %5064 = vmatpush.bf16.msra.mxu0 %v4923
      %5065 = vmatpush.bf16.msra.mxu0 %v4921
      %5066 = vmatpush.bf16.msra.mxu0 %v4919
      %5067 = vmatpush.bf16.msra.mxu0 %v4917
      %5068 = vmatpush.bf16.msra.mxu0 %v4915
      %5069 = vmatpush.bf16.msra.mxu0 %v4913
      %5070 = vmatpush.bf16.msra.mxu0 %v4911
      %5071 = vmatpush.bf16.msra.mxu0 %v4909
      %5072 = vmatmul.bf16.gmra.mxu0 %v5022
      %v5073 = vpop.f32.mrf.mxu0
      %v5074 = vadd.f32 %v5055, %v5073
      %v5075 = vpop.f32.mrf.mxu0
      %v5076 = vadd.f32 %v5057, %v5075
      %5077 = vmatmul.bf16.gmra.mxu0 %v5027
      %v5078 = vpop.f32.mrf.mxu0
      %v5079 = vadd.f32 %v5060, %v5078
      %v5080 = vpop.f32.mrf.mxu0
      %v5081 = vadd.f32 %v5062, %v5080
      %5082 = vdwg.mxu0
      %5083 = vmatpush.bf16.msra.mxu0 %v4939
      %5084 = vmatpush.bf16.msra.mxu0 %v4937
      %5085 = vmatpush.bf16.msra.mxu0 %v4935
      %5086 = vmatpush.bf16.msra.mxu0 %v4933
      %5087 = vmatpush.bf16.msra.mxu0 %v4931
      %5088 = vmatpush.bf16.msra.mxu0 %v4929
      %5089 = vmatpush.bf16.msra.mxu0 %v4927
      %5090 = vmatpush.bf16.msra.mxu0 %v4925
      %5091 = vmatmul.bf16.gmra.mxu0 %v5023
      %v5092 = vpop.f32.mrf.mxu0
      %v5093 = vadd.f32 %v5074, %v5092
      %v5094 = vpop.f32.mrf.mxu0
      %v5095 = vadd.f32 %v5076, %v5094
      %5096 = vmatmul.bf16.gmra.mxu0 %v5028
      %v5097 = vpop.f32.mrf.mxu0
      %v5098 = vadd.f32 %v5079, %v5097
      %v5099 = vpop.f32.mrf.mxu0
      %v5100 = vadd.f32 %v5081, %v5099
      %5101 = vdwg.mxu0
      %5102 = vmatpush.bf16.msra.mxu0 %v4955
      %5103 = vmatpush.bf16.msra.mxu0 %v4953
      %5104 = vmatpush.bf16.msra.mxu0 %v4951
      %5105 = vmatpush.bf16.msra.mxu0 %v4949
      %5106 = vmatpush.bf16.msra.mxu0 %v4947
      %5107 = vmatpush.bf16.msra.mxu0 %v4945
      %5108 = vmatpush.bf16.msra.mxu0 %v4943
      %5109 = vmatpush.bf16.msra.mxu0 %v4941
      %5110 = vmatmul.bf16.gmra.mxu0 %v5024
      %v5111 = vpop.f32.mrf.mxu0
      %v5112 = vadd.f32 %v5093, %v5111
      %v5113 = vpop.f32.mrf.mxu0
      %v5114 = vadd.f32 %v5095, %v5113
      %5115 = vmatmul.bf16.gmra.mxu0 %v5029
      %v5116 = vpop.f32.mrf.mxu0
      %v5117 = vadd.f32 %v5098, %v5116
      %v5118 = vpop.f32.mrf.mxu0
      %v5119 = vadd.f32 %v5100, %v5118
      %5120 = vdwg.mxu0
      %5121 = vmatpush.bf16.msra.mxu0 0
      %5122 = vmatpush.bf16.msra.mxu0 0
      %5123 = vmatpush.bf16.msra.mxu0 0
      %5124 = vmatpush.bf16.msra.mxu0 0
      %5125 = vmatpush.bf16.msra.mxu0 %v4963
      %5126 = vmatpush.bf16.msra.mxu0 %v4961
      %5127 = vmatpush.bf16.msra.mxu0 %v4959
      %5128 = vmatpush.bf16.msra.mxu0 %v4957
      %5129 = vmatmul.bf16.gmra.mxu0 %v5040
      %v5130 = vpop.f32.mrf.mxu0
      %v5131 = vadd.f32 %v5112, %v5130
      %v5132 = vpop.f32.mrf.mxu0
      %v5133 = vadd.f32 %v5114, %v5132
      %5134 = vmatmul.bf16.gmra.mxu0 %v5043
      %v5135 = vpop.f32.mrf.mxu0
      %v5136 = vadd.f32 %v5117, %v5135
      %v5137 = vpop.f32.mrf.mxu0
      %v5138 = vadd.f32 %v5119, %v5137
      %5139 = vdwg.mxu0
      %5140 = vmatpush.bf16.msra.mxu0 %v4908
      %5141 = vmatpush.bf16.msra.mxu0 %v4906
      %5142 = vmatpush.bf16.msra.mxu0 %v4904
      %5143 = vmatpush.bf16.msra.mxu0 %v4902
      %5144 = vmatpush.bf16.msra.mxu0 %v4900
      %5145 = vmatpush.bf16.msra.mxu0 %v4898
      %5146 = vmatpush.bf16.msra.mxu0 %v4896
      %5147 = vmatpush.bf16.msra.mxu0 %v4894
      %5148 = vmatmul.bf16.gmra.mxu0 %v5021
      %v5149 = vpop.f32.mrf.mxu0
      %v5150 = vadd.f32 %v4972, %v5149
      %v5151 = vpop.f32.mrf.mxu0
      %v5152 = vadd.f32 %v4977, %v5151
      %5153 = vmatmul.bf16.gmra.mxu0 %v5026
      %v5154 = vpop.f32.mrf.mxu0
      %v5155 = vadd.f32 %v4982, %v5154
      %v5156 = vpop.f32.mrf.mxu0
      %v5157 = vadd.f32 %v4987, %v5156
      %5158 = vdwg.mxu0
      %5159 = vmatpush.bf16.msra.mxu0 %v4924
      %5160 = vmatpush.bf16.msra.mxu0 %v4922
      %5161 = vmatpush.bf16.msra.mxu0 %v4920
      %5162 = vmatpush.bf16.msra.mxu0 %v4918
      %5163 = vmatpush.bf16.msra.mxu0 %v4916
      %5164 = vmatpush.bf16.msra.mxu0 %v4914
      %5165 = vmatpush.bf16.msra.mxu0 %v4912
      %5166 = vmatpush.bf16.msra.mxu0 %v4910
      %5167 = vmatmul.bf16.gmra.mxu0 %v5022
      %v5168 = vpop.f32.mrf.mxu0
      %v5169 = vadd.f32 %v5150, %v5168
      %v5170 = vpop.f32.mrf.mxu0
      %v5171 = vadd.f32 %v5152, %v5170
      %5172 = vmatmul.bf16.gmra.mxu0 %v5027
      %v5173 = vpop.f32.mrf.mxu0
      %v5174 = vadd.f32 %v5155, %v5173
      %v5175 = vpop.f32.mrf.mxu0
      %v5176 = vadd.f32 %v5157, %v5175
      %5177 = vdwg.mxu0
      %5178 = vmatpush.bf16.msra.mxu0 %v4940
      %5179 = vmatpush.bf16.msra.mxu0 %v4938
      %5180 = vmatpush.bf16.msra.mxu0 %v4936
      %5181 = vmatpush.bf16.msra.mxu0 %v4934
      %5182 = vmatpush.bf16.msra.mxu0 %v4932
      %5183 = vmatpush.bf16.msra.mxu0 %v4930
      %5184 = vmatpush.bf16.msra.mxu0 %v4928
      %5185 = vmatpush.bf16.msra.mxu0 %v4926
      %5186 = vmatmul.bf16.gmra.mxu0 %v5023
      %v5187 = vpop.f32.mrf.mxu0
      %v5188 = vadd.f32 %v5169, %v5187
      %v5189 = vpop.f32.mrf.mxu0
      %v5190 = vadd.f32 %v5171, %v5189
      %5191 = vmatmul.bf16.gmra.mxu0 %v5028
      %v5192 = vpop.f32.mrf.mxu0
      %v5193 = vadd.f32 %v5174, %v5192
      %v5194 = vpop.f32.mrf.mxu0
      %v5195 = vadd.f32 %v5176, %v5194
      %5196 = vdwg.mxu0
      %5197 = vmatpush.bf16.msra.mxu0 %v4956
      %5198 = vmatpush.bf16.msra.mxu0 %v4954
      %5199 = vmatpush.bf16.msra.mxu0 %v4952
      %5200 = vmatpush.bf16.msra.mxu0 %v4950
      %5201 = vmatpush.bf16.msra.mxu0 %v4948
      %5202 = vmatpush.bf16.msra.mxu0 %v4946
      %5203 = vmatpush.bf16.msra.mxu0 %v4944
      %5204 = vmatpush.bf16.msra.mxu0 %v4942
      %5205 = vmatmul.bf16.gmra.mxu0 %v5024
      %v5206 = vpop.f32.mrf.mxu0
      %v5207 = vadd.f32 %v5188, %v5206
      %v5208 = vpop.f32.mrf.mxu0
      %v5209 = vadd.f32 %v5190, %v5208
      %5210 = vmatmul.bf16.gmra.mxu0 %v5029
      %v5211 = vpop.f32.mrf.mxu0
      %v5212 = vadd.f32 %v5193, %v5211
      %v5213 = vpop.f32.mrf.mxu0
      %v5214 = vadd.f32 %v5195, %v5213
      %5215 = vdwg.mxu0
      %5216 = vmatpush.bf16.msra.mxu0 0
      %5217 = vmatpush.bf16.msra.mxu0 0
      %5218 = vmatpush.bf16.msra.mxu0 0
      %5219 = vmatpush.bf16.msra.mxu0 0
      %5220 = vmatpush.bf16.msra.mxu0 %v4964
      %5221 = vmatpush.bf16.msra.mxu0 %v4962
      %5222 = vmatpush.bf16.msra.mxu0 %v4960
      %5223 = vmatpush.bf16.msra.mxu0 %v4958
      %5224 = vmatmul.bf16.gmra.mxu0 %v5040
      %v5225 = vpop.f32.mrf.mxu0
      %v5226 = vadd.f32 %v5207, %v5225
      %v5227 = vpop.f32.mrf.mxu0
      %v5228 = vadd.f32 %v5209, %v5227
      %5229 = vmatmul.bf16.gmra.mxu0 %v5043
      %v5230 = vpop.f32.mrf.mxu0
      %v5231 = vadd.f32 %v5212, %v5230
      %v5232 = vpop.f32.mrf.mxu0
      %v5233 = vadd.f32 %v5214, %v5232
      %5234 = vdwg.mxu0
      %v5235 = vmax.f32 %v5131, 0.0
      %v5236 = vmax.f32 %v5226, 0.0
      %v5237 = vmax.f32 %v5133, 0.0
      %v5238 = vmax.f32 %v5228, 0.0
      %v5239 = vmax.f32 %v5136, 0.0
      %v5240 = vmax.f32 %v5231, 0.0
      %v5241 = vmax.f32 %v5138, 0.0
      %v5242 = vmax.f32 %v5233, 0.0
      %v5243 = vld [vmem:[%s23] sm:$0xff]
      %v5244 = vld [vmem:[%s23 + $0x8] sm:$0xf]
      %v5245 = vld [vmem:[%s23 + $0xc] sm:$0xff]
      %v5246 = vld [vmem:[%s23 + $0x14] sm:$0xf]
      %v5247 = vld [vmem:[%s23 + $0x18] sm:$0xff]
      %v5248 = vld [vmem:[%s23 + $0x20] sm:$0xf]
      %v5249 = vld [vmem:[%s23 + $0x24] sm:$0xff]
      %v5250 = vld [vmem:[%s23 + $0x2c] sm:$0xf]
      %5251 = vrot.lane.b32.xlu0 %v5235, 17
      %v5252 = vpop.permute.xlu0 %5251
      %5253 = vrot.lane.b32.xlu0 %v5237, 17
      %v5254 = vpop.permute.xlu0 %5253
      %5255 = vrot.lane.b32.xlu0 %v5239, 17
      %v5256 = vpop.permute.xlu0 %5255
      %5257 = vrot.lane.b32.xlu0 %v5241, 17
      %v5258 = vpop.permute.xlu0 %5257
      %5259 = vrot.lane.b32.xlu0 %v5236, 17
      %v5260 = vpop.permute.xlu0 %5259
      %5261 = vrot.lane.b32.xlu0 %v5238, 17
      %v5262 = vpop.permute.xlu0 %5261
      %5263 = vrot.lane.b32.xlu0 %v5240, 17
      %v5264 = vpop.permute.xlu0 %5263
      %5265 = vrot.lane.b32.xlu0 %v5242, 17
      %v5266 = vpop.permute.xlu0 %5265
      %v5267 = vsel %vm1622, %v5252, %v5260
      %v5268 = vsel %vm1622, %v5254, %v5262
      %v5269 = vsel %vm1622, %v5256, %v5264
      %v5270 = vsel %vm1622, %v5258, %v5266
      %v5271 = vsel %vm1622, %v5260, %v5252
      %v5272 = vsel %vm1622, %v5262, %v5254
      %v5273 = vsel %vm1622, %v5264, %v5256
      %v5274 = vsel %vm1622, %v5266, %v5258
      %v5275 = vmul.f32 %v5271, %v1626
      %v5276 = vmul.f32 %v5267, %v1627
      %v5277 = vmul.f32 %v5272, %v1626
      %v5278 = vmul.f32 %v5268, %v1627
      %v5279 = vmul.f32 %v5273, %v1626
      %v5280 = vmul.f32 %v5269, %v1627
      %v5281 = vmul.f32 %v5274, %v1626
      %v5282 = vmul.f32 %v5270, %v1627
      %5283 = vrot.lane.b32.xlu0 %v5235, 16
      %v5284 = vpop.permute.xlu0 %5283
      %5285 = vrot.lane.b32.xlu0 %v5237, 16
      %v5286 = vpop.permute.xlu0 %5285
      %5287 = vrot.lane.b32.xlu0 %v5239, 16
      %v5288 = vpop.permute.xlu0 %5287
      %5289 = vrot.lane.b32.xlu0 %v5241, 16
      %v5290 = vpop.permute.xlu0 %5289
      %5291 = vrot.lane.b32.xlu0 %v5236, 16
      %v5292 = vpop.permute.xlu0 %5291
      %5293 = vrot.lane.b32.xlu0 %v5238, 16
      %v5294 = vpop.permute.xlu0 %5293
      %5295 = vrot.lane.b32.xlu0 %v5240, 16
      %v5296 = vpop.permute.xlu0 %5295
      %5297 = vrot.lane.b32.xlu0 %v5242, 16
      %v5298 = vpop.permute.xlu0 %5297
      %v5299 = vsel %vm1636, %v5284, %v5292
      %v5300 = vsel %vm1636, %v5286, %v5294
      %v5301 = vsel %vm1636, %v5288, %v5296
      %v5302 = vsel %vm1636, %v5290, %v5298
      %v5303 = vsel %vm1636, %v5292, %v5284
      %v5304 = vsel %vm1636, %v5294, %v5286
      %v5305 = vsel %vm1636, %v5296, %v5288
      %v5306 = vsel %vm1636, %v5298, %v5290
      %v5307 = vmul.f32 %v5303, %v1640
      %v5308 = vmul.f32 %v5299, %v1641
      %v5309 = vmul.f32 %v5304, %v1640
      %v5310 = vmul.f32 %v5300, %v1641
      %v5311 = vmul.f32 %v5305, %v1640
      %v5312 = vmul.f32 %v5301, %v1641
      %v5313 = vmul.f32 %v5306, %v1640
      %v5314 = vmul.f32 %v5302, %v1641
      %5315 = vrot.lane.b32.xlu0 %v5235, 15
      %v5316 = vpop.permute.xlu0 %5315
      %5317 = vrot.lane.b32.xlu0 %v5237, 15
      %v5318 = vpop.permute.xlu0 %5317
      %5319 = vrot.lane.b32.xlu0 %v5239, 15
      %v5320 = vpop.permute.xlu0 %5319
      %5321 = vrot.lane.b32.xlu0 %v5241, 15
      %v5322 = vpop.permute.xlu0 %5321
      %5323 = vrot.lane.b32.xlu0 %v5236, 15
      %v5324 = vpop.permute.xlu0 %5323
      %5325 = vrot.lane.b32.xlu0 %v5238, 15
      %v5326 = vpop.permute.xlu0 %5325
      %5327 = vrot.lane.b32.xlu0 %v5240, 15
      %v5328 = vpop.permute.xlu0 %5327
      %5329 = vrot.lane.b32.xlu0 %v5242, 15
      %v5330 = vpop.permute.xlu0 %5329
      %v5331 = vsel %vm1650, %v5316, %v5324
      %v5332 = vsel %vm1650, %v5318, %v5326
      %v5333 = vsel %vm1650, %v5320, %v5328
      %v5334 = vsel %vm1650, %v5322, %v5330
      %v5335 = vsel %vm1650, %v5324, %v5316
      %v5336 = vsel %vm1650, %v5326, %v5318
      %v5337 = vsel %vm1650, %v5328, %v5320
      %v5338 = vsel %vm1650, %v5330, %v5322
      %v5339 = vmul.f32 %v5335, %v1654
      %v5340 = vmul.f32 %v5331, %v1655
      %v5341 = vmul.f32 %v5336, %v1654
      %v5342 = vmul.f32 %v5332, %v1655
      %v5343 = vmul.f32 %v5337, %v1654
      %v5344 = vmul.f32 %v5333, %v1655
      %v5345 = vmul.f32 %v5338, %v1654
      %v5346 = vmul.f32 %v5334, %v1655
      %5347 = vrot.lane.b32.xlu0 %v5235, 1
      %v5348 = vpop.permute.xlu0 %5347
      %5349 = vrot.lane.b32.xlu0 %v5237, 1
      %v5350 = vpop.permute.xlu0 %5349
      %5351 = vrot.lane.b32.xlu0 %v5239, 1
      %v5352 = vpop.permute.xlu0 %5351
      %5353 = vrot.lane.b32.xlu0 %v5241, 1
      %v5354 = vpop.permute.xlu0 %5353
      %5355 = vrot.lane.b32.xlu0 %v5236, 1
      %v5356 = vpop.permute.xlu0 %5355
      %5357 = vrot.lane.b32.xlu0 %v5238, 1
      %v5358 = vpop.permute.xlu0 %5357
      %5359 = vrot.lane.b32.xlu0 %v5240, 1
      %v5360 = vpop.permute.xlu0 %5359
      %5361 = vrot.lane.b32.xlu0 %v5242, 1
      %v5362 = vpop.permute.xlu0 %5361
      %v5363 = vsel %vm1664, %v5348, %v5356
      %v5364 = vsel %vm1664, %v5350, %v5358
      %v5365 = vsel %vm1664, %v5352, %v5360
      %v5366 = vsel %vm1664, %v5354, %v5362
      %v5367 = vsel %vm1664, %v5356, %v5348
      %v5368 = vsel %vm1664, %v5358, %v5350
      %v5369 = vsel %vm1664, %v5360, %v5352
      %v5370 = vsel %vm1664, %v5362, %v5354
      %v5371 = vmul.f32 %v5367, %v1668
      %v5372 = vmul.f32 %v5363, %v1669
      %v5373 = vmul.f32 %v5368, %v1668
      %v5374 = vmul.f32 %v5364, %v1669
      %v5375 = vmul.f32 %v5369, %v1668
      %v5376 = vmul.f32 %v5365, %v1669
      %v5377 = vmul.f32 %v5370, %v1668
      %v5378 = vmul.f32 %v5366, %v1669
      %5379 = vrot.lane.b32.xlu0 %v5235, 127
      %v5380 = vpop.permute.xlu0 %5379
      %5381 = vrot.lane.b32.xlu0 %v5237, 127
      %v5382 = vpop.permute.xlu0 %5381
      %5383 = vrot.lane.b32.xlu0 %v5239, 127
      %v5384 = vpop.permute.xlu0 %5383
      %5385 = vrot.lane.b32.xlu0 %v5241, 127
      %v5386 = vpop.permute.xlu0 %5385
      %5387 = vrot.lane.b32.xlu0 %v5236, 127
      %v5388 = vpop.permute.xlu0 %5387
      %5389 = vrot.lane.b32.xlu0 %v5238, 127
      %v5390 = vpop.permute.xlu0 %5389
      %5391 = vrot.lane.b32.xlu0 %v5240, 127
      %v5392 = vpop.permute.xlu0 %5391
      %5393 = vrot.lane.b32.xlu0 %v5242, 127
      %v5394 = vpop.permute.xlu0 %5393
      %v5395 = vsel %vm1678, %v5380, %v5388
      %v5396 = vsel %vm1678, %v5382, %v5390
      %v5397 = vsel %vm1678, %v5384, %v5392
      %v5398 = vsel %vm1678, %v5386, %v5394
      %v5399 = vsel %vm1678, %v5388, %v5380
      %v5400 = vsel %vm1678, %v5390, %v5382
      %v5401 = vsel %vm1678, %v5392, %v5384
      %v5402 = vsel %vm1678, %v5394, %v5386
      %v5403 = vmul.f32 %v5395, %v1682
      %v5404 = vmul.f32 %v5399, %v1683
      %v5405 = vmul.f32 %v5396, %v1682
      %v5406 = vmul.f32 %v5400, %v1683
      %v5407 = vmul.f32 %v5397, %v1682
      %v5408 = vmul.f32 %v5401, %v1683
      %v5409 = vmul.f32 %v5398, %v1682
      %v5410 = vmul.f32 %v5402, %v1683
      %5411 = vrot.lane.b32.xlu0 %v5235, 113
      %v5412 = vpop.permute.xlu0 %5411
      %5413 = vrot.lane.b32.xlu0 %v5237, 113
      %v5414 = vpop.permute.xlu0 %5413
      %5415 = vrot.lane.b32.xlu0 %v5239, 113
      %v5416 = vpop.permute.xlu0 %5415
      %5417 = vrot.lane.b32.xlu0 %v5241, 113
      %v5418 = vpop.permute.xlu0 %5417
      %5419 = vrot.lane.b32.xlu0 %v5236, 113
      %v5420 = vpop.permute.xlu0 %5419
      %5421 = vrot.lane.b32.xlu0 %v5238, 113
      %v5422 = vpop.permute.xlu0 %5421
      %5423 = vrot.lane.b32.xlu0 %v5240, 113
      %v5424 = vpop.permute.xlu0 %5423
      %5425 = vrot.lane.b32.xlu0 %v5242, 113
      %v5426 = vpop.permute.xlu0 %5425
      %v5427 = vsel %vm1692, %v5412, %v5420
      %v5428 = vsel %vm1692, %v5414, %v5422
      %v5429 = vsel %vm1692, %v5416, %v5424
      %v5430 = vsel %vm1692, %v5418, %v5426
      %v5431 = vsel %vm1692, %v5420, %v5412
      %v5432 = vsel %vm1692, %v5422, %v5414
      %v5433 = vsel %vm1692, %v5424, %v5416
      %v5434 = vsel %vm1692, %v5426, %v5418
      %v5435 = vmul.f32 %v5427, %v1696
      %v5436 = vmul.f32 %v5431, %v1697
      %v5437 = vmul.f32 %v5428, %v1696
      %v5438 = vmul.f32 %v5432, %v1697
      %v5439 = vmul.f32 %v5429, %v1696
      %v5440 = vmul.f32 %v5433, %v1697
      %v5441 = vmul.f32 %v5430, %v1696
      %v5442 = vmul.f32 %v5434, %v1697
      %5443 = vrot.lane.b32.xlu0 %v5235, 112
      %v5444 = vpop.permute.xlu0 %5443
      %5445 = vrot.lane.b32.xlu0 %v5237, 112
      %v5446 = vpop.permute.xlu0 %5445
      %5447 = vrot.lane.b32.xlu0 %v5239, 112
      %v5448 = vpop.permute.xlu0 %5447
      %5449 = vrot.lane.b32.xlu0 %v5241, 112
      %v5450 = vpop.permute.xlu0 %5449
      %5451 = vrot.lane.b32.xlu0 %v5236, 112
      %v5452 = vpop.permute.xlu0 %5451
      %5453 = vrot.lane.b32.xlu0 %v5238, 112
      %v5454 = vpop.permute.xlu0 %5453
      %5455 = vrot.lane.b32.xlu0 %v5240, 112
      %v5456 = vpop.permute.xlu0 %5455
      %5457 = vrot.lane.b32.xlu0 %v5242, 112
      %v5458 = vpop.permute.xlu0 %5457
      %v5459 = vsel %vm1706, %v5444, %v5452
      %v5460 = vsel %vm1706, %v5446, %v5454
      %v5461 = vsel %vm1706, %v5448, %v5456
      %v5462 = vsel %vm1706, %v5450, %v5458
      %v5463 = vsel %vm1706, %v5452, %v5444
      %v5464 = vsel %vm1706, %v5454, %v5446
      %v5465 = vsel %vm1706, %v5456, %v5448
      %v5466 = vsel %vm1706, %v5458, %v5450
      %v5467 = vmul.f32 %v5459, %v1710
      %v5468 = vmul.f32 %v5463, %v1711
      %v5469 = vmul.f32 %v5460, %v1710
      %v5470 = vmul.f32 %v5464, %v1711
      %v5471 = vmul.f32 %v5461, %v1710
      %v5472 = vmul.f32 %v5465, %v1711
      %v5473 = vmul.f32 %v5462, %v1710
      %v5474 = vmul.f32 %v5466, %v1711
      %5475 = vrot.lane.b32.xlu0 %v5235, 111
      %v5476 = vpop.permute.xlu0 %5475
      %5477 = vrot.lane.b32.xlu0 %v5237, 111
      %v5478 = vpop.permute.xlu0 %5477
      %5479 = vrot.lane.b32.xlu0 %v5239, 111
      %v5480 = vpop.permute.xlu0 %5479
      %5481 = vrot.lane.b32.xlu0 %v5241, 111
      %v5482 = vpop.permute.xlu0 %5481
      %5483 = vrot.lane.b32.xlu0 %v5236, 111
      %v5484 = vpop.permute.xlu0 %5483
      %5485 = vrot.lane.b32.xlu0 %v5238, 111
      %v5486 = vpop.permute.xlu0 %5485
      %5487 = vrot.lane.b32.xlu0 %v5240, 111
      %v5488 = vpop.permute.xlu0 %5487
      %5489 = vrot.lane.b32.xlu0 %v5242, 111
      %v5490 = vpop.permute.xlu0 %5489
      %v5491 = vsel %vm1720, %v5476, %v5484
      %v5492 = vsel %vm1720, %v5478, %v5486
      %v5493 = vsel %vm1720, %v5480, %v5488
      %v5494 = vsel %vm1720, %v5482, %v5490
      %v5495 = vsel %vm1720, %v5484, %v5476
      %v5496 = vsel %vm1720, %v5486, %v5478
      %v5497 = vsel %vm1720, %v5488, %v5480
      %v5498 = vsel %vm1720, %v5490, %v5482
      %v5499 = vmul.f32 %v5491, %v1724
      %v5500 = vmul.f32 %v5495, %v1725
      %v5501 = vmul.f32 %v5492, %v1724
      %v5502 = vmul.f32 %v5496, %v1725
      %v5503 = vmul.f32 %v5493, %v1724
      %v5504 = vmul.f32 %v5497, %v1725
      %v5505 = vmul.f32 %v5494, %v1724
      %v5506 = vmul.f32 %v5498, %v1725
      %v5507 = vpack.c.bf16 %v5277, %v5275
      %v5508 = vpack.c.bf16 %v5278, %v5276
      %v5509 = vpack.c.bf16 %v5281, %v5279
      %v5510 = vpack.c.bf16 %v5282, %v5280
      %v5511 = vpack.c.bf16 %v5309, %v5307
      %v5512 = vpack.c.bf16 %v5310, %v5308
      %v5513 = vpack.c.bf16 %v5313, %v5311
      %v5514 = vpack.c.bf16 %v5314, %v5312
      %v5515 = vpack.c.bf16 %v5341, %v5339
      %v5516 = vpack.c.bf16 %v5342, %v5340
      %v5517 = vpack.c.bf16 %v5345, %v5343
      %v5518 = vpack.c.bf16 %v5346, %v5344
      %v5519 = vpack.c.bf16 %v5373, %v5371
      %v5520 = vpack.c.bf16 %v5374, %v5372
      %v5521 = vpack.c.bf16 %v5377, %v5375
      %v5522 = vpack.c.bf16 %v5378, %v5376
      %v5523 = vpack.c.bf16 %v5237, %v5235
      %v5524 = vpack.c.bf16 %v5238, %v5236
      %v5525 = vpack.c.bf16 %v5241, %v5239
      %v5526 = vpack.c.bf16 %v5242, %v5240
      %v5527 = vpack.c.bf16 %v5405, %v5403
      %v5528 = vpack.c.bf16 %v5406, %v5404
      %v5529 = vpack.c.bf16 %v5409, %v5407
      %v5530 = vpack.c.bf16 %v5410, %v5408
      %v5531 = vpack.c.bf16 %v5437, %v5435
      %v5532 = vpack.c.bf16 %v5438, %v5436
      %v5533 = vpack.c.bf16 %v5441, %v5439
      %v5534 = vpack.c.bf16 %v5442, %v5440
      %v5535 = vpack.c.bf16 %v5469, %v5467
      %v5536 = vpack.c.bf16 %v5470, %v5468
      %v5537 = vpack.c.bf16 %v5473, %v5471
      %v5538 = vpack.c.bf16 %v5474, %v5472
      %v5539 = vpack.c.bf16 %v5501, %v5499
      %v5540 = vpack.c.bf16 %v5502, %v5500
      %v5541 = vpack.c.bf16 %v5505, %v5503
      %v5542 = vpack.c.bf16 %v5506, %v5504
      %v5543 = vld [vmem:[%s24] sm:$0xff]
      %v5544 = vld [vmem:[%s24 + $0x8] sm:$0xf]
      %v5545 = vld [vmem:[%s24 + $0xc] sm:$0xff]
      %v5546 = vld [vmem:[%s24 + $0x14] sm:$0xf]
      %v5547 = vld [vmem:[%s24 + $0x18] sm:$0xff]
      %v5548 = vld [vmem:[%s24 + $0x20] sm:$0xf]
      %v5549 = vld [vmem:[%s24 + $0x24] sm:$0xff]
      %v5550 = vld [vmem:[%s24 + $0x2c] sm:$0xf]
      %v5559 = vunpack.c.l.b16 %v5543
      %v5560 = vunpack.c.h.b16 %v5543
      %v5561 = vunpack.c.l.b16 %v5544
      %v5562 = vunpack.c.l.b16 %v5545
      %v5563 = vunpack.c.h.b16 %v5545
      %v5564 = vunpack.c.l.b16 %v5546
      %v5565 = vunpack.c.l.b16 %v5547
      %v5566 = vunpack.c.h.b16 %v5547
      %v5567 = vunpack.c.l.b16 %v5548
      %v5568 = vunpack.c.l.b16 %v5549
      %v5569 = vunpack.c.h.b16 %v5549
      %v5570 = vunpack.c.l.b16 %v5550
      %v5571 = vpack.c.b16 %v5562, %v5559
      %v5572 = vpack.c.b16 %v5563, %v5560
      %v5573 = vpack.c.b16 %v5564, %v5561
      %v5574 = vpack.c.b16 %v5568, %v5565
      %v5575 = vpack.c.b16 %v5569, %v5566
      %v5576 = vpack.c.b16 %v5570, %v5567
      %v5582 = vsel %vm1205, %v5573, 0
      %v5585 = vsel %vm1205, %v5576, 0
      %5587 = vmatpush.bf16.msra.mxu0 %v2654
      %5588 = vmatpush.bf16.msra.mxu0 %v2652
      %5589 = vmatpush.bf16.msra.mxu0 %v2650
      %5590 = vmatpush.bf16.msra.mxu0 %v2648
      %5591 = vmatpush.bf16.msra.mxu0 %v2646
      %5592 = vmatpush.bf16.msra.mxu0 %v2644
      %5593 = vmatpush.bf16.msra.mxu0 %v2642
      %5594 = vmatpush.bf16.msra.mxu0 %v2640
      %5595 = vmatmul.bf16.gmra.mxu0 %v5571
      %v5596 = vpop.f32.mrf.mxu0
      %v5597 = vadd.f32 0.0, %v5596
      %v5598 = vpop.f32.mrf.mxu0
      %v5599 = vadd.f32 0.0, %v5598
      %5600 = vmatmul.bf16.gmra.mxu0 %v5574
      %v5601 = vpop.f32.mrf.mxu0
      %v5602 = vadd.f32 0.0, %v5601
      %v5603 = vpop.f32.mrf.mxu0
      %v5604 = vadd.f32 0.0, %v5603
      %5605 = vdwg.mxu0
      %5606 = vmatpush.bf16.msra.mxu0 %v2670
      %5607 = vmatpush.bf16.msra.mxu0 %v2668
      %5608 = vmatpush.bf16.msra.mxu0 %v2666
      %5609 = vmatpush.bf16.msra.mxu0 %v2664
      %5610 = vmatpush.bf16.msra.mxu0 %v2662
      %5611 = vmatpush.bf16.msra.mxu0 %v2660
      %5612 = vmatpush.bf16.msra.mxu0 %v2658
      %5613 = vmatpush.bf16.msra.mxu0 %v2656
      %5614 = vmatmul.bf16.gmra.mxu0 %v5572
      %v5615 = vpop.f32.mrf.mxu0
      %v5616 = vadd.f32 %v5597, %v5615
      %v5617 = vpop.f32.mrf.mxu0
      %v5618 = vadd.f32 %v5599, %v5617
      %5619 = vmatmul.bf16.gmra.mxu0 %v5575
      %v5620 = vpop.f32.mrf.mxu0
      %v5621 = vadd.f32 %v5602, %v5620
      %v5622 = vpop.f32.mrf.mxu0
      %v5623 = vadd.f32 %v5604, %v5622
      %5624 = vdwg.mxu0
      %5625 = vmatpush.bf16.msra.mxu0 0
      %5626 = vmatpush.bf16.msra.mxu0 0
      %5627 = vmatpush.bf16.msra.mxu0 0
      %5628 = vmatpush.bf16.msra.mxu0 0
      %5629 = vmatpush.bf16.msra.mxu0 0
      %5630 = vmatpush.bf16.msra.mxu0 0
      %5631 = vmatpush.bf16.msra.mxu0 %v2674
      %5632 = vmatpush.bf16.msra.mxu0 %v2672
      %5633 = vmatmul.bf16.gmra.mxu0 %v5582
      %v5634 = vpop.f32.mrf.mxu0
      %v5635 = vadd.f32 %v5616, %v5634
      %v5636 = vpop.f32.mrf.mxu0
      %v5637 = vadd.f32 %v5618, %v5636
      %5638 = vmatmul.bf16.gmra.mxu0 %v5585
      %v5639 = vpop.f32.mrf.mxu0
      %v5640 = vadd.f32 %v5621, %v5639
      %v5641 = vpop.f32.mrf.mxu0
      %v5642 = vadd.f32 %v5623, %v5641
      %5643 = vdwg.mxu0
      %5644 = vmatpush.bf16.msra.mxu0 %v2655
      %5645 = vmatpush.bf16.msra.mxu0 %v2653
      %5646 = vmatpush.bf16.msra.mxu0 %v2651
      %5647 = vmatpush.bf16.msra.mxu0 %v2649
      %5648 = vmatpush.bf16.msra.mxu0 %v2647
      %5649 = vmatpush.bf16.msra.mxu0 %v2645
      %5650 = vmatpush.bf16.msra.mxu0 %v2643
      %5651 = vmatpush.bf16.msra.mxu0 %v2641
      %5652 = vmatmul.bf16.gmra.mxu0 %v5571
      %v5653 = vpop.f32.mrf.mxu0
      %v5654 = vadd.f32 0.0, %v5653
      %v5655 = vpop.f32.mrf.mxu0
      %v5656 = vadd.f32 0.0, %v5655
      %5657 = vmatmul.bf16.gmra.mxu0 %v5574
      %v5658 = vpop.f32.mrf.mxu0
      %v5659 = vadd.f32 0.0, %v5658
      %v5660 = vpop.f32.mrf.mxu0
      %v5661 = vadd.f32 0.0, %v5660
      %5662 = vdwg.mxu0
      %5663 = vmatpush.bf16.msra.mxu0 %v2671
      %5664 = vmatpush.bf16.msra.mxu0 %v2669
      %5665 = vmatpush.bf16.msra.mxu0 %v2667
      %5666 = vmatpush.bf16.msra.mxu0 %v2665
      %5667 = vmatpush.bf16.msra.mxu0 %v2663
      %5668 = vmatpush.bf16.msra.mxu0 %v2661
      %5669 = vmatpush.bf16.msra.mxu0 %v2659
      %5670 = vmatpush.bf16.msra.mxu0 %v2657
      %5671 = vmatmul.bf16.gmra.mxu0 %v5572
      %v5672 = vpop.f32.mrf.mxu0
      %v5673 = vadd.f32 %v5654, %v5672
      %v5674 = vpop.f32.mrf.mxu0
      %v5675 = vadd.f32 %v5656, %v5674
      %5676 = vmatmul.bf16.gmra.mxu0 %v5575
      %v5677 = vpop.f32.mrf.mxu0
      %v5678 = vadd.f32 %v5659, %v5677
      %v5679 = vpop.f32.mrf.mxu0
      %v5680 = vadd.f32 %v5661, %v5679
      %5681 = vdwg.mxu0
      %5682 = vmatpush.bf16.msra.mxu0 0
      %5683 = vmatpush.bf16.msra.mxu0 0
      %5684 = vmatpush.bf16.msra.mxu0 0
      %5685 = vmatpush.bf16.msra.mxu0 0
      %5686 = vmatpush.bf16.msra.mxu0 0
      %5687 = vmatpush.bf16.msra.mxu0 0
      %5688 = vmatpush.bf16.msra.mxu0 %v2675
      %5689 = vmatpush.bf16.msra.mxu0 %v2673
      %5690 = vmatmul.bf16.gmra.mxu0 %v5582
      %v5691 = vpop.f32.mrf.mxu0
      %v5692 = vadd.f32 %v5673, %v5691
      %v5693 = vpop.f32.mrf.mxu0
      %v5694 = vadd.f32 %v5675, %v5693
      %5695 = vmatmul.bf16.gmra.mxu0 %v5585
      %v5696 = vpop.f32.mrf.mxu0
      %v5697 = vadd.f32 %v5678, %v5696
      %v5698 = vpop.f32.mrf.mxu0
      %v5699 = vadd.f32 %v5680, %v5698
      %5700 = vdwg.mxu0
      %v5709 = vunpack.c.l.b16 %v5243
      %v5710 = vunpack.c.h.b16 %v5243
      %v5711 = vunpack.c.l.b16 %v5244
      %v5712 = vunpack.c.l.b16 %v5245
      %v5713 = vunpack.c.h.b16 %v5245
      %v5714 = vunpack.c.l.b16 %v5246
      %v5715 = vunpack.c.l.b16 %v5247
      %v5716 = vunpack.c.h.b16 %v5247
      %v5717 = vunpack.c.l.b16 %v5248
      %v5718 = vunpack.c.l.b16 %v5249
      %v5719 = vunpack.c.h.b16 %v5249
      %v5720 = vunpack.c.l.b16 %v5250
      %v5721 = vpack.c.b16 %v5712, %v5709
      %v5722 = vpack.c.b16 %v5713, %v5710
      %v5723 = vpack.c.b16 %v5714, %v5711
      %v5724 = vpack.c.b16 %v5718, %v5715
      %v5725 = vpack.c.b16 %v5719, %v5716
      %v5726 = vpack.c.b16 %v5720, %v5717
      %v5732 = vsel %vm1205, %v5723, 0
      %v5735 = vsel %vm1205, %v5726, 0
      %5737 = vmatpush.bf16.msra.mxu0 %v5521
      %5738 = vmatpush.bf16.msra.mxu0 %v5519
      %5739 = vmatpush.bf16.msra.mxu0 %v5517
      %5740 = vmatpush.bf16.msra.mxu0 %v5515
      %5741 = vmatpush.bf16.msra.mxu0 %v5513
      %5742 = vmatpush.bf16.msra.mxu0 %v5511
      %5743 = vmatpush.bf16.msra.mxu0 %v5509
      %5744 = vmatpush.bf16.msra.mxu0 %v5507
      %5745 = vmatmul.bf16.gmra.mxu0 %v5721
      %v5746 = vpop.f32.mrf.mxu0
      %v5747 = vadd.f32 %v5635, %v5746
      %v5748 = vpop.f32.mrf.mxu0
      %v5749 = vadd.f32 %v5637, %v5748
      %5750 = vmatmul.bf16.gmra.mxu0 %v5724
      %v5751 = vpop.f32.mrf.mxu0
      %v5752 = vadd.f32 %v5640, %v5751
      %v5753 = vpop.f32.mrf.mxu0
      %v5754 = vadd.f32 %v5642, %v5753
      %5755 = vdwg.mxu0
      %5756 = vmatpush.bf16.msra.mxu0 %v5537
      %5757 = vmatpush.bf16.msra.mxu0 %v5535
      %5758 = vmatpush.bf16.msra.mxu0 %v5533
      %5759 = vmatpush.bf16.msra.mxu0 %v5531
      %5760 = vmatpush.bf16.msra.mxu0 %v5529
      %5761 = vmatpush.bf16.msra.mxu0 %v5527
      %5762 = vmatpush.bf16.msra.mxu0 %v5525
      %5763 = vmatpush.bf16.msra.mxu0 %v5523
      %5764 = vmatmul.bf16.gmra.mxu0 %v5722
      %v5765 = vpop.f32.mrf.mxu0
      %v5766 = vadd.f32 %v5747, %v5765
      %v5767 = vpop.f32.mrf.mxu0
      %v5768 = vadd.f32 %v5749, %v5767
      %5769 = vmatmul.bf16.gmra.mxu0 %v5725
      %v5770 = vpop.f32.mrf.mxu0
      %v5771 = vadd.f32 %v5752, %v5770
      %v5772 = vpop.f32.mrf.mxu0
      %v5773 = vadd.f32 %v5754, %v5772
      %5774 = vdwg.mxu0
      %5775 = vmatpush.bf16.msra.mxu0 0
      %5776 = vmatpush.bf16.msra.mxu0 0
      %5777 = vmatpush.bf16.msra.mxu0 0
      %5778 = vmatpush.bf16.msra.mxu0 0
      %5779 = vmatpush.bf16.msra.mxu0 0
      %5780 = vmatpush.bf16.msra.mxu0 0
      %5781 = vmatpush.bf16.msra.mxu0 %v5541
      %5782 = vmatpush.bf16.msra.mxu0 %v5539
      %5783 = vmatmul.bf16.gmra.mxu0 %v5732
      %v5784 = vpop.f32.mrf.mxu0
      %v5785 = vadd.f32 %v5766, %v5784
      %v5786 = vpop.f32.mrf.mxu0
      %v5787 = vadd.f32 %v5768, %v5786
      %5788 = vmatmul.bf16.gmra.mxu0 %v5735
      %v5789 = vpop.f32.mrf.mxu0
      %v5790 = vadd.f32 %v5771, %v5789
      %v5791 = vpop.f32.mrf.mxu0
      %v5792 = vadd.f32 %v5773, %v5791
      %5793 = vdwg.mxu0
      %5794 = vmatpush.bf16.msra.mxu0 %v5522
      %5795 = vmatpush.bf16.msra.mxu0 %v5520
      %5796 = vmatpush.bf16.msra.mxu0 %v5518
      %5797 = vmatpush.bf16.msra.mxu0 %v5516
      %5798 = vmatpush.bf16.msra.mxu0 %v5514
      %5799 = vmatpush.bf16.msra.mxu0 %v5512
      %5800 = vmatpush.bf16.msra.mxu0 %v5510
      %5801 = vmatpush.bf16.msra.mxu0 %v5508
      %5802 = vmatmul.bf16.gmra.mxu0 %v5721
      %v5803 = vpop.f32.mrf.mxu0
      %v5804 = vadd.f32 %v5692, %v5803
      %v5805 = vpop.f32.mrf.mxu0
      %v5806 = vadd.f32 %v5694, %v5805
      %5807 = vmatmul.bf16.gmra.mxu0 %v5724
      %v5808 = vpop.f32.mrf.mxu0
      %v5809 = vadd.f32 %v5697, %v5808
      %v5810 = vpop.f32.mrf.mxu0
      %v5811 = vadd.f32 %v5699, %v5810
      %5812 = vdwg.mxu0
      %5813 = vmatpush.bf16.msra.mxu0 %v5538
      %5814 = vmatpush.bf16.msra.mxu0 %v5536
      %5815 = vmatpush.bf16.msra.mxu0 %v5534
      %5816 = vmatpush.bf16.msra.mxu0 %v5532
      %5817 = vmatpush.bf16.msra.mxu0 %v5530
      %5818 = vmatpush.bf16.msra.mxu0 %v5528
      %5819 = vmatpush.bf16.msra.mxu0 %v5526
      %5820 = vmatpush.bf16.msra.mxu0 %v5524
      %5821 = vmatmul.bf16.gmra.mxu0 %v5722
      %v5822 = vpop.f32.mrf.mxu0
      %v5823 = vadd.f32 %v5804, %v5822
      %v5824 = vpop.f32.mrf.mxu0
      %v5825 = vadd.f32 %v5806, %v5824
      %5826 = vmatmul.bf16.gmra.mxu0 %v5725
      %v5827 = vpop.f32.mrf.mxu0
      %v5828 = vadd.f32 %v5809, %v5827
      %v5829 = vpop.f32.mrf.mxu0
      %v5830 = vadd.f32 %v5811, %v5829
      %5831 = vdwg.mxu0
      %5832 = vmatpush.bf16.msra.mxu0 0
      %5833 = vmatpush.bf16.msra.mxu0 0
      %5834 = vmatpush.bf16.msra.mxu0 0
      %5835 = vmatpush.bf16.msra.mxu0 0
      %5836 = vmatpush.bf16.msra.mxu0 0
      %5837 = vmatpush.bf16.msra.mxu0 0
      %5838 = vmatpush.bf16.msra.mxu0 %v5542
      %5839 = vmatpush.bf16.msra.mxu0 %v5540
      %5840 = vmatmul.bf16.gmra.mxu0 %v5732
      %v5841 = vpop.f32.mrf.mxu0
      %v5842 = vadd.f32 %v5823, %v5841
      %v5843 = vpop.f32.mrf.mxu0
      %v5844 = vadd.f32 %v5825, %v5843
      %5845 = vmatmul.bf16.gmra.mxu0 %v5735
      %v5846 = vpop.f32.mrf.mxu0
      %v5847 = vadd.f32 %v5828, %v5846
      %v5848 = vpop.f32.mrf.mxu0
      %v5849 = vadd.f32 %v5830, %v5848
      %5850 = vdwg.mxu0
      %v5851 = vld [vmem:[%s25] sm:$0xff]
      %v5852 = vld [vmem:[%s25 + $0x8] sm:$0xff]
      %v5853 = vld [vmem:[%s25 + $0x10] sm:$0xff]
      %v5854 = vld [vmem:[%s25 + $0x18] sm:$0xff]
      %5856 = vset.pattern.permute.xlu0 0
      %5857 = vperm.xlu0 %5856, %v5851
      %v5858 = vpop.permute.xlu0 %5857
      %5861 = vset.pattern.permute.xlu0 0
      %5862 = vperm.xlu0 %5861, %v5852
      %v5863 = vpop.permute.xlu0 %5862
      %5866 = vset.pattern.permute.xlu0 0
      %5867 = vperm.xlu0 %5866, %v5853
      %v5868 = vpop.permute.xlu0 %5867
      %5871 = vset.pattern.permute.xlu0 0
      %5872 = vperm.xlu0 %5871, %v5854
      %v5873 = vpop.permute.xlu0 %5872
      %v5875 = vadd.f32 %v5785, %v5858
      %v5876 = vadd.f32 %v5842, %v5858
      %v5877 = vadd.f32 %v5787, %v5863
      %v5878 = vadd.f32 %v5844, %v5863
      %v5879 = vadd.f32 %v5790, %v5868
      %v5880 = vadd.f32 %v5847, %v5868
      %v5881 = vadd.f32 %v5792, %v5873
      %v5882 = vadd.f32 %v5849, %v5873
      %v5883 = vadd.f32 %v1602, 1.0
      %v5884 = vadd.f32 %v1603, 1.0
      %v5885 = vadd.f32 %v1604, 1.0
      %v5886 = vadd.f32 %v1605, 1.0
      %5888 = vset.pattern.permute.xlu0 0
      %5889 = vperm.xlu0 %5888, %v5883
      %v5890 = vpop.permute.xlu0 %5889
      %5893 = vset.pattern.permute.xlu0 0
      %5894 = vperm.xlu0 %5893, %v5884
      %v5895 = vpop.permute.xlu0 %5894
      %5898 = vset.pattern.permute.xlu0 0
      %5899 = vperm.xlu0 %5898, %v5885
      %v5900 = vpop.permute.xlu0 %5899
      %5903 = vset.pattern.permute.xlu0 0
      %5904 = vperm.xlu0 %5903, %v5886
      %v5905 = vpop.permute.xlu0 %5904
      %v5907 = vmul.f32 %v5875, %v5890
      %v5908 = vmul.f32 %v5876, %v5890
      %v5909 = vmul.f32 %v5877, %v5895
      %v5910 = vmul.f32 %v5878, %v5895
      %v5911 = vmul.f32 %v5879, %v5900
      %v5912 = vmul.f32 %v5880, %v5900
      %v5913 = vmul.f32 %v5881, %v5905
      %v5914 = vmul.f32 %v5882, %v5905
      %5916 = vset.pattern.permute.xlu0 0
      %5917 = vperm.xlu0 %5916, %v1606
      %v5918 = vpop.permute.xlu0 %5917
      %5921 = vset.pattern.permute.xlu0 0
      %5922 = vperm.xlu0 %5921, %v1607
      %v5923 = vpop.permute.xlu0 %5922
      %5926 = vset.pattern.permute.xlu0 0
      %5927 = vperm.xlu0 %5926, %v1608
      %v5928 = vpop.permute.xlu0 %5927
      %5931 = vset.pattern.permute.xlu0 0
      %5932 = vperm.xlu0 %5931, %v1609
      %v5933 = vpop.permute.xlu0 %5932
      %v5935 = vadd.f32 %v5907, %v5918
      %v5936 = vadd.f32 %v5908, %v5918
      %v5937 = vadd.f32 %v5909, %v5923
      %v5938 = vadd.f32 %v5910, %v5923
      %v5939 = vadd.f32 %v5911, %v5928
      %v5940 = vadd.f32 %v5912, %v5928
      %v5941 = vadd.f32 %v5913, %v5933
      %v5942 = vadd.f32 %v5914, %v5933
      %v5943 = vmax.f32 %v5935, 0.0
      %v5944 = vmax.f32 %v5936, 0.0
      %v5945 = vmax.f32 %v5937, 0.0
      %v5946 = vmax.f32 %v5938, 0.0
      %v5947 = vmax.f32 %v5939, 0.0
      %v5948 = vmax.f32 %v5940, 0.0
      %v5949 = vmax.f32 %v5941, 0.0
      %v5950 = vmax.f32 %v5942, 0.0
      %v5951 = vld [vmem:[%s26] sm:$0x3f]
      %5952 = vrot.lane.b32.xlu0 %v5943, 17
      %v5953 = vpop.permute.xlu0 %5952
      %5954 = vrot.lane.b32.xlu0 %v5945, 17
      %v5955 = vpop.permute.xlu0 %5954
      %5956 = vrot.lane.b32.xlu0 %v5947, 17
      %v5957 = vpop.permute.xlu0 %5956
      %5958 = vrot.lane.b32.xlu0 %v5949, 17
      %v5959 = vpop.permute.xlu0 %5958
      %5960 = vrot.lane.b32.xlu0 %v5944, 17
      %v5961 = vpop.permute.xlu0 %5960
      %5962 = vrot.lane.b32.xlu0 %v5946, 17
      %v5963 = vpop.permute.xlu0 %5962
      %5964 = vrot.lane.b32.xlu0 %v5948, 17
      %v5965 = vpop.permute.xlu0 %5964
      %5966 = vrot.lane.b32.xlu0 %v5950, 17
      %v5967 = vpop.permute.xlu0 %5966
      %v5968 = vsel %vm1622, %v5953, %v5961
      %v5969 = vsel %vm1622, %v5955, %v5963
      %v5970 = vsel %vm1622, %v5957, %v5965
      %v5971 = vsel %vm1622, %v5959, %v5967
      %v5972 = vsel %vm1622, %v5961, %v5953
      %v5973 = vsel %vm1622, %v5963, %v5955
      %v5974 = vsel %vm1622, %v5965, %v5957
      %v5975 = vsel %vm1622, %v5967, %v5959
      %v5976 = vmul.f32 %v5972, %v1626
      %v5977 = vmul.f32 %v5968, %v1627
      %v5978 = vmul.f32 %v5973, %v1626
      %v5979 = vmul.f32 %v5969, %v1627
      %v5980 = vmul.f32 %v5974, %v1626
      %v5981 = vmul.f32 %v5970, %v1627
      %v5982 = vmul.f32 %v5975, %v1626
      %v5983 = vmul.f32 %v5971, %v1627
      %5984 = vrot.lane.b32.xlu0 %v5943, 16
      %v5985 = vpop.permute.xlu0 %5984
      %5986 = vrot.lane.b32.xlu0 %v5945, 16
      %v5987 = vpop.permute.xlu0 %5986
      %5988 = vrot.lane.b32.xlu0 %v5947, 16
      %v5989 = vpop.permute.xlu0 %5988
      %5990 = vrot.lane.b32.xlu0 %v5949, 16
      %v5991 = vpop.permute.xlu0 %5990
      %5992 = vrot.lane.b32.xlu0 %v5944, 16
      %v5993 = vpop.permute.xlu0 %5992
      %5994 = vrot.lane.b32.xlu0 %v5946, 16
      %v5995 = vpop.permute.xlu0 %5994
      %5996 = vrot.lane.b32.xlu0 %v5948, 16
      %v5997 = vpop.permute.xlu0 %5996
      %5998 = vrot.lane.b32.xlu0 %v5950, 16
      %v5999 = vpop.permute.xlu0 %5998
      %v6000 = vsel %vm1636, %v5985, %v5993
      %v6001 = vsel %vm1636, %v5987, %v5995
      %v6002 = vsel %vm1636, %v5989, %v5997
      %v6003 = vsel %vm1636, %v5991, %v5999
      %v6004 = vsel %vm1636, %v5993, %v5985
      %v6005 = vsel %vm1636, %v5995, %v5987
      %v6006 = vsel %vm1636, %v5997, %v5989
      %v6007 = vsel %vm1636, %v5999, %v5991
      %v6008 = vmul.f32 %v6004, %v1640
      %v6009 = vmul.f32 %v6000, %v1641
      %v6010 = vmul.f32 %v6005, %v1640
      %v6011 = vmul.f32 %v6001, %v1641
      %v6012 = vmul.f32 %v6006, %v1640
      %v6013 = vmul.f32 %v6002, %v1641
      %v6014 = vmul.f32 %v6007, %v1640
      %v6015 = vmul.f32 %v6003, %v1641
      %6016 = vrot.lane.b32.xlu0 %v5943, 15
      %v6017 = vpop.permute.xlu0 %6016
      %6018 = vrot.lane.b32.xlu0 %v5945, 15
      %v6019 = vpop.permute.xlu0 %6018
      %6020 = vrot.lane.b32.xlu0 %v5947, 15
      %v6021 = vpop.permute.xlu0 %6020
      %6022 = vrot.lane.b32.xlu0 %v5949, 15
      %v6023 = vpop.permute.xlu0 %6022
      %6024 = vrot.lane.b32.xlu0 %v5944, 15
      %v6025 = vpop.permute.xlu0 %6024
      %6026 = vrot.lane.b32.xlu0 %v5946, 15
      %v6027 = vpop.permute.xlu0 %6026
      %6028 = vrot.lane.b32.xlu0 %v5948, 15
      %v6029 = vpop.permute.xlu0 %6028
      %6030 = vrot.lane.b32.xlu0 %v5950, 15
      %v6031 = vpop.permute.xlu0 %6030
      %v6032 = vsel %vm1650, %v6017, %v6025
      %v6033 = vsel %vm1650, %v6019, %v6027
      %v6034 = vsel %vm1650, %v6021, %v6029
      %v6035 = vsel %vm1650, %v6023, %v6031
      %v6036 = vsel %vm1650, %v6025, %v6017
      %v6037 = vsel %vm1650, %v6027, %v6019
      %v6038 = vsel %vm1650, %v6029, %v6021
      %v6039 = vsel %vm1650, %v6031, %v6023
      %v6040 = vmul.f32 %v6036, %v1654
      %v6041 = vmul.f32 %v6032, %v1655
      %v6042 = vmul.f32 %v6037, %v1654
      %v6043 = vmul.f32 %v6033, %v1655
      %v6044 = vmul.f32 %v6038, %v1654
      %v6045 = vmul.f32 %v6034, %v1655
      %v6046 = vmul.f32 %v6039, %v1654
      %v6047 = vmul.f32 %v6035, %v1655
      %6048 = vrot.lane.b32.xlu0 %v5943, 1
      %v6049 = vpop.permute.xlu0 %6048
      %6050 = vrot.lane.b32.xlu0 %v5945, 1
      %v6051 = vpop.permute.xlu0 %6050
      %6052 = vrot.lane.b32.xlu0 %v5947, 1
      %v6053 = vpop.permute.xlu0 %6052
      %6054 = vrot.lane.b32.xlu0 %v5949, 1
      %v6055 = vpop.permute.xlu0 %6054
      %6056 = vrot.lane.b32.xlu0 %v5944, 1
      %v6057 = vpop.permute.xlu0 %6056
      %6058 = vrot.lane.b32.xlu0 %v5946, 1
      %v6059 = vpop.permute.xlu0 %6058
      %6060 = vrot.lane.b32.xlu0 %v5948, 1
      %v6061 = vpop.permute.xlu0 %6060
      %6062 = vrot.lane.b32.xlu0 %v5950, 1
      %v6063 = vpop.permute.xlu0 %6062
      %v6064 = vsel %vm1664, %v6049, %v6057
      %v6065 = vsel %vm1664, %v6051, %v6059
      %v6066 = vsel %vm1664, %v6053, %v6061
      %v6067 = vsel %vm1664, %v6055, %v6063
      %v6068 = vsel %vm1664, %v6057, %v6049
      %v6069 = vsel %vm1664, %v6059, %v6051
      %v6070 = vsel %vm1664, %v6061, %v6053
      %v6071 = vsel %vm1664, %v6063, %v6055
      %v6072 = vmul.f32 %v6068, %v1668
      %v6073 = vmul.f32 %v6064, %v1669
      %v6074 = vmul.f32 %v6069, %v1668
      %v6075 = vmul.f32 %v6065, %v1669
      %v6076 = vmul.f32 %v6070, %v1668
      %v6077 = vmul.f32 %v6066, %v1669
      %v6078 = vmul.f32 %v6071, %v1668
      %v6079 = vmul.f32 %v6067, %v1669
      %6080 = vrot.lane.b32.xlu0 %v5943, 127
      %v6081 = vpop.permute.xlu0 %6080
      %6082 = vrot.lane.b32.xlu0 %v5945, 127
      %v6083 = vpop.permute.xlu0 %6082
      %6084 = vrot.lane.b32.xlu0 %v5947, 127
      %v6085 = vpop.permute.xlu0 %6084
      %6086 = vrot.lane.b32.xlu0 %v5949, 127
      %v6087 = vpop.permute.xlu0 %6086
      %6088 = vrot.lane.b32.xlu0 %v5944, 127
      %v6089 = vpop.permute.xlu0 %6088
      %6090 = vrot.lane.b32.xlu0 %v5946, 127
      %v6091 = vpop.permute.xlu0 %6090
      %6092 = vrot.lane.b32.xlu0 %v5948, 127
      %v6093 = vpop.permute.xlu0 %6092
      %6094 = vrot.lane.b32.xlu0 %v5950, 127
      %v6095 = vpop.permute.xlu0 %6094
      %v6096 = vsel %vm1678, %v6081, %v6089
      %v6097 = vsel %vm1678, %v6083, %v6091
      %v6098 = vsel %vm1678, %v6085, %v6093
      %v6099 = vsel %vm1678, %v6087, %v6095
      %v6100 = vsel %vm1678, %v6089, %v6081
      %v6101 = vsel %vm1678, %v6091, %v6083
      %v6102 = vsel %vm1678, %v6093, %v6085
      %v6103 = vsel %vm1678, %v6095, %v6087
      %v6104 = vmul.f32 %v6096, %v1682
      %v6105 = vmul.f32 %v6100, %v1683
      %v6106 = vmul.f32 %v6097, %v1682
      %v6107 = vmul.f32 %v6101, %v1683
      %v6108 = vmul.f32 %v6098, %v1682
      %v6109 = vmul.f32 %v6102, %v1683
      %v6110 = vmul.f32 %v6099, %v1682
      %v6111 = vmul.f32 %v6103, %v1683
      %6112 = vrot.lane.b32.xlu0 %v5943, 113
      %v6113 = vpop.permute.xlu0 %6112
      %6114 = vrot.lane.b32.xlu0 %v5945, 113
      %v6115 = vpop.permute.xlu0 %6114
      %6116 = vrot.lane.b32.xlu0 %v5947, 113
      %v6117 = vpop.permute.xlu0 %6116
      %6118 = vrot.lane.b32.xlu0 %v5949, 113
      %v6119 = vpop.permute.xlu0 %6118
      %6120 = vrot.lane.b32.xlu0 %v5944, 113
      %v6121 = vpop.permute.xlu0 %6120
      %6122 = vrot.lane.b32.xlu0 %v5946, 113
      %v6123 = vpop.permute.xlu0 %6122
      %6124 = vrot.lane.b32.xlu0 %v5948, 113
      %v6125 = vpop.permute.xlu0 %6124
      %6126 = vrot.lane.b32.xlu0 %v5950, 113
      %v6127 = vpop.permute.xlu0 %6126
      %v6128 = vsel %vm1692, %v6113, %v6121
      %v6129 = vsel %vm1692, %v6115, %v6123
      %v6130 = vsel %vm1692, %v6117, %v6125
      %v6131 = vsel %vm1692, %v6119, %v6127
      %v6132 = vsel %vm1692, %v6121, %v6113
      %v6133 = vsel %vm1692, %v6123, %v6115
      %v6134 = vsel %vm1692, %v6125, %v6117
      %v6135 = vsel %vm1692, %v6127, %v6119
      %v6136 = vmul.f32 %v6128, %v1696
      %v6137 = vmul.f32 %v6132, %v1697
      %v6138 = vmul.f32 %v6129, %v1696
      %v6139 = vmul.f32 %v6133, %v1697
      %v6140 = vmul.f32 %v6130, %v1696
      %v6141 = vmul.f32 %v6134, %v1697
      %v6142 = vmul.f32 %v6131, %v1696
      %v6143 = vmul.f32 %v6135, %v1697
      %6144 = vrot.lane.b32.xlu0 %v5943, 112
      %v6145 = vpop.permute.xlu0 %6144
      %6146 = vrot.lane.b32.xlu0 %v5945, 112
      %v6147 = vpop.permute.xlu0 %6146
      %6148 = vrot.lane.b32.xlu0 %v5947, 112
      %v6149 = vpop.permute.xlu0 %6148
      %6150 = vrot.lane.b32.xlu0 %v5949, 112
      %v6151 = vpop.permute.xlu0 %6150
      %6152 = vrot.lane.b32.xlu0 %v5944, 112
      %v6153 = vpop.permute.xlu0 %6152
      %6154 = vrot.lane.b32.xlu0 %v5946, 112
      %v6155 = vpop.permute.xlu0 %6154
      %6156 = vrot.lane.b32.xlu0 %v5948, 112
      %v6157 = vpop.permute.xlu0 %6156
      %6158 = vrot.lane.b32.xlu0 %v5950, 112
      %v6159 = vpop.permute.xlu0 %6158
      %v6160 = vsel %vm1706, %v6145, %v6153
      %v6161 = vsel %vm1706, %v6147, %v6155
      %v6162 = vsel %vm1706, %v6149, %v6157
      %v6163 = vsel %vm1706, %v6151, %v6159
      %v6164 = vsel %vm1706, %v6153, %v6145
      %v6165 = vsel %vm1706, %v6155, %v6147
      %v6166 = vsel %vm1706, %v6157, %v6149
      %v6167 = vsel %vm1706, %v6159, %v6151
      %v6168 = vmul.f32 %v6160, %v1710
      %v6169 = vmul.f32 %v6164, %v1711
      %v6170 = vmul.f32 %v6161, %v1710
      %v6171 = vmul.f32 %v6165, %v1711
      %v6172 = vmul.f32 %v6162, %v1710
      %v6173 = vmul.f32 %v6166, %v1711
      %v6174 = vmul.f32 %v6163, %v1710
      %v6175 = vmul.f32 %v6167, %v1711
      %6176 = vrot.lane.b32.xlu0 %v5943, 111
      %v6177 = vpop.permute.xlu0 %6176
      %6178 = vrot.lane.b32.xlu0 %v5945, 111
      %v6179 = vpop.permute.xlu0 %6178
      %6180 = vrot.lane.b32.xlu0 %v5947, 111
      %v6181 = vpop.permute.xlu0 %6180
      %6182 = vrot.lane.b32.xlu0 %v5949, 111
      %v6183 = vpop.permute.xlu0 %6182
      %6184 = vrot.lane.b32.xlu0 %v5944, 111
      %v6185 = vpop.permute.xlu0 %6184
      %6186 = vrot.lane.b32.xlu0 %v5946, 111
      %v6187 = vpop.permute.xlu0 %6186
      %6188 = vrot.lane.b32.xlu0 %v5948, 111
      %v6189 = vpop.permute.xlu0 %6188
      %6190 = vrot.lane.b32.xlu0 %v5950, 111
      %v6191 = vpop.permute.xlu0 %6190
      %v6192 = vsel %vm1720, %v6177, %v6185
      %v6193 = vsel %vm1720, %v6179, %v6187
      %v6194 = vsel %vm1720, %v6181, %v6189
      %v6195 = vsel %vm1720, %v6183, %v6191
      %v6196 = vsel %vm1720, %v6185, %v6177
      %v6197 = vsel %vm1720, %v6187, %v6179
      %v6198 = vsel %vm1720, %v6189, %v6181
      %v6199 = vsel %vm1720, %v6191, %v6183
      %v6200 = vmul.f32 %v6192, %v1724
      %v6201 = vmul.f32 %v6196, %v1725
      %v6202 = vmul.f32 %v6193, %v1724
      %v6203 = vmul.f32 %v6197, %v1725
      %v6204 = vmul.f32 %v6194, %v1724
      %v6205 = vmul.f32 %v6198, %v1725
      %v6206 = vmul.f32 %v6195, %v1724
      %v6207 = vmul.f32 %v6199, %v1725
      %v6208 = vpack.c.bf16 %v5978, %v5976
      %v6209 = vpack.c.bf16 %v5979, %v5977
      %v6210 = vpack.c.bf16 %v5982, %v5980
      %v6211 = vpack.c.bf16 %v5983, %v5981
      %v6212 = vpack.c.bf16 %v6010, %v6008
      %v6213 = vpack.c.bf16 %v6011, %v6009
      %v6214 = vpack.c.bf16 %v6014, %v6012
      %v6215 = vpack.c.bf16 %v6015, %v6013
      %v6216 = vpack.c.bf16 %v6042, %v6040
      %v6217 = vpack.c.bf16 %v6043, %v6041
      %v6218 = vpack.c.bf16 %v6046, %v6044
      %v6219 = vpack.c.bf16 %v6047, %v6045
      %v6220 = vpack.c.bf16 %v6074, %v6072
      %v6221 = vpack.c.bf16 %v6075, %v6073
      %v6222 = vpack.c.bf16 %v6078, %v6076
      %v6223 = vpack.c.bf16 %v6079, %v6077
      %v6224 = vpack.c.bf16 %v5945, %v5943
      %v6225 = vpack.c.bf16 %v5946, %v5944
      %v6226 = vpack.c.bf16 %v5949, %v5947
      %v6227 = vpack.c.bf16 %v5950, %v5948
      %v6228 = vpack.c.bf16 %v6106, %v6104
      %v6229 = vpack.c.bf16 %v6107, %v6105
      %v6230 = vpack.c.bf16 %v6110, %v6108
      %v6231 = vpack.c.bf16 %v6111, %v6109
      %v6232 = vpack.c.bf16 %v6138, %v6136
      %v6233 = vpack.c.bf16 %v6139, %v6137
      %v6234 = vpack.c.bf16 %v6142, %v6140
      %v6235 = vpack.c.bf16 %v6143, %v6141
      %v6236 = vpack.c.bf16 %v6170, %v6168
      %v6237 = vpack.c.bf16 %v6171, %v6169
      %v6238 = vpack.c.bf16 %v6174, %v6172
      %v6239 = vpack.c.bf16 %v6175, %v6173
      %v6240 = vpack.c.bf16 %v6202, %v6200
      %v6241 = vpack.c.bf16 %v6203, %v6201
      %v6242 = vpack.c.bf16 %v6206, %v6204
      %v6243 = vpack.c.bf16 %v6207, %v6205
      %v6244 = vld [vmem:[%s27] sm:$0xf]
      %6246 = vset.pattern.permute.xlu0 0
      %6247 = vperm.xlu0 %6246, %v6244
      %v6248 = vpop.permute.xlu0 %6247
      %6251 = vst [vmem:[#allocation1] ss:$4 sm:$0xff] %v5951
      %v6252 = vld.sshfl [vmem:[#allocation1] sm:$0xff pattern:$0x73625140]
      %v6253 = vld.sshfl [vmem:[#allocation1 + $0x8] sm:$0xff pattern:$0x73625140]
      %v6254 = vld.sshfl [vmem:[#allocation1 + $0x10] sm:$0xff pattern:$0x73625140]
      %v6257 = vsel %vm1205, %v6254, 0
      %6259 = vmatpush.bf16.msra.mxu0 %v6222
      %6260 = vmatpush.bf16.msra.mxu0 %v6220
      %6261 = vmatpush.bf16.msra.mxu0 %v6218
      %6262 = vmatpush.bf16.msra.mxu0 %v6216
      %6263 = vmatpush.bf16.msra.mxu0 %v6214
      %6264 = vmatpush.bf16.msra.mxu0 %v6212
      %6265 = vmatpush.bf16.msra.mxu0 %v6210
      %6266 = vmatpush.bf16.msra.mxu0 %v6208
      %6267 = vmatmul.bf16.gmra.mxu0 %v6252
      %v6268 = vpop.f32.mrf.mxu0
      %v6269 = vadd.f32 %v6248, %v6268
      %v6270 = vpop.f32.mrf.mxu0
      %6271 = vdwg.mxu0
      %6272 = vmatpush.bf16.msra.mxu0 %v6238
      %6273 = vmatpush.bf16.msra.mxu0 %v6236
      %6274 = vmatpush.bf16.msra.mxu0 %v6234
      %6275 = vmatpush.bf16.msra.mxu0 %v6232
      %6276 = vmatpush.bf16.msra.mxu0 %v6230
      %6277 = vmatpush.bf16.msra.mxu0 %v6228
      %6278 = vmatpush.bf16.msra.mxu0 %v6226
      %6279 = vmatpush.bf16.msra.mxu0 %v6224
      %6280 = vmatmul.bf16.gmra.mxu0 %v6253
      %v6281 = vpop.f32.mrf.mxu0
      %v6282 = vadd.f32 %v6269, %v6281
      %v6283 = vpop.f32.mrf.mxu0
      %6284 = vdwg.mxu0
      %6285 = vmatpush.bf16.msra.mxu0 0
      %6286 = vmatpush.bf16.msra.mxu0 0
      %6287 = vmatpush.bf16.msra.mxu0 0
      %6288 = vmatpush.bf16.msra.mxu0 0
      %6289 = vmatpush.bf16.msra.mxu0 0
      %6290 = vmatpush.bf16.msra.mxu0 0
      %6291 = vmatpush.bf16.msra.mxu0 %v6242
      %6292 = vmatpush.bf16.msra.mxu0 %v6240
      %6293 = vmatmul.bf16.gmra.mxu0 %v6257
      %v6294 = vpop.f32.mrf.mxu0
      %v6295 = vadd.f32 %v6282, %v6294
      %v6296 = vpop.f32.mrf.mxu0
      %6297 = vdwg.mxu0
      %6298 = vmatpush.bf16.msra.mxu0 %v6223
      %6299 = vmatpush.bf16.msra.mxu0 %v6221
      %6300 = vmatpush.bf16.msra.mxu0 %v6219
      %6301 = vmatpush.bf16.msra.mxu0 %v6217
      %6302 = vmatpush.bf16.msra.mxu0 %v6215
      %6303 = vmatpush.bf16.msra.mxu0 %v6213
      %6304 = vmatpush.bf16.msra.mxu0 %v6211
      %6305 = vmatpush.bf16.msra.mxu0 %v6209
      %6306 = vmatmul.bf16.gmra.mxu0 %v6252
      %v6307 = vpop.f32.mrf.mxu0
      %v6308 = vadd.f32 %v6248, %v6307
      %v6309 = vpop.f32.mrf.mxu0
      %6310 = vdwg.mxu0
      %6311 = vmatpush.bf16.msra.mxu0 %v6239
      %6312 = vmatpush.bf16.msra.mxu0 %v6237
      %6313 = vmatpush.bf16.msra.mxu0 %v6235
      %6314 = vmatpush.bf16.msra.mxu0 %v6233
      %6315 = vmatpush.bf16.msra.mxu0 %v6231
      %6316 = vmatpush.bf16.msra.mxu0 %v6229
      %6317 = vmatpush.bf16.msra.mxu0 %v6227
      %6318 = vmatpush.bf16.msra.mxu0 %v6225
      %6319 = vmatmul.bf16.gmra.mxu0 %v6253
      %v6320 = vpop.f32.mrf.mxu0
      %v6321 = vadd.f32 %v6308, %v6320
      %v6322 = vpop.f32.mrf.mxu0
      %6323 = vdwg.mxu0
      %6324 = vmatpush.bf16.msra.mxu0 0
      %6325 = vmatpush.bf16.msra.mxu0 0
      %6326 = vmatpush.bf16.msra.mxu0 0
      %6327 = vmatpush.bf16.msra.mxu0 0
      %6328 = vmatpush.bf16.msra.mxu0 0
      %6329 = vmatpush.bf16.msra.mxu0 0
      %6330 = vmatpush.bf16.msra.mxu0 %v6243
      %6331 = vmatpush.bf16.msra.mxu0 %v6241
      %6332 = vmatmul.bf16.gmra.mxu0 %v6257
      %v6333 = vpop.f32.mrf.mxu0
      %v6334 = vadd.f32 %v6321, %v6333
      %v6335 = vpop.f32.mrf.mxu0
      %6336 = vdwg.mxu0
      %v6339 = vrot.slane %v6334, 4
      %v6340 = vsel %vm1781, %v6295, %v6339
      %6342 = vst [vmem:[%s859] sm:$0xff] %v6340
      %p6343 = scmp.lt.s32.totalorder %s39, 1
      %s6344 = scalar_select %p6343, %s39, 1
      %s6345 = smul.addr %s6344, 2
      %s6346 = smul.addr %s6345, 4
      %s6347 = scalar_lea.vmem %s28, %s6346
      // Predicated region
      $region133: #{diffusion_unet_forward.1} parent=131 // pred_check
        %p6348 = pneg %p655
      $region134: #{diffusion_unet_forward.1} parent=131 // pred_check_branch
        %6350 = sbr.rel (%p6348) target = $region136
      $region135: #{diffusion_unet_forward.1} parent=131 // pred_region
        _
      $region136: #{diffusion_unet_forward.1} parent=131 // pred_fallthru
        _
    $region132: #{diffusion_unet_forward.1} parent=5 // pred_fallthru
      _
    %p6351 = scmp.le.s32.totalorder 2, %s34
    // Predicated region
    $region137: #{diffusion_unet_forward.1} parent=5 // pred_check
      %p6352 = pneg %p6351
    $region138: #{diffusion_unet_forward.1} parent=5 // pred_check_branch
      %6354 = sbr.rel (%p6352) target = $region140
    $region139: #{diffusion_unet_forward.1} parent=5 // pred_region
      %s6355 = ssub.s32 %s34, 2
      // Predicated region
      $region141: #{diffusion_unet_forward.1} parent=139 // pred_check
        %p6356 = pneg %p661
      $region142: #{diffusion_unet_forward.1} parent=139 // pred_check_branch
        %6358 = sbr.rel (%p6356) target = $region144
      $region143: #{diffusion_unet_forward.1} parent=139 // pred_region
        %p6359 = scmp.lt.s32.totalorder %s40, 1
        %s6360 = scalar_select %p6359, %s40, 1
        %s6361 = smul.addr %s6360, 2
        %s6362 = smul.addr %s6361, 4
        %s6363 = scalar_lea.vmem %s28, %s6362
      $region144: #{diffusion_unet_forward.1} parent=139 // pred_fallthru
        _
    $region140: #{diffusion_unet_forward.1} parent=5 // pred_fallthru
      _
  $region6: #{diffusion_unet_forward.1} parent=0 // loop_footer
    %s38 = sadd.s32 1, %s34
  $region7: #{diffusion_unet_forward.1} parent=0 // loop_footer_branch
    %33 = sbr.rel target = $region3
  $region8: #{diffusion_unet_forward.1} parent=0 // loop_exit
    _

</llo_original>
